<compile_context>
chip_gen: v7x
topology: tpu7x:2x2x1
jax: 0.10.0
libtpu: 0.0.40
codegen_flags: <defaults>
</compile_context>

<pallas_src>
import functools
import math

import jax
import jax.numpy as jnp
from jax.experimental import pallas as pl


# ---------------------------------------------------------------------------
# Fused kernel: full attention_block forward, batch folded into sublanes.
# ---------------------------------------------------------------------------
def fused_attention_block_kernel(
    pep_ref, a_ref, b_ref,                                   # [B*S, D] each
    mask_pep_ref, mask_a_ref, mask_b_ref,                    # block-diag masks
    mask_pz_ref, mask_ap_ref, mask_bp_ref,
    wqkv_ref, bqkv_ref, wo_ref, bo_ref,                      # [6,D,3D],[6,1,3D],[6,D,D],[6,1,D]
    w1_ref, b1_ref, w2_ref, b2_ref,                          # [3,D,F],[3,1,F],[3,F,D],[3,1,D]
    gamma_ref, beta_ref,                                     # [1,D],[1,D]
    pep_out_ref, a_out_ref, b_out_ref,                       # [B*S, D]
    pep_att_ref, a_att_ref, b_att_ref,                       # [B*Sq, H*Sk] (folded)
    *, num_heads, d_model, batch, s_pep, s_a, s_b, eps=1e-5):
  d = d_model
  hd = d // num_heads
  scale = 1.0 / math.sqrt(hd)

  gamma = gamma_ref[...]                                     # hoisted once
  beta = beta_ref[...]

  def add_ln(res, x):
    y = res + x
    mean = jnp.mean(y, axis=-1, keepdims=True)
    var = jnp.mean((y - mean) ** 2, axis=-1, keepdims=True)  # biased, torch-style
    return (y - mean) * jax.lax.rsqrt(var + eps) * gamma + beta

  def mha(m, x_q, x_kv, mask, self_attn, att=None):
    wqkv = wqkv_ref[m]                                       # [D, 3D]
    bqkv = bqkv_ref[m]                                       # [1, 3D]
    if self_attn:
      qkv = jnp.dot(x_q, wqkv, preferred_element_type=jnp.float32) + bqkv
      q, k, v = qkv[:, :d], qkv[:, d:2 * d], qkv[:, 2 * d:]
    else:
      q = jnp.dot(x_q, wqkv[:, :d],
                  preferred_element_type=jnp.float32) + bqkv[:, :d]
      kv = jnp.dot(x_kv, wqkv[:, d:],
                   preferred_element_type=jnp.float32) + bqkv[:, d:]
      k, v = kv[:, :d], kv[:, d:]
    q = q * scale                                            # fold 1/sqrt(hd) once

    heads = []
    for h in range(num_heads):                               # static unroll
      qh = q[:, h * hd:(h + 1) * hd]                         # [B*Sq, hd]
      kh = k[:, h * hd:(h + 1) * hd]                         # [B*Sk, hd]
      vh = v[:, h * hd:(h + 1) * hd]                         # [B*Sk, hd]
      # QK^T without an explicit transpose: contract dim 1 of both operands.
      s = jax.lax.dot_general(qh, kh, (((1,), (1,)), ((), ())),
                              preferred_element_type=jnp.float32)
      s = s + mask                                           # -1e9 off-batch
      s = s - jnp.max(s, axis=-1, keepdims=True)
      e = jnp.exp(s)
      p = e / jnp.sum(e, axis=-1, keepdims=True)             # exact softmax
      if att is not None:                                    # cross-attn only
        att_ref, sq, sk = att
        for bb in range(batch):
          att_ref[bb * sq:(bb + 1) * sq, h * sk:(h + 1) * sk] = (
              p[bb * sq:(bb + 1) * sq, bb * sk:(bb + 1) * sk])
      heads.append(jnp.dot(p, vh, preferred_element_type=jnp.float32))
    ctx = jnp.concatenate(heads, axis=-1)                    # [B*Sq, D]
    return jnp.dot(ctx, wo_ref[m],
                   preferred_element_type=jnp.float32) + bo_ref[m]

  def ffn(m, x):
    h1 = jnp.dot(x, w1_ref[m], preferred_element_type=jnp.float32) + b1_ref[m]
    h1 = jnp.maximum(h1, 0.0)
    return jnp.dot(h1, w2_ref[m], preferred_element_type=jnp.float32) + b2_ref[m]

  pep = pep_ref[...]                                         # [B*S_pep, D]
  a = a_ref[...]
  b = b_ref[...]

  # --- self attention + add & norm ---
  pep = add_ln(pep, mha(0, pep, pep, mask_pep_ref[...], True))
  a = add_ln(a, mha(1, a, a, mask_a_ref[...], True))
  b = add_ln(b, mha(2, b, b, mask_b_ref[...], True))

  # --- z = per-batch concat(a, b), batch-contiguous rows ---
  z_parts = []
  for bb in range(batch):
    z_parts.append(a[bb * s_a:(bb + 1) * s_a])
    z_parts.append(b[bb * s_b:(bb + 1) * s_b])
  z = jnp.concatenate(z_parts, axis=0)                       # [B*(S_a+S_b), D]
  s_z = s_a + s_b

  # --- cross attention + add & norm (pep updated before a/b consume it) ---
  pep = add_ln(pep, mha(3, pep, z, mask_pz_ref[...], False,
                        (pep_att_ref, s_pep, s_z)))
  a = add_ln(a, mha(4, a, pep, mask_ap_ref[...], False,
                    (a_att_ref, s_a, s_pep)))
  b = add_ln(b, mha(5, b, pep, mask_bp_ref[...], False,
                    (b_att_ref, s_b, s_pep)))

  # --- feed forward + add & norm ---
  pep = add_ln(pep, ffn(0, pep))
  a = add_ln(a, ffn(1, a))
  b = add_ln(b, ffn(2, b))

  pep_out_ref[...] = pep
  a_out_ref[...] = a
  b_out_ref[...] = b


# ---------------------------------------------------------------------------
# Wrapper: pack parameters, build masks, run one grid-less pallas_call.
# ---------------------------------------------------------------------------
def attention_block_forward(pep, a, b, params, num_heads):
  B, s_pep, D = pep.shape
  s_a, s_b = a.shape[1], b.shape[1]
  s_z = s_a + s_b
  H = num_heads

  # Fold batch into the sublane axis (free reshape: rows are batch-major).
  pep_f = pep.reshape(B * s_pep, D)
  a_f = a.reshape(B * s_a, D)
  b_f = b.reshape(B * s_b, D)

  mha_names = ("self_attn1", "self_attn2", "self_attn3", "mha1", "mha2", "mha3")
  ffn_names = ("ffn1", "ffn2", "ffn3")

  # Fused [D, 3D] q/k/v weights & biases per MHA module (x @ W layout).
  wqkv = jnp.stack([jnp.concatenate(
      [params[n]["wq"], params[n]["wk"], params[n]["wv"]], axis=1)
      for n in mha_names])
  bqkv = jnp.stack([jnp.concatenate(
      [params[n]["bq"], params[n]["bk"], params[n]["bv"]], axis=1)
      for n in mha_names])
  wo = jnp.stack([params[n]["wo"] for n in mha_names])
  bo = jnp.stack([params[n]["bo"] for n in mha_names])
  w1 = jnp.stack([params[n]["w1"] for n in ffn_names])
  b1 = jnp.stack([params[n]["b1"] for n in ffn_names])
  w2 = jnp.stack([params[n]["w2"] for n in ffn_names])
  b2 = jnp.stack([params[n]["b2"] for n in ffn_names])
  gamma, beta = params["ln"]["gamma"], params["ln"]["beta"]

  # Additive block-diagonal masks (0 within a batch, -1e9 across batches).
  def bdiag_mask(sq, sk):
    rq = jnp.arange(B * sq) // sq
    ck = jnp.arange(B * sk) // sk
    return jnp.where(rq[:, None] == ck[None, :], 0.0, -1e9).astype(jnp.float32)

  m_pep = bdiag_mask(s_pep, s_pep)
  m_a = bdiag_mask(s_a, s_a)
  m_b = bdiag_mask(s_b, s_b)
  m_pz = bdiag_mask(s_pep, s_z)
  m_ap = bdiag_mask(s_a, s_pep)
  m_bp = bdiag_mask(s_b, s_pep)

  out_shapes = (
      jax.ShapeDtypeStruct((B * s_pep, D), jnp.float32),
      jax.ShapeDtypeStruct((B * s_a, D), jnp.float32),
      jax.ShapeDtypeStruct((B * s_b, D), jnp.float32),
      jax.ShapeDtypeStruct((B * s_pep, H * s_z), jnp.float32),   # folded att
      jax.ShapeDtypeStruct((B * s_a, H * s_pep), jnp.float32),
      jax.ShapeDtypeStruct((B * s_b, H * s_pep), jnp.float32),
  )

  kernel = functools.partial(
      fused_attention_block_kernel,
      num_heads=H, d_model=D, batch=B, s_pep=s_pep, s_a=s_a, s_b=s_b)

  # No grid: everything (<~200 KiB) lives in VMEM for a single kernel step.
  outs = pl.pallas_call(kernel, out_shape=out_shapes)(
      pep_f, a_f, b_f, m_pep, m_a, m_b, m_pz, m_ap, m_bp,
      wqkv, bqkv, wo, bo, w1, b1, w2, b2, gamma, beta)

  pep_o, a_o, b_o, pep_att2, a_att2, b_att2 = outs

  def unfold_att(att2d, sq, sk):
    return att2d.reshape(B, sq, H, sk).transpose(0, 2, 1, 3)

  return (pep_o.reshape(B, s_pep, D),
          a_o.reshape(B, s_a, D),
          b_o.reshape(B, s_b, D),
          unfold_att(pep_att2, s_pep, s_z),
          unfold_att(a_att2, s_a, s_pep),
          unfold_att(b_att2, s_b, s_pep))


# ---------------------------------------------------------------------------
# Parameter construction (deterministic, synthetic)
# ---------------------------------------------------------------------------
def init_mha_params(key, D):
  ks = jax.random.split(key, 8)
  s = 1.0 / math.sqrt(D)
  return {
      "wq": jax.random.normal(ks[0], (D, D), jnp.float32) * s,
      "bq": jax.random.normal(ks[1], (1, D), jnp.float32) * 0.1,
      "wk": jax.random.normal(ks[2], (D, D), jnp.float32) * s,
      "bk": jax.random.normal(ks[3], (1, D), jnp.float32) * 0.1,
      "wv": jax.random.normal(ks[4], (D, D), jnp.float32) * s,
      "bv": jax.random.normal(ks[5], (1, D), jnp.float32) * 0.1,
      "wo": jax.random.normal(ks[6], (D, D), jnp.float32) * s,
      "bo": jax.random.normal(ks[7], (1, D), jnp.float32) * 0.1,
  }


def init_ffn_params(key, D, F):
  ks = jax.random.split(key, 4)
  return {
      "w1": jax.random.normal(ks[0], (D, F), jnp.float32) * (1.0 / math.sqrt(D)),
      "b1": jax.random.normal(ks[1], (1, F), jnp.float32) * 0.1,
      "w2": jax.random.normal(ks[2], (F, D), jnp.float32) * (1.0 / math.sqrt(F)),
      "b2": jax.random.normal(ks[3], (1, D), jnp.float32) * 0.1,
  }


def init_params(key, D, F):
  ks = jax.random.split(key, 11)
  return {
      "self_attn1": init_mha_params(ks[0], D),
      "self_attn2": init_mha_params(ks[1], D),
      "self_attn3": init_mha_params(ks[2], D),
      "mha1": init_mha_params(ks[3], D),
      "mha2": init_mha_params(ks[4], D),
      "mha3": init_mha_params(ks[5], D),
      "ffn1": init_ffn_params(ks[6], D, F),
      "ffn2": init_ffn_params(ks[7], D, F),
      "ffn3": init_ffn_params(ks[8], D, F),
      "ln": {"gamma": 1.0 + 0.1 * jax.random.normal(ks[9], (1, D), jnp.float32),
             "beta": 0.1 * jax.random.normal(ks[10], (1, D), jnp.float32)},
  }


# ---------------------------------------------------------------------------
# Pure-JAX reference (mirrors attention_block.forward; dropout=0 -> identity)
# ---------------------------------------------------------------------------
def _ref_mha(x_q, x_kv, p, H):
  D = x_q.shape[-1]
  hd = D // H
  q = x_q @ p["wq"] + p["bq"]
  k = x_kv @ p["wk"] + p["bk"]
  v = x_kv @ p["wv"] + p["bv"]
  B, Sq, _ = x_q.shape
  Sk = x_kv.shape[1]
  qh = q.reshape(B, Sq, H, hd).transpose(0, 2, 1, 3)
  kh = k.reshape(B, Sk, H, hd).transpose(0, 2, 1, 3)
  vh = v.reshape(B, Sk, H, hd).transpose(0, 2, 1, 3)
  s = jnp.einsum("bhqd,bhkd->bhqk", qh, kh) / math.sqrt(hd)
  att = jax.nn.softmax(s, axis=-1)
  o = jnp.einsum("bhqk,bhkd->bhqd", att, vh).transpose(0, 2, 1, 3).reshape(B, Sq, D)
  return o @ p["wo"] + p["bo"], att


def _ref_add_ln(res, x, ln, eps=1e-5):
  y = res + x
  mean = y.mean(-1, keepdims=True)
  var = ((y - mean) ** 2).mean(-1, keepdims=True)
  return (y - mean) / jnp.sqrt(var + eps) * ln["gamma"] + ln["beta"]


def _ref_ffn(x, p):
  return jnp.maximum(x @ p["w1"] + p["b1"], 0.0) @ p["w2"] + p["b2"]


def _ref_forward(pep, a, b, params, H):
  ln = params["ln"]
  pep = _ref_add_ln(pep, _ref_mha(pep, pep, params["self_attn1"], H)[0], ln)
  a = _ref_add_ln(a, _ref_mha(a, a, params["self_attn2"], H)[0], ln)
  b = _ref_add_ln(b, _ref_mha(b, b, params["self_attn3"], H)[0], ln)
  z = jnp.concatenate((a, b), axis=1)
  pep_, pep_att = _ref_mha(pep, z, params["mha1"], H)
  pep = _ref_add_ln(pep, pep_, ln)
  a_, a_att = _ref_mha(a, pep, params["mha2"], H)
  a = _ref_add_ln(a, a_, ln)
  b_, b_att = _ref_mha(b, pep, params["mha3"], H)
  b = _ref_add_ln(b, b_, ln)
  pep = _ref_add_ln(pep, _ref_ffn(pep, params["ffn1"]), ln)
  a = _ref_add_ln(a, _ref_ffn(a, params["ffn2"]), ln)
  b = _ref_add_ln(b, _ref_ffn(b, params["ffn3"]), ln)
  return pep, a, b, pep_att, a_att, b_att


# ---------------------------------------------------------------------------
if __name__ == "__main__":
  B, S_PEP, S_A, S_B = 2, 8, 8, 8
  D, H, FF = 32, 4, 64

  key = jax.random.PRNGKey(0)
  k_pep, k_a, k_b, k_par = jax.random.split(key, 4)
  pep = jax.random.normal(k_pep, (B, S_PEP, D), jnp.float32)
  a = jax.random.normal(k_a, (B, S_A, D), jnp.float32)
  b = jax.random.normal(k_b, (B, S_B, D), jnp.float32)
  params = init_params(k_par, D, FF)

  fwd = jax.jit(functools.partial(attention_block_forward, num_heads=H))
  outs = jax.block_until_ready(fwd(pep, a, b, params))

  refs = _ref_forward(pep, a, b, params, H)
  names = ("pep", "a", "b", "pep_att", "a_att", "b_att")
  expected = ((B, S_PEP, D), (B, S_A, D), (B, S_B, D),
              (B, H, S_PEP, S_A + S_B), (B, H, S_A, S_PEP),
              (B, H, S_B, S_PEP))
  for name, got, want, shp in zip(names, outs, refs, expected):
    assert got.shape == shp, (name, got.shape, shp)
    err = float(jnp.max(jnp.abs(got - want)))
    assert err < 2e-3, (name, err)
  print("KERNEL_OK")
</pallas_src>

<mosaic_0001>
module attributes {stable_mosaic.version = 11 : i64} {
  func.func @fused_attention_block_kernel(%arg0: memref<16x32xf32, #tpu.memory_space<vmem>>, %arg1: memref<16x32xf32, #tpu.memory_space<vmem>>, %arg2: memref<16x32xf32, #tpu.memory_space<vmem>>, %arg3: memref<16x16xf32, #tpu.memory_space<vmem>>, %arg4: memref<16x16xf32, #tpu.memory_space<vmem>>, %arg5: memref<16x16xf32, #tpu.memory_space<vmem>>, %arg6: memref<16x32xf32, #tpu.memory_space<vmem>>, %arg7: memref<16x16xf32, #tpu.memory_space<vmem>>, %arg8: memref<16x16xf32, #tpu.memory_space<vmem>>, %arg9: memref<6x32x96xf32, #tpu.memory_space<vmem>>, %arg10: memref<6x1x96xf32, #tpu.memory_space<vmem>>, %arg11: memref<6x32x32xf32, #tpu.memory_space<vmem>>, %arg12: memref<6x1x32xf32, #tpu.memory_space<vmem>>, %arg13: memref<3x32x64xf32, #tpu.memory_space<vmem>>, %arg14: memref<3x1x64xf32, #tpu.memory_space<vmem>>, %arg15: memref<3x64x32xf32, #tpu.memory_space<vmem>>, %arg16: memref<3x1x32xf32, #tpu.memory_space<vmem>>, %arg17: memref<1x32xf32, #tpu.memory_space<vmem>>, %arg18: memref<1x32xf32, #tpu.memory_space<vmem>>, %arg19: memref<16x32xf32, #tpu.memory_space<vmem>>, %arg20: memref<16x32xf32, #tpu.memory_space<vmem>>, %arg21: memref<16x32xf32, #tpu.memory_space<vmem>>, %arg22: memref<16x64xf32, #tpu.memory_space<vmem>>, %arg23: memref<16x32xf32, #tpu.memory_space<vmem>>, %arg24: memref<16x32xf32, #tpu.memory_space<vmem>>) attributes {dimension_semantics = [], scalar_prefetch = 0 : i64, scratch_operands = 0 : i64, tpu.core_type = #tpu.core_type<tc>} {
    %c0 = arith.constant 0 : index
    %c0_0 = arith.constant 0 : index
    %0 = vector.load %arg17[%c0, %c0_0] : memref<1x32xf32, #tpu.memory_space<vmem>>, vector<1x32xf32>
    %c0_1 = arith.constant 0 : index
    %c0_2 = arith.constant 0 : index
    %1 = vector.load %arg18[%c0_1, %c0_2] : memref<1x32xf32, #tpu.memory_space<vmem>>, vector<1x32xf32>
    %c0_3 = arith.constant 0 : index
    %c0_4 = arith.constant 0 : index
    %2 = vector.load %arg0[%c0_3, %c0_4] : memref<16x32xf32, #tpu.memory_space<vmem>>, vector<16x32xf32>
    %c0_5 = arith.constant 0 : index
    %c0_6 = arith.constant 0 : index
    %3 = vector.load %arg1[%c0_5, %c0_6] : memref<16x32xf32, #tpu.memory_space<vmem>>, vector<16x32xf32>
    %c0_7 = arith.constant 0 : index
    %c0_8 = arith.constant 0 : index
    %4 = vector.load %arg2[%c0_7, %c0_8] : memref<16x32xf32, #tpu.memory_space<vmem>>, vector<16x32xf32>
    %c0_9 = arith.constant 0 : index
    %c0_10 = arith.constant 0 : index
    %5 = vector.load %arg3[%c0_9, %c0_10] : memref<16x16xf32, #tpu.memory_space<vmem>>, vector<16x16xf32>
    %c0_11 = arith.constant 0 : index
    %c0_12 = arith.constant 0 : index
    %c0_13 = arith.constant 0 : index
    %6 = vector.load %arg9[%c0_11, %c0_12, %c0_13] : memref<6x32x96xf32, #tpu.memory_space<vmem>>, vector<1x32x96xf32>
    %7 = vector.shape_cast %6 : vector<1x32x96xf32> to vector<32x96xf32>
    %c0_14 = arith.constant 0 : index
    %c0_15 = arith.constant 0 : index
    %c0_16 = arith.constant 0 : index
    %8 = vector.load %arg10[%c0_14, %c0_15, %c0_16] : memref<6x1x96xf32, #tpu.memory_space<vmem>>, vector<1x1x96xf32>
    %9 = vector.shape_cast %8 : vector<1x1x96xf32> to vector<1x96xf32>
    %cst = arith.constant dense<0.000000e+00> : vector<16x96xf32>
    %10 = tpu.matmul %2, %7, %cst {dimension_numbers = #tpu.dot_dimension_numbers<[1], [0], [0], [1], [0, 0, 1, 1], [], []>} : vector<16x32xf32>, vector<32x96xf32>, vector<16x96xf32> -> vector<16x96xf32>
    %11 = vector.broadcast %9 : vector<1x96xf32> to vector<16x96xf32>
    %12 = arith.addf %10, %11 : vector<16x96xf32>
    %13 = vector.extract_strided_slice %12 {offsets = [0, 0], sizes = [16, 32], strides = [1, 1]} : vector<16x96xf32> to vector<16x32xf32>
    %14 = vector.extract_strided_slice %12 {offsets = [0, 32], sizes = [16, 32], strides = [1, 1]} : vector<16x96xf32> to vector<16x32xf32>
    %15 = vector.extract_strided_slice %12 {offsets = [0, 64], sizes = [16, 32], strides = [1, 1]} : vector<16x96xf32> to vector<16x32xf32>
    %cst_17 = arith.constant 0.353553385 : f32
    %16 = vector.broadcast %cst_17 : f32 to vector<16x32xf32>
    %17 = arith.mulf %13, %16 : vector<16x32xf32>
    %18 = vector.extract_strided_slice %17 {offsets = [0, 0], sizes = [16, 8], strides = [1, 1]} : vector<16x32xf32> to vector<16x8xf32>
    %19 = vector.extract_strided_slice %14 {offsets = [0, 0], sizes = [16, 8], strides = [1, 1]} : vector<16x32xf32> to vector<16x8xf32>
    %20 = vector.extract_strided_slice %15 {offsets = [0, 0], sizes = [16, 8], strides = [1, 1]} : vector<16x32xf32> to vector<16x8xf32>
    %cst_18 = arith.constant dense<0.000000e+00> : vector<16x16xf32>
    %21 = tpu.matmul %18, %19, %cst_18 {dimension_numbers = #tpu.dot_dimension_numbers<[1], [1], [0], [0], [0, 0, 1, 0], [], []>} : vector<16x8xf32>, vector<16x8xf32>, vector<16x16xf32> -> vector<16x16xf32>
    %22 = arith.addf %21, %5 : vector<16x16xf32>
    %cst_19 = arith.constant dense<0xFF800000> : vector<16xf32>
    %23 = vector.multi_reduction <maximumf>, %22, %cst_19 [1] : vector<16x16xf32> to vector<16xf32>
    %24 = vector.shape_cast %23 : vector<16xf32> to vector<16x1xf32>
    %25 = vector.broadcast %24 : vector<16x1xf32> to vector<16x16xf32>
    %26 = arith.subf %22, %25 : vector<16x16xf32>
    %27 = math.exp %26 : vector<16x16xf32>
    %cst_20 = arith.constant dense<0.000000e+00> : vector<16xf32>
    %28 = vector.multi_reduction <add>, %27, %cst_20 [1] : vector<16x16xf32> to vector<16xf32>
    %29 = vector.shape_cast %28 : vector<16xf32> to vector<16x1xf32>
    %30 = vector.broadcast %29 : vector<16x1xf32> to vector<16x16xf32>
    %31 = arith.divf %27, %30 : vector<16x16xf32>
    %cst_21 = arith.constant dense<0.000000e+00> : vector<16x8xf32>
    %32 = tpu.matmul %31, %20, %cst_21 {dimension_numbers = #tpu.dot_dimension_numbers<[1], [0], [0], [1], [0, 0, 1, 1], [], []>} : vector<16x16xf32>, vector<16x8xf32>, vector<16x8xf32> -> vector<16x8xf32>
    %33 = vector.extract_strided_slice %17 {offsets = [0, 8], sizes = [16, 8], strides = [1, 1]} : vector<16x32xf32> to vector<16x8xf32>
    %34 = vector.extract_strided_slice %14 {offsets = [0, 8], sizes = [16, 8], strides = [1, 1]} : vector<16x32xf32> to vector<16x8xf32>
    %35 = vector.extract_strided_slice %15 {offsets = [0, 8], sizes = [16, 8], strides = [1, 1]} : vector<16x32xf32> to vector<16x8xf32>
    %cst_22 = arith.constant dense<0.000000e+00> : vector<16x16xf32>
    %36 = tpu.matmul %33, %34, %cst_22 {dimension_numbers = #tpu.dot_dimension_numbers<[1], [1], [0], [0], [0, 0, 1, 0], [], []>} : vector<16x8xf32>, vector<16x8xf32>, vector<16x16xf32> -> vector<16x16xf32>
    %37 = arith.addf %36, %5 : vector<16x16xf32>
    %cst_23 = arith.constant dense<0xFF800000> : vector<16xf32>
    %38 = vector.multi_reduction <maximumf>, %37, %cst_23 [1] : vector<16x16xf32> to vector<16xf32>
    %39 = vector.shape_cast %38 : vector<16xf32> to vector<16x1xf32>
    %40 = vector.broadcast %39 : vector<16x1xf32> to vector<16x16xf32>
    %41 = arith.subf %37, %40 : vector<16x16xf32>
    %42 = math.exp %41 : vector<16x16xf32>
    %cst_24 = arith.constant dense<0.000000e+00> : vector<16xf32>
    %43 = vector.multi_reduction <add>, %42, %cst_24 [1] : vector<16x16xf32> to vector<16xf32>
    %44 = vector.shape_cast %43 : vector<16xf32> to vector<16x1xf32>
    %45 = vector.broadcast %44 : vector<16x1xf32> to vector<16x16xf32>
    %46 = arith.divf %42, %45 : vector<16x16xf32>
    %cst_25 = arith.constant dense<0.000000e+00> : vector<16x8xf32>
    %47 = tpu.matmul %46, %35, %cst_25 {dimension_numbers = #tpu.dot_dimension_numbers<[1], [0], [0], [1], [0, 0, 1, 1], [], []>} : vector<16x16xf32>, vector<16x8xf32>, vector<16x8xf32> -> vector<16x8xf32>
    %48 = vector.extract_strided_slice %17 {offsets = [0, 16], sizes = [16, 8], strides = [1, 1]} : vector<16x32xf32> to vector<16x8xf32>
    %49 = vector.extract_strided_slice %14 {offsets = [0, 16], sizes = [16, 8], strides = [1, 1]} : vector<16x32xf32> to vector<16x8xf32>
    %50 = vector.extract_strided_slice %15 {offsets = [0, 16], sizes = [16, 8], strides = [1, 1]} : vector<16x32xf32> to vector<16x8xf32>
    %cst_26 = arith.constant dense<0.000000e+00> : vector<16x16xf32>
    %51 = tpu.matmul %48, %49, %cst_26 {dimension_numbers = #tpu.dot_dimension_numbers<[1], [1], [0], [0], [0, 0, 1, 0], [], []>} : vector<16x8xf32>, vector<16x8xf32>, vector<16x16xf32> -> vector<16x16xf32>
    %52 = arith.addf %51, %5 : vector<16x16xf32>
    %cst_27 = arith.constant dense<0xFF800000> : vector<16xf32>
    %53 = vector.multi_reduction <maximumf>, %52, %cst_27 [1] : vector<16x16xf32> to vector<16xf32>
    %54 = vector.shape_cast %53 : vector<16xf32> to vector<16x1xf32>
    %55 = vector.broadcast %54 : vector<16x1xf32> to vector<16x16xf32>
    %56 = arith.subf %52, %55 : vector<16x16xf32>
    %57 = math.exp %56 : vector<16x16xf32>
    %cst_28 = arith.constant dense<0.000000e+00> : vector<16xf32>
    %58 = vector.multi_reduction <add>, %57, %cst_28 [1] : vector<16x16xf32> to vector<16xf32>
    %59 = vector.shape_cast %58 : vector<16xf32> to vector<16x1xf32>
    %60 = vector.broadcast %59 : vector<16x1xf32> to vector<16x16xf32>
    %61 = arith.divf %57, %60 : vector<16x16xf32>
    %cst_29 = arith.constant dense<0.000000e+00> : vector<16x8xf32>
    %62 = tpu.matmul %61, %50, %cst_29 {dimension_numbers = #tpu.dot_dimension_numbers<[1], [0], [0], [1], [0, 0, 1, 1], [], []>} : vector<16x16xf32>, vector<16x8xf32>, vector<16x8xf32> -> vector<16x8xf32>
    %63 = vector.extract_strided_slice %17 {offsets = [0, 24], sizes = [16, 8], strides = [1, 1]} : vector<16x32xf32> to vector<16x8xf32>
    %64 = vector.extract_strided_slice %14 {offsets = [0, 24], sizes = [16, 8], strides = [1, 1]} : vector<16x32xf32> to vector<16x8xf32>
    %65 = vector.extract_strided_slice %15 {offsets = [0, 24], sizes = [16, 8], strides = [1, 1]} : vector<16x32xf32> to vector<16x8xf32>
    %cst_30 = arith.constant dense<0.000000e+00> : vector<16x16xf32>
    %66 = tpu.matmul %63, %64, %cst_30 {dimension_numbers = #tpu.dot_dimension_numbers<[1], [1], [0], [0], [0, 0, 1, 0], [], []>} : vector<16x8xf32>, vector<16x8xf32>, vector<16x16xf32> -> vector<16x16xf32>
    %67 = arith.addf %66, %5 : vector<16x16xf32>
    %cst_31 = arith.constant dense<0xFF800000> : vector<16xf32>
    %68 = vector.multi_reduction <maximumf>, %67, %cst_31 [1] : vector<16x16xf32> to vector<16xf32>
    %69 = vector.shape_cast %68 : vector<16xf32> to vector<16x1xf32>
    %70 = vector.broadcast %69 : vector<16x1xf32> to vector<16x16xf32>
    %71 = arith.subf %67, %70 : vector<16x16xf32>
    %72 = math.exp %71 : vector<16x16xf32>
    %cst_32 = arith.constant dense<0.000000e+00> : vector<16xf32>
    %73 = vector.multi_reduction <add>, %72, %cst_32 [1] : vector<16x16xf32> to vector<16xf32>
    %74 = vector.shape_cast %73 : vector<16xf32> to vector<16x1xf32>
    %75 = vector.broadcast %74 : vector<16x1xf32> to vector<16x16xf32>
    %76 = arith.divf %72, %75 : vector<16x16xf32>
    %cst_33 = arith.constant dense<0.000000e+00> : vector<16x8xf32>
    %77 = tpu.matmul %76, %65, %cst_33 {dimension_numbers = #tpu.dot_dimension_numbers<[1], [0], [0], [1], [0, 0, 1, 1], [], []>} : vector<16x16xf32>, vector<16x8xf32>, vector<16x8xf32> -> vector<16x8xf32>
    %78 = tpu.concatenate %32, %47, %62, %77 in 1 : vector<16x8xf32>, vector<16x8xf32>, vector<16x8xf32>, vector<16x8xf32> -> vector<16x32xf32>
    %c0_34 = arith.constant 0 : index
    %c0_35 = arith.constant 0 : index
    %c0_36 = arith.constant 0 : index
    %79 = vector.load %arg11[%c0_34, %c0_35, %c0_36] : memref<6x32x32xf32, #tpu.memory_space<vmem>>, vector<1x32x32xf32>
    %80 = vector.shape_cast %79 : vector<1x32x32xf32> to vector<32x32xf32>
    %cst_37 = arith.constant dense<0.000000e+00> : vector<16x32xf32>
    %81 = tpu.matmul %78, %80, %cst_37 {dimension_numbers = #tpu.dot_dimension_numbers<[1], [0], [0], [1], [0, 0, 1, 1], [], []>} : vector<16x32xf32>, vector<32x32xf32>, vector<16x32xf32> -> vector<16x32xf32>
    %c0_38 = arith.constant 0 : index
    %c0_39 = arith.constant 0 : index
    %c0_40 = arith.constant 0 : index
    %82 = vector.load %arg12[%c0_38, %c0_39, %c0_40] : memref<6x1x32xf32, #tpu.memory_space<vmem>>, vector<1x1x32xf32>
    %83 = vector.shape_cast %82 : vector<1x1x32xf32> to vector<1x32xf32>
    %84 = vector.broadcast %83 : vector<1x32xf32> to vector<16x32xf32>
    %85 = arith.addf %81, %84 : vector<16x32xf32>
    %86 = arith.addf %2, %85 : vector<16x32xf32>
    %cst_41 = arith.constant dense<0.000000e+00> : vector<16xf32>
    %87 = vector.multi_reduction <add>, %86, %cst_41 [1] : vector<16x32xf32> to vector<16xf32>
    %88 = vector.shape_cast %87 : vector<16xf32> to vector<16x1xf32>
    %cst_42 = arith.constant 3.200000e+01 : f32
    %89 = vector.broadcast %cst_42 : f32 to vector<16x1xf32>
    %90 = arith.divf %88, %89 : vector<16x1xf32>
    %91 = vector.broadcast %90 : vector<16x1xf32> to vector<16x32xf32>
    %92 = arith.subf %86, %91 : vector<16x32xf32>
    %93 = arith.mulf %92, %92 : vector<16x32xf32>
    %cst_43 = arith.constant dense<0.000000e+00> : vector<16xf32>
    %94 = vector.multi_reduction <add>, %93, %cst_43 [1] : vector<16x32xf32> to vector<16xf32>
    %95 = vector.shape_cast %94 : vector<16xf32> to vector<16x1xf32>
    %cst_44 = arith.constant 3.200000e+01 : f32
    %96 = vector.broadcast %cst_44 : f32 to vector<16x1xf32>
    %97 = arith.divf %95, %96 : vector<16x1xf32>
    %98 = vector.broadcast %90 : vector<16x1xf32> to vector<16x32xf32>
    %99 = arith.subf %86, %98 : vector<16x32xf32>
    %cst_45 = arith.constant 9.99999974E-6 : f32
    %100 = vector.broadcast %cst_45 : f32 to vector<16x1xf32>
    %101 = arith.addf %97, %100 : vector<16x1xf32>
    %102 = math.rsqrt %101 : vector<16x1xf32>
    %103 = vector.broadcast %102 : vector<16x1xf32> to vector<16x32xf32>
    %104 = arith.mulf %99, %103 : vector<16x32xf32>
    %105 = vector.broadcast %0 : vector<1x32xf32> to vector<16x32xf32>
    %106 = arith.mulf %104, %105 : vector<16x32xf32>
    %107 = vector.broadcast %1 : vector<1x32xf32> to vector<16x32xf32>
    %108 = arith.addf %106, %107 : vector<16x32xf32>
    %c0_46 = arith.constant 0 : index
    %c0_47 = arith.constant 0 : index
    %109 = vector.load %arg4[%c0_46, %c0_47] : memref<16x16xf32, #tpu.memory_space<vmem>>, vector<16x16xf32>
    %c1 = arith.constant 1 : index
    %c0_48 = arith.constant 0 : index
    %c0_49 = arith.constant 0 : index
    %110 = vector.load %arg9[%c1, %c0_48, %c0_49] : memref<6x32x96xf32, #tpu.memory_space<vmem>>, vector<1x32x96xf32>
    %111 = vector.shape_cast %110 : vector<1x32x96xf32> to vector<32x96xf32>
    %c1_50 = arith.constant 1 : index
    %c0_51 = arith.constant 0 : index
    %c0_52 = arith.constant 0 : index
    %112 = vector.load %arg10[%c1_50, %c0_51, %c0_52] : memref<6x1x96xf32, #tpu.memory_space<vmem>>, vector<1x1x96xf32>
    %113 = vector.shape_cast %112 : vector<1x1x96xf32> to vector<1x96xf32>
    %cst_53 = arith.constant dense<0.000000e+00> : vector<16x96xf32>
    %114 = tpu.matmul %3, %111, %cst_53 {dimension_numbers = #tpu.dot_dimension_numbers<[1], [0], [0], [1], [0, 0, 1, 1], [], []>} : vector<16x32xf32>, vector<32x96xf32>, vector<16x96xf32> -> vector<16x96xf32>
    %115 = vector.broadcast %113 : vector<1x96xf32> to vector<16x96xf32>
    %116 = arith.addf %114, %115 : vector<16x96xf32>
    %117 = vector.extract_strided_slice %116 {offsets = [0, 0], sizes = [16, 32], strides = [1, 1]} : vector<16x96xf32> to vector<16x32xf32>
    %118 = vector.extract_strided_slice %116 {offsets = [0, 32], sizes = [16, 32], strides = [1, 1]} : vector<16x96xf32> to vector<16x32xf32>
    %119 = vector.extract_strided_slice %116 {offsets = [0, 64], sizes = [16, 32], strides = [1, 1]} : vector<16x96xf32> to vector<16x32xf32>
    %cst_54 = arith.constant 0.353553385 : f32
    %120 = vector.broadcast %cst_54 : f32 to vector<16x32xf32>
    %121 = arith.mulf %117, %120 : vector<16x32xf32>
    %122 = vector.extract_strided_slice %121 {offsets = [0, 0], sizes = [16, 8], strides = [1, 1]} : vector<16x32xf32> to vector<16x8xf32>
    %123 = vector.extract_strided_slice %118 {offsets = [0, 0], sizes = [16, 8], strides = [1, 1]} : vector<16x32xf32> to vector<16x8xf32>
    %124 = vector.extract_strided_slice %119 {offsets = [0, 0], sizes = [16, 8], strides = [1, 1]} : vector<16x32xf32> to vector<16x8xf32>
    %cst_55 = arith.constant dense<0.000000e+00> : vector<16x16xf32>
    %125 = tpu.matmul %122, %123, %cst_55 {dimension_numbers = #tpu.dot_dimension_numbers<[1], [1], [0], [0], [0, 0, 1, 0], [], []>} : vector<16x8xf32>, vector<16x8xf32>, vector<16x16xf32> -> vector<16x16xf32>
    %126 = arith.addf %125, %109 : vector<16x16xf32>
    %cst_56 = arith.constant dense<0xFF800000> : vector<16xf32>
    %127 = vector.multi_reduction <maximumf>, %126, %cst_56 [1] : vector<16x16xf32> to vector<16xf32>
    %128 = vector.shape_cast %127 : vector<16xf32> to vector<16x1xf32>
    %129 = vector.broadcast %128 : vector<16x1xf32> to vector<16x16xf32>
    %130 = arith.subf %126, %129 : vector<16x16xf32>
    %131 = math.exp %130 : vector<16x16xf32>
    %cst_57 = arith.constant dense<0.000000e+00> : vector<16xf32>
    %132 = vector.multi_reduction <add>, %131, %cst_57 [1] : vector<16x16xf32> to vector<16xf32>
    %133 = vector.shape_cast %132 : vector<16xf32> to vector<16x1xf32>
    %134 = vector.broadcast %133 : vector<16x1xf32> to vector<16x16xf32>
    %135 = arith.divf %131, %134 : vector<16x16xf32>
    %cst_58 = arith.constant dense<0.000000e+00> : vector<16x8xf32>
    %136 = tpu.matmul %135, %124, %cst_58 {dimension_numbers = #tpu.dot_dimension_numbers<[1], [0], [0], [1], [0, 0, 1, 1], [], []>} : vector<16x16xf32>, vector<16x8xf32>, vector<16x8xf32> -> vector<16x8xf32>
    %137 = vector.extract_strided_slice %121 {offsets = [0, 8], sizes = [16, 8], strides = [1, 1]} : vector<16x32xf32> to vector<16x8xf32>
    %138 = vector.extract_strided_slice %118 {offsets = [0, 8], sizes = [16, 8], strides = [1, 1]} : vector<16x32xf32> to vector<16x8xf32>
    %139 = vector.extract_strided_slice %119 {offsets = [0, 8], sizes = [16, 8], strides = [1, 1]} : vector<16x32xf32> to vector<16x8xf32>
    %cst_59 = arith.constant dense<0.000000e+00> : vector<16x16xf32>
    %140 = tpu.matmul %137, %138, %cst_59 {dimension_numbers = #tpu.dot_dimension_numbers<[1], [1], [0], [0], [0, 0, 1, 0], [], []>} : vector<16x8xf32>, vector<16x8xf32>, vector<16x16xf32> -> vector<16x16xf32>
    %141 = arith.addf %140, %109 : vector<16x16xf32>
    %cst_60 = arith.constant dense<0xFF800000> : vector<16xf32>
    %142 = vector.multi_reduction <maximumf>, %141, %cst_60 [1] : vector<16x16xf32> to vector<16xf32>
    %143 = vector.shape_cast %142 : vector<16xf32> to vector<16x1xf32>
    %144 = vector.broadcast %143 : vector<16x1xf32> to vector<16x16xf32>
    %145 = arith.subf %141, %144 : vector<16x16xf32>
    %146 = math.exp %145 : vector<16x16xf32>
    %cst_61 = arith.constant dense<0.000000e+00> : vector<16xf32>
    %147 = vector.multi_reduction <add>, %146, %cst_61 [1] : vector<16x16xf32> to vector<16xf32>
    %148 = vector.shape_cast %147 : vector<16xf32> to vector<16x1xf32>
    %149 = vector.broadcast %148 : vector<16x1xf32> to vector<16x16xf32>
    %150 = arith.divf %146, %149 : vector<16x16xf32>
    %cst_62 = arith.constant dense<0.000000e+00> : vector<16x8xf32>
    %151 = tpu.matmul %150, %139, %cst_62 {dimension_numbers = #tpu.dot_dimension_numbers<[1], [0], [0], [1], [0, 0, 1, 1], [], []>} : vector<16x16xf32>, vector<16x8xf32>, vector<16x8xf32> -> vector<16x8xf32>
    %152 = vector.extract_strided_slice %121 {offsets = [0, 16], sizes = [16, 8], strides = [1, 1]} : vector<16x32xf32> to vector<16x8xf32>
    %153 = vector.extract_strided_slice %118 {offsets = [0, 16], sizes = [16, 8], strides = [1, 1]} : vector<16x32xf32> to vector<16x8xf32>
    %154 = vector.extract_strided_slice %119 {offsets = [0, 16], sizes = [16, 8], strides = [1, 1]} : vector<16x32xf32> to vector<16x8xf32>
    %cst_63 = arith.constant dense<0.000000e+00> : vector<16x16xf32>
    %155 = tpu.matmul %152, %153, %cst_63 {dimension_numbers = #tpu.dot_dimension_numbers<[1], [1], [0], [0], [0, 0, 1, 0], [], []>} : vector<16x8xf32>, vector<16x8xf32>, vector<16x16xf32> -> vector<16x16xf32>
    %156 = arith.addf %155, %109 : vector<16x16xf32>
    %cst_64 = arith.constant dense<0xFF800000> : vector<16xf32>
    %157 = vector.multi_reduction <maximumf>, %156, %cst_64 [1] : vector<16x16xf32> to vector<16xf32>
    %158 = vector.shape_cast %157 : vector<16xf32> to vector<16x1xf32>
    %159 = vector.broadcast %158 : vector<16x1xf32> to vector<16x16xf32>
    %160 = arith.subf %156, %159 : vector<16x16xf32>
    %161 = math.exp %160 : vector<16x16xf32>
    %cst_65 = arith.constant dense<0.000000e+00> : vector<16xf32>
    %162 = vector.multi_reduction <add>, %161, %cst_65 [1] : vector<16x16xf32> to vector<16xf32>
    %163 = vector.shape_cast %162 : vector<16xf32> to vector<16x1xf32>
    %164 = vector.broadcast %163 : vector<16x1xf32> to vector<16x16xf32>
    %165 = arith.divf %161, %164 : vector<16x16xf32>
    %cst_66 = arith.constant dense<0.000000e+00> : vector<16x8xf32>
    %166 = tpu.matmul %165, %154, %cst_66 {dimension_numbers = #tpu.dot_dimension_numbers<[1], [0], [0], [1], [0, 0, 1, 1], [], []>} : vector<16x16xf32>, vector<16x8xf32>, vector<16x8xf32> -> vector<16x8xf32>
    %167 = vector.extract_strided_slice %121 {offsets = [0, 24], sizes = [16, 8], strides = [1, 1]} : vector<16x32xf32> to vector<16x8xf32>
    %168 = vector.extract_strided_slice %118 {offsets = [0, 24], sizes = [16, 8], strides = [1, 1]} : vector<16x32xf32> to vector<16x8xf32>
    %169 = vector.extract_strided_slice %119 {offsets = [0, 24], sizes = [16, 8], strides = [1, 1]} : vector<16x32xf32> to vector<16x8xf32>
    %cst_67 = arith.constant dense<0.000000e+00> : vector<16x16xf32>
    %170 = tpu.matmul %167, %168, %cst_67 {dimension_numbers = #tpu.dot_dimension_numbers<[1], [1], [0], [0], [0, 0, 1, 0], [], []>} : vector<16x8xf32>, vector<16x8xf32>, vector<16x16xf32> -> vector<16x16xf32>
    %171 = arith.addf %170, %109 : vector<16x16xf32>
    %cst_68 = arith.constant dense<0xFF800000> : vector<16xf32>
    %172 = vector.multi_reduction <maximumf>, %171, %cst_68 [1] : vector<16x16xf32> to vector<16xf32>
    %173 = vector.shape_cast %172 : vector<16xf32> to vector<16x1xf32>
    %174 = vector.broadcast %173 : vector<16x1xf32> to vector<16x16xf32>
    %175 = arith.subf %171, %174 : vector<16x16xf32>
    %176 = math.exp %175 : vector<16x16xf32>
    %cst_69 = arith.constant dense<0.000000e+00> : vector<16xf32>
    %177 = vector.multi_reduction <add>, %176, %cst_69 [1] : vector<16x16xf32> to vector<16xf32>
    %178 = vector.shape_cast %177 : vector<16xf32> to vector<16x1xf32>
    %179 = vector.broadcast %178 : vector<16x1xf32> to vector<16x16xf32>
    %180 = arith.divf %176, %179 : vector<16x16xf32>
    %cst_70 = arith.constant dense<0.000000e+00> : vector<16x8xf32>
    %181 = tpu.matmul %180, %169, %cst_70 {dimension_numbers = #tpu.dot_dimension_numbers<[1], [0], [0], [1], [0, 0, 1, 1], [], []>} : vector<16x16xf32>, vector<16x8xf32>, vector<16x8xf32> -> vector<16x8xf32>
    %182 = tpu.concatenate %136, %151, %166, %181 in 1 : vector<16x8xf32>, vector<16x8xf32>, vector<16x8xf32>, vector<16x8xf32> -> vector<16x32xf32>
    %c1_71 = arith.constant 1 : index
    %c0_72 = arith.constant 0 : index
    %c0_73 = arith.constant 0 : index
    %183 = vector.load %arg11[%c1_71, %c0_72, %c0_73] : memref<6x32x32xf32, #tpu.memory_space<vmem>>, vector<1x32x32xf32>
    %184 = vector.shape_cast %183 : vector<1x32x32xf32> to vector<32x32xf32>
    %cst_74 = arith.constant dense<0.000000e+00> : vector<16x32xf32>
    %185 = tpu.matmul %182, %184, %cst_74 {dimension_numbers = #tpu.dot_dimension_numbers<[1], [0], [0], [1], [0, 0, 1, 1], [], []>} : vector<16x32xf32>, vector<32x32xf32>, vector<16x32xf32> -> vector<16x32xf32>
    %c1_75 = arith.constant 1 : index
    %c0_76 = arith.constant 0 : index
    %c0_77 = arith.constant 0 : index
    %186 = vector.load %arg12[%c1_75, %c0_76, %c0_77] : memref<6x1x32xf32, #tpu.memory_space<vmem>>, vector<1x1x32xf32>
    %187 = vector.shape_cast %186 : vector<1x1x32xf32> to vector<1x32xf32>
    %188 = vector.broadcast %187 : vector<1x32xf32> to vector<16x32xf32>
    %189 = arith.addf %185, %188 : vector<16x32xf32>
    %190 = arith.addf %3, %189 : vector<16x32xf32>
    %cst_78 = arith.constant dense<0.000000e+00> : vector<16xf32>
    %191 = vector.multi_reduction <add>, %190, %cst_78 [1] : vector<16x32xf32> to vector<16xf32>
    %192 = vector.shape_cast %191 : vector<16xf32> to vector<16x1xf32>
    %cst_79 = arith.constant 3.200000e+01 : f32
    %193 = vector.broadcast %cst_79 : f32 to vector<16x1xf32>
    %194 = arith.divf %192, %193 : vector<16x1xf32>
    %195 = vector.broadcast %194 : vector<16x1xf32> to vector<16x32xf32>
    %196 = arith.subf %190, %195 : vector<16x32xf32>
    %197 = arith.mulf %196, %196 : vector<16x32xf32>
    %cst_80 = arith.constant dense<0.000000e+00> : vector<16xf32>
    %198 = vector.multi_reduction <add>, %197, %cst_80 [1] : vector<16x32xf32> to vector<16xf32>
    %199 = vector.shape_cast %198 : vector<16xf32> to vector<16x1xf32>
    %cst_81 = arith.constant 3.200000e+01 : f32
    %200 = vector.broadcast %cst_81 : f32 to vector<16x1xf32>
    %201 = arith.divf %199, %200 : vector<16x1xf32>
    %202 = vector.broadcast %194 : vector<16x1xf32> to vector<16x32xf32>
    %203 = arith.subf %190, %202 : vector<16x32xf32>
    %cst_82 = arith.constant 9.99999974E-6 : f32
    %204 = vector.broadcast %cst_82 : f32 to vector<16x1xf32>
    %205 = arith.addf %201, %204 : vector<16x1xf32>
    %206 = math.rsqrt %205 : vector<16x1xf32>
    %207 = vector.broadcast %206 : vector<16x1xf32> to vector<16x32xf32>
    %208 = arith.mulf %203, %207 : vector<16x32xf32>
    %209 = vector.broadcast %0 : vector<1x32xf32> to vector<16x32xf32>
    %210 = arith.mulf %208, %209 : vector<16x32xf32>
    %211 = vector.broadcast %1 : vector<1x32xf32> to vector<16x32xf32>
    %212 = arith.addf %210, %211 : vector<16x32xf32>
    %c0_83 = arith.constant 0 : index
    %c0_84 = arith.constant 0 : index
    %213 = vector.load %arg5[%c0_83, %c0_84] : memref<16x16xf32, #tpu.memory_space<vmem>>, vector<16x16xf32>
    %c2 = arith.constant 2 : index
    %c0_85 = arith.constant 0 : index
    %c0_86 = arith.constant 0 : index
    %214 = vector.load %arg9[%c2, %c0_85, %c0_86] : memref<6x32x96xf32, #tpu.memory_space<vmem>>, vector<1x32x96xf32>
    %215 = vector.shape_cast %214 : vector<1x32x96xf32> to vector<32x96xf32>
    %c2_87 = arith.constant 2 : index
    %c0_88 = arith.constant 0 : index
    %c0_89 = arith.constant 0 : index
    %216 = vector.load %arg10[%c2_87, %c0_88, %c0_89] : memref<6x1x96xf32, #tpu.memory_space<vmem>>, vector<1x1x96xf32>
    %217 = vector.shape_cast %216 : vector<1x1x96xf32> to vector<1x96xf32>
    %cst_90 = arith.constant dense<0.000000e+00> : vector<16x96xf32>
    %218 = tpu.matmul %4, %215, %cst_90 {dimension_numbers = #tpu.dot_dimension_numbers<[1], [0], [0], [1], [0, 0, 1, 1], [], []>} : vector<16x32xf32>, vector<32x96xf32>, vector<16x96xf32> -> vector<16x96xf32>
    %219 = vector.broadcast %217 : vector<1x96xf32> to vector<16x96xf32>
    %220 = arith.addf %218, %219 : vector<16x96xf32>
    %221 = vector.extract_strided_slice %220 {offsets = [0, 0], sizes = [16, 32], strides = [1, 1]} : vector<16x96xf32> to vector<16x32xf32>
    %222 = vector.extract_strided_slice %220 {offsets = [0, 32], sizes = [16, 32], strides = [1, 1]} : vector<16x96xf32> to vector<16x32xf32>
    %223 = vector.extract_strided_slice %220 {offsets = [0, 64], sizes = [16, 32], strides = [1, 1]} : vector<16x96xf32> to vector<16x32xf32>
    %cst_91 = arith.constant 0.353553385 : f32
    %224 = vector.broadcast %cst_91 : f32 to vector<16x32xf32>
    %225 = arith.mulf %221, %224 : vector<16x32xf32>
    %226 = vector.extract_strided_slice %225 {offsets = [0, 0], sizes = [16, 8], strides = [1, 1]} : vector<16x32xf32> to vector<16x8xf32>
    %227 = vector.extract_strided_slice %222 {offsets = [0, 0], sizes = [16, 8], strides = [1, 1]} : vector<16x32xf32> to vector<16x8xf32>
    %228 = vector.extract_strided_slice %223 {offsets = [0, 0], sizes = [16, 8], strides = [1, 1]} : vector<16x32xf32> to vector<16x8xf32>
    %cst_92 = arith.constant dense<0.000000e+00> : vector<16x16xf32>
    %229 = tpu.matmul %226, %227, %cst_92 {dimension_numbers = #tpu.dot_dimension_numbers<[1], [1], [0], [0], [0, 0, 1, 0], [], []>} : vector<16x8xf32>, vector<16x8xf32>, vector<16x16xf32> -> vector<16x16xf32>
    %230 = arith.addf %229, %213 : vector<16x16xf32>
    %cst_93 = arith.constant dense<0xFF800000> : vector<16xf32>
    %231 = vector.multi_reduction <maximumf>, %230, %cst_93 [1] : vector<16x16xf32> to vector<16xf32>
    %232 = vector.shape_cast %231 : vector<16xf32> to vector<16x1xf32>
    %233 = vector.broadcast %232 : vector<16x1xf32> to vector<16x16xf32>
    %234 = arith.subf %230, %233 : vector<16x16xf32>
    %235 = math.exp %234 : vector<16x16xf32>
    %cst_94 = arith.constant dense<0.000000e+00> : vector<16xf32>
    %236 = vector.multi_reduction <add>, %235, %cst_94 [1] : vector<16x16xf32> to vector<16xf32>
    %237 = vector.shape_cast %236 : vector<16xf32> to vector<16x1xf32>
    %238 = vector.broadcast %237 : vector<16x1xf32> to vector<16x16xf32>
    %239 = arith.divf %235, %238 : vector<16x16xf32>
    %cst_95 = arith.constant dense<0.000000e+00> : vector<16x8xf32>
    %240 = tpu.matmul %239, %228, %cst_95 {dimension_numbers = #tpu.dot_dimension_numbers<[1], [0], [0], [1], [0, 0, 1, 1], [], []>} : vector<16x16xf32>, vector<16x8xf32>, vector<16x8xf32> -> vector<16x8xf32>
    %241 = vector.extract_strided_slice %225 {offsets = [0, 8], sizes = [16, 8], strides = [1, 1]} : vector<16x32xf32> to vector<16x8xf32>
    %242 = vector.extract_strided_slice %222 {offsets = [0, 8], sizes = [16, 8], strides = [1, 1]} : vector<16x32xf32> to vector<16x8xf32>
    %243 = vector.extract_strided_slice %223 {offsets = [0, 8], sizes = [16, 8], strides = [1, 1]} : vector<16x32xf32> to vector<16x8xf32>
    %cst_96 = arith.constant dense<0.000000e+00> : vector<16x16xf32>
    %244 = tpu.matmul %241, %242, %cst_96 {dimension_numbers = #tpu.dot_dimension_numbers<[1], [1], [0], [0], [0, 0, 1, 0], [], []>} : vector<16x8xf32>, vector<16x8xf32>, vector<16x16xf32> -> vector<16x16xf32>
    %245 = arith.addf %244, %213 : vector<16x16xf32>
    %cst_97 = arith.constant dense<0xFF800000> : vector<16xf32>
    %246 = vector.multi_reduction <maximumf>, %245, %cst_97 [1] : vector<16x16xf32> to vector<16xf32>
    %247 = vector.shape_cast %246 : vector<16xf32> to vector<16x1xf32>
    %248 = vector.broadcast %247 : vector<16x1xf32> to vector<16x16xf32>
    %249 = arith.subf %245, %248 : vector<16x16xf32>
    %250 = math.exp %249 : vector<16x16xf32>
    %cst_98 = arith.constant dense<0.000000e+00> : vector<16xf32>
    %251 = vector.multi_reduction <add>, %250, %cst_98 [1] : vector<16x16xf32> to vector<16xf32>
    %252 = vector.shape_cast %251 : vector<16xf32> to vector<16x1xf32>
    %253 = vector.broadcast %252 : vector<16x1xf32> to vector<16x16xf32>
    %254 = arith.divf %250, %253 : vector<16x16xf32>
    %cst_99 = arith.constant dense<0.000000e+00> : vector<16x8xf32>
    %255 = tpu.matmul %254, %243, %cst_99 {dimension_numbers = #tpu.dot_dimension_numbers<[1], [0], [0], [1], [0, 0, 1, 1], [], []>} : vector<16x16xf32>, vector<16x8xf32>, vector<16x8xf32> -> vector<16x8xf32>
    %256 = vector.extract_strided_slice %225 {offsets = [0, 16], sizes = [16, 8], strides = [1, 1]} : vector<16x32xf32> to vector<16x8xf32>
    %257 = vector.extract_strided_slice %222 {offsets = [0, 16], sizes = [16, 8], strides = [1, 1]} : vector<16x32xf32> to vector<16x8xf32>
    %258 = vector.extract_strided_slice %223 {offsets = [0, 16], sizes = [16, 8], strides = [1, 1]} : vector<16x32xf32> to vector<16x8xf32>
    %cst_100 = arith.constant dense<0.000000e+00> : vector<16x16xf32>
    %259 = tpu.matmul %256, %257, %cst_100 {dimension_numbers = #tpu.dot_dimension_numbers<[1], [1], [0], [0], [0, 0, 1, 0], [], []>} : vector<16x8xf32>, vector<16x8xf32>, vector<16x16xf32> -> vector<16x16xf32>
    %260 = arith.addf %259, %213 : vector<16x16xf32>
    %cst_101 = arith.constant dense<0xFF800000> : vector<16xf32>
    %261 = vector.multi_reduction <maximumf>, %260, %cst_101 [1] : vector<16x16xf32> to vector<16xf32>
    %262 = vector.shape_cast %261 : vector<16xf32> to vector<16x1xf32>
    %263 = vector.broadcast %262 : vector<16x1xf32> to vector<16x16xf32>
    %264 = arith.subf %260, %263 : vector<16x16xf32>
    %265 = math.exp %264 : vector<16x16xf32>
    %cst_102 = arith.constant dense<0.000000e+00> : vector<16xf32>
    %266 = vector.multi_reduction <add>, %265, %cst_102 [1] : vector<16x16xf32> to vector<16xf32>
    %267 = vector.shape_cast %266 : vector<16xf32> to vector<16x1xf32>
    %268 = vector.broadcast %267 : vector<16x1xf32> to vector<16x16xf32>
    %269 = arith.divf %265, %268 : vector<16x16xf32>
    %cst_103 = arith.constant dense<0.000000e+00> : vector<16x8xf32>
    %270 = tpu.matmul %269, %258, %cst_103 {dimension_numbers = #tpu.dot_dimension_numbers<[1], [0], [0], [1], [0, 0, 1, 1], [], []>} : vector<16x16xf32>, vector<16x8xf32>, vector<16x8xf32> -> vector<16x8xf32>
    %271 = vector.extract_strided_slice %225 {offsets = [0, 24], sizes = [16, 8], strides = [1, 1]} : vector<16x32xf32> to vector<16x8xf32>
    %272 = vector.extract_strided_slice %222 {offsets = [0, 24], sizes = [16, 8], strides = [1, 1]} : vector<16x32xf32> to vector<16x8xf32>
    %273 = vector.extract_strided_slice %223 {offsets = [0, 24], sizes = [16, 8], strides = [1, 1]} : vector<16x32xf32> to vector<16x8xf32>
    %cst_104 = arith.constant dense<0.000000e+00> : vector<16x16xf32>
    %274 = tpu.matmul %271, %272, %cst_104 {dimension_numbers = #tpu.dot_dimension_numbers<[1], [1], [0], [0], [0, 0, 1, 0], [], []>} : vector<16x8xf32>, vector<16x8xf32>, vector<16x16xf32> -> vector<16x16xf32>
    %275 = arith.addf %274, %213 : vector<16x16xf32>
    %cst_105 = arith.constant dense<0xFF800000> : vector<16xf32>
    %276 = vector.multi_reduction <maximumf>, %275, %cst_105 [1] : vector<16x16xf32> to vector<16xf32>
    %277 = vector.shape_cast %276 : vector<16xf32> to vector<16x1xf32>
    %278 = vector.broadcast %277 : vector<16x1xf32> to vector<16x16xf32>
    %279 = arith.subf %275, %278 : vector<16x16xf32>
    %280 = math.exp %279 : vector<16x16xf32>
    %cst_106 = arith.constant dense<0.000000e+00> : vector<16xf32>
    %281 = vector.multi_reduction <add>, %280, %cst_106 [1] : vector<16x16xf32> to vector<16xf32>
    %282 = vector.shape_cast %281 : vector<16xf32> to vector<16x1xf32>
    %283 = vector.broadcast %282 : vector<16x1xf32> to vector<16x16xf32>
    %284 = arith.divf %280, %283 : vector<16x16xf32>
    %cst_107 = arith.constant dense<0.000000e+00> : vector<16x8xf32>
    %285 = tpu.matmul %284, %273, %cst_107 {dimension_numbers = #tpu.dot_dimension_numbers<[1], [0], [0], [1], [0, 0, 1, 1], [], []>} : vector<16x16xf32>, vector<16x8xf32>, vector<16x8xf32> -> vector<16x8xf32>
    %286 = tpu.concatenate %240, %255, %270, %285 in 1 : vector<16x8xf32>, vector<16x8xf32>, vector<16x8xf32>, vector<16x8xf32> -> vector<16x32xf32>
    %c2_108 = arith.constant 2 : index
    %c0_109 = arith.constant 0 : index
    %c0_110 = arith.constant 0 : index
    %287 = vector.load %arg11[%c2_108, %c0_109, %c0_110] : memref<6x32x32xf32, #tpu.memory_space<vmem>>, vector<1x32x32xf32>
    %288 = vector.shape_cast %287 : vector<1x32x32xf32> to vector<32x32xf32>
    %cst_111 = arith.constant dense<0.000000e+00> : vector<16x32xf32>
    %289 = tpu.matmul %286, %288, %cst_111 {dimension_numbers = #tpu.dot_dimension_numbers<[1], [0], [0], [1], [0, 0, 1, 1], [], []>} : vector<16x32xf32>, vector<32x32xf32>, vector<16x32xf32> -> vector<16x32xf32>
    %c2_112 = arith.constant 2 : index
    %c0_113 = arith.constant 0 : index
    %c0_114 = arith.constant 0 : index
    %290 = vector.load %arg12[%c2_112, %c0_113, %c0_114] : memref<6x1x32xf32, #tpu.memory_space<vmem>>, vector<1x1x32xf32>
    %291 = vector.shape_cast %290 : vector<1x1x32xf32> to vector<1x32xf32>
    %292 = vector.broadcast %291 : vector<1x32xf32> to vector<16x32xf32>
    %293 = arith.addf %289, %292 : vector<16x32xf32>
    %294 = arith.addf %4, %293 : vector<16x32xf32>
    %cst_115 = arith.constant dense<0.000000e+00> : vector<16xf32>
    %295 = vector.multi_reduction <add>, %294, %cst_115 [1] : vector<16x32xf32> to vector<16xf32>
    %296 = vector.shape_cast %295 : vector<16xf32> to vector<16x1xf32>
    %cst_116 = arith.constant 3.200000e+01 : f32
    %297 = vector.broadcast %cst_116 : f32 to vector<16x1xf32>
    %298 = arith.divf %296, %297 : vector<16x1xf32>
    %299 = vector.broadcast %298 : vector<16x1xf32> to vector<16x32xf32>
    %300 = arith.subf %294, %299 : vector<16x32xf32>
    %301 = arith.mulf %300, %300 : vector<16x32xf32>
    %cst_117 = arith.constant dense<0.000000e+00> : vector<16xf32>
    %302 = vector.multi_reduction <add>, %301, %cst_117 [1] : vector<16x32xf32> to vector<16xf32>
    %303 = vector.shape_cast %302 : vector<16xf32> to vector<16x1xf32>
    %cst_118 = arith.constant 3.200000e+01 : f32
    %304 = vector.broadcast %cst_118 : f32 to vector<16x1xf32>
    %305 = arith.divf %303, %304 : vector<16x1xf32>
    %306 = vector.broadcast %298 : vector<16x1xf32> to vector<16x32xf32>
    %307 = arith.subf %294, %306 : vector<16x32xf32>
    %cst_119 = arith.constant 9.99999974E-6 : f32
    %308 = vector.broadcast %cst_119 : f32 to vector<16x1xf32>
    %309 = arith.addf %305, %308 : vector<16x1xf32>
    %310 = math.rsqrt %309 : vector<16x1xf32>
    %311 = vector.broadcast %310 : vector<16x1xf32> to vector<16x32xf32>
    %312 = arith.mulf %307, %311 : vector<16x32xf32>
    %313 = vector.broadcast %0 : vector<1x32xf32> to vector<16x32xf32>
    %314 = arith.mulf %312, %313 : vector<16x32xf32>
    %315 = vector.broadcast %1 : vector<1x32xf32> to vector<16x32xf32>
    %316 = arith.addf %314, %315 : vector<16x32xf32>
    %317 = vector.extract_strided_slice %212 {offsets = [0, 0], sizes = [8, 32], strides = [1, 1]} : vector<16x32xf32> to vector<8x32xf32>
    %318 = vector.extract_strided_slice %316 {offsets = [0, 0], sizes = [8, 32], strides = [1, 1]} : vector<16x32xf32> to vector<8x32xf32>
    %319 = vector.extract_strided_slice %212 {offsets = [8, 0], sizes = [8, 32], strides = [1, 1]} : vector<16x32xf32> to vector<8x32xf32>
    %320 = vector.extract_strided_slice %316 {offsets = [8, 0], sizes = [8, 32], strides = [1, 1]} : vector<16x32xf32> to vector<8x32xf32>
    %321 = tpu.concatenate %317, %318, %319, %320 in 0 : vector<8x32xf32>, vector<8x32xf32>, vector<8x32xf32>, vector<8x32xf32> -> vector<32x32xf32>
    %c0_120 = arith.constant 0 : index
    %c0_121 = arith.constant 0 : index
    %322 = vector.load %arg6[%c0_120, %c0_121] : memref<16x32xf32, #tpu.memory_space<vmem>>, vector<16x32xf32>
    %c3 = arith.constant 3 : index
    %c0_122 = arith.constant 0 : index
    %c0_123 = arith.constant 0 : index
    %323 = vector.load %arg9[%c3, %c0_122, %c0_123] : memref<6x32x96xf32, #tpu.memory_space<vmem>>, vector<1x32x96xf32>
    %324 = vector.shape_cast %323 : vector<1x32x96xf32> to vector<32x96xf32>
    %c3_124 = arith.constant 3 : index
    %c0_125 = arith.constant 0 : index
    %c0_126 = arith.constant 0 : index
    %325 = vector.load %arg10[%c3_124, %c0_125, %c0_126] : memref<6x1x96xf32, #tpu.memory_space<vmem>>, vector<1x1x96xf32>
    %326 = vector.shape_cast %325 : vector<1x1x96xf32> to vector<1x96xf32>
    %327 = vector.extract_strided_slice %324 {offsets = [0, 0], sizes = [32, 32], strides = [1, 1]} : vector<32x96xf32> to vector<32x32xf32>
    %cst_127 = arith.constant dense<0.000000e+00> : vector<16x32xf32>
    %328 = tpu.matmul %108, %327, %cst_127 {dimension_numbers = #tpu.dot_dimension_numbers<[1], [0], [0], [1], [0, 0, 1, 1], [], []>} : vector<16x32xf32>, vector<32x32xf32>, vector<16x32xf32> -> vector<16x32xf32>
    %329 = vector.extract_strided_slice %326 {offsets = [0, 0], sizes = [1, 32], strides = [1, 1]} : vector<1x96xf32> to vector<1x32xf32>
    %330 = vector.broadcast %329 : vector<1x32xf32> to vector<16x32xf32>
    %331 = arith.addf %328, %330 : vector<16x32xf32>
    %332 = vector.extract_strided_slice %324 {offsets = [0, 32], sizes = [32, 64], strides = [1, 1]} : vector<32x96xf32> to vector<32x64xf32>
    %cst_128 = arith.constant dense<0.000000e+00> : vector<32x64xf32>
    %333 = tpu.matmul %321, %332, %cst_128 {dimension_numbers = #tpu.dot_dimension_numbers<[1], [0], [0], [1], [0, 0, 1, 1], [], []>} : vector<32x32xf32>, vector<32x64xf32>, vector<32x64xf32> -> vector<32x64xf32>
    %334 = vector.extract_strided_slice %326 {offsets = [0, 32], sizes = [1, 64], strides = [1, 1]} : vector<1x96xf32> to vector<1x64xf32>
    %335 = vector.broadcast %334 : vector<1x64xf32> to vector<32x64xf32>
    %336 = arith.addf %333, %335 : vector<32x64xf32>
    %337 = vector.extract_strided_slice %336 {offsets = [0, 0], sizes = [32, 32], strides = [1, 1]} : vector<32x64xf32> to vector<32x32xf32>
    %338 = vector.extract_strided_slice %336 {offsets = [0, 32], sizes = [32, 32], strides = [1, 1]} : vector<32x64xf32> to vector<32x32xf32>
    %cst_129 = arith.constant 0.353553385 : f32
    %339 = vector.broadcast %cst_129 : f32 to vector<16x32xf32>
    %340 = arith.mulf %331, %339 : vector<16x32xf32>
    %341 = vector.extract_strided_slice %340 {offsets = [0, 0], sizes = [16, 8], strides = [1, 1]} : vector<16x32xf32> to vector<16x8xf32>
    %342 = vector.extract_strided_slice %337 {offsets = [0, 0], sizes = [32, 8], strides = [1, 1]} : vector<32x32xf32> to vector<32x8xf32>
    %343 = vector.extract_strided_slice %338 {offsets = [0, 0], sizes = [32, 8], strides = [1, 1]} : vector<32x32xf32> to vector<32x8xf32>
    %cst_130 = arith.constant dense<0.000000e+00> : vector<16x32xf32>
    %344 = tpu.matmul %341, %342, %cst_130 {dimension_numbers = #tpu.dot_dimension_numbers<[1], [1], [0], [0], [0, 0, 1, 0], [], []>} : vector<16x8xf32>, vector<32x8xf32>, vector<16x32xf32> -> vector<16x32xf32>
    %345 = arith.addf %344, %322 : vector<16x32xf32>
    %cst_131 = arith.constant dense<0xFF800000> : vector<16xf32>
    %346 = vector.multi_reduction <maximumf>, %345, %cst_131 [1] : vector<16x32xf32> to vector<16xf32>
    %347 = vector.shape_cast %346 : vector<16xf32> to vector<16x1xf32>
    %348 = vector.broadcast %347 : vector<16x1xf32> to vector<16x32xf32>
    %349 = arith.subf %345, %348 : vector<16x32xf32>
    %350 = math.exp %349 : vector<16x32xf32>
    %cst_132 = arith.constant dense<0.000000e+00> : vector<16xf32>
    %351 = vector.multi_reduction <add>, %350, %cst_132 [1] : vector<16x32xf32> to vector<16xf32>
    %352 = vector.shape_cast %351 : vector<16xf32> to vector<16x1xf32>
    %353 = vector.broadcast %352 : vector<16x1xf32> to vector<16x32xf32>
    %354 = arith.divf %350, %353 : vector<16x32xf32>
    %355 = vector.extract_strided_slice %354 {offsets = [0, 0], sizes = [8, 16], strides = [1, 1]} : vector<16x32xf32> to vector<8x16xf32>
    %c0_133 = arith.constant 0 : index
    %c0_134 = arith.constant 0 : index
    %356 = vector.load %arg22[%c0_133, %c0_134] : memref<16x64xf32, #tpu.memory_space<vmem>>, vector<8x16xf32>
    tpu.vector_store %arg22[%c0_133, %c0_134], %355 {strides = array<i32>} : memref<16x64xf32, #tpu.memory_space<vmem>>, vector<8x16xf32>,
    %357 = vector.extract_strided_slice %354 {offsets = [8, 16], sizes = [8, 16], strides = [1, 1]} : vector<16x32xf32> to vector<8x16xf32>
    %c8 = arith.constant 8 : index
    %c0_135 = arith.constant 0 : index
    %358 = vector.load %arg22[%c8, %c0_135] : memref<16x64xf32, #tpu.memory_space<vmem>>, vector<8x16xf32>
    tpu.vector_store %arg22[%c8, %c0_135], %357 {strides = array<i32>} : memref<16x64xf32, #tpu.memory_space<vmem>>, vector<8x16xf32>,
    %cst_136 = arith.constant dense<0.000000e+00> : vector<16x8xf32>
    %359 = tpu.matmul %354, %343, %cst_136 {dimension_numbers = #tpu.dot_dimension_numbers<[1], [0], [0], [1], [0, 0, 1, 1], [], []>} : vector<16x32xf32>, vector<32x8xf32>, vector<16x8xf32> -> vector<16x8xf32>
    %360 = vector.extract_strided_slice %340 {offsets = [0, 8], sizes = [16, 8], strides = [1, 1]} : vector<16x32xf32> to vector<16x8xf32>
    %361 = vector.extract_strided_slice %337 {offsets = [0, 8], sizes = [32, 8], strides = [1, 1]} : vector<32x32xf32> to vector<32x8xf32>
    %362 = vector.extract_strided_slice %338 {offsets = [0, 8], sizes = [32, 8], strides = [1, 1]} : vector<32x32xf32> to vector<32x8xf32>
    %cst_137 = arith.constant dense<0.000000e+00> : vector<16x32xf32>
    %363 = tpu.matmul %360, %361, %cst_137 {dimension_numbers = #tpu.dot_dimension_numbers<[1], [1], [0], [0], [0, 0, 1, 0], [], []>} : vector<16x8xf32>, vector<32x8xf32>, vector<16x32xf32> -> vector<16x32xf32>
    %364 = arith.addf %363, %322 : vector<16x32xf32>
    %cst_138 = arith.constant dense<0xFF800000> : vector<16xf32>
    %365 = vector.multi_reduction <maximumf>, %364, %cst_138 [1] : vector<16x32xf32> to vector<16xf32>
    %366 = vector.shape_cast %365 : vector<16xf32> to vector<16x1xf32>
    %367 = vector.broadcast %366 : vector<16x1xf32> to vector<16x32xf32>
    %368 = arith.subf %364, %367 : vector<16x32xf32>
    %369 = math.exp %368 : vector<16x32xf32>
    %cst_139 = arith.constant dense<0.000000e+00> : vector<16xf32>
    %370 = vector.multi_reduction <add>, %369, %cst_139 [1] : vector<16x32xf32> to vector<16xf32>
    %371 = vector.shape_cast %370 : vector<16xf32> to vector<16x1xf32>
    %372 = vector.broadcast %371 : vector<16x1xf32> to vector<16x32xf32>
    %373 = arith.divf %369, %372 : vector<16x32xf32>
    %374 = vector.extract_strided_slice %373 {offsets = [0, 0], sizes = [8, 16], strides = [1, 1]} : vector<16x32xf32> to vector<8x16xf32>
    %c0_140 = arith.constant 0 : index
    %c16 = arith.constant 16 : index
    %375 = vector.load %arg22[%c0_140, %c16] : memref<16x64xf32, #tpu.memory_space<vmem>>, vector<8x16xf32>
    tpu.vector_store %arg22[%c0_140, %c16], %374 {strides = array<i32>} : memref<16x64xf32, #tpu.memory_space<vmem>>, vector<8x16xf32>,
    %376 = vector.extract_strided_slice %373 {offsets = [8, 16], sizes = [8, 16], strides = [1, 1]} : vector<16x32xf32> to vector<8x16xf32>
    %c8_141 = arith.constant 8 : index
    %c16_142 = arith.constant 16 : index
    %377 = vector.load %arg22[%c8_141, %c16_142] : memref<16x64xf32, #tpu.memory_space<vmem>>, vector<8x16xf32>
    tpu.vector_store %arg22[%c8_141, %c16_142], %376 {strides = array<i32>} : memref<16x64xf32, #tpu.memory_space<vmem>>, vector<8x16xf32>,
    %cst_143 = arith.constant dense<0.000000e+00> : vector<16x8xf32>
    %378 = tpu.matmul %373, %362, %cst_143 {dimension_numbers = #tpu.dot_dimension_numbers<[1], [0], [0], [1], [0, 0, 1, 1], [], []>} : vector<16x32xf32>, vector<32x8xf32>, vector<16x8xf32> -> vector<16x8xf32>
    %379 = vector.extract_strided_slice %340 {offsets = [0, 16], sizes = [16, 8], strides = [1, 1]} : vector<16x32xf32> to vector<16x8xf32>
    %380 = vector.extract_strided_slice %337 {offsets = [0, 16], sizes = [32, 8], strides = [1, 1]} : vector<32x32xf32> to vector<32x8xf32>
    %381 = vector.extract_strided_slice %338 {offsets = [0, 16], sizes = [32, 8], strides = [1, 1]} : vector<32x32xf32> to vector<32x8xf32>
    %cst_144 = arith.constant dense<0.000000e+00> : vector<16x32xf32>
    %382 = tpu.matmul %379, %380, %cst_144 {dimension_numbers = #tpu.dot_dimension_numbers<[1], [1], [0], [0], [0, 0, 1, 0], [], []>} : vector<16x8xf32>, vector<32x8xf32>, vector<16x32xf32> -> vector<16x32xf32>
    %383 = arith.addf %382, %322 : vector<16x32xf32>
    %cst_145 = arith.constant dense<0xFF800000> : vector<16xf32>
    %384 = vector.multi_reduction <maximumf>, %383, %cst_145 [1] : vector<16x32xf32> to vector<16xf32>
    %385 = vector.shape_cast %384 : vector<16xf32> to vector<16x1xf32>
    %386 = vector.broadcast %385 : vector<16x1xf32> to vector<16x32xf32>
    %387 = arith.subf %383, %386 : vector<16x32xf32>
    %388 = math.exp %387 : vector<16x32xf32>
    %cst_146 = arith.constant dense<0.000000e+00> : vector<16xf32>
    %389 = vector.multi_reduction <add>, %388, %cst_146 [1] : vector<16x32xf32> to vector<16xf32>
    %390 = vector.shape_cast %389 : vector<16xf32> to vector<16x1xf32>
    %391 = vector.broadcast %390 : vector<16x1xf32> to vector<16x32xf32>
    %392 = arith.divf %388, %391 : vector<16x32xf32>
    %393 = vector.extract_strided_slice %392 {offsets = [0, 0], sizes = [8, 16], strides = [1, 1]} : vector<16x32xf32> to vector<8x16xf32>
    %c0_147 = arith.constant 0 : index
    %c32 = arith.constant 32 : index
    %394 = vector.load %arg22[%c0_147, %c32] : memref<16x64xf32, #tpu.memory_space<vmem>>, vector<8x16xf32>
    tpu.vector_store %arg22[%c0_147, %c32], %393 {strides = array<i32>} : memref<16x64xf32, #tpu.memory_space<vmem>>, vector<8x16xf32>,
    %395 = vector.extract_strided_slice %392 {offsets = [8, 16], sizes = [8, 16], strides = [1, 1]} : vector<16x32xf32> to vector<8x16xf32>
    %c8_148 = arith.constant 8 : index
    %c32_149 = arith.constant 32 : index
    %396 = vector.load %arg22[%c8_148, %c32_149] : memref<16x64xf32, #tpu.memory_space<vmem>>, vector<8x16xf32>
    tpu.vector_store %arg22[%c8_148, %c32_149], %395 {strides = array<i32>} : memref<16x64xf32, #tpu.memory_space<vmem>>, vector<8x16xf32>,
    %cst_150 = arith.constant dense<0.000000e+00> : vector<16x8xf32>
    %397 = tpu.matmul %392, %381, %cst_150 {dimension_numbers = #tpu.dot_dimension_numbers<[1], [0], [0], [1], [0, 0, 1, 1], [], []>} : vector<16x32xf32>, vector<32x8xf32>, vector<16x8xf32> -> vector<16x8xf32>
    %398 = vector.extract_strided_slice %340 {offsets = [0, 24], sizes = [16, 8], strides = [1, 1]} : vector<16x32xf32> to vector<16x8xf32>
    %399 = vector.extract_strided_slice %337 {offsets = [0, 24], sizes = [32, 8], strides = [1, 1]} : vector<32x32xf32> to vector<32x8xf32>
    %400 = vector.extract_strided_slice %338 {offsets = [0, 24], sizes = [32, 8], strides = [1, 1]} : vector<32x32xf32> to vector<32x8xf32>
    %cst_151 = arith.constant dense<0.000000e+00> : vector<16x32xf32>
    %401 = tpu.matmul %398, %399, %cst_151 {dimension_numbers = #tpu.dot_dimension_numbers<[1], [1], [0], [0], [0, 0, 1, 0], [], []>} : vector<16x8xf32>, vector<32x8xf32>, vector<16x32xf32> -> vector<16x32xf32>
    %402 = arith.addf %401, %322 : vector<16x32xf32>
    %cst_152 = arith.constant dense<0xFF800000> : vector<16xf32>
    %403 = vector.multi_reduction <maximumf>, %402, %cst_152 [1] : vector<16x32xf32> to vector<16xf32>
    %404 = vector.shape_cast %403 : vector<16xf32> to vector<16x1xf32>
    %405 = vector.broadcast %404 : vector<16x1xf32> to vector<16x32xf32>
    %406 = arith.subf %402, %405 : vector<16x32xf32>
    %407 = math.exp %406 : vector<16x32xf32>
    %cst_153 = arith.constant dense<0.000000e+00> : vector<16xf32>
    %408 = vector.multi_reduction <add>, %407, %cst_153 [1] : vector<16x32xf32> to vector<16xf32>
    %409 = vector.shape_cast %408 : vector<16xf32> to vector<16x1xf32>
    %410 = vector.broadcast %409 : vector<16x1xf32> to vector<16x32xf32>
    %411 = arith.divf %407, %410 : vector<16x32xf32>
    %412 = vector.extract_strided_slice %411 {offsets = [0, 0], sizes = [8, 16], strides = [1, 1]} : vector<16x32xf32> to vector<8x16xf32>
    %c0_154 = arith.constant 0 : index
    %c48 = arith.constant 48 : index
    %413 = vector.load %arg22[%c0_154, %c48] : memref<16x64xf32, #tpu.memory_space<vmem>>, vector<8x16xf32>
    tpu.vector_store %arg22[%c0_154, %c48], %412 {strides = array<i32>} : memref<16x64xf32, #tpu.memory_space<vmem>>, vector<8x16xf32>,
    %414 = vector.extract_strided_slice %411 {offsets = [8, 16], sizes = [8, 16], strides = [1, 1]} : vector<16x32xf32> to vector<8x16xf32>
    %c8_155 = arith.constant 8 : index
    %c48_156 = arith.constant 48 : index
    %415 = vector.load %arg22[%c8_155, %c48_156] : memref<16x64xf32, #tpu.memory_space<vmem>>, vector<8x16xf32>
    tpu.vector_store %arg22[%c8_155, %c48_156], %414 {strides = array<i32>} : memref<16x64xf32, #tpu.memory_space<vmem>>, vector<8x16xf32>,
    %cst_157 = arith.constant dense<0.000000e+00> : vector<16x8xf32>
    %416 = tpu.matmul %411, %400, %cst_157 {dimension_numbers = #tpu.dot_dimension_numbers<[1], [0], [0], [1], [0, 0, 1, 1], [], []>} : vector<16x32xf32>, vector<32x8xf32>, vector<16x8xf32> -> vector<16x8xf32>
    %417 = tpu.concatenate %359, %378, %397, %416 in 1 : vector<16x8xf32>, vector<16x8xf32>, vector<16x8xf32>, vector<16x8xf32> -> vector<16x32xf32>
    %c3_158 = arith.constant 3 : index
    %c0_159 = arith.constant 0 : index
    %c0_160 = arith.constant 0 : index
    %418 = vector.load %arg11[%c3_158, %c0_159, %c0_160] : memref<6x32x32xf32, #tpu.memory_space<vmem>>, vector<1x32x32xf32>
    %419 = vector.shape_cast %418 : vector<1x32x32xf32> to vector<32x32xf32>
    %cst_161 = arith.constant dense<0.000000e+00> : vector<16x32xf32>
    %420 = tpu.matmul %417, %419, %cst_161 {dimension_numbers = #tpu.dot_dimension_numbers<[1], [0], [0], [1], [0, 0, 1, 1], [], []>} : vector<16x32xf32>, vector<32x32xf32>, vector<16x32xf32> -> vector<16x32xf32>
    %c3_162 = arith.constant 3 : index
    %c0_163 = arith.constant 0 : index
    %c0_164 = arith.constant 0 : index
    %421 = vector.load %arg12[%c3_162, %c0_163, %c0_164] : memref<6x1x32xf32, #tpu.memory_space<vmem>>, vector<1x1x32xf32>
    %422 = vector.shape_cast %421 : vector<1x1x32xf32> to vector<1x32xf32>
    %423 = vector.broadcast %422 : vector<1x32xf32> to vector<16x32xf32>
    %424 = arith.addf %420, %423 : vector<16x32xf32>
    %425 = arith.addf %108, %424 : vector<16x32xf32>
    %cst_165 = arith.constant dense<0.000000e+00> : vector<16xf32>
    %426 = vector.multi_reduction <add>, %425, %cst_165 [1] : vector<16x32xf32> to vector<16xf32>
    %427 = vector.shape_cast %426 : vector<16xf32> to vector<16x1xf32>
    %cst_166 = arith.constant 3.200000e+01 : f32
    %428 = vector.broadcast %cst_166 : f32 to vector<16x1xf32>
    %429 = arith.divf %427, %428 : vector<16x1xf32>
    %430 = vector.broadcast %429 : vector<16x1xf32> to vector<16x32xf32>
    %431 = arith.subf %425, %430 : vector<16x32xf32>
    %432 = arith.mulf %431, %431 : vector<16x32xf32>
    %cst_167 = arith.constant dense<0.000000e+00> : vector<16xf32>
    %433 = vector.multi_reduction <add>, %432, %cst_167 [1] : vector<16x32xf32> to vector<16xf32>
    %434 = vector.shape_cast %433 : vector<16xf32> to vector<16x1xf32>
    %cst_168 = arith.constant 3.200000e+01 : f32
    %435 = vector.broadcast %cst_168 : f32 to vector<16x1xf32>
    %436 = arith.divf %434, %435 : vector<16x1xf32>
    %437 = vector.broadcast %429 : vector<16x1xf32> to vector<16x32xf32>
    %438 = arith.subf %425, %437 : vector<16x32xf32>
    %cst_169 = arith.constant 9.99999974E-6 : f32
    %439 = vector.broadcast %cst_169 : f32 to vector<16x1xf32>
    %440 = arith.addf %436, %439 : vector<16x1xf32>
    %441 = math.rsqrt %440 : vector<16x1xf32>
    %442 = vector.broadcast %441 : vector<16x1xf32> to vector<16x32xf32>
    %443 = arith.mulf %438, %442 : vector<16x32xf32>
    %444 = vector.broadcast %0 : vector<1x32xf32> to vector<16x32xf32>
    %445 = arith.mulf %443, %444 : vector<16x32xf32>
    %446 = vector.broadcast %1 : vector<1x32xf32> to vector<16x32xf32>
    %447 = arith.addf %445, %446 : vector<16x32xf32>
    %c0_170 = arith.constant 0 : index
    %c0_171 = arith.constant 0 : index
    %448 = vector.load %arg7[%c0_170, %c0_171] : memref<16x16xf32, #tpu.memory_space<vmem>>, vector<16x16xf32>
    %c4 = arith.constant 4 : index
    %c0_172 = arith.constant 0 : index
    %c0_173 = arith.constant 0 : index
    %449 = vector.load %arg9[%c4, %c0_172, %c0_173] : memref<6x32x96xf32, #tpu.memory_space<vmem>>, vector<1x32x96xf32>
    %450 = vector.shape_cast %449 : vector<1x32x96xf32> to vector<32x96xf32>
    %c4_174 = arith.constant 4 : index
    %c0_175 = arith.constant 0 : index
    %c0_176 = arith.constant 0 : index
    %451 = vector.load %arg10[%c4_174, %c0_175, %c0_176] : memref<6x1x96xf32, #tpu.memory_space<vmem>>, vector<1x1x96xf32>
    %452 = vector.shape_cast %451 : vector<1x1x96xf32> to vector<1x96xf32>
    %453 = vector.extract_strided_slice %450 {offsets = [0, 0], sizes = [32, 32], strides = [1, 1]} : vector<32x96xf32> to vector<32x32xf32>
    %cst_177 = arith.constant dense<0.000000e+00> : vector<16x32xf32>
    %454 = tpu.matmul %212, %453, %cst_177 {dimension_numbers = #tpu.dot_dimension_numbers<[1], [0], [0], [1], [0, 0, 1, 1], [], []>} : vector<16x32xf32>, vector<32x32xf32>, vector<16x32xf32> -> vector<16x32xf32>
    %455 = vector.extract_strided_slice %452 {offsets = [0, 0], sizes = [1, 32], strides = [1, 1]} : vector<1x96xf32> to vector<1x32xf32>
    %456 = vector.broadcast %455 : vector<1x32xf32> to vector<16x32xf32>
    %457 = arith.addf %454, %456 : vector<16x32xf32>
    %458 = vector.extract_strided_slice %450 {offsets = [0, 32], sizes = [32, 64], strides = [1, 1]} : vector<32x96xf32> to vector<32x64xf32>
    %cst_178 = arith.constant dense<0.000000e+00> : vector<16x64xf32>
    %459 = tpu.matmul %447, %458, %cst_178 {dimension_numbers = #tpu.dot_dimension_numbers<[1], [0], [0], [1], [0, 0, 1, 1], [], []>} : vector<16x32xf32>, vector<32x64xf32>, vector<16x64xf32> -> vector<16x64xf32>
    %460 = vector.extract_strided_slice %452 {offsets = [0, 32], sizes = [1, 64], strides = [1, 1]} : vector<1x96xf32> to vector<1x64xf32>
    %461 = vector.broadcast %460 : vector<1x64xf32> to vector<16x64xf32>
    %462 = arith.addf %459, %461 : vector<16x64xf32>
    %463 = vector.extract_strided_slice %462 {offsets = [0, 0], sizes = [16, 32], strides = [1, 1]} : vector<16x64xf32> to vector<16x32xf32>
    %464 = vector.extract_strided_slice %462 {offsets = [0, 32], sizes = [16, 32], strides = [1, 1]} : vector<16x64xf32> to vector<16x32xf32>
    %cst_179 = arith.constant 0.353553385 : f32
    %465 = vector.broadcast %cst_179 : f32 to vector<16x32xf32>
    %466 = arith.mulf %457, %465 : vector<16x32xf32>
    %467 = vector.extract_strided_slice %466 {offsets = [0, 0], sizes = [16, 8], strides = [1, 1]} : vector<16x32xf32> to vector<16x8xf32>
    %468 = vector.extract_strided_slice %463 {offsets = [0, 0], sizes = [16, 8], strides = [1, 1]} : vector<16x32xf32> to vector<16x8xf32>
    %469 = vector.extract_strided_slice %464 {offsets = [0, 0], sizes = [16, 8], strides = [1, 1]} : vector<16x32xf32> to vector<16x8xf32>
    %cst_180 = arith.constant dense<0.000000e+00> : vector<16x16xf32>
    %470 = tpu.matmul %467, %468, %cst_180 {dimension_numbers = #tpu.dot_dimension_numbers<[1], [1], [0], [0], [0, 0, 1, 0], [], []>} : vector<16x8xf32>, vector<16x8xf32>, vector<16x16xf32> -> vector<16x16xf32>
    %471 = arith.addf %470, %448 : vector<16x16xf32>
    %cst_181 = arith.constant dense<0xFF800000> : vector<16xf32>
    %472 = vector.multi_reduction <maximumf>, %471, %cst_181 [1] : vector<16x16xf32> to vector<16xf32>
    %473 = vector.shape_cast %472 : vector<16xf32> to vector<16x1xf32>
    %474 = vector.broadcast %473 : vector<16x1xf32> to vector<16x16xf32>
    %475 = arith.subf %471, %474 : vector<16x16xf32>
    %476 = math.exp %475 : vector<16x16xf32>
    %cst_182 = arith.constant dense<0.000000e+00> : vector<16xf32>
    %477 = vector.multi_reduction <add>, %476, %cst_182 [1] : vector<16x16xf32> to vector<16xf32>
    %478 = vector.shape_cast %477 : vector<16xf32> to vector<16x1xf32>
    %479 = vector.broadcast %478 : vector<16x1xf32> to vector<16x16xf32>
    %480 = arith.divf %476, %479 : vector<16x16xf32>
    %481 = vector.extract_strided_slice %480 {offsets = [0, 0], sizes = [8, 8], strides = [1, 1]} : vector<16x16xf32> to vector<8x8xf32>
    %c0_183 = arith.constant 0 : index
    %c0_184 = arith.constant 0 : index
    %482 = vector.load %arg23[%c0_183, %c0_184] : memref<16x32xf32, #tpu.memory_space<vmem>>, vector<8x8xf32>
    tpu.vector_store %arg23[%c0_183, %c0_184], %481 {strides = array<i32>} : memref<16x32xf32, #tpu.memory_space<vmem>>, vector<8x8xf32>,
    %483 = vector.extract_strided_slice %480 {offsets = [8, 8], sizes = [8, 8], strides = [1, 1]} : vector<16x16xf32> to vector<8x8xf32>
    %c8_185 = arith.constant 8 : index
    %c0_186 = arith.constant 0 : index
    %484 = vector.load %arg23[%c8_185, %c0_186] : memref<16x32xf32, #tpu.memory_space<vmem>>, vector<8x8xf32>
    tpu.vector_store %arg23[%c8_185, %c0_186], %483 {strides = array<i32>} : memref<16x32xf32, #tpu.memory_space<vmem>>, vector<8x8xf32>,
    %cst_187 = arith.constant dense<0.000000e+00> : vector<16x8xf32>
    %485 = tpu.matmul %480, %469, %cst_187 {dimension_numbers = #tpu.dot_dimension_numbers<[1], [0], [0], [1], [0, 0, 1, 1], [], []>} : vector<16x16xf32>, vector<16x8xf32>, vector<16x8xf32> -> vector<16x8xf32>
    %486 = vector.extract_strided_slice %466 {offsets = [0, 8], sizes = [16, 8], strides = [1, 1]} : vector<16x32xf32> to vector<16x8xf32>
    %487 = vector.extract_strided_slice %463 {offsets = [0, 8], sizes = [16, 8], strides = [1, 1]} : vector<16x32xf32> to vector<16x8xf32>
    %488 = vector.extract_strided_slice %464 {offsets = [0, 8], sizes = [16, 8], strides = [1, 1]} : vector<16x32xf32> to vector<16x8xf32>
    %cst_188 = arith.constant dense<0.000000e+00> : vector<16x16xf32>
    %489 = tpu.matmul %486, %487, %cst_188 {dimension_numbers = #tpu.dot_dimension_numbers<[1], [1], [0], [0], [0, 0, 1, 0], [], []>} : vector<16x8xf32>, vector<16x8xf32>, vector<16x16xf32> -> vector<16x16xf32>
    %490 = arith.addf %489, %448 : vector<16x16xf32>
    %cst_189 = arith.constant dense<0xFF800000> : vector<16xf32>
    %491 = vector.multi_reduction <maximumf>, %490, %cst_189 [1] : vector<16x16xf32> to vector<16xf32>
    %492 = vector.shape_cast %491 : vector<16xf32> to vector<16x1xf32>
    %493 = vector.broadcast %492 : vector<16x1xf32> to vector<16x16xf32>
    %494 = arith.subf %490, %493 : vector<16x16xf32>
    %495 = math.exp %494 : vector<16x16xf32>
    %cst_190 = arith.constant dense<0.000000e+00> : vector<16xf32>
    %496 = vector.multi_reduction <add>, %495, %cst_190 [1] : vector<16x16xf32> to vector<16xf32>
    %497 = vector.shape_cast %496 : vector<16xf32> to vector<16x1xf32>
    %498 = vector.broadcast %497 : vector<16x1xf32> to vector<16x16xf32>
    %499 = arith.divf %495, %498 : vector<16x16xf32>
    %500 = vector.extract_strided_slice %499 {offsets = [0, 0], sizes = [8, 8], strides = [1, 1]} : vector<16x16xf32> to vector<8x8xf32>
    %c0_191 = arith.constant 0 : index
    %c8_192 = arith.constant 8 : index
    %501 = vector.load %arg23[%c0_191, %c8_192] : memref<16x32xf32, #tpu.memory_space<vmem>>, vector<8x8xf32>
    tpu.vector_store %arg23[%c0_191, %c8_192], %500 {strides = array<i32>} : memref<16x32xf32, #tpu.memory_space<vmem>>, vector<8x8xf32>,
    %502 = vector.extract_strided_slice %499 {offsets = [8, 8], sizes = [8, 8], strides = [1, 1]} : vector<16x16xf32> to vector<8x8xf32>
    %c8_193 = arith.constant 8 : index
    %c8_194 = arith.constant 8 : index
    %503 = vector.load %arg23[%c8_193, %c8_194] : memref<16x32xf32, #tpu.memory_space<vmem>>, vector<8x8xf32>
    tpu.vector_store %arg23[%c8_193, %c8_194], %502 {strides = array<i32>} : memref<16x32xf32, #tpu.memory_space<vmem>>, vector<8x8xf32>,
    %cst_195 = arith.constant dense<0.000000e+00> : vector<16x8xf32>
    %504 = tpu.matmul %499, %488, %cst_195 {dimension_numbers = #tpu.dot_dimension_numbers<[1], [0], [0], [1], [0, 0, 1, 1], [], []>} : vector<16x16xf32>, vector<16x8xf32>, vector<16x8xf32> -> vector<16x8xf32>
    %505 = vector.extract_strided_slice %466 {offsets = [0, 16], sizes = [16, 8], strides = [1, 1]} : vector<16x32xf32> to vector<16x8xf32>
    %506 = vector.extract_strided_slice %463 {offsets = [0, 16], sizes = [16, 8], strides = [1, 1]} : vector<16x32xf32> to vector<16x8xf32>
    %507 = vector.extract_strided_slice %464 {offsets = [0, 16], sizes = [16, 8], strides = [1, 1]} : vector<16x32xf32> to vector<16x8xf32>
    %cst_196 = arith.constant dense<0.000000e+00> : vector<16x16xf32>
    %508 = tpu.matmul %505, %506, %cst_196 {dimension_numbers = #tpu.dot_dimension_numbers<[1], [1], [0], [0], [0, 0, 1, 0], [], []>} : vector<16x8xf32>, vector<16x8xf32>, vector<16x16xf32> -> vector<16x16xf32>
    %509 = arith.addf %508, %448 : vector<16x16xf32>
    %cst_197 = arith.constant dense<0xFF800000> : vector<16xf32>
    %510 = vector.multi_reduction <maximumf>, %509, %cst_197 [1] : vector<16x16xf32> to vector<16xf32>
    %511 = vector.shape_cast %510 : vector<16xf32> to vector<16x1xf32>
    %512 = vector.broadcast %511 : vector<16x1xf32> to vector<16x16xf32>
    %513 = arith.subf %509, %512 : vector<16x16xf32>
    %514 = math.exp %513 : vector<16x16xf32>
    %cst_198 = arith.constant dense<0.000000e+00> : vector<16xf32>
    %515 = vector.multi_reduction <add>, %514, %cst_198 [1] : vector<16x16xf32> to vector<16xf32>
    %516 = vector.shape_cast %515 : vector<16xf32> to vector<16x1xf32>
    %517 = vector.broadcast %516 : vector<16x1xf32> to vector<16x16xf32>
    %518 = arith.divf %514, %517 : vector<16x16xf32>
    %519 = vector.extract_strided_slice %518 {offsets = [0, 0], sizes = [8, 8], strides = [1, 1]} : vector<16x16xf32> to vector<8x8xf32>
    %c0_199 = arith.constant 0 : index
    %c16_200 = arith.constant 16 : index
    %520 = vector.load %arg23[%c0_199, %c16_200] : memref<16x32xf32, #tpu.memory_space<vmem>>, vector<8x8xf32>
    tpu.vector_store %arg23[%c0_199, %c16_200], %519 {strides = array<i32>} : memref<16x32xf32, #tpu.memory_space<vmem>>, vector<8x8xf32>,
    %521 = vector.extract_strided_slice %518 {offsets = [8, 8], sizes = [8, 8], strides = [1, 1]} : vector<16x16xf32> to vector<8x8xf32>
    %c8_201 = arith.constant 8 : index
    %c16_202 = arith.constant 16 : index
    %522 = vector.load %arg23[%c8_201, %c16_202] : memref<16x32xf32, #tpu.memory_space<vmem>>, vector<8x8xf32>
    tpu.vector_store %arg23[%c8_201, %c16_202], %521 {strides = array<i32>} : memref<16x32xf32, #tpu.memory_space<vmem>>, vector<8x8xf32>,
    %cst_203 = arith.constant dense<0.000000e+00> : vector<16x8xf32>
    %523 = tpu.matmul %518, %507, %cst_203 {dimension_numbers = #tpu.dot_dimension_numbers<[1], [0], [0], [1], [0, 0, 1, 1], [], []>} : vector<16x16xf32>, vector<16x8xf32>, vector<16x8xf32> -> vector<16x8xf32>
    %524 = vector.extract_strided_slice %466 {offsets = [0, 24], sizes = [16, 8], strides = [1, 1]} : vector<16x32xf32> to vector<16x8xf32>
    %525 = vector.extract_strided_slice %463 {offsets = [0, 24], sizes = [16, 8], strides = [1, 1]} : vector<16x32xf32> to vector<16x8xf32>
    %526 = vector.extract_strided_slice %464 {offsets = [0, 24], sizes = [16, 8], strides = [1, 1]} : vector<16x32xf32> to vector<16x8xf32>
    %cst_204 = arith.constant dense<0.000000e+00> : vector<16x16xf32>
    %527 = tpu.matmul %524, %525, %cst_204 {dimension_numbers = #tpu.dot_dimension_numbers<[1], [1], [0], [0], [0, 0, 1, 0], [], []>} : vector<16x8xf32>, vector<16x8xf32>, vector<16x16xf32> -> vector<16x16xf32>
    %528 = arith.addf %527, %448 : vector<16x16xf32>
    %cst_205 = arith.constant dense<0xFF800000> : vector<16xf32>
    %529 = vector.multi_reduction <maximumf>, %528, %cst_205 [1] : vector<16x16xf32> to vector<16xf32>
    %530 = vector.shape_cast %529 : vector<16xf32> to vector<16x1xf32>
    %531 = vector.broadcast %530 : vector<16x1xf32> to vector<16x16xf32>
    %532 = arith.subf %528, %531 : vector<16x16xf32>
    %533 = math.exp %532 : vector<16x16xf32>
    %cst_206 = arith.constant dense<0.000000e+00> : vector<16xf32>
    %534 = vector.multi_reduction <add>, %533, %cst_206 [1] : vector<16x16xf32> to vector<16xf32>
    %535 = vector.shape_cast %534 : vector<16xf32> to vector<16x1xf32>
    %536 = vector.broadcast %535 : vector<16x1xf32> to vector<16x16xf32>
    %537 = arith.divf %533, %536 : vector<16x16xf32>
    %538 = vector.extract_strided_slice %537 {offsets = [0, 0], sizes = [8, 8], strides = [1, 1]} : vector<16x16xf32> to vector<8x8xf32>
    %c0_207 = arith.constant 0 : index
    %c24 = arith.constant 24 : index
    %539 = vector.load %arg23[%c0_207, %c24] : memref<16x32xf32, #tpu.memory_space<vmem>>, vector<8x8xf32>
    tpu.vector_store %arg23[%c0_207, %c24], %538 {strides = array<i32>} : memref<16x32xf32, #tpu.memory_space<vmem>>, vector<8x8xf32>,
    %540 = vector.extract_strided_slice %537 {offsets = [8, 8], sizes = [8, 8], strides = [1, 1]} : vector<16x16xf32> to vector<8x8xf32>
    %c8_208 = arith.constant 8 : index
    %c24_209 = arith.constant 24 : index
    %541 = vector.load %arg23[%c8_208, %c24_209] : memref<16x32xf32, #tpu.memory_space<vmem>>, vector<8x8xf32>
    tpu.vector_store %arg23[%c8_208, %c24_209], %540 {strides = array<i32>} : memref<16x32xf32, #tpu.memory_space<vmem>>, vector<8x8xf32>,
    %cst_210 = arith.constant dense<0.000000e+00> : vector<16x8xf32>
    %542 = tpu.matmul %537, %526, %cst_210 {dimension_numbers = #tpu.dot_dimension_numbers<[1], [0], [0], [1], [0, 0, 1, 1], [], []>} : vector<16x16xf32>, vector<16x8xf32>, vector<16x8xf32> -> vector<16x8xf32>
    %543 = tpu.concatenate %485, %504, %523, %542 in 1 : vector<16x8xf32>, vector<16x8xf32>, vector<16x8xf32>, vector<16x8xf32> -> vector<16x32xf32>
    %c4_211 = arith.constant 4 : index
    %c0_212 = arith.constant 0 : index
    %c0_213 = arith.constant 0 : index
    %544 = vector.load %arg11[%c4_211, %c0_212, %c0_213] : memref<6x32x32xf32, #tpu.memory_space<vmem>>, vector<1x32x32xf32>
    %545 = vector.shape_cast %544 : vector<1x32x32xf32> to vector<32x32xf32>
    %cst_214 = arith.constant dense<0.000000e+00> : vector<16x32xf32>
    %546 = tpu.matmul %543, %545, %cst_214 {dimension_numbers = #tpu.dot_dimension_numbers<[1], [0], [0], [1], [0, 0, 1, 1], [], []>} : vector<16x32xf32>, vector<32x32xf32>, vector<16x32xf32> -> vector<16x32xf32>
    %c4_215 = arith.constant 4 : index
    %c0_216 = arith.constant 0 : index
    %c0_217 = arith.constant 0 : index
    %547 = vector.load %arg12[%c4_215, %c0_216, %c0_217] : memref<6x1x32xf32, #tpu.memory_space<vmem>>, vector<1x1x32xf32>
    %548 = vector.shape_cast %547 : vector<1x1x32xf32> to vector<1x32xf32>
    %549 = vector.broadcast %548 : vector<1x32xf32> to vector<16x32xf32>
    %550 = arith.addf %546, %549 : vector<16x32xf32>
    %551 = arith.addf %212, %550 : vector<16x32xf32>
    %cst_218 = arith.constant dense<0.000000e+00> : vector<16xf32>
    %552 = vector.multi_reduction <add>, %551, %cst_218 [1] : vector<16x32xf32> to vector<16xf32>
    %553 = vector.shape_cast %552 : vector<16xf32> to vector<16x1xf32>
    %cst_219 = arith.constant 3.200000e+01 : f32
    %554 = vector.broadcast %cst_219 : f32 to vector<16x1xf32>
    %555 = arith.divf %553, %554 : vector<16x1xf32>
    %556 = vector.broadcast %555 : vector<16x1xf32> to vector<16x32xf32>
    %557 = arith.subf %551, %556 : vector<16x32xf32>
    %558 = arith.mulf %557, %557 : vector<16x32xf32>
    %cst_220 = arith.constant dense<0.000000e+00> : vector<16xf32>
    %559 = vector.multi_reduction <add>, %558, %cst_220 [1] : vector<16x32xf32> to vector<16xf32>
    %560 = vector.shape_cast %559 : vector<16xf32> to vector<16x1xf32>
    %cst_221 = arith.constant 3.200000e+01 : f32
    %561 = vector.broadcast %cst_221 : f32 to vector<16x1xf32>
    %562 = arith.divf %560, %561 : vector<16x1xf32>
    %563 = vector.broadcast %555 : vector<16x1xf32> to vector<16x32xf32>
    %564 = arith.subf %551, %563 : vector<16x32xf32>
    %cst_222 = arith.constant 9.99999974E-6 : f32
    %565 = vector.broadcast %cst_222 : f32 to vector<16x1xf32>
    %566 = arith.addf %562, %565 : vector<16x1xf32>
    %567 = math.rsqrt %566 : vector<16x1xf32>
    %568 = vector.broadcast %567 : vector<16x1xf32> to vector<16x32xf32>
    %569 = arith.mulf %564, %568 : vector<16x32xf32>
    %570 = vector.broadcast %0 : vector<1x32xf32> to vector<16x32xf32>
    %571 = arith.mulf %569, %570 : vector<16x32xf32>
    %572 = vector.broadcast %1 : vector<1x32xf32> to vector<16x32xf32>
    %573 = arith.addf %571, %572 : vector<16x32xf32>
    %c0_223 = arith.constant 0 : index
    %c0_224 = arith.constant 0 : index
    %574 = vector.load %arg8[%c0_223, %c0_224] : memref<16x16xf32, #tpu.memory_space<vmem>>, vector<16x16xf32>
    %c5 = arith.constant 5 : index
    %c0_225 = arith.constant 0 : index
    %c0_226 = arith.constant 0 : index
    %575 = vector.load %arg9[%c5, %c0_225, %c0_226] : memref<6x32x96xf32, #tpu.memory_space<vmem>>, vector<1x32x96xf32>
    %576 = vector.shape_cast %575 : vector<1x32x96xf32> to vector<32x96xf32>
    %c5_227 = arith.constant 5 : index
    %c0_228 = arith.constant 0 : index
    %c0_229 = arith.constant 0 : index
    %577 = vector.load %arg10[%c5_227, %c0_228, %c0_229] : memref<6x1x96xf32, #tpu.memory_space<vmem>>, vector<1x1x96xf32>
    %578 = vector.shape_cast %577 : vector<1x1x96xf32> to vector<1x96xf32>
    %579 = vector.extract_strided_slice %576 {offsets = [0, 0], sizes = [32, 32], strides = [1, 1]} : vector<32x96xf32> to vector<32x32xf32>
    %cst_230 = arith.constant dense<0.000000e+00> : vector<16x32xf32>
    %580 = tpu.matmul %316, %579, %cst_230 {dimension_numbers = #tpu.dot_dimension_numbers<[1], [0], [0], [1], [0, 0, 1, 1], [], []>} : vector<16x32xf32>, vector<32x32xf32>, vector<16x32xf32> -> vector<16x32xf32>
    %581 = vector.extract_strided_slice %578 {offsets = [0, 0], sizes = [1, 32], strides = [1, 1]} : vector<1x96xf32> to vector<1x32xf32>
    %582 = vector.broadcast %581 : vector<1x32xf32> to vector<16x32xf32>
    %583 = arith.addf %580, %582 : vector<16x32xf32>
    %584 = vector.extract_strided_slice %576 {offsets = [0, 32], sizes = [32, 64], strides = [1, 1]} : vector<32x96xf32> to vector<32x64xf32>
    %cst_231 = arith.constant dense<0.000000e+00> : vector<16x64xf32>
    %585 = tpu.matmul %447, %584, %cst_231 {dimension_numbers = #tpu.dot_dimension_numbers<[1], [0], [0], [1], [0, 0, 1, 1], [], []>} : vector<16x32xf32>, vector<32x64xf32>, vector<16x64xf32> -> vector<16x64xf32>
    %586 = vector.extract_strided_slice %578 {offsets = [0, 32], sizes = [1, 64], strides = [1, 1]} : vector<1x96xf32> to vector<1x64xf32>
    %587 = vector.broadcast %586 : vector<1x64xf32> to vector<16x64xf32>
    %588 = arith.addf %585, %587 : vector<16x64xf32>
    %589 = vector.extract_strided_slice %588 {offsets = [0, 0], sizes = [16, 32], strides = [1, 1]} : vector<16x64xf32> to vector<16x32xf32>
    %590 = vector.extract_strided_slice %588 {offsets = [0, 32], sizes = [16, 32], strides = [1, 1]} : vector<16x64xf32> to vector<16x32xf32>
    %cst_232 = arith.constant 0.353553385 : f32
    %591 = vector.broadcast %cst_232 : f32 to vector<16x32xf32>
    %592 = arith.mulf %583, %591 : vector<16x32xf32>
    %593 = vector.extract_strided_slice %592 {offsets = [0, 0], sizes = [16, 8], strides = [1, 1]} : vector<16x32xf32> to vector<16x8xf32>
    %594 = vector.extract_strided_slice %589 {offsets = [0, 0], sizes = [16, 8], strides = [1, 1]} : vector<16x32xf32> to vector<16x8xf32>
    %595 = vector.extract_strided_slice %590 {offsets = [0, 0], sizes = [16, 8], strides = [1, 1]} : vector<16x32xf32> to vector<16x8xf32>
    %cst_233 = arith.constant dense<0.000000e+00> : vector<16x16xf32>
    %596 = tpu.matmul %593, %594, %cst_233 {dimension_numbers = #tpu.dot_dimension_numbers<[1], [1], [0], [0], [0, 0, 1, 0], [], []>} : vector<16x8xf32>, vector<16x8xf32>, vector<16x16xf32> -> vector<16x16xf32>
    %597 = arith.addf %596, %574 : vector<16x16xf32>
    %cst_234 = arith.constant dense<0xFF800000> : vector<16xf32>
    %598 = vector.multi_reduction <maximumf>, %597, %cst_234 [1] : vector<16x16xf32> to vector<16xf32>
    %599 = vector.shape_cast %598 : vector<16xf32> to vector<16x1xf32>
    %600 = vector.broadcast %599 : vector<16x1xf32> to vector<16x16xf32>
    %601 = arith.subf %597, %600 : vector<16x16xf32>
    %602 = math.exp %601 : vector<16x16xf32>
    %cst_235 = arith.constant dense<0.000000e+00> : vector<16xf32>
    %603 = vector.multi_reduction <add>, %602, %cst_235 [1] : vector<16x16xf32> to vector<16xf32>
    %604 = vector.shape_cast %603 : vector<16xf32> to vector<16x1xf32>
    %605 = vector.broadcast %604 : vector<16x1xf32> to vector<16x16xf32>
    %606 = arith.divf %602, %605 : vector<16x16xf32>
    %607 = vector.extract_strided_slice %606 {offsets = [0, 0], sizes = [8, 8], strides = [1, 1]} : vector<16x16xf32> to vector<8x8xf32>
    %c0_236 = arith.constant 0 : index
    %c0_237 = arith.constant 0 : index
    %608 = vector.load %arg24[%c0_236, %c0_237] : memref<16x32xf32, #tpu.memory_space<vmem>>, vector<8x8xf32>
    tpu.vector_store %arg24[%c0_236, %c0_237], %607 {strides = array<i32>} : memref<16x32xf32, #tpu.memory_space<vmem>>, vector<8x8xf32>,
    %609 = vector.extract_strided_slice %606 {offsets = [8, 8], sizes = [8, 8], strides = [1, 1]} : vector<16x16xf32> to vector<8x8xf32>
    %c8_238 = arith.constant 8 : index
    %c0_239 = arith.constant 0 : index
    %610 = vector.load %arg24[%c8_238, %c0_239] : memref<16x32xf32, #tpu.memory_space<vmem>>, vector<8x8xf32>
    tpu.vector_store %arg24[%c8_238, %c0_239], %609 {strides = array<i32>} : memref<16x32xf32, #tpu.memory_space<vmem>>, vector<8x8xf32>,
    %cst_240 = arith.constant dense<0.000000e+00> : vector<16x8xf32>
    %611 = tpu.matmul %606, %595, %cst_240 {dimension_numbers = #tpu.dot_dimension_numbers<[1], [0], [0], [1], [0, 0, 1, 1], [], []>} : vector<16x16xf32>, vector<16x8xf32>, vector<16x8xf32> -> vector<16x8xf32>
    %612 = vector.extract_strided_slice %592 {offsets = [0, 8], sizes = [16, 8], strides = [1, 1]} : vector<16x32xf32> to vector<16x8xf32>
    %613 = vector.extract_strided_slice %589 {offsets = [0, 8], sizes = [16, 8], strides = [1, 1]} : vector<16x32xf32> to vector<16x8xf32>
    %614 = vector.extract_strided_slice %590 {offsets = [0, 8], sizes = [16, 8], strides = [1, 1]} : vector<16x32xf32> to vector<16x8xf32>
    %cst_241 = arith.constant dense<0.000000e+00> : vector<16x16xf32>
    %615 = tpu.matmul %612, %613, %cst_241 {dimension_numbers = #tpu.dot_dimension_numbers<[1], [1], [0], [0], [0, 0, 1, 0], [], []>} : vector<16x8xf32>, vector<16x8xf32>, vector<16x16xf32> -> vector<16x16xf32>
    %616 = arith.addf %615, %574 : vector<16x16xf32>
    %cst_242 = arith.constant dense<0xFF800000> : vector<16xf32>
    %617 = vector.multi_reduction <maximumf>, %616, %cst_242 [1] : vector<16x16xf32> to vector<16xf32>
    %618 = vector.shape_cast %617 : vector<16xf32> to vector<16x1xf32>
    %619 = vector.broadcast %618 : vector<16x1xf32> to vector<16x16xf32>
    %620 = arith.subf %616, %619 : vector<16x16xf32>
    %621 = math.exp %620 : vector<16x16xf32>
    %cst_243 = arith.constant dense<0.000000e+00> : vector<16xf32>
    %622 = vector.multi_reduction <add>, %621, %cst_243 [1] : vector<16x16xf32> to vector<16xf32>
    %623 = vector.shape_cast %622 : vector<16xf32> to vector<16x1xf32>
    %624 = vector.broadcast %623 : vector<16x1xf32> to vector<16x16xf32>
    %625 = arith.divf %621, %624 : vector<16x16xf32>
    %626 = vector.extract_strided_slice %625 {offsets = [0, 0], sizes = [8, 8], strides = [1, 1]} : vector<16x16xf32> to vector<8x8xf32>
    %c0_244 = arith.constant 0 : index
    %c8_245 = arith.constant 8 : index
    %627 = vector.load %arg24[%c0_244, %c8_245] : memref<16x32xf32, #tpu.memory_space<vmem>>, vector<8x8xf32>
    tpu.vector_store %arg24[%c0_244, %c8_245], %626 {strides = array<i32>} : memref<16x32xf32, #tpu.memory_space<vmem>>, vector<8x8xf32>,
    %628 = vector.extract_strided_slice %625 {offsets = [8, 8], sizes = [8, 8], strides = [1, 1]} : vector<16x16xf32> to vector<8x8xf32>
    %c8_246 = arith.constant 8 : index
    %c8_247 = arith.constant 8 : index
    %629 = vector.load %arg24[%c8_246, %c8_247] : memref<16x32xf32, #tpu.memory_space<vmem>>, vector<8x8xf32>
    tpu.vector_store %arg24[%c8_246, %c8_247], %628 {strides = array<i32>} : memref<16x32xf32, #tpu.memory_space<vmem>>, vector<8x8xf32>,
    %cst_248 = arith.constant dense<0.000000e+00> : vector<16x8xf32>
    %630 = tpu.matmul %625, %614, %cst_248 {dimension_numbers = #tpu.dot_dimension_numbers<[1], [0], [0], [1], [0, 0, 1, 1], [], []>} : vector<16x16xf32>, vector<16x8xf32>, vector<16x8xf32> -> vector<16x8xf32>
    %631 = vector.extract_strided_slice %592 {offsets = [0, 16], sizes = [16, 8], strides = [1, 1]} : vector<16x32xf32> to vector<16x8xf32>
    %632 = vector.extract_strided_slice %589 {offsets = [0, 16], sizes = [16, 8], strides = [1, 1]} : vector<16x32xf32> to vector<16x8xf32>
    %633 = vector.extract_strided_slice %590 {offsets = [0, 16], sizes = [16, 8], strides = [1, 1]} : vector<16x32xf32> to vector<16x8xf32>
    %cst_249 = arith.constant dense<0.000000e+00> : vector<16x16xf32>
    %634 = tpu.matmul %631, %632, %cst_249 {dimension_numbers = #tpu.dot_dimension_numbers<[1], [1], [0], [0], [0, 0, 1, 0], [], []>} : vector<16x8xf32>, vector<16x8xf32>, vector<16x16xf32> -> vector<16x16xf32>
    %635 = arith.addf %634, %574 : vector<16x16xf32>
    %cst_250 = arith.constant dense<0xFF800000> : vector<16xf32>
    %636 = vector.multi_reduction <maximumf>, %635, %cst_250 [1] : vector<16x16xf32> to vector<16xf32>
    %637 = vector.shape_cast %636 : vector<16xf32> to vector<16x1xf32>
    %638 = vector.broadcast %637 : vector<16x1xf32> to vector<16x16xf32>
    %639 = arith.subf %635, %638 : vector<16x16xf32>
    %640 = math.exp %639 : vector<16x16xf32>
    %cst_251 = arith.constant dense<0.000000e+00> : vector<16xf32>
    %641 = vector.multi_reduction <add>, %640, %cst_251 [1] : vector<16x16xf32> to vector<16xf32>
    %642 = vector.shape_cast %641 : vector<16xf32> to vector<16x1xf32>
    %643 = vector.broadcast %642 : vector<16x1xf32> to vector<16x16xf32>
    %644 = arith.divf %640, %643 : vector<16x16xf32>
    %645 = vector.extract_strided_slice %644 {offsets = [0, 0], sizes = [8, 8], strides = [1, 1]} : vector<16x16xf32> to vector<8x8xf32>
    %c0_252 = arith.constant 0 : index
    %c16_253 = arith.constant 16 : index
    %646 = vector.load %arg24[%c0_252, %c16_253] : memref<16x32xf32, #tpu.memory_space<vmem>>, vector<8x8xf32>
    tpu.vector_store %arg24[%c0_252, %c16_253], %645 {strides = array<i32>} : memref<16x32xf32, #tpu.memory_space<vmem>>, vector<8x8xf32>,
    %647 = vector.extract_strided_slice %644 {offsets = [8, 8], sizes = [8, 8], strides = [1, 1]} : vector<16x16xf32> to vector<8x8xf32>
    %c8_254 = arith.constant 8 : index
    %c16_255 = arith.constant 16 : index
    %648 = vector.load %arg24[%c8_254, %c16_255] : memref<16x32xf32, #tpu.memory_space<vmem>>, vector<8x8xf32>
    tpu.vector_store %arg24[%c8_254, %c16_255], %647 {strides = array<i32>} : memref<16x32xf32, #tpu.memory_space<vmem>>, vector<8x8xf32>,
    %cst_256 = arith.constant dense<0.000000e+00> : vector<16x8xf32>
    %649 = tpu.matmul %644, %633, %cst_256 {dimension_numbers = #tpu.dot_dimension_numbers<[1], [0], [0], [1], [0, 0, 1, 1], [], []>} : vector<16x16xf32>, vector<16x8xf32>, vector<16x8xf32> -> vector<16x8xf32>
    %650 = vector.extract_strided_slice %592 {offsets = [0, 24], sizes = [16, 8], strides = [1, 1]} : vector<16x32xf32> to vector<16x8xf32>
    %651 = vector.extract_strided_slice %589 {offsets = [0, 24], sizes = [16, 8], strides = [1, 1]} : vector<16x32xf32> to vector<16x8xf32>
    %652 = vector.extract_strided_slice %590 {offsets = [0, 24], sizes = [16, 8], strides = [1, 1]} : vector<16x32xf32> to vector<16x8xf32>
    %cst_257 = arith.constant dense<0.000000e+00> : vector<16x16xf32>
    %653 = tpu.matmul %650, %651, %cst_257 {dimension_numbers = #tpu.dot_dimension_numbers<[1], [1], [0], [0], [0, 0, 1, 0], [], []>} : vector<16x8xf32>, vector<16x8xf32>, vector<16x16xf32> -> vector<16x16xf32>
    %654 = arith.addf %653, %574 : vector<16x16xf32>
    %cst_258 = arith.constant dense<0xFF800000> : vector<16xf32>
    %655 = vector.multi_reduction <maximumf>, %654, %cst_258 [1] : vector<16x16xf32> to vector<16xf32>
    %656 = vector.shape_cast %655 : vector<16xf32> to vector<16x1xf32>
    %657 = vector.broadcast %656 : vector<16x1xf32> to vector<16x16xf32>
    %658 = arith.subf %654, %657 : vector<16x16xf32>
    %659 = math.exp %658 : vector<16x16xf32>
    %cst_259 = arith.constant dense<0.000000e+00> : vector<16xf32>
    %660 = vector.multi_reduction <add>, %659, %cst_259 [1] : vector<16x16xf32> to vector<16xf32>
    %661 = vector.shape_cast %660 : vector<16xf32> to vector<16x1xf32>
    %662 = vector.broadcast %661 : vector<16x1xf32> to vector<16x16xf32>
    %663 = arith.divf %659, %662 : vector<16x16xf32>
    %664 = vector.extract_strided_slice %663 {offsets = [0, 0], sizes = [8, 8], strides = [1, 1]} : vector<16x16xf32> to vector<8x8xf32>
    %c0_260 = arith.constant 0 : index
    %c24_261 = arith.constant 24 : index
    %665 = vector.load %arg24[%c0_260, %c24_261] : memref<16x32xf32, #tpu.memory_space<vmem>>, vector<8x8xf32>
    tpu.vector_store %arg24[%c0_260, %c24_261], %664 {strides = array<i32>} : memref<16x32xf32, #tpu.memory_space<vmem>>, vector<8x8xf32>,
    %666 = vector.extract_strided_slice %663 {offsets = [8, 8], sizes = [8, 8], strides = [1, 1]} : vector<16x16xf32> to vector<8x8xf32>
    %c8_262 = arith.constant 8 : index
    %c24_263 = arith.constant 24 : index
    %667 = vector.load %arg24[%c8_262, %c24_263] : memref<16x32xf32, #tpu.memory_space<vmem>>, vector<8x8xf32>
    tpu.vector_store %arg24[%c8_262, %c24_263], %666 {strides = array<i32>} : memref<16x32xf32, #tpu.memory_space<vmem>>, vector<8x8xf32>,
    %cst_264 = arith.constant dense<0.000000e+00> : vector<16x8xf32>
    %668 = tpu.matmul %663, %652, %cst_264 {dimension_numbers = #tpu.dot_dimension_numbers<[1], [0], [0], [1], [0, 0, 1, 1], [], []>} : vector<16x16xf32>, vector<16x8xf32>, vector<16x8xf32> -> vector<16x8xf32>
    %669 = tpu.concatenate %611, %630, %649, %668 in 1 : vector<16x8xf32>, vector<16x8xf32>, vector<16x8xf32>, vector<16x8xf32> -> vector<16x32xf32>
    %c5_265 = arith.constant 5 : index
    %c0_266 = arith.constant 0 : index
    %c0_267 = arith.constant 0 : index
    %670 = vector.load %arg11[%c5_265, %c0_266, %c0_267] : memref<6x32x32xf32, #tpu.memory_space<vmem>>, vector<1x32x32xf32>
    %671 = vector.shape_cast %670 : vector<1x32x32xf32> to vector<32x32xf32>
    %cst_268 = arith.constant dense<0.000000e+00> : vector<16x32xf32>
    %672 = tpu.matmul %669, %671, %cst_268 {dimension_numbers = #tpu.dot_dimension_numbers<[1], [0], [0], [1], [0, 0, 1, 1], [], []>} : vector<16x32xf32>, vector<32x32xf32>, vector<16x32xf32> -> vector<16x32xf32>
    %c5_269 = arith.constant 5 : index
    %c0_270 = arith.constant 0 : index
    %c0_271 = arith.constant 0 : index
    %673 = vector.load %arg12[%c5_269, %c0_270, %c0_271] : memref<6x1x32xf32, #tpu.memory_space<vmem>>, vector<1x1x32xf32>
    %674 = vector.shape_cast %673 : vector<1x1x32xf32> to vector<1x32xf32>
    %675 = vector.broadcast %674 : vector<1x32xf32> to vector<16x32xf32>
    %676 = arith.addf %672, %675 : vector<16x32xf32>
    %677 = arith.addf %316, %676 : vector<16x32xf32>
    %cst_272 = arith.constant dense<0.000000e+00> : vector<16xf32>
    %678 = vector.multi_reduction <add>, %677, %cst_272 [1] : vector<16x32xf32> to vector<16xf32>
    %679 = vector.shape_cast %678 : vector<16xf32> to vector<16x1xf32>
    %cst_273 = arith.constant 3.200000e+01 : f32
    %680 = vector.broadcast %cst_273 : f32 to vector<16x1xf32>
    %681 = arith.divf %679, %680 : vector<16x1xf32>
    %682 = vector.broadcast %681 : vector<16x1xf32> to vector<16x32xf32>
    %683 = arith.subf %677, %682 : vector<16x32xf32>
    %684 = arith.mulf %683, %683 : vector<16x32xf32>
    %cst_274 = arith.constant dense<0.000000e+00> : vector<16xf32>
    %685 = vector.multi_reduction <add>, %684, %cst_274 [1] : vector<16x32xf32> to vector<16xf32>
    %686 = vector.shape_cast %685 : vector<16xf32> to vector<16x1xf32>
    %cst_275 = arith.constant 3.200000e+01 : f32
    %687 = vector.broadcast %cst_275 : f32 to vector<16x1xf32>
    %688 = arith.divf %686, %687 : vector<16x1xf32>
    %689 = vector.broadcast %681 : vector<16x1xf32> to vector<16x32xf32>
    %690 = arith.subf %677, %689 : vector<16x32xf32>
    %cst_276 = arith.constant 9.99999974E-6 : f32
    %691 = vector.broadcast %cst_276 : f32 to vector<16x1xf32>
    %692 = arith.addf %688, %691 : vector<16x1xf32>
    %693 = math.rsqrt %692 : vector<16x1xf32>
    %694 = vector.broadcast %693 : vector<16x1xf32> to vector<16x32xf32>
    %695 = arith.mulf %690, %694 : vector<16x32xf32>
    %696 = vector.broadcast %0 : vector<1x32xf32> to vector<16x32xf32>
    %697 = arith.mulf %695, %696 : vector<16x32xf32>
    %698 = vector.broadcast %1 : vector<1x32xf32> to vector<16x32xf32>
    %699 = arith.addf %697, %698 : vector<16x32xf32>
    %c0_277 = arith.constant 0 : index
    %c0_278 = arith.constant 0 : index
    %c0_279 = arith.constant 0 : index
    %700 = vector.load %arg13[%c0_277, %c0_278, %c0_279] : memref<3x32x64xf32, #tpu.memory_space<vmem>>, vector<1x32x64xf32>
    %701 = vector.shape_cast %700 : vector<1x32x64xf32> to vector<32x64xf32>
    %cst_280 = arith.constant dense<0.000000e+00> : vector<16x64xf32>
    %702 = tpu.matmul %447, %701, %cst_280 {dimension_numbers = #tpu.dot_dimension_numbers<[1], [0], [0], [1], [0, 0, 1, 1], [], []>} : vector<16x32xf32>, vector<32x64xf32>, vector<16x64xf32> -> vector<16x64xf32>
    %c0_281 = arith.constant 0 : index
    %c0_282 = arith.constant 0 : index
    %c0_283 = arith.constant 0 : index
    %703 = vector.load %arg14[%c0_281, %c0_282, %c0_283] : memref<3x1x64xf32, #tpu.memory_space<vmem>>, vector<1x1x64xf32>
    %704 = vector.shape_cast %703 : vector<1x1x64xf32> to vector<1x64xf32>
    %705 = vector.broadcast %704 : vector<1x64xf32> to vector<16x64xf32>
    %706 = arith.addf %702, %705 : vector<16x64xf32>
    %cst_284 = arith.constant 0.000000e+00 : f32
    %707 = vector.broadcast %cst_284 : f32 to vector<16x64xf32>
    %708 = arith.maximumf %706, %707 : vector<16x64xf32>
    %c0_285 = arith.constant 0 : index
    %c0_286 = arith.constant 0 : index
    %c0_287 = arith.constant 0 : index
    %709 = vector.load %arg15[%c0_285, %c0_286, %c0_287] : memref<3x64x32xf32, #tpu.memory_space<vmem>>, vector<1x64x32xf32>
    %710 = vector.shape_cast %709 : vector<1x64x32xf32> to vector<64x32xf32>
    %cst_288 = arith.constant dense<0.000000e+00> : vector<16x32xf32>
    %711 = tpu.matmul %708, %710, %cst_288 {dimension_numbers = #tpu.dot_dimension_numbers<[1], [0], [0], [1], [0, 0, 1, 1], [], []>} : vector<16x64xf32>, vector<64x32xf32>, vector<16x32xf32> -> vector<16x32xf32>
    %c0_289 = arith.constant 0 : index
    %c0_290 = arith.constant 0 : index
    %c0_291 = arith.constant 0 : index
    %712 = vector.load %arg16[%c0_289, %c0_290, %c0_291] : memref<3x1x32xf32, #tpu.memory_space<vmem>>, vector<1x1x32xf32>
    %713 = vector.shape_cast %712 : vector<1x1x32xf32> to vector<1x32xf32>
    %714 = vector.broadcast %713 : vector<1x32xf32> to vector<16x32xf32>
    %715 = arith.addf %711, %714 : vector<16x32xf32>
    %716 = arith.addf %447, %715 : vector<16x32xf32>
    %cst_292 = arith.constant dense<0.000000e+00> : vector<16xf32>
    %717 = vector.multi_reduction <add>, %716, %cst_292 [1] : vector<16x32xf32> to vector<16xf32>
    %718 = vector.shape_cast %717 : vector<16xf32> to vector<16x1xf32>
    %cst_293 = arith.constant 3.200000e+01 : f32
    %719 = vector.broadcast %cst_293 : f32 to vector<16x1xf32>
    %720 = arith.divf %718, %719 : vector<16x1xf32>
    %721 = vector.broadcast %720 : vector<16x1xf32> to vector<16x32xf32>
    %722 = arith.subf %716, %721 : vector<16x32xf32>
    %723 = arith.mulf %722, %722 : vector<16x32xf32>
    %cst_294 = arith.constant dense<0.000000e+00> : vector<16xf32>
    %724 = vector.multi_reduction <add>, %723, %cst_294 [1] : vector<16x32xf32> to vector<16xf32>
    %725 = vector.shape_cast %724 : vector<16xf32> to vector<16x1xf32>
    %cst_295 = arith.constant 3.200000e+01 : f32
    %726 = vector.broadcast %cst_295 : f32 to vector<16x1xf32>
    %727 = arith.divf %725, %726 : vector<16x1xf32>
    %728 = vector.broadcast %720 : vector<16x1xf32> to vector<16x32xf32>
    %729 = arith.subf %716, %728 : vector<16x32xf32>
    %cst_296 = arith.constant 9.99999974E-6 : f32
    %730 = vector.broadcast %cst_296 : f32 to vector<16x1xf32>
    %731 = arith.addf %727, %730 : vector<16x1xf32>
    %732 = math.rsqrt %731 : vector<16x1xf32>
    %733 = vector.broadcast %732 : vector<16x1xf32> to vector<16x32xf32>
    %734 = arith.mulf %729, %733 : vector<16x32xf32>
    %735 = vector.broadcast %0 : vector<1x32xf32> to vector<16x32xf32>
    %736 = arith.mulf %734, %735 : vector<16x32xf32>
    %737 = vector.broadcast %1 : vector<1x32xf32> to vector<16x32xf32>
    %738 = arith.addf %736, %737 : vector<16x32xf32>
    %c1_297 = arith.constant 1 : index
    %c0_298 = arith.constant 0 : index
    %c0_299 = arith.constant 0 : index
    %739 = vector.load %arg13[%c1_297, %c0_298, %c0_299] : memref<3x32x64xf32, #tpu.memory_space<vmem>>, vector<1x32x64xf32>
    %740 = vector.shape_cast %739 : vector<1x32x64xf32> to vector<32x64xf32>
    %cst_300 = arith.constant dense<0.000000e+00> : vector<16x64xf32>
    %741 = tpu.matmul %573, %740, %cst_300 {dimension_numbers = #tpu.dot_dimension_numbers<[1], [0], [0], [1], [0, 0, 1, 1], [], []>} : vector<16x32xf32>, vector<32x64xf32>, vector<16x64xf32> -> vector<16x64xf32>
    %c1_301 = arith.constant 1 : index
    %c0_302 = arith.constant 0 : index
    %c0_303 = arith.constant 0 : index
    %742 = vector.load %arg14[%c1_301, %c0_302, %c0_303] : memref<3x1x64xf32, #tpu.memory_space<vmem>>, vector<1x1x64xf32>
    %743 = vector.shape_cast %742 : vector<1x1x64xf32> to vector<1x64xf32>
    %744 = vector.broadcast %743 : vector<1x64xf32> to vector<16x64xf32>
    %745 = arith.addf %741, %744 : vector<16x64xf32>
    %cst_304 = arith.constant 0.000000e+00 : f32
    %746 = vector.broadcast %cst_304 : f32 to vector<16x64xf32>
    %747 = arith.maximumf %745, %746 : vector<16x64xf32>
    %c1_305 = arith.constant 1 : index
    %c0_306 = arith.constant 0 : index
    %c0_307 = arith.constant 0 : index
    %748 = vector.load %arg15[%c1_305, %c0_306, %c0_307] : memref<3x64x32xf32, #tpu.memory_space<vmem>>, vector<1x64x32xf32>
    %749 = vector.shape_cast %748 : vector<1x64x32xf32> to vector<64x32xf32>
    %cst_308 = arith.constant dense<0.000000e+00> : vector<16x32xf32>
    %750 = tpu.matmul %747, %749, %cst_308 {dimension_numbers = #tpu.dot_dimension_numbers<[1], [0], [0], [1], [0, 0, 1, 1], [], []>} : vector<16x64xf32>, vector<64x32xf32>, vector<16x32xf32> -> vector<16x32xf32>
    %c1_309 = arith.constant 1 : index
    %c0_310 = arith.constant 0 : index
    %c0_311 = arith.constant 0 : index
    %751 = vector.load %arg16[%c1_309, %c0_310, %c0_311] : memref<3x1x32xf32, #tpu.memory_space<vmem>>, vector<1x1x32xf32>
    %752 = vector.shape_cast %751 : vector<1x1x32xf32> to vector<1x32xf32>
    %753 = vector.broadcast %752 : vector<1x32xf32> to vector<16x32xf32>
    %754 = arith.addf %750, %753 : vector<16x32xf32>
    %755 = arith.addf %573, %754 : vector<16x32xf32>
    %cst_312 = arith.constant dense<0.000000e+00> : vector<16xf32>
    %756 = vector.multi_reduction <add>, %755, %cst_312 [1] : vector<16x32xf32> to vector<16xf32>
    %757 = vector.shape_cast %756 : vector<16xf32> to vector<16x1xf32>
    %cst_313 = arith.constant 3.200000e+01 : f32
    %758 = vector.broadcast %cst_313 : f32 to vector<16x1xf32>
    %759 = arith.divf %757, %758 : vector<16x1xf32>
    %760 = vector.broadcast %759 : vector<16x1xf32> to vector<16x32xf32>
    %761 = arith.subf %755, %760 : vector<16x32xf32>
    %762 = arith.mulf %761, %761 : vector<16x32xf32>
    %cst_314 = arith.constant dense<0.000000e+00> : vector<16xf32>
    %763 = vector.multi_reduction <add>, %762, %cst_314 [1] : vector<16x32xf32> to vector<16xf32>
    %764 = vector.shape_cast %763 : vector<16xf32> to vector<16x1xf32>
    %cst_315 = arith.constant 3.200000e+01 : f32
    %765 = vector.broadcast %cst_315 : f32 to vector<16x1xf32>
    %766 = arith.divf %764, %765 : vector<16x1xf32>
    %767 = vector.broadcast %759 : vector<16x1xf32> to vector<16x32xf32>
    %768 = arith.subf %755, %767 : vector<16x32xf32>
    %cst_316 = arith.constant 9.99999974E-6 : f32
    %769 = vector.broadcast %cst_316 : f32 to vector<16x1xf32>
    %770 = arith.addf %766, %769 : vector<16x1xf32>
    %771 = math.rsqrt %770 : vector<16x1xf32>
    %772 = vector.broadcast %771 : vector<16x1xf32> to vector<16x32xf32>
    %773 = arith.mulf %768, %772 : vector<16x32xf32>
    %774 = vector.broadcast %0 : vector<1x32xf32> to vector<16x32xf32>
    %775 = arith.mulf %773, %774 : vector<16x32xf32>
    %776 = vector.broadcast %1 : vector<1x32xf32> to vector<16x32xf32>
    %777 = arith.addf %775, %776 : vector<16x32xf32>
    %c2_317 = arith.constant 2 : index
    %c0_318 = arith.constant 0 : index
    %c0_319 = arith.constant 0 : index
    %778 = vector.load %arg13[%c2_317, %c0_318, %c0_319] : memref<3x32x64xf32, #tpu.memory_space<vmem>>, vector<1x32x64xf32>
    %779 = vector.shape_cast %778 : vector<1x32x64xf32> to vector<32x64xf32>
    %cst_320 = arith.constant dense<0.000000e+00> : vector<16x64xf32>
    %780 = tpu.matmul %699, %779, %cst_320 {dimension_numbers = #tpu.dot_dimension_numbers<[1], [0], [0], [1], [0, 0, 1, 1], [], []>} : vector<16x32xf32>, vector<32x64xf32>, vector<16x64xf32> -> vector<16x64xf32>
    %c2_321 = arith.constant 2 : index
    %c0_322 = arith.constant 0 : index
    %c0_323 = arith.constant 0 : index
    %781 = vector.load %arg14[%c2_321, %c0_322, %c0_323] : memref<3x1x64xf32, #tpu.memory_space<vmem>>, vector<1x1x64xf32>
    %782 = vector.shape_cast %781 : vector<1x1x64xf32> to vector<1x64xf32>
    %783 = vector.broadcast %782 : vector<1x64xf32> to vector<16x64xf32>
    %784 = arith.addf %780, %783 : vector<16x64xf32>
    %cst_324 = arith.constant 0.000000e+00 : f32
    %785 = vector.broadcast %cst_324 : f32 to vector<16x64xf32>
    %786 = arith.maximumf %784, %785 : vector<16x64xf32>
    %c2_325 = arith.constant 2 : index
    %c0_326 = arith.constant 0 : index
    %c0_327 = arith.constant 0 : index
    %787 = vector.load %arg15[%c2_325, %c0_326, %c0_327] : memref<3x64x32xf32, #tpu.memory_space<vmem>>, vector<1x64x32xf32>
    %788 = vector.shape_cast %787 : vector<1x64x32xf32> to vector<64x32xf32>
    %cst_328 = arith.constant dense<0.000000e+00> : vector<16x32xf32>
    %789 = tpu.matmul %786, %788, %cst_328 {dimension_numbers = #tpu.dot_dimension_numbers<[1], [0], [0], [1], [0, 0, 1, 1], [], []>} : vector<16x64xf32>, vector<64x32xf32>, vector<16x32xf32> -> vector<16x32xf32>
    %c2_329 = arith.constant 2 : index
    %c0_330 = arith.constant 0 : index
    %c0_331 = arith.constant 0 : index
    %790 = vector.load %arg16[%c2_329, %c0_330, %c0_331] : memref<3x1x32xf32, #tpu.memory_space<vmem>>, vector<1x1x32xf32>
    %791 = vector.shape_cast %790 : vector<1x1x32xf32> to vector<1x32xf32>
    %792 = vector.broadcast %791 : vector<1x32xf32> to vector<16x32xf32>
    %793 = arith.addf %789, %792 : vector<16x32xf32>
    %794 = arith.addf %699, %793 : vector<16x32xf32>
    %cst_332 = arith.constant dense<0.000000e+00> : vector<16xf32>
    %795 = vector.multi_reduction <add>, %794, %cst_332 [1] : vector<16x32xf32> to vector<16xf32>
    %796 = vector.shape_cast %795 : vector<16xf32> to vector<16x1xf32>
    %cst_333 = arith.constant 3.200000e+01 : f32
    %797 = vector.broadcast %cst_333 : f32 to vector<16x1xf32>
    %798 = arith.divf %796, %797 : vector<16x1xf32>
    %799 = vector.broadcast %798 : vector<16x1xf32> to vector<16x32xf32>
    %800 = arith.subf %794, %799 : vector<16x32xf32>
    %801 = arith.mulf %800, %800 : vector<16x32xf32>
    %cst_334 = arith.constant dense<0.000000e+00> : vector<16xf32>
    %802 = vector.multi_reduction <add>, %801, %cst_334 [1] : vector<16x32xf32> to vector<16xf32>
    %803 = vector.shape_cast %802 : vector<16xf32> to vector<16x1xf32>
    %cst_335 = arith.constant 3.200000e+01 : f32
    %804 = vector.broadcast %cst_335 : f32 to vector<16x1xf32>
    %805 = arith.divf %803, %804 : vector<16x1xf32>
    %806 = vector.broadcast %798 : vector<16x1xf32> to vector<16x32xf32>
    %807 = arith.subf %794, %806 : vector<16x32xf32>
    %cst_336 = arith.constant 9.99999974E-6 : f32
    %808 = vector.broadcast %cst_336 : f32 to vector<16x1xf32>
    %809 = arith.addf %805, %808 : vector<16x1xf32>
    %810 = math.rsqrt %809 : vector<16x1xf32>
    %811 = vector.broadcast %810 : vector<16x1xf32> to vector<16x32xf32>
    %812 = arith.mulf %807, %811 : vector<16x32xf32>
    %813 = vector.broadcast %0 : vector<1x32xf32> to vector<16x32xf32>
    %814 = arith.mulf %812, %813 : vector<16x32xf32>
    %815 = vector.broadcast %1 : vector<1x32xf32> to vector<16x32xf32>
    %816 = arith.addf %814, %815 : vector<16x32xf32>
    %c0_337 = arith.constant 0 : index
    %c0_338 = arith.constant 0 : index
    %817 = vector.load %arg19[%c0_337, %c0_338] : memref<16x32xf32, #tpu.memory_space<vmem>>, vector<16x32xf32>
    tpu.vector_store %arg19[%c0_337, %c0_338], %738 {strides = array<i32>} : memref<16x32xf32, #tpu.memory_space<vmem>>, vector<16x32xf32>,
    %c0_339 = arith.constant 0 : index
    %c0_340 = arith.constant 0 : index
    %818 = vector.load %arg20[%c0_339, %c0_340] : memref<16x32xf32, #tpu.memory_space<vmem>>, vector<16x32xf32>
    tpu.vector_store %arg20[%c0_339, %c0_340], %777 {strides = array<i32>} : memref<16x32xf32, #tpu.memory_space<vmem>>, vector<16x32xf32>,
    %c0_341 = arith.constant 0 : index
    %c0_342 = arith.constant 0 : index
    %819 = vector.load %arg21[%c0_341, %c0_342] : memref<16x32xf32, #tpu.memory_space<vmem>>, vector<16x32xf32>
    tpu.vector_store %arg21[%c0_341, %c0_342], %816 {strides = array<i32>} : memref<16x32xf32, #tpu.memory_space<vmem>>, vector<16x32xf32>,
    return
  }
}

</mosaic_0001>

<llo_original>
// kernel: attention_block_forward.1
$region0: #{attention_block_forward.1}
  #allocation0 [shape = 'u32[]', space=smem, size = 0x4, offset = 0x4, fixed_abs, tag = 'smem constant byte address 0x4 - core index']
  #allocation1 [shape = 'u32[144,128]{1,0:T(1,128)}', space=vmem, size = 0x12000, scoped, tag = 'internal scratch']
  %s0 = inlined_call_operand.vmem [shape: f32[16,32], index: 0, kind: input, shape index: {}]
  %s1 = inlined_call_operand.vmem [shape: f32[16,32], index: 1, kind: input, shape index: {}]
  %s2 = inlined_call_operand.vmem [shape: f32[16,32], index: 2, kind: input, shape index: {}]
  %s3 = inlined_call_operand.vmem [shape: f32[16,16], index: 3, kind: input, shape index: {}, may-alias: {3,4,5,7,8}]
  %s4 = inlined_call_operand.vmem [shape: f32[16,16], index: 4, kind: input, shape index: {}, may-alias: {3,4,5,7,8}]
  %s5 = inlined_call_operand.vmem [shape: f32[16,16], index: 5, kind: input, shape index: {}, may-alias: {3,4,5,7,8}]
  %s6 = inlined_call_operand.vmem [shape: f32[16,32], index: 6, kind: input, shape index: {}]
  %s7 = inlined_call_operand.vmem [shape: f32[16,16], index: 7, kind: input, shape index: {}, may-alias: {3,4,5,7,8}]
  %s8 = inlined_call_operand.vmem [shape: f32[16,16], index: 8, kind: input, shape index: {}, may-alias: {3,4,5,7,8}]
  %s9 = inlined_call_operand.vmem [shape: f32[6,32,96], index: 9, kind: input, shape index: {}]
  %s10 = inlined_call_operand.vmem [shape: f32[6,1,96], index: 10, kind: input, shape index: {}]
  %s11 = inlined_call_operand.vmem [shape: f32[6,32,32], index: 11, kind: input, shape index: {}]
  %s12 = inlined_call_operand.vmem [shape: f32[6,1,32], index: 12, kind: input, shape index: {}]
  %s13 = inlined_call_operand.vmem [shape: f32[3,32,64], index: 13, kind: input, shape index: {}]
  %s14 = inlined_call_operand.vmem [shape: f32[3,1,64], index: 14, kind: input, shape index: {}]
  %s15 = inlined_call_operand.vmem [shape: f32[3,64,32], index: 15, kind: input, shape index: {}]
  %s16 = inlined_call_operand.vmem [shape: f32[3,1,32], index: 16, kind: input, shape index: {}]
  %s17 = inlined_call_operand.vmem [shape: f32[1,32], index: 17, kind: input, shape index: {}]
  %s18 = inlined_call_operand.vmem [shape: f32[1,32], index: 18, kind: input, shape index: {}]
  %s19 = inlined_call_operand.hbm [shape: f32[16,32], index: 19, kind: output, shape index: {0}]
  %s20 = inlined_call_operand.hbm [shape: f32[16,32], index: 20, kind: output, shape index: {1}]
  %s21 = inlined_call_operand.hbm [shape: f32[16,32], index: 21, kind: output, shape index: {2}]
  %s22 = inlined_call_operand.vmem [shape: f32[16,64], index: 22, kind: output, shape index: {3}]
  %s23 = inlined_call_operand.vmem [shape: f32[16,32], index: 23, kind: output, shape index: {4}]
  %s24 = inlined_call_operand.vmem [shape: f32[16,32], index: 24, kind: output, shape index: {5}]
  %25 = xla_tuple %s19, %s20, %s21, %s22, %s23, %s24
  %s26 = sld [smem:[#allocation0]]
  $region126: #{attention_block_forward.1} parent=0
    _
  %s28 = ssub.s32 1, %s26
  %s29 = scalar_select 0, %s28, %s26
  $region1: #{attention_block_forward.1} parent=0
    #allocation2 [shape = 'u8[8192]{0}', space=vmem, size = 0x2000, scoped, tag = 'output window, operand 0, single buffered']
    #allocation3 [shape = 's32[1]{0}', space=sflag, size = 0x4, scoped, tag = 'scoped memory for attention_block_forward.1']
    #allocation4 [shape = 'u8[8192]{0}', space=vmem, size = 0x2000, scoped, tag = 'output window, operand 1, single buffered']
    #allocation5 [shape = 's32[1]{0}', space=sflag, size = 0x4, scoped, tag = 'scoped memory for attention_block_forward.1']
    #allocation6 [shape = 'u8[8192]{0}', space=vmem, size = 0x2000, scoped, tag = 'output window, operand 2, single buffered']
    %30 = vsyncpa [#allocation3], 0
    %31 = vsyncpa [#allocation5], 0
    // Predicated region
    $region2: #{attention_block_forward.1} parent=1 // pred_check
      _
    $region3: #{attention_block_forward.1} parent=1 // pred_check_branch
      %33 = sbr.rel (0) target = $region5
    $region4: #{attention_block_forward.1} parent=1 // pred_region
      _
    $region5: #{attention_block_forward.1} parent=1 // pred_fallthru
      _
    // Predicated region
    $region6: #{attention_block_forward.1} parent=1 // pred_check
      _
    $region7: #{attention_block_forward.1} parent=1 // pred_check_branch
      %35 = sbr.rel (0) target = $region9
    $region8: #{attention_block_forward.1} parent=1 // pred_region
      _
    $region9: #{attention_block_forward.1} parent=1 // pred_fallthru
      _
    // Predicated region
    $region10: #{attention_block_forward.1} parent=1 // pred_check
      _
    $region11: #{attention_block_forward.1} parent=1 // pred_check_branch
      %37 = sbr.rel (0) target = $region13
    $region12: #{attention_block_forward.1} parent=1 // pred_region
      _
    $region13: #{attention_block_forward.1} parent=1 // pred_fallthru
      _
    // Predicated region
    $region14: #{attention_block_forward.1} parent=1 // pred_check
      _
    $region15: #{attention_block_forward.1} parent=1 // pred_check_branch
      %39 = sbr.rel (0) target = $region17
    $region16: #{attention_block_forward.1} parent=1 // pred_region
      _
    $region17: #{attention_block_forward.1} parent=1 // pred_fallthru
      _
    // Predicated region
    $region18: #{attention_block_forward.1} parent=1 // pred_check
      _
    $region19: #{attention_block_forward.1} parent=1 // pred_check_branch
      %41 = sbr.rel (0) target = $region21
    $region20: #{attention_block_forward.1} parent=1 // pred_region
      _
    $region21: #{attention_block_forward.1} parent=1 // pred_fallthru
      _
    // Predicated region
    $region22: #{attention_block_forward.1} parent=1 // pred_check
      _
    $region23: #{attention_block_forward.1} parent=1 // pred_check_branch
      %43 = sbr.rel (0) target = $region25
    $region24: #{attention_block_forward.1} parent=1 // pred_region
      _
    $region25: #{attention_block_forward.1} parent=1 // pred_fallthru
      _
    // Predicated region
    $region26: #{attention_block_forward.1} parent=1 // pred_check
      _
    $region27: #{attention_block_forward.1} parent=1 // pred_check_branch
      %45 = sbr.rel (0) target = $region29
    $region28: #{attention_block_forward.1} parent=1 // pred_region
      _
    $region29: #{attention_block_forward.1} parent=1 // pred_fallthru
      _
    // Predicated region
    $region30: #{attention_block_forward.1} parent=1 // pred_check
      _
    $region31: #{attention_block_forward.1} parent=1 // pred_check_branch
      %47 = sbr.rel (0) target = $region33
    $region32: #{attention_block_forward.1} parent=1 // pred_region
      _
    $region33: #{attention_block_forward.1} parent=1 // pred_fallthru
      _
    // Predicated region
    $region34: #{attention_block_forward.1} parent=1 // pred_check
      _
    $region35: #{attention_block_forward.1} parent=1 // pred_check_branch
      %49 = sbr.rel (0) target = $region37
    $region36: #{attention_block_forward.1} parent=1 // pred_region
      _
    $region37: #{attention_block_forward.1} parent=1 // pred_fallthru
      _
    // Predicated region
    $region38: #{attention_block_forward.1} parent=1 // pred_check
      _
    $region39: #{attention_block_forward.1} parent=1 // pred_check_branch
      %51 = sbr.rel (0) target = $region41
    $region40: #{attention_block_forward.1} parent=1 // pred_region
      _
    $region41: #{attention_block_forward.1} parent=1 // pred_fallthru
      _
    // Predicated region
    $region42: #{attention_block_forward.1} parent=1 // pred_check
      _
    $region43: #{attention_block_forward.1} parent=1 // pred_check_branch
      %53 = sbr.rel (0) target = $region45
    $region44: #{attention_block_forward.1} parent=1 // pred_region
      _
    $region45: #{attention_block_forward.1} parent=1 // pred_fallthru
      _
    // Predicated region
    $region46: #{attention_block_forward.1} parent=1 // pred_check
      _
    $region47: #{attention_block_forward.1} parent=1 // pred_check_branch
      %55 = sbr.rel (0) target = $region49
    $region48: #{attention_block_forward.1} parent=1 // pred_region
      _
    $region49: #{attention_block_forward.1} parent=1 // pred_fallthru
      _
    // Predicated region
    $region50: #{attention_block_forward.1} parent=1 // pred_check
      _
    $region51: #{attention_block_forward.1} parent=1 // pred_check_branch
      %57 = sbr.rel (0) target = $region53
    $region52: #{attention_block_forward.1} parent=1 // pred_region
      _
    $region53: #{attention_block_forward.1} parent=1 // pred_fallthru
      _
    // Predicated region
    $region54: #{attention_block_forward.1} parent=1 // pred_check
      _
    $region55: #{attention_block_forward.1} parent=1 // pred_check_branch
      %59 = sbr.rel (0) target = $region57
    $region56: #{attention_block_forward.1} parent=1 // pred_region
      _
    $region57: #{attention_block_forward.1} parent=1 // pred_fallthru
      _
    // Predicated region
    $region58: #{attention_block_forward.1} parent=1 // pred_check
      _
    $region59: #{attention_block_forward.1} parent=1 // pred_check_branch
      %61 = sbr.rel (0) target = $region61
    $region60: #{attention_block_forward.1} parent=1 // pred_region
      _
    $region61: #{attention_block_forward.1} parent=1 // pred_fallthru
      _
    // Predicated region
    $region62: #{attention_block_forward.1} parent=1 // pred_check
      _
    $region63: #{attention_block_forward.1} parent=1 // pred_check_branch
      %63 = sbr.rel (0) target = $region65
    $region64: #{attention_block_forward.1} parent=1 // pred_region
      _
    $region65: #{attention_block_forward.1} parent=1 // pred_fallthru
      _
    // Predicated region
    $region66: #{attention_block_forward.1} parent=1 // pred_check
      _
    $region67: #{attention_block_forward.1} parent=1 // pred_check_branch
      %65 = sbr.rel (0) target = $region69
    $region68: #{attention_block_forward.1} parent=1 // pred_region
      _
    $region69: #{attention_block_forward.1} parent=1 // pred_fallthru
      _
    // Predicated region
    $region70: #{attention_block_forward.1} parent=1 // pred_check
      _
    $region71: #{attention_block_forward.1} parent=1 // pred_check_branch
      %67 = sbr.rel (0) target = $region73
    $region72: #{attention_block_forward.1} parent=1 // pred_region
      _
    $region73: #{attention_block_forward.1} parent=1 // pred_fallthru
      _
    // Predicated region
    $region74: #{attention_block_forward.1} parent=1 // pred_check
      _
    $region75: #{attention_block_forward.1} parent=1 // pred_check_branch
      %69 = sbr.rel (0) target = $region77
    $region76: #{attention_block_forward.1} parent=1 // pred_region
      _
    $region77: #{attention_block_forward.1} parent=1 // pred_fallthru
      _
    %v70 = vld [vmem:[%s17] sm:$0x1]
    %v71 = vld [vmem:[%s18] sm:$0x1]
    %v72 = vld [vmem:[%s0] sm:$0xff]
    %v73 = vld [vmem:[%s0 + $0x8] sm:$0xff]
    %v74 = vld [vmem:[%s1] sm:$0xff]
    %v75 = vld [vmem:[%s1 + $0x8] sm:$0xff]
    %v76 = vld [vmem:[%s2] sm:$0xff]
    %v77 = vld [vmem:[%s2 + $0x8] sm:$0xff]
    %v78 = vld [vmem:[%s3] sm:$0xff]
    %v79 = vld [vmem:[%s3 + $0x8] sm:$0xff]
    %v80 = vld [vmem:[%s9] sm:$0xff]
    %v81 = vld [vmem:[%s9 + $0x8] sm:$0xff]
    %v82 = vld [vmem:[%s9 + $0x10] sm:$0xff]
    %v83 = vld [vmem:[%s9 + $0x18] sm:$0xff]
    %v84 = vld [vmem:[%s10] sm:$0x1]
    %v86 = vlaneseq
    %v87 = vshrl.u32 %v86, 7
    %v88 = vsub.s32 0, %v87
    %v89 = vrot.slane %v84, %v88
    %vm91 = vcmask 261120
    %v93 = vsel %vm91, %v72, 0
    %v96 = vsel %vm91, %v73, 0
    %98 = vmatprep.subr.mxu0 0.0
    %99 = vmatpush1.msra.mxu0 %v80
    %100 = vmatprep.subr.mxu0 0.0
    %101 = vmatpush1.msra.mxu0 %v81
    %102 = vmatprep.subr.mxu0 0.0
    %103 = vmatpush1.msra.mxu0 %v82
    %104 = vmatprep.subr.mxu0 0.0
    %105 = vmatpush1.msra.mxu0 %v83
    %106 = vmatprep.subr.mxu0 0.0
    %107 = vmatpush1.msra.mxu0 0.0
    %108 = vmatprep.subr.mxu0 0.0
    %109 = vmatpush1.msra.mxu0 0.0
    %110 = vmatprep.subr.mxu0 0.0
    %111 = vmatpush1.msra.mxu0 0.0
    %112 = vmatprep.subr.mxu0 0.0
    %113 = vmatpush1.msra.mxu0 0.0
    %114 = vmatprep.subr.mxu0 0.0
    %115 = vmatpush1.msra.mxu0 0.0
    %116 = vmatprep.subr.mxu0 0.0
    %117 = vmatpush1.msra.mxu0 0.0
    %118 = vmatprep.subr.mxu0 0.0
    %119 = vmatpush1.msra.mxu0 0.0
    %120 = vmatprep.subr.mxu0 0.0
    %121 = vmatpush1.msra.mxu0 0.0
    %122 = vmatprep.subr.mxu0 0.0
    %123 = vmatpush1.msra.mxu0 0.0
    %124 = vmatprep.subr.mxu0 0.0
    %125 = vmatpush1.msra.mxu0 0.0
    %126 = vmatprep.subr.mxu0 0.0
    %127 = vmatpush1.msra.mxu0 0.0
    %128 = vmatprep.subr.mxu0 0.0
    %129 = vmatpush1.msra.mxu0 0.0
    %130 = vmatprep.subr.mxu0 0.0
    %131 = vmatpush1.msra.mxu0 0.0
    %132 = vmatprep.subr.mxu0 0.0
    %133 = vmatpush1.msra.mxu0 0.0
    %134 = vmatprep.subr.mxu0 0.0
    %135 = vmatpush1.msra.mxu0 0.0
    %136 = vmatprep.subr.mxu0 0.0
    %137 = vmatpush1.msra.mxu0 0.0
    %138 = vmatprep.subr.mxu0 0.0
    %139 = vmatpush1.msra.mxu0 0.0
    %140 = vmatprep.subr.mxu0 0.0
    %141 = vmatpush1.msra.mxu0 0.0
    %142 = vmatprep.subr.mxu0 0.0
    %143 = vmatpush1.msra.mxu0 0.0
    %144 = vmatprep.subr.mxu0 0.0
    %145 = vmatpush1.msra.mxu0 0.0
    %146 = vmatprep.subr.mxu0 0.0
    %147 = vmatpush1.msra.mxu0 0.0
    %148 = vmatprep.subr.mxu0 0.0
    %149 = vmatpush1.msra.mxu0 0.0
    %150 = vmatprep.subr.mxu0 0.0
    %151 = vmatpush1.msra.mxu0 0.0
    %152 = vmatprep.subr.mxu0 0.0
    %153 = vmatpush1.msra.mxu0 0.0
    %154 = vmatprep.subr.mxu0 0.0
    %155 = vmatpush1.msra.mxu0 0.0
    %156 = vmatprep.subr.mxu0 0.0
    %157 = vmatpush1.msra.mxu0 0.0
    %158 = vmatprep.subr.mxu0 0.0
    %159 = vmatpush1.msra.mxu0 0.0
    %160 = vmatprep.subr.mxu0 0.0
    %161 = vmatpush1.msra.mxu0 0.0
    %162 = vmatprep.mubr.f32.mxu0 0.0
    %163 = vmatmul.mubr.f32.gmra.mrb[0].mxu0 %v93
    %v164 = vpop.f32.mrb[0].mxu0
    %v165 = vadd.f32 %v89, %v164
    %v166 = vpop.f32.mrb[0].mxu0
    %167 = vmatprep.mubr.f32.mxu0 0.0
    %168 = vmatmul.mubr.f32.gmra.mrb[0].mxu0 %v96
    %v169 = vpop.f32.mrb[0].mxu0
    %v170 = vadd.f32 %v89, %v169
    %v171 = vpop.f32.mrb[0].mxu0
    %172 = vdwg.mxu0
    %v173 = vmul.f32 %v165, 0.35355338
    %v174 = vmul.f32 %v170, 0.35355338
    %177 = vrot.lane.b32.xlu0 %v165, 96
    %v178 = vpop.permute.xlu0 %177
    %179 = vrot.lane.b32.xlu0 %v170, 96
    %v180 = vpop.permute.xlu0 %179
    %vm181 = vcmask 64512
    %v183 = vsel %vm181, %v173, 0
    %v186 = vsel %vm181, %v174, 0
    %v188 = vsel %vm181, %v178, 0
    %v190 = vsel %vm181, %v180, 0
    %192 = vmatprep.subr.mxu0 0.0
    %193 = vmatpush1.xpose.msra.mxu0 %v188
    %194 = vmatprep.subr.mxu0 0.0
    %195 = vmatpush1.xpose.msra.mxu0 %v190
    %196 = vmatprep.subr.mxu0 0.0
    %197 = vmatpush1.xpose.msra.mxu0 0.0
    %198 = vmatprep.subr.mxu0 0.0
    %199 = vmatpush1.xpose.msra.mxu0 0.0
    %200 = vmatprep.subr.mxu0 0.0
    %201 = vmatpush1.xpose.msra.mxu0 0.0
    %202 = vmatprep.subr.mxu0 0.0
    %203 = vmatpush1.xpose.msra.mxu0 0.0
    %204 = vmatprep.subr.mxu0 0.0
    %205 = vmatpush1.xpose.msra.mxu0 0.0
    %206 = vmatprep.subr.mxu0 0.0
    %207 = vmatpush1.xpose.msra.mxu0 0.0
    %208 = vmatprep.subr.mxu0 0.0
    %209 = vmatpush1.xpose.msra.mxu0 0.0
    %210 = vmatprep.subr.mxu0 0.0
    %211 = vmatpush1.xpose.msra.mxu0 0.0
    %212 = vmatprep.subr.mxu0 0.0
    %213 = vmatpush1.xpose.msra.mxu0 0.0
    %214 = vmatprep.subr.mxu0 0.0
    %215 = vmatpush1.xpose.msra.mxu0 0.0
    %216 = vmatprep.subr.mxu0 0.0
    %217 = vmatpush1.xpose.msra.mxu0 0.0
    %218 = vmatprep.subr.mxu0 0.0
    %219 = vmatpush1.xpose.msra.mxu0 0.0
    %220 = vmatprep.subr.mxu0 0.0
    %221 = vmatpush1.xpose.msra.mxu0 0.0
    %222 = vmatprep.subr.mxu0 0.0
    %223 = vmatpush1.xpose.msra.mxu0 0.0
    %224 = vmatprep.subr.mxu0 0.0
    %225 = vmatpush1.xpose.msra.mxu0 0.0
    %226 = vmatprep.subr.mxu0 0.0
    %227 = vmatpush1.xpose.msra.mxu0 0.0
    %228 = vmatprep.subr.mxu0 0.0
    %229 = vmatpush1.xpose.msra.mxu0 0.0
    %230 = vmatprep.subr.mxu0 0.0
    %231 = vmatpush1.xpose.msra.mxu0 0.0
    %232 = vmatprep.subr.mxu0 0.0
    %233 = vmatpush1.xpose.msra.mxu0 0.0
    %234 = vmatprep.subr.mxu0 0.0
    %235 = vmatpush1.xpose.msra.mxu0 0.0
    %236 = vmatprep.subr.mxu0 0.0
    %237 = vmatpush1.xpose.msra.mxu0 0.0
    %238 = vmatprep.subr.mxu0 0.0
    %239 = vmatpush1.xpose.msra.mxu0 0.0
    %240 = vmatprep.subr.mxu0 0.0
    %241 = vmatpush1.xpose.msra.mxu0 0.0
    %242 = vmatprep.subr.mxu0 0.0
    %243 = vmatpush1.xpose.msra.mxu0 0.0
    %244 = vmatprep.subr.mxu0 0.0
    %245 = vmatpush1.xpose.msra.mxu0 0.0
    %246 = vmatprep.subr.mxu0 0.0
    %247 = vmatpush1.xpose.msra.mxu0 0.0
    %248 = vmatprep.subr.mxu0 0.0
    %249 = vmatpush1.xpose.msra.mxu0 0.0
    %250 = vmatprep.subr.mxu0 0.0
    %251 = vmatpush1.xpose.msra.mxu0 0.0
    %252 = vmatprep.subr.mxu0 0.0
    %253 = vmatpush1.xpose.msra.mxu0 0.0
    %254 = vmatprep.subr.mxu0 0.0
    %255 = vmatpush1.xpose.msra.mxu0 0.0
    %256 = vmatprep.mubr.f32.mxu0 0.0
    %257 = vmatmul.mubr.f32.gmra.mrb[0].mxu0 %v183
    %v258 = vpop.f32.mrb[0].mxu0
    %v259 = vadd.f32 %v78, %v258
    %v260 = vpop.f32.mrb[0].mxu0
    %261 = vmatprep.mubr.f32.mxu0 0.0
    %262 = vmatmul.mubr.f32.gmra.mrb[0].mxu0 %v186
    %v263 = vpop.f32.mrb[0].mxu0
    %v264 = vadd.f32 %v79, %v263
    %v265 = vpop.f32.mrb[0].mxu0
    %266 = vdwg.mxu0
    %vm267 = vcmask 130048
    %v268 = vsel %vm267, %v259, -inf
    %269 = vmax.xlane.f32.xlu0 %v268
    %v270 = vpop.xlane.xlu0 %269
    %v271 = vsel %vm267, %v264, -inf
    %272 = vmax.xlane.f32.xlu0 %v271
    %v273 = vpop.xlane.xlu0 %272
    %v274 = vsub.f32 %v259, %v270
    %v275 = vsub.f32 %v264, %v273
    %v276 = vmul.f32 %v274, 1.442695
    %v277 = vpow.pop %v276
    %v278 = vmul.f32 %v275, 1.442695
    %v279 = vpow.pop %v278
    %v280 = vsel %vm267, %v277, 0.0
    %281 = vadd.xlane.f32.xlu0 %v280
    %v282 = vpop.xlane.xlu0 %281
    %v283 = vsel %vm267, %v279, 0.0
    %284 = vadd.xlane.f32.xlu0 %v283
    %v285 = vpop.xlane.xlu0 %284
    %v286 = vrcp.pop %v282
    %v287 = vmul.f32 %v277, %v286
    %v288 = vrcp.pop %v285
    %v289 = vmul.f32 %v279, %v288
    %290 = vrot.lane.b32.xlu0 %v165, 64
    %v291 = vpop.permute.xlu0 %290
    %292 = vrot.lane.b32.xlu0 %v170, 64
    %v293 = vpop.permute.xlu0 %292
    %v297 = vsel %vm267, %v287, 0
    %v300 = vsel %vm267, %v289, 0
    %302 = vmatprep.subr.mxu0 0.0
    %303 = vmatpush1.msra.mxu0 %v291
    %304 = vmatprep.subr.mxu0 0.0
    %305 = vmatpush1.msra.mxu0 %v293
    %306 = vmatprep.subr.mxu0 0.0
    %307 = vmatpush1.msra.mxu0 0.0
    %308 = vmatprep.subr.mxu0 0.0
    %309 = vmatpush1.msra.mxu0 0.0
    %310 = vmatprep.subr.mxu0 0.0
    %311 = vmatpush1.msra.mxu0 0.0
    %312 = vmatprep.subr.mxu0 0.0
    %313 = vmatpush1.msra.mxu0 0.0
    %314 = vmatprep.subr.mxu0 0.0
    %315 = vmatpush1.msra.mxu0 0.0
    %316 = vmatprep.subr.mxu0 0.0
    %317 = vmatpush1.msra.mxu0 0.0
    %318 = vmatprep.subr.mxu0 0.0
    %319 = vmatpush1.msra.mxu0 0.0
    %320 = vmatprep.subr.mxu0 0.0
    %321 = vmatpush1.msra.mxu0 0.0
    %322 = vmatprep.subr.mxu0 0.0
    %323 = vmatpush1.msra.mxu0 0.0
    %324 = vmatprep.subr.mxu0 0.0
    %325 = vmatpush1.msra.mxu0 0.0
    %326 = vmatprep.subr.mxu0 0.0
    %327 = vmatpush1.msra.mxu0 0.0
    %328 = vmatprep.subr.mxu0 0.0
    %329 = vmatpush1.msra.mxu0 0.0
    %330 = vmatprep.subr.mxu0 0.0
    %331 = vmatpush1.msra.mxu0 0.0
    %332 = vmatprep.subr.mxu0 0.0
    %333 = vmatpush1.msra.mxu0 0.0
    %334 = vmatprep.subr.mxu0 0.0
    %335 = vmatpush1.msra.mxu0 0.0
    %336 = vmatprep.subr.mxu0 0.0
    %337 = vmatpush1.msra.mxu0 0.0
    %338 = vmatprep.subr.mxu0 0.0
    %339 = vmatpush1.msra.mxu0 0.0
    %340 = vmatprep.subr.mxu0 0.0
    %341 = vmatpush1.msra.mxu0 0.0
    %342 = vmatprep.subr.mxu0 0.0
    %343 = vmatpush1.msra.mxu0 0.0
    %344 = vmatprep.subr.mxu0 0.0
    %345 = vmatpush1.msra.mxu0 0.0
    %346 = vmatprep.subr.mxu0 0.0
    %347 = vmatpush1.msra.mxu0 0.0
    %348 = vmatprep.subr.mxu0 0.0
    %349 = vmatpush1.msra.mxu0 0.0
    %350 = vmatprep.subr.mxu0 0.0
    %351 = vmatpush1.msra.mxu0 0.0
    %352 = vmatprep.subr.mxu0 0.0
    %353 = vmatpush1.msra.mxu0 0.0
    %354 = vmatprep.subr.mxu0 0.0
    %355 = vmatpush1.msra.mxu0 0.0
    %356 = vmatprep.subr.mxu0 0.0
    %357 = vmatpush1.msra.mxu0 0.0
    %358 = vmatprep.subr.mxu0 0.0
    %359 = vmatpush1.msra.mxu0 0.0
    %360 = vmatprep.subr.mxu0 0.0
    %361 = vmatpush1.msra.mxu0 0.0
    %362 = vmatprep.subr.mxu0 0.0
    %363 = vmatpush1.msra.mxu0 0.0
    %364 = vmatprep.subr.mxu0 0.0
    %365 = vmatpush1.msra.mxu0 0.0
    %366 = vmatprep.mubr.f32.mxu0 0.0
    %367 = vmatmul.mubr.f32.gmra.mrb[0].mxu0 %v297
    %v368 = vpop.f32.mrb[0].mxu0
    %v369 = vadd.f32 0.0, %v368
    %v370 = vpop.f32.mrb[0].mxu0
    %371 = vmatprep.mubr.f32.mxu0 0.0
    %372 = vmatmul.mubr.f32.gmra.mrb[0].mxu0 %v300
    %v373 = vpop.f32.mrb[0].mxu0
    %v374 = vadd.f32 0.0, %v373
    %v375 = vpop.f32.mrb[0].mxu0
    %376 = vdwg.mxu0
    %377 = vrot.lane.b32.xlu0 %v173, 120
    %v378 = vpop.permute.xlu0 %377
    %379 = vrot.lane.b32.xlu0 %v174, 120
    %v380 = vpop.permute.xlu0 %379
    %381 = vrot.lane.b32.xlu0 %v165, 88
    %v382 = vpop.permute.xlu0 %381
    %383 = vrot.lane.b32.xlu0 %v170, 88
    %v384 = vpop.permute.xlu0 %383
    %v385 = vsel %vm181, %v378, 0
    %v387 = vsel %vm181, %v380, 0
    %v389 = vsel %vm181, %v382, 0
    %v391 = vsel %vm181, %v384, 0
    %393 = vmatprep.subr.mxu0 0.0
    %394 = vmatpush1.xpose.msra.mxu0 %v389
    %395 = vmatprep.subr.mxu0 0.0
    %396 = vmatpush1.xpose.msra.mxu0 %v391
    %397 = vmatprep.subr.mxu0 0.0
    %398 = vmatpush1.xpose.msra.mxu0 0.0
    %399 = vmatprep.subr.mxu0 0.0
    %400 = vmatpush1.xpose.msra.mxu0 0.0
    %401 = vmatprep.subr.mxu0 0.0
    %402 = vmatpush1.xpose.msra.mxu0 0.0
    %403 = vmatprep.subr.mxu0 0.0
    %404 = vmatpush1.xpose.msra.mxu0 0.0
    %405 = vmatprep.subr.mxu0 0.0
    %406 = vmatpush1.xpose.msra.mxu0 0.0
    %407 = vmatprep.subr.mxu0 0.0
    %408 = vmatpush1.xpose.msra.mxu0 0.0
    %409 = vmatprep.subr.mxu0 0.0
    %410 = vmatpush1.xpose.msra.mxu0 0.0
    %411 = vmatprep.subr.mxu0 0.0
    %412 = vmatpush1.xpose.msra.mxu0 0.0
    %413 = vmatprep.subr.mxu0 0.0
    %414 = vmatpush1.xpose.msra.mxu0 0.0
    %415 = vmatprep.subr.mxu0 0.0
    %416 = vmatpush1.xpose.msra.mxu0 0.0
    %417 = vmatprep.subr.mxu0 0.0
    %418 = vmatpush1.xpose.msra.mxu0 0.0
    %419 = vmatprep.subr.mxu0 0.0
    %420 = vmatpush1.xpose.msra.mxu0 0.0
    %421 = vmatprep.subr.mxu0 0.0
    %422 = vmatpush1.xpose.msra.mxu0 0.0
    %423 = vmatprep.subr.mxu0 0.0
    %424 = vmatpush1.xpose.msra.mxu0 0.0
    %425 = vmatprep.subr.mxu0 0.0
    %426 = vmatpush1.xpose.msra.mxu0 0.0
    %427 = vmatprep.subr.mxu0 0.0
    %428 = vmatpush1.xpose.msra.mxu0 0.0
    %429 = vmatprep.subr.mxu0 0.0
    %430 = vmatpush1.xpose.msra.mxu0 0.0
    %431 = vmatprep.subr.mxu0 0.0
    %432 = vmatpush1.xpose.msra.mxu0 0.0
    %433 = vmatprep.subr.mxu0 0.0
    %434 = vmatpush1.xpose.msra.mxu0 0.0
    %435 = vmatprep.subr.mxu0 0.0
    %436 = vmatpush1.xpose.msra.mxu0 0.0
    %437 = vmatprep.subr.mxu0 0.0
    %438 = vmatpush1.xpose.msra.mxu0 0.0
    %439 = vmatprep.subr.mxu0 0.0
    %440 = vmatpush1.xpose.msra.mxu0 0.0
    %441 = vmatprep.subr.mxu0 0.0
    %442 = vmatpush1.xpose.msra.mxu0 0.0
    %443 = vmatprep.subr.mxu0 0.0
    %444 = vmatpush1.xpose.msra.mxu0 0.0
    %445 = vmatprep.subr.mxu0 0.0
    %446 = vmatpush1.xpose.msra.mxu0 0.0
    %447 = vmatprep.subr.mxu0 0.0
    %448 = vmatpush1.xpose.msra.mxu0 0.0
    %449 = vmatprep.subr.mxu0 0.0
    %450 = vmatpush1.xpose.msra.mxu0 0.0
    %451 = vmatprep.subr.mxu0 0.0
    %452 = vmatpush1.xpose.msra.mxu0 0.0
    %453 = vmatprep.subr.mxu0 0.0
    %454 = vmatpush1.xpose.msra.mxu0 0.0
    %455 = vmatprep.subr.mxu0 0.0
    %456 = vmatpush1.xpose.msra.mxu0 0.0
    %457 = vmatprep.mubr.f32.mxu0 0.0
    %458 = vmatmul.mubr.f32.gmra.mrb[0].mxu0 %v385
    %v459 = vpop.f32.mrb[0].mxu0
    %v460 = vadd.f32 %v78, %v459
    %v461 = vpop.f32.mrb[0].mxu0
    %462 = vmatprep.mubr.f32.mxu0 0.0
    %463 = vmatmul.mubr.f32.gmra.mrb[0].mxu0 %v387
    %v464 = vpop.f32.mrb[0].mxu0
    %v465 = vadd.f32 %v79, %v464
    %v466 = vpop.f32.mrb[0].mxu0
    %467 = vdwg.mxu0
    %v468 = vsel %vm267, %v460, -inf
    %469 = vmax.xlane.f32.xlu0 %v468
    %v470 = vpop.xlane.xlu0 %469
    %v471 = vsel %vm267, %v465, -inf
    %472 = vmax.xlane.f32.xlu0 %v471
    %v473 = vpop.xlane.xlu0 %472
    %v474 = vsub.f32 %v460, %v470
    %v475 = vsub.f32 %v465, %v473
    %v476 = vmul.f32 %v474, 1.442695
    %v477 = vpow.pop %v476
    %v478 = vmul.f32 %v475, 1.442695
    %v479 = vpow.pop %v478
    %v480 = vsel %vm267, %v477, 0.0
    %481 = vadd.xlane.f32.xlu0 %v480
    %v482 = vpop.xlane.xlu0 %481
    %v483 = vsel %vm267, %v479, 0.0
    %484 = vadd.xlane.f32.xlu0 %v483
    %v485 = vpop.xlane.xlu0 %484
    %v486 = vrcp.pop %v482
    %v487 = vmul.f32 %v477, %v486
    %v488 = vrcp.pop %v485
    %v489 = vmul.f32 %v479, %v488
    %490 = vrot.lane.b32.xlu0 %v165, 56
    %v491 = vpop.permute.xlu0 %490
    %492 = vrot.lane.b32.xlu0 %v170, 56
    %v493 = vpop.permute.xlu0 %492
    %v497 = vsel %vm267, %v487, 0
    %v500 = vsel %vm267, %v489, 0
    %502 = vmatprep.subr.mxu0 0.0
    %503 = vmatpush1.msra.mxu0 %v491
    %504 = vmatprep.subr.mxu0 0.0
    %505 = vmatpush1.msra.mxu0 %v493
    %506 = vmatprep.subr.mxu0 0.0
    %507 = vmatpush1.msra.mxu0 0.0
    %508 = vmatprep.subr.mxu0 0.0
    %509 = vmatpush1.msra.mxu0 0.0
    %510 = vmatprep.subr.mxu0 0.0
    %511 = vmatpush1.msra.mxu0 0.0
    %512 = vmatprep.subr.mxu0 0.0
    %513 = vmatpush1.msra.mxu0 0.0
    %514 = vmatprep.subr.mxu0 0.0
    %515 = vmatpush1.msra.mxu0 0.0
    %516 = vmatprep.subr.mxu0 0.0
    %517 = vmatpush1.msra.mxu0 0.0
    %518 = vmatprep.subr.mxu0 0.0
    %519 = vmatpush1.msra.mxu0 0.0
    %520 = vmatprep.subr.mxu0 0.0
    %521 = vmatpush1.msra.mxu0 0.0
    %522 = vmatprep.subr.mxu0 0.0
    %523 = vmatpush1.msra.mxu0 0.0
    %524 = vmatprep.subr.mxu0 0.0
    %525 = vmatpush1.msra.mxu0 0.0
    %526 = vmatprep.subr.mxu0 0.0
    %527 = vmatpush1.msra.mxu0 0.0
    %528 = vmatprep.subr.mxu0 0.0
    %529 = vmatpush1.msra.mxu0 0.0
    %530 = vmatprep.subr.mxu0 0.0
    %531 = vmatpush1.msra.mxu0 0.0
    %532 = vmatprep.subr.mxu0 0.0
    %533 = vmatpush1.msra.mxu0 0.0
    %534 = vmatprep.subr.mxu0 0.0
    %535 = vmatpush1.msra.mxu0 0.0
    %536 = vmatprep.subr.mxu0 0.0
    %537 = vmatpush1.msra.mxu0 0.0
    %538 = vmatprep.subr.mxu0 0.0
    %539 = vmatpush1.msra.mxu0 0.0
    %540 = vmatprep.subr.mxu0 0.0
    %541 = vmatpush1.msra.mxu0 0.0
    %542 = vmatprep.subr.mxu0 0.0
    %543 = vmatpush1.msra.mxu0 0.0
    %544 = vmatprep.subr.mxu0 0.0
    %545 = vmatpush1.msra.mxu0 0.0
    %546 = vmatprep.subr.mxu0 0.0
    %547 = vmatpush1.msra.mxu0 0.0
    %548 = vmatprep.subr.mxu0 0.0
    %549 = vmatpush1.msra.mxu0 0.0
    %550 = vmatprep.subr.mxu0 0.0
    %551 = vmatpush1.msra.mxu0 0.0
    %552 = vmatprep.subr.mxu0 0.0
    %553 = vmatpush1.msra.mxu0 0.0
    %554 = vmatprep.subr.mxu0 0.0
    %555 = vmatpush1.msra.mxu0 0.0
    %556 = vmatprep.subr.mxu0 0.0
    %557 = vmatpush1.msra.mxu0 0.0
    %558 = vmatprep.subr.mxu0 0.0
    %559 = vmatpush1.msra.mxu0 0.0
    %560 = vmatprep.subr.mxu0 0.0
    %561 = vmatpush1.msra.mxu0 0.0
    %562 = vmatprep.subr.mxu0 0.0
    %563 = vmatpush1.msra.mxu0 0.0
    %564 = vmatprep.subr.mxu0 0.0
    %565 = vmatpush1.msra.mxu0 0.0
    %566 = vmatprep.mubr.f32.mxu0 0.0
    %567 = vmatmul.mubr.f32.gmra.mrb[0].mxu0 %v497
    %v568 = vpop.f32.mrb[0].mxu0
    %v569 = vadd.f32 0.0, %v568
    %v570 = vpop.f32.mrb[0].mxu0
    %571 = vmatprep.mubr.f32.mxu0 0.0
    %572 = vmatmul.mubr.f32.gmra.mrb[0].mxu0 %v500
    %v573 = vpop.f32.mrb[0].mxu0
    %v574 = vadd.f32 0.0, %v573
    %v575 = vpop.f32.mrb[0].mxu0
    %576 = vdwg.mxu0
    %577 = vrot.lane.b32.xlu0 %v173, 112
    %v578 = vpop.permute.xlu0 %577
    %579 = vrot.lane.b32.xlu0 %v174, 112
    %v580 = vpop.permute.xlu0 %579
    %581 = vrot.lane.b32.xlu0 %v165, 80
    %v582 = vpop.permute.xlu0 %581
    %583 = vrot.lane.b32.xlu0 %v170, 80
    %v584 = vpop.permute.xlu0 %583
    %v585 = vsel %vm181, %v578, 0
    %v587 = vsel %vm181, %v580, 0
    %v589 = vsel %vm181, %v582, 0
    %v591 = vsel %vm181, %v584, 0
    %593 = vmatprep.subr.mxu0 0.0
    %594 = vmatpush1.xpose.msra.mxu0 %v589
    %595 = vmatprep.subr.mxu0 0.0
    %596 = vmatpush1.xpose.msra.mxu0 %v591
    %597 = vmatprep.subr.mxu0 0.0
    %598 = vmatpush1.xpose.msra.mxu0 0.0
    %599 = vmatprep.subr.mxu0 0.0
    %600 = vmatpush1.xpose.msra.mxu0 0.0
    %601 = vmatprep.subr.mxu0 0.0
    %602 = vmatpush1.xpose.msra.mxu0 0.0
    %603 = vmatprep.subr.mxu0 0.0
    %604 = vmatpush1.xpose.msra.mxu0 0.0
    %605 = vmatprep.subr.mxu0 0.0
    %606 = vmatpush1.xpose.msra.mxu0 0.0
    %607 = vmatprep.subr.mxu0 0.0
    %608 = vmatpush1.xpose.msra.mxu0 0.0
    %609 = vmatprep.subr.mxu0 0.0
    %610 = vmatpush1.xpose.msra.mxu0 0.0
    %611 = vmatprep.subr.mxu0 0.0
    %612 = vmatpush1.xpose.msra.mxu0 0.0
    %613 = vmatprep.subr.mxu0 0.0
    %614 = vmatpush1.xpose.msra.mxu0 0.0
    %615 = vmatprep.subr.mxu0 0.0
    %616 = vmatpush1.xpose.msra.mxu0 0.0
    %617 = vmatprep.subr.mxu0 0.0
    %618 = vmatpush1.xpose.msra.mxu0 0.0
    %619 = vmatprep.subr.mxu0 0.0
    %620 = vmatpush1.xpose.msra.mxu0 0.0
    %621 = vmatprep.subr.mxu0 0.0
    %622 = vmatpush1.xpose.msra.mxu0 0.0
    %623 = vmatprep.subr.mxu0 0.0
    %624 = vmatpush1.xpose.msra.mxu0 0.0
    %625 = vmatprep.subr.mxu0 0.0
    %626 = vmatpush1.xpose.msra.mxu0 0.0
    %627 = vmatprep.subr.mxu0 0.0
    %628 = vmatpush1.xpose.msra.mxu0 0.0
    %629 = vmatprep.subr.mxu0 0.0
    %630 = vmatpush1.xpose.msra.mxu0 0.0
    %631 = vmatprep.subr.mxu0 0.0
    %632 = vmatpush1.xpose.msra.mxu0 0.0
    %633 = vmatprep.subr.mxu0 0.0
    %634 = vmatpush1.xpose.msra.mxu0 0.0
    %635 = vmatprep.subr.mxu0 0.0
    %636 = vmatpush1.xpose.msra.mxu0 0.0
    %637 = vmatprep.subr.mxu0 0.0
    %638 = vmatpush1.xpose.msra.mxu0 0.0
    %639 = vmatprep.subr.mxu0 0.0
    %640 = vmatpush1.xpose.msra.mxu0 0.0
    %641 = vmatprep.subr.mxu0 0.0
    %642 = vmatpush1.xpose.msra.mxu0 0.0
    %643 = vmatprep.subr.mxu0 0.0
    %644 = vmatpush1.xpose.msra.mxu0 0.0
    %645 = vmatprep.subr.mxu0 0.0
    %646 = vmatpush1.xpose.msra.mxu0 0.0
    %647 = vmatprep.subr.mxu0 0.0
    %648 = vmatpush1.xpose.msra.mxu0 0.0
    %649 = vmatprep.subr.mxu0 0.0
    %650 = vmatpush1.xpose.msra.mxu0 0.0
    %651 = vmatprep.subr.mxu0 0.0
    %652 = vmatpush1.xpose.msra.mxu0 0.0
    %653 = vmatprep.subr.mxu0 0.0
    %654 = vmatpush1.xpose.msra.mxu0 0.0
    %655 = vmatprep.subr.mxu0 0.0
    %656 = vmatpush1.xpose.msra.mxu0 0.0
    %657 = vmatprep.mubr.f32.mxu0 0.0
    %658 = vmatmul.mubr.f32.gmra.mrb[0].mxu0 %v585
    %v659 = vpop.f32.mrb[0].mxu0
    %v660 = vadd.f32 %v78, %v659
    %v661 = vpop.f32.mrb[0].mxu0
    %662 = vmatprep.mubr.f32.mxu0 0.0
    %663 = vmatmul.mubr.f32.gmra.mrb[0].mxu0 %v587
    %v664 = vpop.f32.mrb[0].mxu0
    %v665 = vadd.f32 %v79, %v664
    %v666 = vpop.f32.mrb[0].mxu0
    %667 = vdwg.mxu0
    %v668 = vsel %vm267, %v660, -inf
    %669 = vmax.xlane.f32.xlu0 %v668
    %v670 = vpop.xlane.xlu0 %669
    %v671 = vsel %vm267, %v665, -inf
    %672 = vmax.xlane.f32.xlu0 %v671
    %v673 = vpop.xlane.xlu0 %672
    %v674 = vsub.f32 %v660, %v670
    %v675 = vsub.f32 %v665, %v673
    %v676 = vmul.f32 %v674, 1.442695
    %v677 = vpow.pop %v676
    %v678 = vmul.f32 %v675, 1.442695
    %v679 = vpow.pop %v678
    %v680 = vsel %vm267, %v677, 0.0
    %681 = vadd.xlane.f32.xlu0 %v680
    %v682 = vpop.xlane.xlu0 %681
    %v683 = vsel %vm267, %v679, 0.0
    %684 = vadd.xlane.f32.xlu0 %v683
    %v685 = vpop.xlane.xlu0 %684
    %v686 = vrcp.pop %v682
    %v687 = vmul.f32 %v677, %v686
    %v688 = vrcp.pop %v685
    %v689 = vmul.f32 %v679, %v688
    %690 = vrot.lane.b32.xlu0 %v165, 48
    %v691 = vpop.permute.xlu0 %690
    %692 = vrot.lane.b32.xlu0 %v170, 48
    %v693 = vpop.permute.xlu0 %692
    %v697 = vsel %vm267, %v687, 0
    %v700 = vsel %vm267, %v689, 0
    %702 = vmatprep.subr.mxu0 0.0
    %703 = vmatpush1.msra.mxu0 %v691
    %704 = vmatprep.subr.mxu0 0.0
    %705 = vmatpush1.msra.mxu0 %v693
    %706 = vmatprep.subr.mxu0 0.0
    %707 = vmatpush1.msra.mxu0 0.0
    %708 = vmatprep.subr.mxu0 0.0
    %709 = vmatpush1.msra.mxu0 0.0
    %710 = vmatprep.subr.mxu0 0.0
    %711 = vmatpush1.msra.mxu0 0.0
    %712 = vmatprep.subr.mxu0 0.0
    %713 = vmatpush1.msra.mxu0 0.0
    %714 = vmatprep.subr.mxu0 0.0
    %715 = vmatpush1.msra.mxu0 0.0
    %716 = vmatprep.subr.mxu0 0.0
    %717 = vmatpush1.msra.mxu0 0.0
    %718 = vmatprep.subr.mxu0 0.0
    %719 = vmatpush1.msra.mxu0 0.0
    %720 = vmatprep.subr.mxu0 0.0
    %721 = vmatpush1.msra.mxu0 0.0
    %722 = vmatprep.subr.mxu0 0.0
    %723 = vmatpush1.msra.mxu0 0.0
    %724 = vmatprep.subr.mxu0 0.0
    %725 = vmatpush1.msra.mxu0 0.0
    %726 = vmatprep.subr.mxu0 0.0
    %727 = vmatpush1.msra.mxu0 0.0
    %728 = vmatprep.subr.mxu0 0.0
    %729 = vmatpush1.msra.mxu0 0.0
    %730 = vmatprep.subr.mxu0 0.0
    %731 = vmatpush1.msra.mxu0 0.0
    %732 = vmatprep.subr.mxu0 0.0
    %733 = vmatpush1.msra.mxu0 0.0
    %734 = vmatprep.subr.mxu0 0.0
    %735 = vmatpush1.msra.mxu0 0.0
    %736 = vmatprep.subr.mxu0 0.0
    %737 = vmatpush1.msra.mxu0 0.0
    %738 = vmatprep.subr.mxu0 0.0
    %739 = vmatpush1.msra.mxu0 0.0
    %740 = vmatprep.subr.mxu0 0.0
    %741 = vmatpush1.msra.mxu0 0.0
    %742 = vmatprep.subr.mxu0 0.0
    %743 = vmatpush1.msra.mxu0 0.0
    %744 = vmatprep.subr.mxu0 0.0
    %745 = vmatpush1.msra.mxu0 0.0
    %746 = vmatprep.subr.mxu0 0.0
    %747 = vmatpush1.msra.mxu0 0.0
    %748 = vmatprep.subr.mxu0 0.0
    %749 = vmatpush1.msra.mxu0 0.0
    %750 = vmatprep.subr.mxu0 0.0
    %751 = vmatpush1.msra.mxu0 0.0
    %752 = vmatprep.subr.mxu0 0.0
    %753 = vmatpush1.msra.mxu0 0.0
    %754 = vmatprep.subr.mxu0 0.0
    %755 = vmatpush1.msra.mxu0 0.0
    %756 = vmatprep.subr.mxu0 0.0
    %757 = vmatpush1.msra.mxu0 0.0
    %758 = vmatprep.subr.mxu0 0.0
    %759 = vmatpush1.msra.mxu0 0.0
    %760 = vmatprep.subr.mxu0 0.0
    %761 = vmatpush1.msra.mxu0 0.0
    %762 = vmatprep.subr.mxu0 0.0
    %763 = vmatpush1.msra.mxu0 0.0
    %764 = vmatprep.subr.mxu0 0.0
    %765 = vmatpush1.msra.mxu0 0.0
    %766 = vmatprep.mubr.f32.mxu0 0.0
    %767 = vmatmul.mubr.f32.gmra.mrb[0].mxu0 %v697
    %v768 = vpop.f32.mrb[0].mxu0
    %v769 = vadd.f32 0.0, %v768
    %v770 = vpop.f32.mrb[0].mxu0
    %771 = vmatprep.mubr.f32.mxu0 0.0
    %772 = vmatmul.mubr.f32.gmra.mrb[0].mxu0 %v700
    %v773 = vpop.f32.mrb[0].mxu0
    %v774 = vadd.f32 0.0, %v773
    %v775 = vpop.f32.mrb[0].mxu0
    %776 = vdwg.mxu0
    %777 = vrot.lane.b32.xlu0 %v173, 104
    %v778 = vpop.permute.xlu0 %777
    %779 = vrot.lane.b32.xlu0 %v174, 104
    %v780 = vpop.permute.xlu0 %779
    %781 = vrot.lane.b32.xlu0 %v165, 72
    %v782 = vpop.permute.xlu0 %781
    %783 = vrot.lane.b32.xlu0 %v170, 72
    %v784 = vpop.permute.xlu0 %783
    %v785 = vsel %vm181, %v778, 0
    %v787 = vsel %vm181, %v780, 0
    %v789 = vsel %vm181, %v782, 0
    %v791 = vsel %vm181, %v784, 0
    %793 = vmatprep.subr.mxu0 0.0
    %794 = vmatpush1.xpose.msra.mxu0 %v789
    %795 = vmatprep.subr.mxu0 0.0
    %796 = vmatpush1.xpose.msra.mxu0 %v791
    %797 = vmatprep.subr.mxu0 0.0
    %798 = vmatpush1.xpose.msra.mxu0 0.0
    %799 = vmatprep.subr.mxu0 0.0
    %800 = vmatpush1.xpose.msra.mxu0 0.0
    %801 = vmatprep.subr.mxu0 0.0
    %802 = vmatpush1.xpose.msra.mxu0 0.0
    %803 = vmatprep.subr.mxu0 0.0
    %804 = vmatpush1.xpose.msra.mxu0 0.0
    %805 = vmatprep.subr.mxu0 0.0
    %806 = vmatpush1.xpose.msra.mxu0 0.0
    %807 = vmatprep.subr.mxu0 0.0
    %808 = vmatpush1.xpose.msra.mxu0 0.0
    %809 = vmatprep.subr.mxu0 0.0
    %810 = vmatpush1.xpose.msra.mxu0 0.0
    %811 = vmatprep.subr.mxu0 0.0
    %812 = vmatpush1.xpose.msra.mxu0 0.0
    %813 = vmatprep.subr.mxu0 0.0
    %814 = vmatpush1.xpose.msra.mxu0 0.0
    %815 = vmatprep.subr.mxu0 0.0
    %816 = vmatpush1.xpose.msra.mxu0 0.0
    %817 = vmatprep.subr.mxu0 0.0
    %818 = vmatpush1.xpose.msra.mxu0 0.0
    %819 = vmatprep.subr.mxu0 0.0
    %820 = vmatpush1.xpose.msra.mxu0 0.0
    %821 = vmatprep.subr.mxu0 0.0
    %822 = vmatpush1.xpose.msra.mxu0 0.0
    %823 = vmatprep.subr.mxu0 0.0
    %824 = vmatpush1.xpose.msra.mxu0 0.0
    %825 = vmatprep.subr.mxu0 0.0
    %826 = vmatpush1.xpose.msra.mxu0 0.0
    %827 = vmatprep.subr.mxu0 0.0
    %828 = vmatpush1.xpose.msra.mxu0 0.0
    %829 = vmatprep.subr.mxu0 0.0
    %830 = vmatpush1.xpose.msra.mxu0 0.0
    %831 = vmatprep.subr.mxu0 0.0
    %832 = vmatpush1.xpose.msra.mxu0 0.0
    %833 = vmatprep.subr.mxu0 0.0
    %834 = vmatpush1.xpose.msra.mxu0 0.0
    %835 = vmatprep.subr.mxu0 0.0
    %836 = vmatpush1.xpose.msra.mxu0 0.0
    %837 = vmatprep.subr.mxu0 0.0
    %838 = vmatpush1.xpose.msra.mxu0 0.0
    %839 = vmatprep.subr.mxu0 0.0
    %840 = vmatpush1.xpose.msra.mxu0 0.0
    %841 = vmatprep.subr.mxu0 0.0
    %842 = vmatpush1.xpose.msra.mxu0 0.0
    %843 = vmatprep.subr.mxu0 0.0
    %844 = vmatpush1.xpose.msra.mxu0 0.0
    %845 = vmatprep.subr.mxu0 0.0
    %846 = vmatpush1.xpose.msra.mxu0 0.0
    %847 = vmatprep.subr.mxu0 0.0
    %848 = vmatpush1.xpose.msra.mxu0 0.0
    %849 = vmatprep.subr.mxu0 0.0
    %850 = vmatpush1.xpose.msra.mxu0 0.0
    %851 = vmatprep.subr.mxu0 0.0
    %852 = vmatpush1.xpose.msra.mxu0 0.0
    %853 = vmatprep.subr.mxu0 0.0
    %854 = vmatpush1.xpose.msra.mxu0 0.0
    %855 = vmatprep.subr.mxu0 0.0
    %856 = vmatpush1.xpose.msra.mxu0 0.0
    %857 = vmatprep.mubr.f32.mxu0 0.0
    %858 = vmatmul.mubr.f32.gmra.mrb[0].mxu0 %v785
    %v859 = vpop.f32.mrb[0].mxu0
    %v860 = vadd.f32 %v78, %v859
    %v861 = vpop.f32.mrb[0].mxu0
    %862 = vmatprep.mubr.f32.mxu0 0.0
    %863 = vmatmul.mubr.f32.gmra.mrb[0].mxu0 %v787
    %v864 = vpop.f32.mrb[0].mxu0
    %v865 = vadd.f32 %v79, %v864
    %v866 = vpop.f32.mrb[0].mxu0
    %867 = vdwg.mxu0
    %v868 = vsel %vm267, %v860, -inf
    %869 = vmax.xlane.f32.xlu0 %v868
    %v870 = vpop.xlane.xlu0 %869
    %v871 = vsel %vm267, %v865, -inf
    %872 = vmax.xlane.f32.xlu0 %v871
    %v873 = vpop.xlane.xlu0 %872
    %v874 = vsub.f32 %v860, %v870
    %v875 = vsub.f32 %v865, %v873
    %v876 = vmul.f32 %v874, 1.442695
    %v877 = vpow.pop %v876
    %v878 = vmul.f32 %v875, 1.442695
    %v879 = vpow.pop %v878
    %v880 = vsel %vm267, %v877, 0.0
    %881 = vadd.xlane.f32.xlu0 %v880
    %v882 = vpop.xlane.xlu0 %881
    %v883 = vsel %vm267, %v879, 0.0
    %884 = vadd.xlane.f32.xlu0 %v883
    %v885 = vpop.xlane.xlu0 %884
    %v886 = vrcp.pop %v882
    %v887 = vmul.f32 %v877, %v886
    %v888 = vrcp.pop %v885
    %v889 = vmul.f32 %v879, %v888
    %890 = vrot.lane.b32.xlu0 %v165, 40
    %v891 = vpop.permute.xlu0 %890
    %892 = vrot.lane.b32.xlu0 %v170, 40
    %v893 = vpop.permute.xlu0 %892
    %v897 = vsel %vm267, %v887, 0
    %v900 = vsel %vm267, %v889, 0
    %902 = vmatprep.subr.mxu0 0.0
    %903 = vmatpush1.msra.mxu0 %v891
    %904 = vmatprep.subr.mxu0 0.0
    %905 = vmatpush1.msra.mxu0 %v893
    %906 = vmatprep.subr.mxu0 0.0
    %907 = vmatpush1.msra.mxu0 0.0
    %908 = vmatprep.subr.mxu0 0.0
    %909 = vmatpush1.msra.mxu0 0.0
    %910 = vmatprep.subr.mxu0 0.0
    %911 = vmatpush1.msra.mxu0 0.0
    %912 = vmatprep.subr.mxu0 0.0
    %913 = vmatpush1.msra.mxu0 0.0
    %914 = vmatprep.subr.mxu0 0.0
    %915 = vmatpush1.msra.mxu0 0.0
    %916 = vmatprep.subr.mxu0 0.0
    %917 = vmatpush1.msra.mxu0 0.0
    %918 = vmatprep.subr.mxu0 0.0
    %919 = vmatpush1.msra.mxu0 0.0
    %920 = vmatprep.subr.mxu0 0.0
    %921 = vmatpush1.msra.mxu0 0.0
    %922 = vmatprep.subr.mxu0 0.0
    %923 = vmatpush1.msra.mxu0 0.0
    %924 = vmatprep.subr.mxu0 0.0
    %925 = vmatpush1.msra.mxu0 0.0
    %926 = vmatprep.subr.mxu0 0.0
    %927 = vmatpush1.msra.mxu0 0.0
    %928 = vmatprep.subr.mxu0 0.0
    %929 = vmatpush1.msra.mxu0 0.0
    %930 = vmatprep.subr.mxu0 0.0
    %931 = vmatpush1.msra.mxu0 0.0
    %932 = vmatprep.subr.mxu0 0.0
    %933 = vmatpush1.msra.mxu0 0.0
    %934 = vmatprep.subr.mxu0 0.0
    %935 = vmatpush1.msra.mxu0 0.0
    %936 = vmatprep.subr.mxu0 0.0
    %937 = vmatpush1.msra.mxu0 0.0
    %938 = vmatprep.subr.mxu0 0.0
    %939 = vmatpush1.msra.mxu0 0.0
    %940 = vmatprep.subr.mxu0 0.0
    %941 = vmatpush1.msra.mxu0 0.0
    %942 = vmatprep.subr.mxu0 0.0
    %943 = vmatpush1.msra.mxu0 0.0
    %944 = vmatprep.subr.mxu0 0.0
    %945 = vmatpush1.msra.mxu0 0.0
    %946 = vmatprep.subr.mxu0 0.0
    %947 = vmatpush1.msra.mxu0 0.0
    %948 = vmatprep.subr.mxu0 0.0
    %949 = vmatpush1.msra.mxu0 0.0
    %950 = vmatprep.subr.mxu0 0.0
    %951 = vmatpush1.msra.mxu0 0.0
    %952 = vmatprep.subr.mxu0 0.0
    %953 = vmatpush1.msra.mxu0 0.0
    %954 = vmatprep.subr.mxu0 0.0
    %955 = vmatpush1.msra.mxu0 0.0
    %956 = vmatprep.subr.mxu0 0.0
    %957 = vmatpush1.msra.mxu0 0.0
    %958 = vmatprep.subr.mxu0 0.0
    %959 = vmatpush1.msra.mxu0 0.0
    %960 = vmatprep.subr.mxu0 0.0
    %961 = vmatpush1.msra.mxu0 0.0
    %962 = vmatprep.subr.mxu0 0.0
    %963 = vmatpush1.msra.mxu0 0.0
    %964 = vmatprep.subr.mxu0 0.0
    %965 = vmatpush1.msra.mxu0 0.0
    %966 = vmatprep.mubr.f32.mxu0 0.0
    %967 = vmatmul.mubr.f32.gmra.mrb[0].mxu0 %v897
    %v968 = vpop.f32.mrb[0].mxu0
    %v969 = vadd.f32 0.0, %v968
    %v970 = vpop.f32.mrb[0].mxu0
    %971 = vmatprep.mubr.f32.mxu0 0.0
    %972 = vmatmul.mubr.f32.gmra.mrb[0].mxu0 %v900
    %v973 = vpop.f32.mrb[0].mxu0
    %v974 = vadd.f32 0.0, %v973
    %v975 = vpop.f32.mrb[0].mxu0
    %976 = vdwg.mxu0
    %979 = vrot.lane.b32.xlu0 %v569, 8
    %v980 = vpop.permute.xlu0 %979
    %981 = vrot.lane.b32.xlu0 %v574, 8
    %v982 = vpop.permute.xlu0 %981
    %987 = vrot.lane.b32.xlu0 %v769, 16
    %v988 = vpop.permute.xlu0 %987
    %989 = vrot.lane.b32.xlu0 %v774, 16
    %v990 = vpop.permute.xlu0 %989
    %995 = vrot.lane.b32.xlu0 %v969, 24
    %v996 = vpop.permute.xlu0 %995
    %997 = vrot.lane.b32.xlu0 %v974, 24
    %v998 = vpop.permute.xlu0 %997
    %v1001 = vsel %vm181, %v369, %v980
    %v1002 = vsel %vm181, %v374, %v982
    %v1003 = vsel %vm267, %v1001, %v988
    %v1004 = vsel %vm267, %v1002, %v990
    %vm1005 = vcmask 195584
    %v1006 = vsel %vm1005, %v1003, %v996
    %v1007 = vsel %vm1005, %v1004, %v998
    %v1008 = vld [vmem:[%s11] sm:$0xff]
    %v1009 = vld [vmem:[%s11 + $0x8] sm:$0xff]
    %v1010 = vld [vmem:[%s11 + $0x10] sm:$0xff]
    %v1011 = vld [vmem:[%s11 + $0x18] sm:$0xff]
    %v1012 = vld [vmem:[%s12] sm:$0x1]
    %v1014 = vlaneseq
    %v1015 = vshrl.u32 %v1014, 7
    %v1016 = vsub.s32 0, %v1015
    %v1017 = vrot.slane %v1012, %v1016
    %v1020 = vsel %vm91, %v1006, 0
    %v1023 = vsel %vm91, %v1007, 0
    %1025 = vmatprep.subr.mxu0 0.0
    %1026 = vmatpush1.msra.mxu0 %v1008
    %1027 = vmatprep.subr.mxu0 0.0
    %1028 = vmatpush1.msra.mxu0 %v1009
    %1029 = vmatprep.subr.mxu0 0.0
    %1030 = vmatpush1.msra.mxu0 %v1010
    %1031 = vmatprep.subr.mxu0 0.0
    %1032 = vmatpush1.msra.mxu0 %v1011
    %1033 = vmatprep.subr.mxu0 0.0
    %1034 = vmatpush1.msra.mxu0 0.0
    %1035 = vmatprep.subr.mxu0 0.0
    %1036 = vmatpush1.msra.mxu0 0.0
    %1037 = vmatprep.subr.mxu0 0.0
    %1038 = vmatpush1.msra.mxu0 0.0
    %1039 = vmatprep.subr.mxu0 0.0
    %1040 = vmatpush1.msra.mxu0 0.0
    %1041 = vmatprep.subr.mxu0 0.0
    %1042 = vmatpush1.msra.mxu0 0.0
    %1043 = vmatprep.subr.mxu0 0.0
    %1044 = vmatpush1.msra.mxu0 0.0
    %1045 = vmatprep.subr.mxu0 0.0
    %1046 = vmatpush1.msra.mxu0 0.0
    %1047 = vmatprep.subr.mxu0 0.0
    %1048 = vmatpush1.msra.mxu0 0.0
    %1049 = vmatprep.subr.mxu0 0.0
    %1050 = vmatpush1.msra.mxu0 0.0
    %1051 = vmatprep.subr.mxu0 0.0
    %1052 = vmatpush1.msra.mxu0 0.0
    %1053 = vmatprep.subr.mxu0 0.0
    %1054 = vmatpush1.msra.mxu0 0.0
    %1055 = vmatprep.subr.mxu0 0.0
    %1056 = vmatpush1.msra.mxu0 0.0
    %1057 = vmatprep.subr.mxu0 0.0
    %1058 = vmatpush1.msra.mxu0 0.0
    %1059 = vmatprep.subr.mxu0 0.0
    %1060 = vmatpush1.msra.mxu0 0.0
    %1061 = vmatprep.subr.mxu0 0.0
    %1062 = vmatpush1.msra.mxu0 0.0
    %1063 = vmatprep.subr.mxu0 0.0
    %1064 = vmatpush1.msra.mxu0 0.0
    %1065 = vmatprep.subr.mxu0 0.0
    %1066 = vmatpush1.msra.mxu0 0.0
    %1067 = vmatprep.subr.mxu0 0.0
    %1068 = vmatpush1.msra.mxu0 0.0
    %1069 = vmatprep.subr.mxu0 0.0
    %1070 = vmatpush1.msra.mxu0 0.0
    %1071 = vmatprep.subr.mxu0 0.0
    %1072 = vmatpush1.msra.mxu0 0.0
    %1073 = vmatprep.subr.mxu0 0.0
    %1074 = vmatpush1.msra.mxu0 0.0
    %1075 = vmatprep.subr.mxu0 0.0
    %1076 = vmatpush1.msra.mxu0 0.0
    %1077 = vmatprep.subr.mxu0 0.0
    %1078 = vmatpush1.msra.mxu0 0.0
    %1079 = vmatprep.subr.mxu0 0.0
    %1080 = vmatpush1.msra.mxu0 0.0
    %1081 = vmatprep.subr.mxu0 0.0
    %1082 = vmatpush1.msra.mxu0 0.0
    %1083 = vmatprep.subr.mxu0 0.0
    %1084 = vmatpush1.msra.mxu0 0.0
    %1085 = vmatprep.subr.mxu0 0.0
    %1086 = vmatpush1.msra.mxu0 0.0
    %1087 = vmatprep.subr.mxu0 0.0
    %1088 = vmatpush1.msra.mxu0 0.0
    %1089 = vmatprep.mubr.f32.mxu0 0.0
    %1090 = vmatmul.mubr.f32.gmra.mrb[0].mxu0 %v1020
    %v1091 = vpop.f32.mrb[0].mxu0
    %v1092 = vadd.f32 %v1017, %v1091
    %v1093 = vpop.f32.mrb[0].mxu0
    %1094 = vmatprep.mubr.f32.mxu0 0.0
    %1095 = vmatmul.mubr.f32.gmra.mrb[0].mxu0 %v1023
    %v1096 = vpop.f32.mrb[0].mxu0
    %v1097 = vadd.f32 %v1017, %v1096
    %v1098 = vpop.f32.mrb[0].mxu0
    %1099 = vdwg.mxu0
    %v1100 = vadd.f32 %v72, %v1092
    %v1101 = vadd.f32 %v73, %v1097
    %v1102 = vsel %vm91, %v1100, 0.0
    %1103 = vadd.xlane.f32.xlu0 %v1102
    %v1104 = vpop.xlane.xlu0 %1103
    %v1105 = vsel %vm91, %v1101, 0.0
    %1106 = vadd.xlane.f32.xlu0 %v1105
    %v1107 = vpop.xlane.xlu0 %1106
    %v1108 = vrcp.pop 32.0
    %v1109 = vmul.f32 %v1104, %v1108
    %v1110 = vmul.f32 %v1107, %v1108
    %v1111 = vsub.f32 %v1100, %v1109
    %v1112 = vsub.f32 %v1101, %v1110
    %v1113 = vmul.f32 %v1111, %v1111
    %v1114 = vmul.f32 %v1112, %v1112
    %v1115 = vsel %vm91, %v1113, 0.0
    %1116 = vadd.xlane.f32.xlu0 %v1115
    %v1117 = vpop.xlane.xlu0 %1116
    %v1118 = vsel %vm91, %v1114, 0.0
    %1119 = vadd.xlane.f32.xlu0 %v1118
    %v1120 = vpop.xlane.xlu0 %1119
    %v1121 = vmul.f32 %v1117, %v1108
    %v1122 = vmul.f32 %v1120, %v1108
    %v1123 = vadd.f32 %v1121, 1e-05
    %v1124 = vadd.f32 %v1122, 1e-05
    %v1125 = vrsqrt.pop %v1123
    %v1126 = vrsqrt.pop %v1124
    %v1127 = vmul.f32 %v1111, %v1125
    %v1128 = vmul.f32 %v1112, %v1126
    %v1130 = vlaneseq
    %v1131 = vshrl.u32 %v1130, 7
    %v1132 = vsub.s32 0, %v1131
    %v1133 = vrot.slane %v70, %v1132
    %v1135 = vmul.f32 %v1127, %v1133
    %v1136 = vmul.f32 %v1128, %v1133
    %v1138 = vlaneseq
    %v1139 = vshrl.u32 %v1138, 7
    %v1140 = vsub.s32 0, %v1139
    %v1141 = vrot.slane %v71, %v1140
    %v1143 = vadd.f32 %v1135, %v1141
    %v1144 = vadd.f32 %v1136, %v1141
    %v1145 = vld [vmem:[%s4] sm:$0xff]
    %v1146 = vld [vmem:[%s4 + $0x8] sm:$0xff]
    %s1147 = scalar_lea.vmem %s9, 32
    %v1148 = vld [vmem:[%s1147] sm:$0xff]
    %v1149 = vld [vmem:[%s1147 + $0x8] sm:$0xff]
    %v1150 = vld [vmem:[%s1147 + $0x10] sm:$0xff]
    %v1151 = vld [vmem:[%s1147 + $0x18] sm:$0xff]
    %s1152 = scalar_lea.vmem %s10, 1
    %v1153 = vld [vmem:[%s1152] sm:$0x1]
    %v1155 = vlaneseq
    %v1156 = vshrl.u32 %v1155, 7
    %v1157 = vsub.s32 0, %v1156
    %v1158 = vrot.slane %v1153, %v1157
    %v1161 = vsel %vm91, %v74, 0
    %v1164 = vsel %vm91, %v75, 0
    %1166 = vmatprep.subr.mxu0 0.0
    %1167 = vmatpush1.msra.mxu0 %v1148
    %1168 = vmatprep.subr.mxu0 0.0
    %1169 = vmatpush1.msra.mxu0 %v1149
    %1170 = vmatprep.subr.mxu0 0.0
    %1171 = vmatpush1.msra.mxu0 %v1150
    %1172 = vmatprep.subr.mxu0 0.0
    %1173 = vmatpush1.msra.mxu0 %v1151
    %1174 = vmatprep.subr.mxu0 0.0
    %1175 = vmatpush1.msra.mxu0 0.0
    %1176 = vmatprep.subr.mxu0 0.0
    %1177 = vmatpush1.msra.mxu0 0.0
    %1178 = vmatprep.subr.mxu0 0.0
    %1179 = vmatpush1.msra.mxu0 0.0
    %1180 = vmatprep.subr.mxu0 0.0
    %1181 = vmatpush1.msra.mxu0 0.0
    %1182 = vmatprep.subr.mxu0 0.0
    %1183 = vmatpush1.msra.mxu0 0.0
    %1184 = vmatprep.subr.mxu0 0.0
    %1185 = vmatpush1.msra.mxu0 0.0
    %1186 = vmatprep.subr.mxu0 0.0
    %1187 = vmatpush1.msra.mxu0 0.0
    %1188 = vmatprep.subr.mxu0 0.0
    %1189 = vmatpush1.msra.mxu0 0.0
    %1190 = vmatprep.subr.mxu0 0.0
    %1191 = vmatpush1.msra.mxu0 0.0
    %1192 = vmatprep.subr.mxu0 0.0
    %1193 = vmatpush1.msra.mxu0 0.0
    %1194 = vmatprep.subr.mxu0 0.0
    %1195 = vmatpush1.msra.mxu0 0.0
    %1196 = vmatprep.subr.mxu0 0.0
    %1197 = vmatpush1.msra.mxu0 0.0
    %1198 = vmatprep.subr.mxu0 0.0
    %1199 = vmatpush1.msra.mxu0 0.0
    %1200 = vmatprep.subr.mxu0 0.0
    %1201 = vmatpush1.msra.mxu0 0.0
    %1202 = vmatprep.subr.mxu0 0.0
    %1203 = vmatpush1.msra.mxu0 0.0
    %1204 = vmatprep.subr.mxu0 0.0
    %1205 = vmatpush1.msra.mxu0 0.0
    %1206 = vmatprep.subr.mxu0 0.0
    %1207 = vmatpush1.msra.mxu0 0.0
    %1208 = vmatprep.subr.mxu0 0.0
    %1209 = vmatpush1.msra.mxu0 0.0
    %1210 = vmatprep.subr.mxu0 0.0
    %1211 = vmatpush1.msra.mxu0 0.0
    %1212 = vmatprep.subr.mxu0 0.0
    %1213 = vmatpush1.msra.mxu0 0.0
    %1214 = vmatprep.subr.mxu0 0.0
    %1215 = vmatpush1.msra.mxu0 0.0
    %1216 = vmatprep.subr.mxu0 0.0
    %1217 = vmatpush1.msra.mxu0 0.0
    %1218 = vmatprep.subr.mxu0 0.0
    %1219 = vmatpush1.msra.mxu0 0.0
    %1220 = vmatprep.subr.mxu0 0.0
    %1221 = vmatpush1.msra.mxu0 0.0
    %1222 = vmatprep.subr.mxu0 0.0
    %1223 = vmatpush1.msra.mxu0 0.0
    %1224 = vmatprep.subr.mxu0 0.0
    %1225 = vmatpush1.msra.mxu0 0.0
    %1226 = vmatprep.subr.mxu0 0.0
    %1227 = vmatpush1.msra.mxu0 0.0
    %1228 = vmatprep.subr.mxu0 0.0
    %1229 = vmatpush1.msra.mxu0 0.0
    %1230 = vmatprep.mubr.f32.mxu0 0.0
    %1231 = vmatmul.mubr.f32.gmra.mrb[0].mxu0 %v1161
    %v1232 = vpop.f32.mrb[0].mxu0
    %v1233 = vadd.f32 %v1158, %v1232
    %v1234 = vpop.f32.mrb[0].mxu0
    %1235 = vmatprep.mubr.f32.mxu0 0.0
    %1236 = vmatmul.mubr.f32.gmra.mrb[0].mxu0 %v1164
    %v1237 = vpop.f32.mrb[0].mxu0
    %v1238 = vadd.f32 %v1158, %v1237
    %v1239 = vpop.f32.mrb[0].mxu0
    %1240 = vdwg.mxu0
    %v1241 = vmul.f32 %v1233, 0.35355338
    %v1242 = vmul.f32 %v1238, 0.35355338
    %1245 = vrot.lane.b32.xlu0 %v1233, 96
    %v1246 = vpop.permute.xlu0 %1245
    %1247 = vrot.lane.b32.xlu0 %v1238, 96
    %v1248 = vpop.permute.xlu0 %1247
    %v1250 = vsel %vm181, %v1241, 0
    %v1253 = vsel %vm181, %v1242, 0
    %v1255 = vsel %vm181, %v1246, 0
    %v1257 = vsel %vm181, %v1248, 0
    %1259 = vmatprep.subr.mxu0 0.0
    %1260 = vmatpush1.xpose.msra.mxu0 %v1255
    %1261 = vmatprep.subr.mxu0 0.0
    %1262 = vmatpush1.xpose.msra.mxu0 %v1257
    %1263 = vmatprep.subr.mxu0 0.0
    %1264 = vmatpush1.xpose.msra.mxu0 0.0
    %1265 = vmatprep.subr.mxu0 0.0
    %1266 = vmatpush1.xpose.msra.mxu0 0.0
    %1267 = vmatprep.subr.mxu0 0.0
    %1268 = vmatpush1.xpose.msra.mxu0 0.0
    %1269 = vmatprep.subr.mxu0 0.0
    %1270 = vmatpush1.xpose.msra.mxu0 0.0
    %1271 = vmatprep.subr.mxu0 0.0
    %1272 = vmatpush1.xpose.msra.mxu0 0.0
    %1273 = vmatprep.subr.mxu0 0.0
    %1274 = vmatpush1.xpose.msra.mxu0 0.0
    %1275 = vmatprep.subr.mxu0 0.0
    %1276 = vmatpush1.xpose.msra.mxu0 0.0
    %1277 = vmatprep.subr.mxu0 0.0
    %1278 = vmatpush1.xpose.msra.mxu0 0.0
    %1279 = vmatprep.subr.mxu0 0.0
    %1280 = vmatpush1.xpose.msra.mxu0 0.0
    %1281 = vmatprep.subr.mxu0 0.0
    %1282 = vmatpush1.xpose.msra.mxu0 0.0
    %1283 = vmatprep.subr.mxu0 0.0
    %1284 = vmatpush1.xpose.msra.mxu0 0.0
    %1285 = vmatprep.subr.mxu0 0.0
    %1286 = vmatpush1.xpose.msra.mxu0 0.0
    %1287 = vmatprep.subr.mxu0 0.0
    %1288 = vmatpush1.xpose.msra.mxu0 0.0
    %1289 = vmatprep.subr.mxu0 0.0
    %1290 = vmatpush1.xpose.msra.mxu0 0.0
    %1291 = vmatprep.subr.mxu0 0.0
    %1292 = vmatpush1.xpose.msra.mxu0 0.0
    %1293 = vmatprep.subr.mxu0 0.0
    %1294 = vmatpush1.xpose.msra.mxu0 0.0
    %1295 = vmatprep.subr.mxu0 0.0
    %1296 = vmatpush1.xpose.msra.mxu0 0.0
    %1297 = vmatprep.subr.mxu0 0.0
    %1298 = vmatpush1.xpose.msra.mxu0 0.0
    %1299 = vmatprep.subr.mxu0 0.0
    %1300 = vmatpush1.xpose.msra.mxu0 0.0
    %1301 = vmatprep.subr.mxu0 0.0
    %1302 = vmatpush1.xpose.msra.mxu0 0.0
    %1303 = vmatprep.subr.mxu0 0.0
    %1304 = vmatpush1.xpose.msra.mxu0 0.0
    %1305 = vmatprep.subr.mxu0 0.0
    %1306 = vmatpush1.xpose.msra.mxu0 0.0
    %1307 = vmatprep.subr.mxu0 0.0
    %1308 = vmatpush1.xpose.msra.mxu0 0.0
    %1309 = vmatprep.subr.mxu0 0.0
    %1310 = vmatpush1.xpose.msra.mxu0 0.0
    %1311 = vmatprep.subr.mxu0 0.0
    %1312 = vmatpush1.xpose.msra.mxu0 0.0
    %1313 = vmatprep.subr.mxu0 0.0
    %1314 = vmatpush1.xpose.msra.mxu0 0.0
    %1315 = vmatprep.subr.mxu0 0.0
    %1316 = vmatpush1.xpose.msra.mxu0 0.0
    %1317 = vmatprep.subr.mxu0 0.0
    %1318 = vmatpush1.xpose.msra.mxu0 0.0
    %1319 = vmatprep.subr.mxu0 0.0
    %1320 = vmatpush1.xpose.msra.mxu0 0.0
    %1321 = vmatprep.subr.mxu0 0.0
    %1322 = vmatpush1.xpose.msra.mxu0 0.0
    %1323 = vmatprep.mubr.f32.mxu0 0.0
    %1324 = vmatmul.mubr.f32.gmra.mrb[0].mxu0 %v1250
    %v1325 = vpop.f32.mrb[0].mxu0
    %v1326 = vadd.f32 %v1145, %v1325
    %v1327 = vpop.f32.mrb[0].mxu0
    %1328 = vmatprep.mubr.f32.mxu0 0.0
    %1329 = vmatmul.mubr.f32.gmra.mrb[0].mxu0 %v1253
    %v1330 = vpop.f32.mrb[0].mxu0
    %v1331 = vadd.f32 %v1146, %v1330
    %v1332 = vpop.f32.mrb[0].mxu0
    %1333 = vdwg.mxu0
    %v1334 = vsel %vm267, %v1326, -inf
    %1335 = vmax.xlane.f32.xlu0 %v1334
    %v1336 = vpop.xlane.xlu0 %1335
    %v1337 = vsel %vm267, %v1331, -inf
    %1338 = vmax.xlane.f32.xlu0 %v1337
    %v1339 = vpop.xlane.xlu0 %1338
    %v1340 = vsub.f32 %v1326, %v1336
    %v1341 = vsub.f32 %v1331, %v1339
    %v1342 = vmul.f32 %v1340, 1.442695
    %v1343 = vpow.pop %v1342
    %v1344 = vmul.f32 %v1341, 1.442695
    %v1345 = vpow.pop %v1344
    %v1346 = vsel %vm267, %v1343, 0.0
    %1347 = vadd.xlane.f32.xlu0 %v1346
    %v1348 = vpop.xlane.xlu0 %1347
    %v1349 = vsel %vm267, %v1345, 0.0
    %1350 = vadd.xlane.f32.xlu0 %v1349
    %v1351 = vpop.xlane.xlu0 %1350
    %v1352 = vrcp.pop %v1348
    %v1353 = vmul.f32 %v1343, %v1352
    %v1354 = vrcp.pop %v1351
    %v1355 = vmul.f32 %v1345, %v1354
    %1356 = vrot.lane.b32.xlu0 %v1233, 64
    %v1357 = vpop.permute.xlu0 %1356
    %1358 = vrot.lane.b32.xlu0 %v1238, 64
    %v1359 = vpop.permute.xlu0 %1358
    %v1363 = vsel %vm267, %v1353, 0
    %v1366 = vsel %vm267, %v1355, 0
    %1368 = vmatprep.subr.mxu0 0.0
    %1369 = vmatpush1.msra.mxu0 %v1357
    %1370 = vmatprep.subr.mxu0 0.0
    %1371 = vmatpush1.msra.mxu0 %v1359
    %1372 = vmatprep.subr.mxu0 0.0
    %1373 = vmatpush1.msra.mxu0 0.0
    %1374 = vmatprep.subr.mxu0 0.0
    %1375 = vmatpush1.msra.mxu0 0.0
    %1376 = vmatprep.subr.mxu0 0.0
    %1377 = vmatpush1.msra.mxu0 0.0
    %1378 = vmatprep.subr.mxu0 0.0
    %1379 = vmatpush1.msra.mxu0 0.0
    %1380 = vmatprep.subr.mxu0 0.0
    %1381 = vmatpush1.msra.mxu0 0.0
    %1382 = vmatprep.subr.mxu0 0.0
    %1383 = vmatpush1.msra.mxu0 0.0
    %1384 = vmatprep.subr.mxu0 0.0
    %1385 = vmatpush1.msra.mxu0 0.0
    %1386 = vmatprep.subr.mxu0 0.0
    %1387 = vmatpush1.msra.mxu0 0.0
    %1388 = vmatprep.subr.mxu0 0.0
    %1389 = vmatpush1.msra.mxu0 0.0
    %1390 = vmatprep.subr.mxu0 0.0
    %1391 = vmatpush1.msra.mxu0 0.0
    %1392 = vmatprep.subr.mxu0 0.0
    %1393 = vmatpush1.msra.mxu0 0.0
    %1394 = vmatprep.subr.mxu0 0.0
    %1395 = vmatpush1.msra.mxu0 0.0
    %1396 = vmatprep.subr.mxu0 0.0
    %1397 = vmatpush1.msra.mxu0 0.0
    %1398 = vmatprep.subr.mxu0 0.0
    %1399 = vmatpush1.msra.mxu0 0.0
    %1400 = vmatprep.subr.mxu0 0.0
    %1401 = vmatpush1.msra.mxu0 0.0
    %1402 = vmatprep.subr.mxu0 0.0
    %1403 = vmatpush1.msra.mxu0 0.0
    %1404 = vmatprep.subr.mxu0 0.0
    %1405 = vmatpush1.msra.mxu0 0.0
    %1406 = vmatprep.subr.mxu0 0.0
    %1407 = vmatpush1.msra.mxu0 0.0
    %1408 = vmatprep.subr.mxu0 0.0
    %1409 = vmatpush1.msra.mxu0 0.0
    %1410 = vmatprep.subr.mxu0 0.0
    %1411 = vmatpush1.msra.mxu0 0.0
    %1412 = vmatprep.subr.mxu0 0.0
    %1413 = vmatpush1.msra.mxu0 0.0
    %1414 = vmatprep.subr.mxu0 0.0
    %1415 = vmatpush1.msra.mxu0 0.0
    %1416 = vmatprep.subr.mxu0 0.0
    %1417 = vmatpush1.msra.mxu0 0.0
    %1418 = vmatprep.subr.mxu0 0.0
    %1419 = vmatpush1.msra.mxu0 0.0
    %1420 = vmatprep.subr.mxu0 0.0
    %1421 = vmatpush1.msra.mxu0 0.0
    %1422 = vmatprep.subr.mxu0 0.0
    %1423 = vmatpush1.msra.mxu0 0.0
    %1424 = vmatprep.subr.mxu0 0.0
    %1425 = vmatpush1.msra.mxu0 0.0
    %1426 = vmatprep.subr.mxu0 0.0
    %1427 = vmatpush1.msra.mxu0 0.0
    %1428 = vmatprep.subr.mxu0 0.0
    %1429 = vmatpush1.msra.mxu0 0.0
    %1430 = vmatprep.subr.mxu0 0.0
    %1431 = vmatpush1.msra.mxu0 0.0
    %1432 = vmatprep.mubr.f32.mxu0 0.0
    %1433 = vmatmul.mubr.f32.gmra.mrb[0].mxu0 %v1363
    %v1434 = vpop.f32.mrb[0].mxu0
    %v1435 = vadd.f32 0.0, %v1434
    %v1436 = vpop.f32.mrb[0].mxu0
    %1437 = vmatprep.mubr.f32.mxu0 0.0
    %1438 = vmatmul.mubr.f32.gmra.mrb[0].mxu0 %v1366
    %v1439 = vpop.f32.mrb[0].mxu0
    %v1440 = vadd.f32 0.0, %v1439
    %v1441 = vpop.f32.mrb[0].mxu0
    %1442 = vdwg.mxu0
    %1443 = vrot.lane.b32.xlu0 %v1241, 120
    %v1444 = vpop.permute.xlu0 %1443
    %1445 = vrot.lane.b32.xlu0 %v1242, 120
    %v1446 = vpop.permute.xlu0 %1445
    %1447 = vrot.lane.b32.xlu0 %v1233, 88
    %v1448 = vpop.permute.xlu0 %1447
    %1449 = vrot.lane.b32.xlu0 %v1238, 88
    %v1450 = vpop.permute.xlu0 %1449
    %v1451 = vsel %vm181, %v1444, 0
    %v1453 = vsel %vm181, %v1446, 0
    %v1455 = vsel %vm181, %v1448, 0
    %v1457 = vsel %vm181, %v1450, 0
    %1459 = vmatprep.subr.mxu0 0.0
    %1460 = vmatpush1.xpose.msra.mxu0 %v1455
    %1461 = vmatprep.subr.mxu0 0.0
    %1462 = vmatpush1.xpose.msra.mxu0 %v1457
    %1463 = vmatprep.subr.mxu0 0.0
    %1464 = vmatpush1.xpose.msra.mxu0 0.0
    %1465 = vmatprep.subr.mxu0 0.0
    %1466 = vmatpush1.xpose.msra.mxu0 0.0
    %1467 = vmatprep.subr.mxu0 0.0
    %1468 = vmatpush1.xpose.msra.mxu0 0.0
    %1469 = vmatprep.subr.mxu0 0.0
    %1470 = vmatpush1.xpose.msra.mxu0 0.0
    %1471 = vmatprep.subr.mxu0 0.0
    %1472 = vmatpush1.xpose.msra.mxu0 0.0
    %1473 = vmatprep.subr.mxu0 0.0
    %1474 = vmatpush1.xpose.msra.mxu0 0.0
    %1475 = vmatprep.subr.mxu0 0.0
    %1476 = vmatpush1.xpose.msra.mxu0 0.0
    %1477 = vmatprep.subr.mxu0 0.0
    %1478 = vmatpush1.xpose.msra.mxu0 0.0
    %1479 = vmatprep.subr.mxu0 0.0
    %1480 = vmatpush1.xpose.msra.mxu0 0.0
    %1481 = vmatprep.subr.mxu0 0.0
    %1482 = vmatpush1.xpose.msra.mxu0 0.0
    %1483 = vmatprep.subr.mxu0 0.0
    %1484 = vmatpush1.xpose.msra.mxu0 0.0
    %1485 = vmatprep.subr.mxu0 0.0
    %1486 = vmatpush1.xpose.msra.mxu0 0.0
    %1487 = vmatprep.subr.mxu0 0.0
    %1488 = vmatpush1.xpose.msra.mxu0 0.0
    %1489 = vmatprep.subr.mxu0 0.0
    %1490 = vmatpush1.xpose.msra.mxu0 0.0
    %1491 = vmatprep.subr.mxu0 0.0
    %1492 = vmatpush1.xpose.msra.mxu0 0.0
    %1493 = vmatprep.subr.mxu0 0.0
    %1494 = vmatpush1.xpose.msra.mxu0 0.0
    %1495 = vmatprep.subr.mxu0 0.0
    %1496 = vmatpush1.xpose.msra.mxu0 0.0
    %1497 = vmatprep.subr.mxu0 0.0
    %1498 = vmatpush1.xpose.msra.mxu0 0.0
    %1499 = vmatprep.subr.mxu0 0.0
    %1500 = vmatpush1.xpose.msra.mxu0 0.0
    %1501 = vmatprep.subr.mxu0 0.0
    %1502 = vmatpush1.xpose.msra.mxu0 0.0
    %1503 = vmatprep.subr.mxu0 0.0
    %1504 = vmatpush1.xpose.msra.mxu0 0.0
    %1505 = vmatprep.subr.mxu0 0.0
    %1506 = vmatpush1.xpose.msra.mxu0 0.0
    %1507 = vmatprep.subr.mxu0 0.0
    %1508 = vmatpush1.xpose.msra.mxu0 0.0
    %1509 = vmatprep.subr.mxu0 0.0
    %1510 = vmatpush1.xpose.msra.mxu0 0.0
    %1511 = vmatprep.subr.mxu0 0.0
    %1512 = vmatpush1.xpose.msra.mxu0 0.0
    %1513 = vmatprep.subr.mxu0 0.0
    %1514 = vmatpush1.xpose.msra.mxu0 0.0
    %1515 = vmatprep.subr.mxu0 0.0
    %1516 = vmatpush1.xpose.msra.mxu0 0.0
    %1517 = vmatprep.subr.mxu0 0.0
    %1518 = vmatpush1.xpose.msra.mxu0 0.0
    %1519 = vmatprep.subr.mxu0 0.0
    %1520 = vmatpush1.xpose.msra.mxu0 0.0
    %1521 = vmatprep.subr.mxu0 0.0
    %1522 = vmatpush1.xpose.msra.mxu0 0.0
    %1523 = vmatprep.mubr.f32.mxu0 0.0
    %1524 = vmatmul.mubr.f32.gmra.mrb[0].mxu0 %v1451
    %v1525 = vpop.f32.mrb[0].mxu0
    %v1526 = vadd.f32 %v1145, %v1525
    %v1527 = vpop.f32.mrb[0].mxu0
    %1528 = vmatprep.mubr.f32.mxu0 0.0
    %1529 = vmatmul.mubr.f32.gmra.mrb[0].mxu0 %v1453
    %v1530 = vpop.f32.mrb[0].mxu0
    %v1531 = vadd.f32 %v1146, %v1530
    %v1532 = vpop.f32.mrb[0].mxu0
    %1533 = vdwg.mxu0
    %v1534 = vsel %vm267, %v1526, -inf
    %1535 = vmax.xlane.f32.xlu0 %v1534
    %v1536 = vpop.xlane.xlu0 %1535
    %v1537 = vsel %vm267, %v1531, -inf
    %1538 = vmax.xlane.f32.xlu0 %v1537
    %v1539 = vpop.xlane.xlu0 %1538
    %v1540 = vsub.f32 %v1526, %v1536
    %v1541 = vsub.f32 %v1531, %v1539
    %v1542 = vmul.f32 %v1540, 1.442695
    %v1543 = vpow.pop %v1542
    %v1544 = vmul.f32 %v1541, 1.442695
    %v1545 = vpow.pop %v1544
    %v1546 = vsel %vm267, %v1543, 0.0
    %1547 = vadd.xlane.f32.xlu0 %v1546
    %v1548 = vpop.xlane.xlu0 %1547
    %v1549 = vsel %vm267, %v1545, 0.0
    %1550 = vadd.xlane.f32.xlu0 %v1549
    %v1551 = vpop.xlane.xlu0 %1550
    %v1552 = vrcp.pop %v1548
    %v1553 = vmul.f32 %v1543, %v1552
    %v1554 = vrcp.pop %v1551
    %v1555 = vmul.f32 %v1545, %v1554
    %1556 = vrot.lane.b32.xlu0 %v1233, 56
    %v1557 = vpop.permute.xlu0 %1556
    %1558 = vrot.lane.b32.xlu0 %v1238, 56
    %v1559 = vpop.permute.xlu0 %1558
    %v1563 = vsel %vm267, %v1553, 0
    %v1566 = vsel %vm267, %v1555, 0
    %1568 = vmatprep.subr.mxu0 0.0
    %1569 = vmatpush1.msra.mxu0 %v1557
    %1570 = vmatprep.subr.mxu0 0.0
    %1571 = vmatpush1.msra.mxu0 %v1559
    %1572 = vmatprep.subr.mxu0 0.0
    %1573 = vmatpush1.msra.mxu0 0.0
    %1574 = vmatprep.subr.mxu0 0.0
    %1575 = vmatpush1.msra.mxu0 0.0
    %1576 = vmatprep.subr.mxu0 0.0
    %1577 = vmatpush1.msra.mxu0 0.0
    %1578 = vmatprep.subr.mxu0 0.0
    %1579 = vmatpush1.msra.mxu0 0.0
    %1580 = vmatprep.subr.mxu0 0.0
    %1581 = vmatpush1.msra.mxu0 0.0
    %1582 = vmatprep.subr.mxu0 0.0
    %1583 = vmatpush1.msra.mxu0 0.0
    %1584 = vmatprep.subr.mxu0 0.0
    %1585 = vmatpush1.msra.mxu0 0.0
    %1586 = vmatprep.subr.mxu0 0.0
    %1587 = vmatpush1.msra.mxu0 0.0
    %1588 = vmatprep.subr.mxu0 0.0
    %1589 = vmatpush1.msra.mxu0 0.0
    %1590 = vmatprep.subr.mxu0 0.0
    %1591 = vmatpush1.msra.mxu0 0.0
    %1592 = vmatprep.subr.mxu0 0.0
    %1593 = vmatpush1.msra.mxu0 0.0
    %1594 = vmatprep.subr.mxu0 0.0
    %1595 = vmatpush1.msra.mxu0 0.0
    %1596 = vmatprep.subr.mxu0 0.0
    %1597 = vmatpush1.msra.mxu0 0.0
    %1598 = vmatprep.subr.mxu0 0.0
    %1599 = vmatpush1.msra.mxu0 0.0
    %1600 = vmatprep.subr.mxu0 0.0
    %1601 = vmatpush1.msra.mxu0 0.0
    %1602 = vmatprep.subr.mxu0 0.0
    %1603 = vmatpush1.msra.mxu0 0.0
    %1604 = vmatprep.subr.mxu0 0.0
    %1605 = vmatpush1.msra.mxu0 0.0
    %1606 = vmatprep.subr.mxu0 0.0
    %1607 = vmatpush1.msra.mxu0 0.0
    %1608 = vmatprep.subr.mxu0 0.0
    %1609 = vmatpush1.msra.mxu0 0.0
    %1610 = vmatprep.subr.mxu0 0.0
    %1611 = vmatpush1.msra.mxu0 0.0
    %1612 = vmatprep.subr.mxu0 0.0
    %1613 = vmatpush1.msra.mxu0 0.0
    %1614 = vmatprep.subr.mxu0 0.0
    %1615 = vmatpush1.msra.mxu0 0.0
    %1616 = vmatprep.subr.mxu0 0.0
    %1617 = vmatpush1.msra.mxu0 0.0
    %1618 = vmatprep.subr.mxu0 0.0
    %1619 = vmatpush1.msra.mxu0 0.0
    %1620 = vmatprep.subr.mxu0 0.0
    %1621 = vmatpush1.msra.mxu0 0.0
    %1622 = vmatprep.subr.mxu0 0.0
    %1623 = vmatpush1.msra.mxu0 0.0
    %1624 = vmatprep.subr.mxu0 0.0
    %1625 = vmatpush1.msra.mxu0 0.0
    %1626 = vmatprep.subr.mxu0 0.0
    %1627 = vmatpush1.msra.mxu0 0.0
    %1628 = vmatprep.subr.mxu0 0.0
    %1629 = vmatpush1.msra.mxu0 0.0
    %1630 = vmatprep.subr.mxu0 0.0
    %1631 = vmatpush1.msra.mxu0 0.0
    %1632 = vmatprep.mubr.f32.mxu0 0.0
    %1633 = vmatmul.mubr.f32.gmra.mrb[0].mxu0 %v1563
    %v1634 = vpop.f32.mrb[0].mxu0
    %v1635 = vadd.f32 0.0, %v1634
    %v1636 = vpop.f32.mrb[0].mxu0
    %1637 = vmatprep.mubr.f32.mxu0 0.0
    %1638 = vmatmul.mubr.f32.gmra.mrb[0].mxu0 %v1566
    %v1639 = vpop.f32.mrb[0].mxu0
    %v1640 = vadd.f32 0.0, %v1639
    %v1641 = vpop.f32.mrb[0].mxu0
    %1642 = vdwg.mxu0
    %1643 = vrot.lane.b32.xlu0 %v1241, 112
    %v1644 = vpop.permute.xlu0 %1643
    %1645 = vrot.lane.b32.xlu0 %v1242, 112
    %v1646 = vpop.permute.xlu0 %1645
    %1647 = vrot.lane.b32.xlu0 %v1233, 80
    %v1648 = vpop.permute.xlu0 %1647
    %1649 = vrot.lane.b32.xlu0 %v1238, 80
    %v1650 = vpop.permute.xlu0 %1649
    %v1651 = vsel %vm181, %v1644, 0
    %v1653 = vsel %vm181, %v1646, 0
    %v1655 = vsel %vm181, %v1648, 0
    %v1657 = vsel %vm181, %v1650, 0
    %1659 = vmatprep.subr.mxu0 0.0
    %1660 = vmatpush1.xpose.msra.mxu0 %v1655
    %1661 = vmatprep.subr.mxu0 0.0
    %1662 = vmatpush1.xpose.msra.mxu0 %v1657
    %1663 = vmatprep.subr.mxu0 0.0
    %1664 = vmatpush1.xpose.msra.mxu0 0.0
    %1665 = vmatprep.subr.mxu0 0.0
    %1666 = vmatpush1.xpose.msra.mxu0 0.0
    %1667 = vmatprep.subr.mxu0 0.0
    %1668 = vmatpush1.xpose.msra.mxu0 0.0
    %1669 = vmatprep.subr.mxu0 0.0
    %1670 = vmatpush1.xpose.msra.mxu0 0.0
    %1671 = vmatprep.subr.mxu0 0.0
    %1672 = vmatpush1.xpose.msra.mxu0 0.0
    %1673 = vmatprep.subr.mxu0 0.0
    %1674 = vmatpush1.xpose.msra.mxu0 0.0
    %1675 = vmatprep.subr.mxu0 0.0
    %1676 = vmatpush1.xpose.msra.mxu0 0.0
    %1677 = vmatprep.subr.mxu0 0.0
    %1678 = vmatpush1.xpose.msra.mxu0 0.0
    %1679 = vmatprep.subr.mxu0 0.0
    %1680 = vmatpush1.xpose.msra.mxu0 0.0
    %1681 = vmatprep.subr.mxu0 0.0
    %1682 = vmatpush1.xpose.msra.mxu0 0.0
    %1683 = vmatprep.subr.mxu0 0.0
    %1684 = vmatpush1.xpose.msra.mxu0 0.0
    %1685 = vmatprep.subr.mxu0 0.0
    %1686 = vmatpush1.xpose.msra.mxu0 0.0
    %1687 = vmatprep.subr.mxu0 0.0
    %1688 = vmatpush1.xpose.msra.mxu0 0.0
    %1689 = vmatprep.subr.mxu0 0.0
    %1690 = vmatpush1.xpose.msra.mxu0 0.0
    %1691 = vmatprep.subr.mxu0 0.0
    %1692 = vmatpush1.xpose.msra.mxu0 0.0
    %1693 = vmatprep.subr.mxu0 0.0
    %1694 = vmatpush1.xpose.msra.mxu0 0.0
    %1695 = vmatprep.subr.mxu0 0.0
    %1696 = vmatpush1.xpose.msra.mxu0 0.0
    %1697 = vmatprep.subr.mxu0 0.0
    %1698 = vmatpush1.xpose.msra.mxu0 0.0
    %1699 = vmatprep.subr.mxu0 0.0
    %1700 = vmatpush1.xpose.msra.mxu0 0.0
    %1701 = vmatprep.subr.mxu0 0.0
    %1702 = vmatpush1.xpose.msra.mxu0 0.0
    %1703 = vmatprep.subr.mxu0 0.0
    %1704 = vmatpush1.xpose.msra.mxu0 0.0
    %1705 = vmatprep.subr.mxu0 0.0
    %1706 = vmatpush1.xpose.msra.mxu0 0.0
    %1707 = vmatprep.subr.mxu0 0.0
    %1708 = vmatpush1.xpose.msra.mxu0 0.0
    %1709 = vmatprep.subr.mxu0 0.0
    %1710 = vmatpush1.xpose.msra.mxu0 0.0
    %1711 = vmatprep.subr.mxu0 0.0
    %1712 = vmatpush1.xpose.msra.mxu0 0.0
    %1713 = vmatprep.subr.mxu0 0.0
    %1714 = vmatpush1.xpose.msra.mxu0 0.0
    %1715 = vmatprep.subr.mxu0 0.0
    %1716 = vmatpush1.xpose.msra.mxu0 0.0
    %1717 = vmatprep.subr.mxu0 0.0
    %1718 = vmatpush1.xpose.msra.mxu0 0.0
    %1719 = vmatprep.subr.mxu0 0.0
    %1720 = vmatpush1.xpose.msra.mxu0 0.0
    %1721 = vmatprep.subr.mxu0 0.0
    %1722 = vmatpush1.xpose.msra.mxu0 0.0
    %1723 = vmatprep.mubr.f32.mxu0 0.0
    %1724 = vmatmul.mubr.f32.gmra.mrb[0].mxu0 %v1651
    %v1725 = vpop.f32.mrb[0].mxu0
    %v1726 = vadd.f32 %v1145, %v1725
    %v1727 = vpop.f32.mrb[0].mxu0
    %1728 = vmatprep.mubr.f32.mxu0 0.0
    %1729 = vmatmul.mubr.f32.gmra.mrb[0].mxu0 %v1653
    %v1730 = vpop.f32.mrb[0].mxu0
    %v1731 = vadd.f32 %v1146, %v1730
    %v1732 = vpop.f32.mrb[0].mxu0
    %1733 = vdwg.mxu0
    %v1734 = vsel %vm267, %v1726, -inf
    %1735 = vmax.xlane.f32.xlu0 %v1734
    %v1736 = vpop.xlane.xlu0 %1735
    %v1737 = vsel %vm267, %v1731, -inf
    %1738 = vmax.xlane.f32.xlu0 %v1737
    %v1739 = vpop.xlane.xlu0 %1738
    %v1740 = vsub.f32 %v1726, %v1736
    %v1741 = vsub.f32 %v1731, %v1739
    %v1742 = vmul.f32 %v1740, 1.442695
    %v1743 = vpow.pop %v1742
    %v1744 = vmul.f32 %v1741, 1.442695
    %v1745 = vpow.pop %v1744
    %v1746 = vsel %vm267, %v1743, 0.0
    %1747 = vadd.xlane.f32.xlu0 %v1746
    %v1748 = vpop.xlane.xlu0 %1747
    %v1749 = vsel %vm267, %v1745, 0.0
    %1750 = vadd.xlane.f32.xlu0 %v1749
    %v1751 = vpop.xlane.xlu0 %1750
    %v1752 = vrcp.pop %v1748
    %v1753 = vmul.f32 %v1743, %v1752
    %v1754 = vrcp.pop %v1751
    %v1755 = vmul.f32 %v1745, %v1754
    %1756 = vrot.lane.b32.xlu0 %v1233, 48
    %v1757 = vpop.permute.xlu0 %1756
    %1758 = vrot.lane.b32.xlu0 %v1238, 48
    %v1759 = vpop.permute.xlu0 %1758
    %v1763 = vsel %vm267, %v1753, 0
    %v1766 = vsel %vm267, %v1755, 0
    %1768 = vmatprep.subr.mxu0 0.0
    %1769 = vmatpush1.msra.mxu0 %v1757
    %1770 = vmatprep.subr.mxu0 0.0
    %1771 = vmatpush1.msra.mxu0 %v1759
    %1772 = vmatprep.subr.mxu0 0.0
    %1773 = vmatpush1.msra.mxu0 0.0
    %1774 = vmatprep.subr.mxu0 0.0
    %1775 = vmatpush1.msra.mxu0 0.0
    %1776 = vmatprep.subr.mxu0 0.0
    %1777 = vmatpush1.msra.mxu0 0.0
    %1778 = vmatprep.subr.mxu0 0.0
    %1779 = vmatpush1.msra.mxu0 0.0
    %1780 = vmatprep.subr.mxu0 0.0
    %1781 = vmatpush1.msra.mxu0 0.0
    %1782 = vmatprep.subr.mxu0 0.0
    %1783 = vmatpush1.msra.mxu0 0.0
    %1784 = vmatprep.subr.mxu0 0.0
    %1785 = vmatpush1.msra.mxu0 0.0
    %1786 = vmatprep.subr.mxu0 0.0
    %1787 = vmatpush1.msra.mxu0 0.0
    %1788 = vmatprep.subr.mxu0 0.0
    %1789 = vmatpush1.msra.mxu0 0.0
    %1790 = vmatprep.subr.mxu0 0.0
    %1791 = vmatpush1.msra.mxu0 0.0
    %1792 = vmatprep.subr.mxu0 0.0
    %1793 = vmatpush1.msra.mxu0 0.0
    %1794 = vmatprep.subr.mxu0 0.0
    %1795 = vmatpush1.msra.mxu0 0.0
    %1796 = vmatprep.subr.mxu0 0.0
    %1797 = vmatpush1.msra.mxu0 0.0
    %1798 = vmatprep.subr.mxu0 0.0
    %1799 = vmatpush1.msra.mxu0 0.0
    %1800 = vmatprep.subr.mxu0 0.0
    %1801 = vmatpush1.msra.mxu0 0.0
    %1802 = vmatprep.subr.mxu0 0.0
    %1803 = vmatpush1.msra.mxu0 0.0
    %1804 = vmatprep.subr.mxu0 0.0
    %1805 = vmatpush1.msra.mxu0 0.0
    %1806 = vmatprep.subr.mxu0 0.0
    %1807 = vmatpush1.msra.mxu0 0.0
    %1808 = vmatprep.subr.mxu0 0.0
    %1809 = vmatpush1.msra.mxu0 0.0
    %1810 = vmatprep.subr.mxu0 0.0
    %1811 = vmatpush1.msra.mxu0 0.0
    %1812 = vmatprep.subr.mxu0 0.0
    %1813 = vmatpush1.msra.mxu0 0.0
    %1814 = vmatprep.subr.mxu0 0.0
    %1815 = vmatpush1.msra.mxu0 0.0
    %1816 = vmatprep.subr.mxu0 0.0
    %1817 = vmatpush1.msra.mxu0 0.0
    %1818 = vmatprep.subr.mxu0 0.0
    %1819 = vmatpush1.msra.mxu0 0.0
    %1820 = vmatprep.subr.mxu0 0.0
    %1821 = vmatpush1.msra.mxu0 0.0
    %1822 = vmatprep.subr.mxu0 0.0
    %1823 = vmatpush1.msra.mxu0 0.0
    %1824 = vmatprep.subr.mxu0 0.0
    %1825 = vmatpush1.msra.mxu0 0.0
    %1826 = vmatprep.subr.mxu0 0.0
    %1827 = vmatpush1.msra.mxu0 0.0
    %1828 = vmatprep.subr.mxu0 0.0
    %1829 = vmatpush1.msra.mxu0 0.0
    %1830 = vmatprep.subr.mxu0 0.0
    %1831 = vmatpush1.msra.mxu0 0.0
    %1832 = vmatprep.mubr.f32.mxu0 0.0
    %1833 = vmatmul.mubr.f32.gmra.mrb[0].mxu0 %v1763
    %v1834 = vpop.f32.mrb[0].mxu0
    %v1835 = vadd.f32 0.0, %v1834
    %v1836 = vpop.f32.mrb[0].mxu0
    %1837 = vmatprep.mubr.f32.mxu0 0.0
    %1838 = vmatmul.mubr.f32.gmra.mrb[0].mxu0 %v1766
    %v1839 = vpop.f32.mrb[0].mxu0
    %v1840 = vadd.f32 0.0, %v1839
    %v1841 = vpop.f32.mrb[0].mxu0
    %1842 = vdwg.mxu0
    %1843 = vrot.lane.b32.xlu0 %v1241, 104
    %v1844 = vpop.permute.xlu0 %1843
    %1845 = vrot.lane.b32.xlu0 %v1242, 104
    %v1846 = vpop.permute.xlu0 %1845
    %1847 = vrot.lane.b32.xlu0 %v1233, 72
    %v1848 = vpop.permute.xlu0 %1847
    %1849 = vrot.lane.b32.xlu0 %v1238, 72
    %v1850 = vpop.permute.xlu0 %1849
    %v1851 = vsel %vm181, %v1844, 0
    %v1853 = vsel %vm181, %v1846, 0
    %v1855 = vsel %vm181, %v1848, 0
    %v1857 = vsel %vm181, %v1850, 0
    %1859 = vmatprep.subr.mxu0 0.0
    %1860 = vmatpush1.xpose.msra.mxu0 %v1855
    %1861 = vmatprep.subr.mxu0 0.0
    %1862 = vmatpush1.xpose.msra.mxu0 %v1857
    %1863 = vmatprep.subr.mxu0 0.0
    %1864 = vmatpush1.xpose.msra.mxu0 0.0
    %1865 = vmatprep.subr.mxu0 0.0
    %1866 = vmatpush1.xpose.msra.mxu0 0.0
    %1867 = vmatprep.subr.mxu0 0.0
    %1868 = vmatpush1.xpose.msra.mxu0 0.0
    %1869 = vmatprep.subr.mxu0 0.0
    %1870 = vmatpush1.xpose.msra.mxu0 0.0
    %1871 = vmatprep.subr.mxu0 0.0
    %1872 = vmatpush1.xpose.msra.mxu0 0.0
    %1873 = vmatprep.subr.mxu0 0.0
    %1874 = vmatpush1.xpose.msra.mxu0 0.0
    %1875 = vmatprep.subr.mxu0 0.0
    %1876 = vmatpush1.xpose.msra.mxu0 0.0
    %1877 = vmatprep.subr.mxu0 0.0
    %1878 = vmatpush1.xpose.msra.mxu0 0.0
    %1879 = vmatprep.subr.mxu0 0.0
    %1880 = vmatpush1.xpose.msra.mxu0 0.0
    %1881 = vmatprep.subr.mxu0 0.0
    %1882 = vmatpush1.xpose.msra.mxu0 0.0
    %1883 = vmatprep.subr.mxu0 0.0
    %1884 = vmatpush1.xpose.msra.mxu0 0.0
    %1885 = vmatprep.subr.mxu0 0.0
    %1886 = vmatpush1.xpose.msra.mxu0 0.0
    %1887 = vmatprep.subr.mxu0 0.0
    %1888 = vmatpush1.xpose.msra.mxu0 0.0
    %1889 = vmatprep.subr.mxu0 0.0
    %1890 = vmatpush1.xpose.msra.mxu0 0.0
    %1891 = vmatprep.subr.mxu0 0.0
    %1892 = vmatpush1.xpose.msra.mxu0 0.0
    %1893 = vmatprep.subr.mxu0 0.0
    %1894 = vmatpush1.xpose.msra.mxu0 0.0
    %1895 = vmatprep.subr.mxu0 0.0
    %1896 = vmatpush1.xpose.msra.mxu0 0.0
    %1897 = vmatprep.subr.mxu0 0.0
    %1898 = vmatpush1.xpose.msra.mxu0 0.0
    %1899 = vmatprep.subr.mxu0 0.0
    %1900 = vmatpush1.xpose.msra.mxu0 0.0
    %1901 = vmatprep.subr.mxu0 0.0
    %1902 = vmatpush1.xpose.msra.mxu0 0.0
    %1903 = vmatprep.subr.mxu0 0.0
    %1904 = vmatpush1.xpose.msra.mxu0 0.0
    %1905 = vmatprep.subr.mxu0 0.0
    %1906 = vmatpush1.xpose.msra.mxu0 0.0
    %1907 = vmatprep.subr.mxu0 0.0
    %1908 = vmatpush1.xpose.msra.mxu0 0.0
    %1909 = vmatprep.subr.mxu0 0.0
    %1910 = vmatpush1.xpose.msra.mxu0 0.0
    %1911 = vmatprep.subr.mxu0 0.0
    %1912 = vmatpush1.xpose.msra.mxu0 0.0
    %1913 = vmatprep.subr.mxu0 0.0
    %1914 = vmatpush1.xpose.msra.mxu0 0.0
    %1915 = vmatprep.subr.mxu0 0.0
    %1916 = vmatpush1.xpose.msra.mxu0 0.0
    %1917 = vmatprep.subr.mxu0 0.0
    %1918 = vmatpush1.xpose.msra.mxu0 0.0
    %1919 = vmatprep.subr.mxu0 0.0
    %1920 = vmatpush1.xpose.msra.mxu0 0.0
    %1921 = vmatprep.subr.mxu0 0.0
    %1922 = vmatpush1.xpose.msra.mxu0 0.0
    %1923 = vmatprep.mubr.f32.mxu0 0.0
    %1924 = vmatmul.mubr.f32.gmra.mrb[0].mxu0 %v1851
    %v1925 = vpop.f32.mrb[0].mxu0
    %v1926 = vadd.f32 %v1145, %v1925
    %v1927 = vpop.f32.mrb[0].mxu0
    %1928 = vmatprep.mubr.f32.mxu0 0.0
    %1929 = vmatmul.mubr.f32.gmra.mrb[0].mxu0 %v1853
    %v1930 = vpop.f32.mrb[0].mxu0
    %v1931 = vadd.f32 %v1146, %v1930
    %v1932 = vpop.f32.mrb[0].mxu0
    %1933 = vdwg.mxu0
    %v1934 = vsel %vm267, %v1926, -inf
    %1935 = vmax.xlane.f32.xlu0 %v1934
    %v1936 = vpop.xlane.xlu0 %1935
    %v1937 = vsel %vm267, %v1931, -inf
    %1938 = vmax.xlane.f32.xlu0 %v1937
    %v1939 = vpop.xlane.xlu0 %1938
    %v1940 = vsub.f32 %v1926, %v1936
    %v1941 = vsub.f32 %v1931, %v1939
    %v1942 = vmul.f32 %v1940, 1.442695
    %v1943 = vpow.pop %v1942
    %v1944 = vmul.f32 %v1941, 1.442695
    %v1945 = vpow.pop %v1944
    %v1946 = vsel %vm267, %v1943, 0.0
    %1947 = vadd.xlane.f32.xlu0 %v1946
    %v1948 = vpop.xlane.xlu0 %1947
    %v1949 = vsel %vm267, %v1945, 0.0
    %1950 = vadd.xlane.f32.xlu0 %v1949
    %v1951 = vpop.xlane.xlu0 %1950
    %v1952 = vrcp.pop %v1948
    %v1953 = vmul.f32 %v1943, %v1952
    %v1954 = vrcp.pop %v1951
    %v1955 = vmul.f32 %v1945, %v1954
    %1956 = vrot.lane.b32.xlu0 %v1233, 40
    %v1957 = vpop.permute.xlu0 %1956
    %1958 = vrot.lane.b32.xlu0 %v1238, 40
    %v1959 = vpop.permute.xlu0 %1958
    %v1963 = vsel %vm267, %v1953, 0
    %v1966 = vsel %vm267, %v1955, 0
    %1968 = vmatprep.subr.mxu0 0.0
    %1969 = vmatpush1.msra.mxu0 %v1957
    %1970 = vmatprep.subr.mxu0 0.0
    %1971 = vmatpush1.msra.mxu0 %v1959
    %1972 = vmatprep.subr.mxu0 0.0
    %1973 = vmatpush1.msra.mxu0 0.0
    %1974 = vmatprep.subr.mxu0 0.0
    %1975 = vmatpush1.msra.mxu0 0.0
    %1976 = vmatprep.subr.mxu0 0.0
    %1977 = vmatpush1.msra.mxu0 0.0
    %1978 = vmatprep.subr.mxu0 0.0
    %1979 = vmatpush1.msra.mxu0 0.0
    %1980 = vmatprep.subr.mxu0 0.0
    %1981 = vmatpush1.msra.mxu0 0.0
    %1982 = vmatprep.subr.mxu0 0.0
    %1983 = vmatpush1.msra.mxu0 0.0
    %1984 = vmatprep.subr.mxu0 0.0
    %1985 = vmatpush1.msra.mxu0 0.0
    %1986 = vmatprep.subr.mxu0 0.0
    %1987 = vmatpush1.msra.mxu0 0.0
    %1988 = vmatprep.subr.mxu0 0.0
    %1989 = vmatpush1.msra.mxu0 0.0
    %1990 = vmatprep.subr.mxu0 0.0
    %1991 = vmatpush1.msra.mxu0 0.0
    %1992 = vmatprep.subr.mxu0 0.0
    %1993 = vmatpush1.msra.mxu0 0.0
    %1994 = vmatprep.subr.mxu0 0.0
    %1995 = vmatpush1.msra.mxu0 0.0
    %1996 = vmatprep.subr.mxu0 0.0
    %1997 = vmatpush1.msra.mxu0 0.0
    %1998 = vmatprep.subr.mxu0 0.0
    %1999 = vmatpush1.msra.mxu0 0.0
    %2000 = vmatprep.subr.mxu0 0.0
    %2001 = vmatpush1.msra.mxu0 0.0
    %2002 = vmatprep.subr.mxu0 0.0
    %2003 = vmatpush1.msra.mxu0 0.0
    %2004 = vmatprep.subr.mxu0 0.0
    %2005 = vmatpush1.msra.mxu0 0.0
    %2006 = vmatprep.subr.mxu0 0.0
    %2007 = vmatpush1.msra.mxu0 0.0
    %2008 = vmatprep.subr.mxu0 0.0
    %2009 = vmatpush1.msra.mxu0 0.0
    %2010 = vmatprep.subr.mxu0 0.0
    %2011 = vmatpush1.msra.mxu0 0.0
    %2012 = vmatprep.subr.mxu0 0.0
    %2013 = vmatpush1.msra.mxu0 0.0
    %2014 = vmatprep.subr.mxu0 0.0
    %2015 = vmatpush1.msra.mxu0 0.0
    %2016 = vmatprep.subr.mxu0 0.0
    %2017 = vmatpush1.msra.mxu0 0.0
    %2018 = vmatprep.subr.mxu0 0.0
    %2019 = vmatpush1.msra.mxu0 0.0
    %2020 = vmatprep.subr.mxu0 0.0
    %2021 = vmatpush1.msra.mxu0 0.0
    %2022 = vmatprep.subr.mxu0 0.0
    %2023 = vmatpush1.msra.mxu0 0.0
    %2024 = vmatprep.subr.mxu0 0.0
    %2025 = vmatpush1.msra.mxu0 0.0
    %2026 = vmatprep.subr.mxu0 0.0
    %2027 = vmatpush1.msra.mxu0 0.0
    %2028 = vmatprep.subr.mxu0 0.0
    %2029 = vmatpush1.msra.mxu0 0.0
    %2030 = vmatprep.subr.mxu0 0.0
    %2031 = vmatpush1.msra.mxu0 0.0
    %2032 = vmatprep.mubr.f32.mxu0 0.0
    %2033 = vmatmul.mubr.f32.gmra.mrb[0].mxu0 %v1963
    %v2034 = vpop.f32.mrb[0].mxu0
    %v2035 = vadd.f32 0.0, %v2034
    %v2036 = vpop.f32.mrb[0].mxu0
    %2037 = vmatprep.mubr.f32.mxu0 0.0
    %2038 = vmatmul.mubr.f32.gmra.mrb[0].mxu0 %v1966
    %v2039 = vpop.f32.mrb[0].mxu0
    %v2040 = vadd.f32 0.0, %v2039
    %v2041 = vpop.f32.mrb[0].mxu0
    %2042 = vdwg.mxu0
    %2045 = vrot.lane.b32.xlu0 %v1635, 8
    %v2046 = vpop.permute.xlu0 %2045
    %2047 = vrot.lane.b32.xlu0 %v1640, 8
    %v2048 = vpop.permute.xlu0 %2047
    %2053 = vrot.lane.b32.xlu0 %v1835, 16
    %v2054 = vpop.permute.xlu0 %2053
    %2055 = vrot.lane.b32.xlu0 %v1840, 16
    %v2056 = vpop.permute.xlu0 %2055
    %2061 = vrot.lane.b32.xlu0 %v2035, 24
    %v2062 = vpop.permute.xlu0 %2061
    %2063 = vrot.lane.b32.xlu0 %v2040, 24
    %v2064 = vpop.permute.xlu0 %2063
    %v2067 = vsel %vm181, %v1435, %v2046
    %v2068 = vsel %vm181, %v1440, %v2048
    %v2069 = vsel %vm267, %v2067, %v2054
    %v2070 = vsel %vm267, %v2068, %v2056
    %v2071 = vsel %vm1005, %v2069, %v2062
    %v2072 = vsel %vm1005, %v2070, %v2064
    %s2073 = scalar_lea.vmem %s11, 32
    %v2074 = vld [vmem:[%s2073] sm:$0xff]
    %v2075 = vld [vmem:[%s2073 + $0x8] sm:$0xff]
    %v2076 = vld [vmem:[%s2073 + $0x10] sm:$0xff]
    %v2077 = vld [vmem:[%s2073 + $0x18] sm:$0xff]
    %s2078 = scalar_lea.vmem %s12, 1
    %v2079 = vld [vmem:[%s2078] sm:$0x1]
    %v2081 = vlaneseq
    %v2082 = vshrl.u32 %v2081, 7
    %v2083 = vsub.s32 0, %v2082
    %v2084 = vrot.slane %v2079, %v2083
    %v2087 = vsel %vm91, %v2071, 0
    %v2090 = vsel %vm91, %v2072, 0
    %2092 = vmatprep.subr.mxu0 0.0
    %2093 = vmatpush1.msra.mxu0 %v2074
    %2094 = vmatprep.subr.mxu0 0.0
    %2095 = vmatpush1.msra.mxu0 %v2075
    %2096 = vmatprep.subr.mxu0 0.0
    %2097 = vmatpush1.msra.mxu0 %v2076
    %2098 = vmatprep.subr.mxu0 0.0
    %2099 = vmatpush1.msra.mxu0 %v2077
    %2100 = vmatprep.subr.mxu0 0.0
    %2101 = vmatpush1.msra.mxu0 0.0
    %2102 = vmatprep.subr.mxu0 0.0
    %2103 = vmatpush1.msra.mxu0 0.0
    %2104 = vmatprep.subr.mxu0 0.0
    %2105 = vmatpush1.msra.mxu0 0.0
    %2106 = vmatprep.subr.mxu0 0.0
    %2107 = vmatpush1.msra.mxu0 0.0
    %2108 = vmatprep.subr.mxu0 0.0
    %2109 = vmatpush1.msra.mxu0 0.0
    %2110 = vmatprep.subr.mxu0 0.0
    %2111 = vmatpush1.msra.mxu0 0.0
    %2112 = vmatprep.subr.mxu0 0.0
    %2113 = vmatpush1.msra.mxu0 0.0
    %2114 = vmatprep.subr.mxu0 0.0
    %2115 = vmatpush1.msra.mxu0 0.0
    %2116 = vmatprep.subr.mxu0 0.0
    %2117 = vmatpush1.msra.mxu0 0.0
    %2118 = vmatprep.subr.mxu0 0.0
    %2119 = vmatpush1.msra.mxu0 0.0
    %2120 = vmatprep.subr.mxu0 0.0
    %2121 = vmatpush1.msra.mxu0 0.0
    %2122 = vmatprep.subr.mxu0 0.0
    %2123 = vmatpush1.msra.mxu0 0.0
    %2124 = vmatprep.subr.mxu0 0.0
    %2125 = vmatpush1.msra.mxu0 0.0
    %2126 = vmatprep.subr.mxu0 0.0
    %2127 = vmatpush1.msra.mxu0 0.0
    %2128 = vmatprep.subr.mxu0 0.0
    %2129 = vmatpush1.msra.mxu0 0.0
    %2130 = vmatprep.subr.mxu0 0.0
    %2131 = vmatpush1.msra.mxu0 0.0
    %2132 = vmatprep.subr.mxu0 0.0
    %2133 = vmatpush1.msra.mxu0 0.0
    %2134 = vmatprep.subr.mxu0 0.0
    %2135 = vmatpush1.msra.mxu0 0.0
    %2136 = vmatprep.subr.mxu0 0.0
    %2137 = vmatpush1.msra.mxu0 0.0
    %2138 = vmatprep.subr.mxu0 0.0
    %2139 = vmatpush1.msra.mxu0 0.0
    %2140 = vmatprep.subr.mxu0 0.0
    %2141 = vmatpush1.msra.mxu0 0.0
    %2142 = vmatprep.subr.mxu0 0.0
    %2143 = vmatpush1.msra.mxu0 0.0
    %2144 = vmatprep.subr.mxu0 0.0
    %2145 = vmatpush1.msra.mxu0 0.0
    %2146 = vmatprep.subr.mxu0 0.0
    %2147 = vmatpush1.msra.mxu0 0.0
    %2148 = vmatprep.subr.mxu0 0.0
    %2149 = vmatpush1.msra.mxu0 0.0
    %2150 = vmatprep.subr.mxu0 0.0
    %2151 = vmatpush1.msra.mxu0 0.0
    %2152 = vmatprep.subr.mxu0 0.0
    %2153 = vmatpush1.msra.mxu0 0.0
    %2154 = vmatprep.subr.mxu0 0.0
    %2155 = vmatpush1.msra.mxu0 0.0
    %2156 = vmatprep.mubr.f32.mxu0 0.0
    %2157 = vmatmul.mubr.f32.gmra.mrb[0].mxu0 %v2087
    %v2158 = vpop.f32.mrb[0].mxu0
    %v2159 = vadd.f32 %v2084, %v2158
    %v2160 = vpop.f32.mrb[0].mxu0
    %2161 = vmatprep.mubr.f32.mxu0 0.0
    %2162 = vmatmul.mubr.f32.gmra.mrb[0].mxu0 %v2090
    %v2163 = vpop.f32.mrb[0].mxu0
    %v2164 = vadd.f32 %v2084, %v2163
    %v2165 = vpop.f32.mrb[0].mxu0
    %2166 = vdwg.mxu0
    %v2167 = vadd.f32 %v74, %v2159
    %v2168 = vadd.f32 %v75, %v2164
    %v2169 = vsel %vm91, %v2167, 0.0
    %2170 = vadd.xlane.f32.xlu0 %v2169
    %v2171 = vpop.xlane.xlu0 %2170
    %v2172 = vsel %vm91, %v2168, 0.0
    %2173 = vadd.xlane.f32.xlu0 %v2172
    %v2174 = vpop.xlane.xlu0 %2173
    %v2175 = vmul.f32 %v2171, %v1108
    %v2176 = vmul.f32 %v2174, %v1108
    %v2177 = vsub.f32 %v2167, %v2175
    %v2178 = vsub.f32 %v2168, %v2176
    %v2179 = vmul.f32 %v2177, %v2177
    %v2180 = vmul.f32 %v2178, %v2178
    %v2181 = vsel %vm91, %v2179, 0.0
    %2182 = vadd.xlane.f32.xlu0 %v2181
    %v2183 = vpop.xlane.xlu0 %2182
    %v2184 = vsel %vm91, %v2180, 0.0
    %2185 = vadd.xlane.f32.xlu0 %v2184
    %v2186 = vpop.xlane.xlu0 %2185
    %v2187 = vmul.f32 %v2183, %v1108
    %v2188 = vmul.f32 %v2186, %v1108
    %v2189 = vadd.f32 %v2187, 1e-05
    %v2190 = vadd.f32 %v2188, 1e-05
    %v2191 = vrsqrt.pop %v2189
    %v2192 = vrsqrt.pop %v2190
    %v2193 = vmul.f32 %v2177, %v2191
    %v2194 = vmul.f32 %v2178, %v2192
    %v2195 = vmul.f32 %v2193, %v1133
    %v2196 = vmul.f32 %v2194, %v1133
    %v2197 = vadd.f32 %v2195, %v1141
    %v2198 = vadd.f32 %v2196, %v1141
    %v2199 = vld [vmem:[%s5] sm:$0xff]
    %v2200 = vld [vmem:[%s5 + $0x8] sm:$0xff]
    %s2201 = scalar_lea.vmem %s9, 64
    %v2202 = vld [vmem:[%s2201] sm:$0xff]
    %v2203 = vld [vmem:[%s2201 + $0x8] sm:$0xff]
    %v2204 = vld [vmem:[%s2201 + $0x10] sm:$0xff]
    %v2205 = vld [vmem:[%s2201 + $0x18] sm:$0xff]
    %s2206 = scalar_lea.vmem %s10, 2
    %v2207 = vld [vmem:[%s2206] sm:$0x1]
    %v2209 = vlaneseq
    %v2210 = vshrl.u32 %v2209, 7
    %v2211 = vsub.s32 0, %v2210
    %v2212 = vrot.slane %v2207, %v2211
    %v2215 = vsel %vm91, %v76, 0
    %v2218 = vsel %vm91, %v77, 0
    %2220 = vmatprep.subr.mxu0 0.0
    %2221 = vmatpush1.msra.mxu0 %v2202
    %2222 = vmatprep.subr.mxu0 0.0
    %2223 = vmatpush1.msra.mxu0 %v2203
    %2224 = vmatprep.subr.mxu0 0.0
    %2225 = vmatpush1.msra.mxu0 %v2204
    %2226 = vmatprep.subr.mxu0 0.0
    %2227 = vmatpush1.msra.mxu0 %v2205
    %2228 = vmatprep.subr.mxu0 0.0
    %2229 = vmatpush1.msra.mxu0 0.0
    %2230 = vmatprep.subr.mxu0 0.0
    %2231 = vmatpush1.msra.mxu0 0.0
    %2232 = vmatprep.subr.mxu0 0.0
    %2233 = vmatpush1.msra.mxu0 0.0
    %2234 = vmatprep.subr.mxu0 0.0
    %2235 = vmatpush1.msra.mxu0 0.0
    %2236 = vmatprep.subr.mxu0 0.0
    %2237 = vmatpush1.msra.mxu0 0.0
    %2238 = vmatprep.subr.mxu0 0.0
    %2239 = vmatpush1.msra.mxu0 0.0
    %2240 = vmatprep.subr.mxu0 0.0
    %2241 = vmatpush1.msra.mxu0 0.0
    %2242 = vmatprep.subr.mxu0 0.0
    %2243 = vmatpush1.msra.mxu0 0.0
    %2244 = vmatprep.subr.mxu0 0.0
    %2245 = vmatpush1.msra.mxu0 0.0
    %2246 = vmatprep.subr.mxu0 0.0
    %2247 = vmatpush1.msra.mxu0 0.0
    %2248 = vmatprep.subr.mxu0 0.0
    %2249 = vmatpush1.msra.mxu0 0.0
    %2250 = vmatprep.subr.mxu0 0.0
    %2251 = vmatpush1.msra.mxu0 0.0
    %2252 = vmatprep.subr.mxu0 0.0
    %2253 = vmatpush1.msra.mxu0 0.0
    %2254 = vmatprep.subr.mxu0 0.0
    %2255 = vmatpush1.msra.mxu0 0.0
    %2256 = vmatprep.subr.mxu0 0.0
    %2257 = vmatpush1.msra.mxu0 0.0
    %2258 = vmatprep.subr.mxu0 0.0
    %2259 = vmatpush1.msra.mxu0 0.0
    %2260 = vmatprep.subr.mxu0 0.0
    %2261 = vmatpush1.msra.mxu0 0.0
    %2262 = vmatprep.subr.mxu0 0.0
    %2263 = vmatpush1.msra.mxu0 0.0
    %2264 = vmatprep.subr.mxu0 0.0
    %2265 = vmatpush1.msra.mxu0 0.0
    %2266 = vmatprep.subr.mxu0 0.0
    %2267 = vmatpush1.msra.mxu0 0.0
    %2268 = vmatprep.subr.mxu0 0.0
    %2269 = vmatpush1.msra.mxu0 0.0
    %2270 = vmatprep.subr.mxu0 0.0
    %2271 = vmatpush1.msra.mxu0 0.0
    %2272 = vmatprep.subr.mxu0 0.0
    %2273 = vmatpush1.msra.mxu0 0.0
    %2274 = vmatprep.subr.mxu0 0.0
    %2275 = vmatpush1.msra.mxu0 0.0
    %2276 = vmatprep.subr.mxu0 0.0
    %2277 = vmatpush1.msra.mxu0 0.0
    %2278 = vmatprep.subr.mxu0 0.0
    %2279 = vmatpush1.msra.mxu0 0.0
    %2280 = vmatprep.subr.mxu0 0.0
    %2281 = vmatpush1.msra.mxu0 0.0
    %2282 = vmatprep.subr.mxu0 0.0
    %2283 = vmatpush1.msra.mxu0 0.0
    %2284 = vmatprep.mubr.f32.mxu0 0.0
    %2285 = vmatmul.mubr.f32.gmra.mrb[0].mxu0 %v2215
    %v2286 = vpop.f32.mrb[0].mxu0
    %v2287 = vadd.f32 %v2212, %v2286
    %v2288 = vpop.f32.mrb[0].mxu0
    %2289 = vmatprep.mubr.f32.mxu0 0.0
    %2290 = vmatmul.mubr.f32.gmra.mrb[0].mxu0 %v2218
    %v2291 = vpop.f32.mrb[0].mxu0
    %v2292 = vadd.f32 %v2212, %v2291
    %v2293 = vpop.f32.mrb[0].mxu0
    %2294 = vdwg.mxu0
    %v2295 = vmul.f32 %v2287, 0.35355338
    %v2296 = vmul.f32 %v2292, 0.35355338
    %2299 = vrot.lane.b32.xlu0 %v2287, 96
    %v2300 = vpop.permute.xlu0 %2299
    %2301 = vrot.lane.b32.xlu0 %v2292, 96
    %v2302 = vpop.permute.xlu0 %2301
    %v2304 = vsel %vm181, %v2295, 0
    %v2307 = vsel %vm181, %v2296, 0
    %v2309 = vsel %vm181, %v2300, 0
    %v2311 = vsel %vm181, %v2302, 0
    %2313 = vmatprep.subr.mxu0 0.0
    %2314 = vmatpush1.xpose.msra.mxu0 %v2309
    %2315 = vmatprep.subr.mxu0 0.0
    %2316 = vmatpush1.xpose.msra.mxu0 %v2311
    %2317 = vmatprep.subr.mxu0 0.0
    %2318 = vmatpush1.xpose.msra.mxu0 0.0
    %2319 = vmatprep.subr.mxu0 0.0
    %2320 = vmatpush1.xpose.msra.mxu0 0.0
    %2321 = vmatprep.subr.mxu0 0.0
    %2322 = vmatpush1.xpose.msra.mxu0 0.0
    %2323 = vmatprep.subr.mxu0 0.0
    %2324 = vmatpush1.xpose.msra.mxu0 0.0
    %2325 = vmatprep.subr.mxu0 0.0
    %2326 = vmatpush1.xpose.msra.mxu0 0.0
    %2327 = vmatprep.subr.mxu0 0.0
    %2328 = vmatpush1.xpose.msra.mxu0 0.0
    %2329 = vmatprep.subr.mxu0 0.0
    %2330 = vmatpush1.xpose.msra.mxu0 0.0
    %2331 = vmatprep.subr.mxu0 0.0
    %2332 = vmatpush1.xpose.msra.mxu0 0.0
    %2333 = vmatprep.subr.mxu0 0.0
    %2334 = vmatpush1.xpose.msra.mxu0 0.0
    %2335 = vmatprep.subr.mxu0 0.0
    %2336 = vmatpush1.xpose.msra.mxu0 0.0
    %2337 = vmatprep.subr.mxu0 0.0
    %2338 = vmatpush1.xpose.msra.mxu0 0.0
    %2339 = vmatprep.subr.mxu0 0.0
    %2340 = vmatpush1.xpose.msra.mxu0 0.0
    %2341 = vmatprep.subr.mxu0 0.0
    %2342 = vmatpush1.xpose.msra.mxu0 0.0
    %2343 = vmatprep.subr.mxu0 0.0
    %2344 = vmatpush1.xpose.msra.mxu0 0.0
    %2345 = vmatprep.subr.mxu0 0.0
    %2346 = vmatpush1.xpose.msra.mxu0 0.0
    %2347 = vmatprep.subr.mxu0 0.0
    %2348 = vmatpush1.xpose.msra.mxu0 0.0
    %2349 = vmatprep.subr.mxu0 0.0
    %2350 = vmatpush1.xpose.msra.mxu0 0.0
    %2351 = vmatprep.subr.mxu0 0.0
    %2352 = vmatpush1.xpose.msra.mxu0 0.0
    %2353 = vmatprep.subr.mxu0 0.0
    %2354 = vmatpush1.xpose.msra.mxu0 0.0
    %2355 = vmatprep.subr.mxu0 0.0
    %2356 = vmatpush1.xpose.msra.mxu0 0.0
    %2357 = vmatprep.subr.mxu0 0.0
    %2358 = vmatpush1.xpose.msra.mxu0 0.0
    %2359 = vmatprep.subr.mxu0 0.0
    %2360 = vmatpush1.xpose.msra.mxu0 0.0
    %2361 = vmatprep.subr.mxu0 0.0
    %2362 = vmatpush1.xpose.msra.mxu0 0.0
    %2363 = vmatprep.subr.mxu0 0.0
    %2364 = vmatpush1.xpose.msra.mxu0 0.0
    %2365 = vmatprep.subr.mxu0 0.0
    %2366 = vmatpush1.xpose.msra.mxu0 0.0
    %2367 = vmatprep.subr.mxu0 0.0
    %2368 = vmatpush1.xpose.msra.mxu0 0.0
    %2369 = vmatprep.subr.mxu0 0.0
    %2370 = vmatpush1.xpose.msra.mxu0 0.0
    %2371 = vmatprep.subr.mxu0 0.0
    %2372 = vmatpush1.xpose.msra.mxu0 0.0
    %2373 = vmatprep.subr.mxu0 0.0
    %2374 = vmatpush1.xpose.msra.mxu0 0.0
    %2375 = vmatprep.subr.mxu0 0.0
    %2376 = vmatpush1.xpose.msra.mxu0 0.0
    %2377 = vmatprep.mubr.f32.mxu0 0.0
    %2378 = vmatmul.mubr.f32.gmra.mrb[0].mxu0 %v2304
    %v2379 = vpop.f32.mrb[0].mxu0
    %v2380 = vadd.f32 %v2199, %v2379
    %v2381 = vpop.f32.mrb[0].mxu0
    %2382 = vmatprep.mubr.f32.mxu0 0.0
    %2383 = vmatmul.mubr.f32.gmra.mrb[0].mxu0 %v2307
    %v2384 = vpop.f32.mrb[0].mxu0
    %v2385 = vadd.f32 %v2200, %v2384
    %v2386 = vpop.f32.mrb[0].mxu0
    %2387 = vdwg.mxu0
    %v2388 = vsel %vm267, %v2380, -inf
    %2389 = vmax.xlane.f32.xlu0 %v2388
    %v2390 = vpop.xlane.xlu0 %2389
    %v2391 = vsel %vm267, %v2385, -inf
    %2392 = vmax.xlane.f32.xlu0 %v2391
    %v2393 = vpop.xlane.xlu0 %2392
    %v2394 = vsub.f32 %v2380, %v2390
    %v2395 = vsub.f32 %v2385, %v2393
    %v2396 = vmul.f32 %v2394, 1.442695
    %v2397 = vpow.pop %v2396
    %v2398 = vmul.f32 %v2395, 1.442695
    %v2399 = vpow.pop %v2398
    %v2400 = vsel %vm267, %v2397, 0.0
    %2401 = vadd.xlane.f32.xlu0 %v2400
    %v2402 = vpop.xlane.xlu0 %2401
    %v2403 = vsel %vm267, %v2399, 0.0
    %2404 = vadd.xlane.f32.xlu0 %v2403
    %v2405 = vpop.xlane.xlu0 %2404
    %v2406 = vrcp.pop %v2402
    %v2407 = vmul.f32 %v2397, %v2406
    %v2408 = vrcp.pop %v2405
    %v2409 = vmul.f32 %v2399, %v2408
    %2410 = vrot.lane.b32.xlu0 %v2287, 64
    %v2411 = vpop.permute.xlu0 %2410
    %2412 = vrot.lane.b32.xlu0 %v2292, 64
    %v2413 = vpop.permute.xlu0 %2412
    %v2417 = vsel %vm267, %v2407, 0
    %v2420 = vsel %vm267, %v2409, 0
    %2422 = vmatprep.subr.mxu0 0.0
    %2423 = vmatpush1.msra.mxu0 %v2411
    %2424 = vmatprep.subr.mxu0 0.0
    %2425 = vmatpush1.msra.mxu0 %v2413
    %2426 = vmatprep.subr.mxu0 0.0
    %2427 = vmatpush1.msra.mxu0 0.0
    %2428 = vmatprep.subr.mxu0 0.0
    %2429 = vmatpush1.msra.mxu0 0.0
    %2430 = vmatprep.subr.mxu0 0.0
    %2431 = vmatpush1.msra.mxu0 0.0
    %2432 = vmatprep.subr.mxu0 0.0
    %2433 = vmatpush1.msra.mxu0 0.0
    %2434 = vmatprep.subr.mxu0 0.0
    %2435 = vmatpush1.msra.mxu0 0.0
    %2436 = vmatprep.subr.mxu0 0.0
    %2437 = vmatpush1.msra.mxu0 0.0
    %2438 = vmatprep.subr.mxu0 0.0
    %2439 = vmatpush1.msra.mxu0 0.0
    %2440 = vmatprep.subr.mxu0 0.0
    %2441 = vmatpush1.msra.mxu0 0.0
    %2442 = vmatprep.subr.mxu0 0.0
    %2443 = vmatpush1.msra.mxu0 0.0
    %2444 = vmatprep.subr.mxu0 0.0
    %2445 = vmatpush1.msra.mxu0 0.0
    %2446 = vmatprep.subr.mxu0 0.0
    %2447 = vmatpush1.msra.mxu0 0.0
    %2448 = vmatprep.subr.mxu0 0.0
    %2449 = vmatpush1.msra.mxu0 0.0
    %2450 = vmatprep.subr.mxu0 0.0
    %2451 = vmatpush1.msra.mxu0 0.0
    %2452 = vmatprep.subr.mxu0 0.0
    %2453 = vmatpush1.msra.mxu0 0.0
    %2454 = vmatprep.subr.mxu0 0.0
    %2455 = vmatpush1.msra.mxu0 0.0
    %2456 = vmatprep.subr.mxu0 0.0
    %2457 = vmatpush1.msra.mxu0 0.0
    %2458 = vmatprep.subr.mxu0 0.0
    %2459 = vmatpush1.msra.mxu0 0.0
    %2460 = vmatprep.subr.mxu0 0.0
    %2461 = vmatpush1.msra.mxu0 0.0
    %2462 = vmatprep.subr.mxu0 0.0
    %2463 = vmatpush1.msra.mxu0 0.0
    %2464 = vmatprep.subr.mxu0 0.0
    %2465 = vmatpush1.msra.mxu0 0.0
    %2466 = vmatprep.subr.mxu0 0.0
    %2467 = vmatpush1.msra.mxu0 0.0
    %2468 = vmatprep.subr.mxu0 0.0
    %2469 = vmatpush1.msra.mxu0 0.0
    %2470 = vmatprep.subr.mxu0 0.0
    %2471 = vmatpush1.msra.mxu0 0.0
    %2472 = vmatprep.subr.mxu0 0.0
    %2473 = vmatpush1.msra.mxu0 0.0
    %2474 = vmatprep.subr.mxu0 0.0
    %2475 = vmatpush1.msra.mxu0 0.0
    %2476 = vmatprep.subr.mxu0 0.0
    %2477 = vmatpush1.msra.mxu0 0.0
    %2478 = vmatprep.subr.mxu0 0.0
    %2479 = vmatpush1.msra.mxu0 0.0
    %2480 = vmatprep.subr.mxu0 0.0
    %2481 = vmatpush1.msra.mxu0 0.0
    %2482 = vmatprep.subr.mxu0 0.0
    %2483 = vmatpush1.msra.mxu0 0.0
    %2484 = vmatprep.subr.mxu0 0.0
    %2485 = vmatpush1.msra.mxu0 0.0
    %2486 = vmatprep.mubr.f32.mxu0 0.0
    %2487 = vmatmul.mubr.f32.gmra.mrb[0].mxu0 %v2417
    %v2488 = vpop.f32.mrb[0].mxu0
    %v2489 = vadd.f32 0.0, %v2488
    %v2490 = vpop.f32.mrb[0].mxu0
    %2491 = vmatprep.mubr.f32.mxu0 0.0
    %2492 = vmatmul.mubr.f32.gmra.mrb[0].mxu0 %v2420
    %v2493 = vpop.f32.mrb[0].mxu0
    %v2494 = vadd.f32 0.0, %v2493
    %v2495 = vpop.f32.mrb[0].mxu0
    %2496 = vdwg.mxu0
    %2497 = vrot.lane.b32.xlu0 %v2295, 120
    %v2498 = vpop.permute.xlu0 %2497
    %2499 = vrot.lane.b32.xlu0 %v2296, 120
    %v2500 = vpop.permute.xlu0 %2499
    %2501 = vrot.lane.b32.xlu0 %v2287, 88
    %v2502 = vpop.permute.xlu0 %2501
    %2503 = vrot.lane.b32.xlu0 %v2292, 88
    %v2504 = vpop.permute.xlu0 %2503
    %v2505 = vsel %vm181, %v2498, 0
    %v2507 = vsel %vm181, %v2500, 0
    %v2509 = vsel %vm181, %v2502, 0
    %v2511 = vsel %vm181, %v2504, 0
    %2513 = vmatprep.subr.mxu0 0.0
    %2514 = vmatpush1.xpose.msra.mxu0 %v2509
    %2515 = vmatprep.subr.mxu0 0.0
    %2516 = vmatpush1.xpose.msra.mxu0 %v2511
    %2517 = vmatprep.subr.mxu0 0.0
    %2518 = vmatpush1.xpose.msra.mxu0 0.0
    %2519 = vmatprep.subr.mxu0 0.0
    %2520 = vmatpush1.xpose.msra.mxu0 0.0
    %2521 = vmatprep.subr.mxu0 0.0
    %2522 = vmatpush1.xpose.msra.mxu0 0.0
    %2523 = vmatprep.subr.mxu0 0.0
    %2524 = vmatpush1.xpose.msra.mxu0 0.0
    %2525 = vmatprep.subr.mxu0 0.0
    %2526 = vmatpush1.xpose.msra.mxu0 0.0
    %2527 = vmatprep.subr.mxu0 0.0
    %2528 = vmatpush1.xpose.msra.mxu0 0.0
    %2529 = vmatprep.subr.mxu0 0.0
    %2530 = vmatpush1.xpose.msra.mxu0 0.0
    %2531 = vmatprep.subr.mxu0 0.0
    %2532 = vmatpush1.xpose.msra.mxu0 0.0
    %2533 = vmatprep.subr.mxu0 0.0
    %2534 = vmatpush1.xpose.msra.mxu0 0.0
    %2535 = vmatprep.subr.mxu0 0.0
    %2536 = vmatpush1.xpose.msra.mxu0 0.0
    %2537 = vmatprep.subr.mxu0 0.0
    %2538 = vmatpush1.xpose.msra.mxu0 0.0
    %2539 = vmatprep.subr.mxu0 0.0
    %2540 = vmatpush1.xpose.msra.mxu0 0.0
    %2541 = vmatprep.subr.mxu0 0.0
    %2542 = vmatpush1.xpose.msra.mxu0 0.0
    %2543 = vmatprep.subr.mxu0 0.0
    %2544 = vmatpush1.xpose.msra.mxu0 0.0
    %2545 = vmatprep.subr.mxu0 0.0
    %2546 = vmatpush1.xpose.msra.mxu0 0.0
    %2547 = vmatprep.subr.mxu0 0.0
    %2548 = vmatpush1.xpose.msra.mxu0 0.0
    %2549 = vmatprep.subr.mxu0 0.0
    %2550 = vmatpush1.xpose.msra.mxu0 0.0
    %2551 = vmatprep.subr.mxu0 0.0
    %2552 = vmatpush1.xpose.msra.mxu0 0.0
    %2553 = vmatprep.subr.mxu0 0.0
    %2554 = vmatpush1.xpose.msra.mxu0 0.0
    %2555 = vmatprep.subr.mxu0 0.0
    %2556 = vmatpush1.xpose.msra.mxu0 0.0
    %2557 = vmatprep.subr.mxu0 0.0
    %2558 = vmatpush1.xpose.msra.mxu0 0.0
    %2559 = vmatprep.subr.mxu0 0.0
    %2560 = vmatpush1.xpose.msra.mxu0 0.0
    %2561 = vmatprep.subr.mxu0 0.0
    %2562 = vmatpush1.xpose.msra.mxu0 0.0
    %2563 = vmatprep.subr.mxu0 0.0
    %2564 = vmatpush1.xpose.msra.mxu0 0.0
    %2565 = vmatprep.subr.mxu0 0.0
    %2566 = vmatpush1.xpose.msra.mxu0 0.0
    %2567 = vmatprep.subr.mxu0 0.0
    %2568 = vmatpush1.xpose.msra.mxu0 0.0
    %2569 = vmatprep.subr.mxu0 0.0
    %2570 = vmatpush1.xpose.msra.mxu0 0.0
    %2571 = vmatprep.subr.mxu0 0.0
    %2572 = vmatpush1.xpose.msra.mxu0 0.0
    %2573 = vmatprep.subr.mxu0 0.0
    %2574 = vmatpush1.xpose.msra.mxu0 0.0
    %2575 = vmatprep.subr.mxu0 0.0
    %2576 = vmatpush1.xpose.msra.mxu0 0.0
    %2577 = vmatprep.mubr.f32.mxu0 0.0
    %2578 = vmatmul.mubr.f32.gmra.mrb[0].mxu0 %v2505
    %v2579 = vpop.f32.mrb[0].mxu0
    %v2580 = vadd.f32 %v2199, %v2579
    %v2581 = vpop.f32.mrb[0].mxu0
    %2582 = vmatprep.mubr.f32.mxu0 0.0
    %2583 = vmatmul.mubr.f32.gmra.mrb[0].mxu0 %v2507
    %v2584 = vpop.f32.mrb[0].mxu0
    %v2585 = vadd.f32 %v2200, %v2584
    %v2586 = vpop.f32.mrb[0].mxu0
    %2587 = vdwg.mxu0
    %v2588 = vsel %vm267, %v2580, -inf
    %2589 = vmax.xlane.f32.xlu0 %v2588
    %v2590 = vpop.xlane.xlu0 %2589
    %v2591 = vsel %vm267, %v2585, -inf
    %2592 = vmax.xlane.f32.xlu0 %v2591
    %v2593 = vpop.xlane.xlu0 %2592
    %v2594 = vsub.f32 %v2580, %v2590
    %v2595 = vsub.f32 %v2585, %v2593
    %v2596 = vmul.f32 %v2594, 1.442695
    %v2597 = vpow.pop %v2596
    %v2598 = vmul.f32 %v2595, 1.442695
    %v2599 = vpow.pop %v2598
    %v2600 = vsel %vm267, %v2597, 0.0
    %2601 = vadd.xlane.f32.xlu0 %v2600
    %v2602 = vpop.xlane.xlu0 %2601
    %v2603 = vsel %vm267, %v2599, 0.0
    %2604 = vadd.xlane.f32.xlu0 %v2603
    %v2605 = vpop.xlane.xlu0 %2604
    %v2606 = vrcp.pop %v2602
    %v2607 = vmul.f32 %v2597, %v2606
    %v2608 = vrcp.pop %v2605
    %v2609 = vmul.f32 %v2599, %v2608
    %2610 = vrot.lane.b32.xlu0 %v2287, 56
    %v2611 = vpop.permute.xlu0 %2610
    %2612 = vrot.lane.b32.xlu0 %v2292, 56
    %v2613 = vpop.permute.xlu0 %2612
    %v2617 = vsel %vm267, %v2607, 0
    %v2620 = vsel %vm267, %v2609, 0
    %2622 = vmatprep.subr.mxu0 0.0
    %2623 = vmatpush1.msra.mxu0 %v2611
    %2624 = vmatprep.subr.mxu0 0.0
    %2625 = vmatpush1.msra.mxu0 %v2613
    %2626 = vmatprep.subr.mxu0 0.0
    %2627 = vmatpush1.msra.mxu0 0.0
    %2628 = vmatprep.subr.mxu0 0.0
    %2629 = vmatpush1.msra.mxu0 0.0
    %2630 = vmatprep.subr.mxu0 0.0
    %2631 = vmatpush1.msra.mxu0 0.0
    %2632 = vmatprep.subr.mxu0 0.0
    %2633 = vmatpush1.msra.mxu0 0.0
    %2634 = vmatprep.subr.mxu0 0.0
    %2635 = vmatpush1.msra.mxu0 0.0
    %2636 = vmatprep.subr.mxu0 0.0
    %2637 = vmatpush1.msra.mxu0 0.0
    %2638 = vmatprep.subr.mxu0 0.0
    %2639 = vmatpush1.msra.mxu0 0.0
    %2640 = vmatprep.subr.mxu0 0.0
    %2641 = vmatpush1.msra.mxu0 0.0
    %2642 = vmatprep.subr.mxu0 0.0
    %2643 = vmatpush1.msra.mxu0 0.0
    %2644 = vmatprep.subr.mxu0 0.0
    %2645 = vmatpush1.msra.mxu0 0.0
    %2646 = vmatprep.subr.mxu0 0.0
    %2647 = vmatpush1.msra.mxu0 0.0
    %2648 = vmatprep.subr.mxu0 0.0
    %2649 = vmatpush1.msra.mxu0 0.0
    %2650 = vmatprep.subr.mxu0 0.0
    %2651 = vmatpush1.msra.mxu0 0.0
    %2652 = vmatprep.subr.mxu0 0.0
    %2653 = vmatpush1.msra.mxu0 0.0
    %2654 = vmatprep.subr.mxu0 0.0
    %2655 = vmatpush1.msra.mxu0 0.0
    %2656 = vmatprep.subr.mxu0 0.0
    %2657 = vmatpush1.msra.mxu0 0.0
    %2658 = vmatprep.subr.mxu0 0.0
    %2659 = vmatpush1.msra.mxu0 0.0
    %2660 = vmatprep.subr.mxu0 0.0
    %2661 = vmatpush1.msra.mxu0 0.0
    %2662 = vmatprep.subr.mxu0 0.0
    %2663 = vmatpush1.msra.mxu0 0.0
    %2664 = vmatprep.subr.mxu0 0.0
    %2665 = vmatpush1.msra.mxu0 0.0
    %2666 = vmatprep.subr.mxu0 0.0
    %2667 = vmatpush1.msra.mxu0 0.0
    %2668 = vmatprep.subr.mxu0 0.0
    %2669 = vmatpush1.msra.mxu0 0.0
    %2670 = vmatprep.subr.mxu0 0.0
    %2671 = vmatpush1.msra.mxu0 0.0
    %2672 = vmatprep.subr.mxu0 0.0
    %2673 = vmatpush1.msra.mxu0 0.0
    %2674 = vmatprep.subr.mxu0 0.0
    %2675 = vmatpush1.msra.mxu0 0.0
    %2676 = vmatprep.subr.mxu0 0.0
    %2677 = vmatpush1.msra.mxu0 0.0
    %2678 = vmatprep.subr.mxu0 0.0
    %2679 = vmatpush1.msra.mxu0 0.0
    %2680 = vmatprep.subr.mxu0 0.0
    %2681 = vmatpush1.msra.mxu0 0.0
    %2682 = vmatprep.subr.mxu0 0.0
    %2683 = vmatpush1.msra.mxu0 0.0
    %2684 = vmatprep.subr.mxu0 0.0
    %2685 = vmatpush1.msra.mxu0 0.0
    %2686 = vmatprep.mubr.f32.mxu0 0.0
    %2687 = vmatmul.mubr.f32.gmra.mrb[0].mxu0 %v2617
    %v2688 = vpop.f32.mrb[0].mxu0
    %v2689 = vadd.f32 0.0, %v2688
    %v2690 = vpop.f32.mrb[0].mxu0
    %2691 = vmatprep.mubr.f32.mxu0 0.0
    %2692 = vmatmul.mubr.f32.gmra.mrb[0].mxu0 %v2620
    %v2693 = vpop.f32.mrb[0].mxu0
    %v2694 = vadd.f32 0.0, %v2693
    %v2695 = vpop.f32.mrb[0].mxu0
    %2696 = vdwg.mxu0
    %2697 = vrot.lane.b32.xlu0 %v2295, 112
    %v2698 = vpop.permute.xlu0 %2697
    %2699 = vrot.lane.b32.xlu0 %v2296, 112
    %v2700 = vpop.permute.xlu0 %2699
    %2701 = vrot.lane.b32.xlu0 %v2287, 80
    %v2702 = vpop.permute.xlu0 %2701
    %2703 = vrot.lane.b32.xlu0 %v2292, 80
    %v2704 = vpop.permute.xlu0 %2703
    %v2705 = vsel %vm181, %v2698, 0
    %v2707 = vsel %vm181, %v2700, 0
    %v2709 = vsel %vm181, %v2702, 0
    %v2711 = vsel %vm181, %v2704, 0
    %2713 = vmatprep.subr.mxu0 0.0
    %2714 = vmatpush1.xpose.msra.mxu0 %v2709
    %2715 = vmatprep.subr.mxu0 0.0
    %2716 = vmatpush1.xpose.msra.mxu0 %v2711
    %2717 = vmatprep.subr.mxu0 0.0
    %2718 = vmatpush1.xpose.msra.mxu0 0.0
    %2719 = vmatprep.subr.mxu0 0.0
    %2720 = vmatpush1.xpose.msra.mxu0 0.0
    %2721 = vmatprep.subr.mxu0 0.0
    %2722 = vmatpush1.xpose.msra.mxu0 0.0
    %2723 = vmatprep.subr.mxu0 0.0
    %2724 = vmatpush1.xpose.msra.mxu0 0.0
    %2725 = vmatprep.subr.mxu0 0.0
    %2726 = vmatpush1.xpose.msra.mxu0 0.0
    %2727 = vmatprep.subr.mxu0 0.0
    %2728 = vmatpush1.xpose.msra.mxu0 0.0
    %2729 = vmatprep.subr.mxu0 0.0
    %2730 = vmatpush1.xpose.msra.mxu0 0.0
    %2731 = vmatprep.subr.mxu0 0.0
    %2732 = vmatpush1.xpose.msra.mxu0 0.0
    %2733 = vmatprep.subr.mxu0 0.0
    %2734 = vmatpush1.xpose.msra.mxu0 0.0
    %2735 = vmatprep.subr.mxu0 0.0
    %2736 = vmatpush1.xpose.msra.mxu0 0.0
    %2737 = vmatprep.subr.mxu0 0.0
    %2738 = vmatpush1.xpose.msra.mxu0 0.0
    %2739 = vmatprep.subr.mxu0 0.0
    %2740 = vmatpush1.xpose.msra.mxu0 0.0
    %2741 = vmatprep.subr.mxu0 0.0
    %2742 = vmatpush1.xpose.msra.mxu0 0.0
    %2743 = vmatprep.subr.mxu0 0.0
    %2744 = vmatpush1.xpose.msra.mxu0 0.0
    %2745 = vmatprep.subr.mxu0 0.0
    %2746 = vmatpush1.xpose.msra.mxu0 0.0
    %2747 = vmatprep.subr.mxu0 0.0
    %2748 = vmatpush1.xpose.msra.mxu0 0.0
    %2749 = vmatprep.subr.mxu0 0.0
    %2750 = vmatpush1.xpose.msra.mxu0 0.0
    %2751 = vmatprep.subr.mxu0 0.0
    %2752 = vmatpush1.xpose.msra.mxu0 0.0
    %2753 = vmatprep.subr.mxu0 0.0
    %2754 = vmatpush1.xpose.msra.mxu0 0.0
    %2755 = vmatprep.subr.mxu0 0.0
    %2756 = vmatpush1.xpose.msra.mxu0 0.0
    %2757 = vmatprep.subr.mxu0 0.0
    %2758 = vmatpush1.xpose.msra.mxu0 0.0
    %2759 = vmatprep.subr.mxu0 0.0
    %2760 = vmatpush1.xpose.msra.mxu0 0.0
    %2761 = vmatprep.subr.mxu0 0.0
    %2762 = vmatpush1.xpose.msra.mxu0 0.0
    %2763 = vmatprep.subr.mxu0 0.0
    %2764 = vmatpush1.xpose.msra.mxu0 0.0
    %2765 = vmatprep.subr.mxu0 0.0
    %2766 = vmatpush1.xpose.msra.mxu0 0.0
    %2767 = vmatprep.subr.mxu0 0.0
    %2768 = vmatpush1.xpose.msra.mxu0 0.0
    %2769 = vmatprep.subr.mxu0 0.0
    %2770 = vmatpush1.xpose.msra.mxu0 0.0
    %2771 = vmatprep.subr.mxu0 0.0
    %2772 = vmatpush1.xpose.msra.mxu0 0.0
    %2773 = vmatprep.subr.mxu0 0.0
    %2774 = vmatpush1.xpose.msra.mxu0 0.0
    %2775 = vmatprep.subr.mxu0 0.0
    %2776 = vmatpush1.xpose.msra.mxu0 0.0
    %2777 = vmatprep.mubr.f32.mxu0 0.0
    %2778 = vmatmul.mubr.f32.gmra.mrb[0].mxu0 %v2705
    %v2779 = vpop.f32.mrb[0].mxu0
    %v2780 = vadd.f32 %v2199, %v2779
    %v2781 = vpop.f32.mrb[0].mxu0
    %2782 = vmatprep.mubr.f32.mxu0 0.0
    %2783 = vmatmul.mubr.f32.gmra.mrb[0].mxu0 %v2707
    %v2784 = vpop.f32.mrb[0].mxu0
    %v2785 = vadd.f32 %v2200, %v2784
    %v2786 = vpop.f32.mrb[0].mxu0
    %2787 = vdwg.mxu0
    %v2788 = vsel %vm267, %v2780, -inf
    %2789 = vmax.xlane.f32.xlu0 %v2788
    %v2790 = vpop.xlane.xlu0 %2789
    %v2791 = vsel %vm267, %v2785, -inf
    %2792 = vmax.xlane.f32.xlu0 %v2791
    %v2793 = vpop.xlane.xlu0 %2792
    %v2794 = vsub.f32 %v2780, %v2790
    %v2795 = vsub.f32 %v2785, %v2793
    %v2796 = vmul.f32 %v2794, 1.442695
    %v2797 = vpow.pop %v2796
    %v2798 = vmul.f32 %v2795, 1.442695
    %v2799 = vpow.pop %v2798
    %v2800 = vsel %vm267, %v2797, 0.0
    %2801 = vadd.xlane.f32.xlu0 %v2800
    %v2802 = vpop.xlane.xlu0 %2801
    %v2803 = vsel %vm267, %v2799, 0.0
    %2804 = vadd.xlane.f32.xlu0 %v2803
    %v2805 = vpop.xlane.xlu0 %2804
    %v2806 = vrcp.pop %v2802
    %v2807 = vmul.f32 %v2797, %v2806
    %v2808 = vrcp.pop %v2805
    %v2809 = vmul.f32 %v2799, %v2808
    %2810 = vrot.lane.b32.xlu0 %v2287, 48
    %v2811 = vpop.permute.xlu0 %2810
    %2812 = vrot.lane.b32.xlu0 %v2292, 48
    %v2813 = vpop.permute.xlu0 %2812
    %v2817 = vsel %vm267, %v2807, 0
    %v2820 = vsel %vm267, %v2809, 0
    %2822 = vmatprep.subr.mxu0 0.0
    %2823 = vmatpush1.msra.mxu0 %v2811
    %2824 = vmatprep.subr.mxu0 0.0
    %2825 = vmatpush1.msra.mxu0 %v2813
    %2826 = vmatprep.subr.mxu0 0.0
    %2827 = vmatpush1.msra.mxu0 0.0
    %2828 = vmatprep.subr.mxu0 0.0
    %2829 = vmatpush1.msra.mxu0 0.0
    %2830 = vmatprep.subr.mxu0 0.0
    %2831 = vmatpush1.msra.mxu0 0.0
    %2832 = vmatprep.subr.mxu0 0.0
    %2833 = vmatpush1.msra.mxu0 0.0
    %2834 = vmatprep.subr.mxu0 0.0
    %2835 = vmatpush1.msra.mxu0 0.0
    %2836 = vmatprep.subr.mxu0 0.0
    %2837 = vmatpush1.msra.mxu0 0.0
    %2838 = vmatprep.subr.mxu0 0.0
    %2839 = vmatpush1.msra.mxu0 0.0
    %2840 = vmatprep.subr.mxu0 0.0
    %2841 = vmatpush1.msra.mxu0 0.0
    %2842 = vmatprep.subr.mxu0 0.0
    %2843 = vmatpush1.msra.mxu0 0.0
    %2844 = vmatprep.subr.mxu0 0.0
    %2845 = vmatpush1.msra.mxu0 0.0
    %2846 = vmatprep.subr.mxu0 0.0
    %2847 = vmatpush1.msra.mxu0 0.0
    %2848 = vmatprep.subr.mxu0 0.0
    %2849 = vmatpush1.msra.mxu0 0.0
    %2850 = vmatprep.subr.mxu0 0.0
    %2851 = vmatpush1.msra.mxu0 0.0
    %2852 = vmatprep.subr.mxu0 0.0
    %2853 = vmatpush1.msra.mxu0 0.0
    %2854 = vmatprep.subr.mxu0 0.0
    %2855 = vmatpush1.msra.mxu0 0.0
    %2856 = vmatprep.subr.mxu0 0.0
    %2857 = vmatpush1.msra.mxu0 0.0
    %2858 = vmatprep.subr.mxu0 0.0
    %2859 = vmatpush1.msra.mxu0 0.0
    %2860 = vmatprep.subr.mxu0 0.0
    %2861 = vmatpush1.msra.mxu0 0.0
    %2862 = vmatprep.subr.mxu0 0.0
    %2863 = vmatpush1.msra.mxu0 0.0
    %2864 = vmatprep.subr.mxu0 0.0
    %2865 = vmatpush1.msra.mxu0 0.0
    %2866 = vmatprep.subr.mxu0 0.0
    %2867 = vmatpush1.msra.mxu0 0.0
    %2868 = vmatprep.subr.mxu0 0.0
    %2869 = vmatpush1.msra.mxu0 0.0
    %2870 = vmatprep.subr.mxu0 0.0
    %2871 = vmatpush1.msra.mxu0 0.0
    %2872 = vmatprep.subr.mxu0 0.0
    %2873 = vmatpush1.msra.mxu0 0.0
    %2874 = vmatprep.subr.mxu0 0.0
    %2875 = vmatpush1.msra.mxu0 0.0
    %2876 = vmatprep.subr.mxu0 0.0
    %2877 = vmatpush1.msra.mxu0 0.0
    %2878 = vmatprep.subr.mxu0 0.0
    %2879 = vmatpush1.msra.mxu0 0.0
    %2880 = vmatprep.subr.mxu0 0.0
    %2881 = vmatpush1.msra.mxu0 0.0
    %2882 = vmatprep.subr.mxu0 0.0
    %2883 = vmatpush1.msra.mxu0 0.0
    %2884 = vmatprep.subr.mxu0 0.0
    %2885 = vmatpush1.msra.mxu0 0.0
    %2886 = vmatprep.mubr.f32.mxu0 0.0
    %2887 = vmatmul.mubr.f32.gmra.mrb[0].mxu0 %v2817
    %v2888 = vpop.f32.mrb[0].mxu0
    %v2889 = vadd.f32 0.0, %v2888
    %v2890 = vpop.f32.mrb[0].mxu0
    %2891 = vmatprep.mubr.f32.mxu0 0.0
    %2892 = vmatmul.mubr.f32.gmra.mrb[0].mxu0 %v2820
    %v2893 = vpop.f32.mrb[0].mxu0
    %v2894 = vadd.f32 0.0, %v2893
    %v2895 = vpop.f32.mrb[0].mxu0
    %2896 = vdwg.mxu0
    %2897 = vrot.lane.b32.xlu0 %v2295, 104
    %v2898 = vpop.permute.xlu0 %2897
    %2899 = vrot.lane.b32.xlu0 %v2296, 104
    %v2900 = vpop.permute.xlu0 %2899
    %2901 = vrot.lane.b32.xlu0 %v2287, 72
    %v2902 = vpop.permute.xlu0 %2901
    %2903 = vrot.lane.b32.xlu0 %v2292, 72
    %v2904 = vpop.permute.xlu0 %2903
    %v2905 = vsel %vm181, %v2898, 0
    %v2907 = vsel %vm181, %v2900, 0
    %v2909 = vsel %vm181, %v2902, 0
    %v2911 = vsel %vm181, %v2904, 0
    %2913 = vmatprep.subr.mxu0 0.0
    %2914 = vmatpush1.xpose.msra.mxu0 %v2909
    %2915 = vmatprep.subr.mxu0 0.0
    %2916 = vmatpush1.xpose.msra.mxu0 %v2911
    %2917 = vmatprep.subr.mxu0 0.0
    %2918 = vmatpush1.xpose.msra.mxu0 0.0
    %2919 = vmatprep.subr.mxu0 0.0
    %2920 = vmatpush1.xpose.msra.mxu0 0.0
    %2921 = vmatprep.subr.mxu0 0.0
    %2922 = vmatpush1.xpose.msra.mxu0 0.0
    %2923 = vmatprep.subr.mxu0 0.0
    %2924 = vmatpush1.xpose.msra.mxu0 0.0
    %2925 = vmatprep.subr.mxu0 0.0
    %2926 = vmatpush1.xpose.msra.mxu0 0.0
    %2927 = vmatprep.subr.mxu0 0.0
    %2928 = vmatpush1.xpose.msra.mxu0 0.0
    %2929 = vmatprep.subr.mxu0 0.0
    %2930 = vmatpush1.xpose.msra.mxu0 0.0
    %2931 = vmatprep.subr.mxu0 0.0
    %2932 = vmatpush1.xpose.msra.mxu0 0.0
    %2933 = vmatprep.subr.mxu0 0.0
    %2934 = vmatpush1.xpose.msra.mxu0 0.0
    %2935 = vmatprep.subr.mxu0 0.0
    %2936 = vmatpush1.xpose.msra.mxu0 0.0
    %2937 = vmatprep.subr.mxu0 0.0
    %2938 = vmatpush1.xpose.msra.mxu0 0.0
    %2939 = vmatprep.subr.mxu0 0.0
    %2940 = vmatpush1.xpose.msra.mxu0 0.0
    %2941 = vmatprep.subr.mxu0 0.0
    %2942 = vmatpush1.xpose.msra.mxu0 0.0
    %2943 = vmatprep.subr.mxu0 0.0
    %2944 = vmatpush1.xpose.msra.mxu0 0.0
    %2945 = vmatprep.subr.mxu0 0.0
    %2946 = vmatpush1.xpose.msra.mxu0 0.0
    %2947 = vmatprep.subr.mxu0 0.0
    %2948 = vmatpush1.xpose.msra.mxu0 0.0
    %2949 = vmatprep.subr.mxu0 0.0
    %2950 = vmatpush1.xpose.msra.mxu0 0.0
    %2951 = vmatprep.subr.mxu0 0.0
    %2952 = vmatpush1.xpose.msra.mxu0 0.0
    %2953 = vmatprep.subr.mxu0 0.0
    %2954 = vmatpush1.xpose.msra.mxu0 0.0
    %2955 = vmatprep.subr.mxu0 0.0
    %2956 = vmatpush1.xpose.msra.mxu0 0.0
    %2957 = vmatprep.subr.mxu0 0.0
    %2958 = vmatpush1.xpose.msra.mxu0 0.0
    %2959 = vmatprep.subr.mxu0 0.0
    %2960 = vmatpush1.xpose.msra.mxu0 0.0
    %2961 = vmatprep.subr.mxu0 0.0
    %2962 = vmatpush1.xpose.msra.mxu0 0.0
    %2963 = vmatprep.subr.mxu0 0.0
    %2964 = vmatpush1.xpose.msra.mxu0 0.0
    %2965 = vmatprep.subr.mxu0 0.0
    %2966 = vmatpush1.xpose.msra.mxu0 0.0
    %2967 = vmatprep.subr.mxu0 0.0
    %2968 = vmatpush1.xpose.msra.mxu0 0.0
    %2969 = vmatprep.subr.mxu0 0.0
    %2970 = vmatpush1.xpose.msra.mxu0 0.0
    %2971 = vmatprep.subr.mxu0 0.0
    %2972 = vmatpush1.xpose.msra.mxu0 0.0
    %2973 = vmatprep.subr.mxu0 0.0
    %2974 = vmatpush1.xpose.msra.mxu0 0.0
    %2975 = vmatprep.subr.mxu0 0.0
    %2976 = vmatpush1.xpose.msra.mxu0 0.0
    %2977 = vmatprep.mubr.f32.mxu0 0.0
    %2978 = vmatmul.mubr.f32.gmra.mrb[0].mxu0 %v2905
    %v2979 = vpop.f32.mrb[0].mxu0
    %v2980 = vadd.f32 %v2199, %v2979
    %v2981 = vpop.f32.mrb[0].mxu0
    %2982 = vmatprep.mubr.f32.mxu0 0.0
    %2983 = vmatmul.mubr.f32.gmra.mrb[0].mxu0 %v2907
    %v2984 = vpop.f32.mrb[0].mxu0
    %v2985 = vadd.f32 %v2200, %v2984
    %v2986 = vpop.f32.mrb[0].mxu0
    %2987 = vdwg.mxu0
    %v2988 = vsel %vm267, %v2980, -inf
    %2989 = vmax.xlane.f32.xlu0 %v2988
    %v2990 = vpop.xlane.xlu0 %2989
    %v2991 = vsel %vm267, %v2985, -inf
    %2992 = vmax.xlane.f32.xlu0 %v2991
    %v2993 = vpop.xlane.xlu0 %2992
    %v2994 = vsub.f32 %v2980, %v2990
    %v2995 = vsub.f32 %v2985, %v2993
    %v2996 = vmul.f32 %v2994, 1.442695
    %v2997 = vpow.pop %v2996
    %v2998 = vmul.f32 %v2995, 1.442695
    %v2999 = vpow.pop %v2998
    %v3000 = vsel %vm267, %v2997, 0.0
    %3001 = vadd.xlane.f32.xlu0 %v3000
    %v3002 = vpop.xlane.xlu0 %3001
    %v3003 = vsel %vm267, %v2999, 0.0
    %3004 = vadd.xlane.f32.xlu0 %v3003
    %v3005 = vpop.xlane.xlu0 %3004
    %v3006 = vrcp.pop %v3002
    %v3007 = vmul.f32 %v2997, %v3006
    %v3008 = vrcp.pop %v3005
    %v3009 = vmul.f32 %v2999, %v3008
    %3010 = vrot.lane.b32.xlu0 %v2287, 40
    %v3011 = vpop.permute.xlu0 %3010
    %3012 = vrot.lane.b32.xlu0 %v2292, 40
    %v3013 = vpop.permute.xlu0 %3012
    %v3017 = vsel %vm267, %v3007, 0
    %v3020 = vsel %vm267, %v3009, 0
    %3022 = vmatprep.subr.mxu0 0.0
    %3023 = vmatpush1.msra.mxu0 %v3011
    %3024 = vmatprep.subr.mxu0 0.0
    %3025 = vmatpush1.msra.mxu0 %v3013
    %3026 = vmatprep.subr.mxu0 0.0
    %3027 = vmatpush1.msra.mxu0 0.0
    %3028 = vmatprep.subr.mxu0 0.0
    %3029 = vmatpush1.msra.mxu0 0.0
    %3030 = vmatprep.subr.mxu0 0.0
    %3031 = vmatpush1.msra.mxu0 0.0
    %3032 = vmatprep.subr.mxu0 0.0
    %3033 = vmatpush1.msra.mxu0 0.0
    %3034 = vmatprep.subr.mxu0 0.0
    %3035 = vmatpush1.msra.mxu0 0.0
    %3036 = vmatprep.subr.mxu0 0.0
    %3037 = vmatpush1.msra.mxu0 0.0
    %3038 = vmatprep.subr.mxu0 0.0
    %3039 = vmatpush1.msra.mxu0 0.0
    %3040 = vmatprep.subr.mxu0 0.0
    %3041 = vmatpush1.msra.mxu0 0.0
    %3042 = vmatprep.subr.mxu0 0.0
    %3043 = vmatpush1.msra.mxu0 0.0
    %3044 = vmatprep.subr.mxu0 0.0
    %3045 = vmatpush1.msra.mxu0 0.0
    %3046 = vmatprep.subr.mxu0 0.0
    %3047 = vmatpush1.msra.mxu0 0.0
    %3048 = vmatprep.subr.mxu0 0.0
    %3049 = vmatpush1.msra.mxu0 0.0
    %3050 = vmatprep.subr.mxu0 0.0
    %3051 = vmatpush1.msra.mxu0 0.0
    %3052 = vmatprep.subr.mxu0 0.0
    %3053 = vmatpush1.msra.mxu0 0.0
    %3054 = vmatprep.subr.mxu0 0.0
    %3055 = vmatpush1.msra.mxu0 0.0
    %3056 = vmatprep.subr.mxu0 0.0
    %3057 = vmatpush1.msra.mxu0 0.0
    %3058 = vmatprep.subr.mxu0 0.0
    %3059 = vmatpush1.msra.mxu0 0.0
    %3060 = vmatprep.subr.mxu0 0.0
    %3061 = vmatpush1.msra.mxu0 0.0
    %3062 = vmatprep.subr.mxu0 0.0
    %3063 = vmatpush1.msra.mxu0 0.0
    %3064 = vmatprep.subr.mxu0 0.0
    %3065 = vmatpush1.msra.mxu0 0.0
    %3066 = vmatprep.subr.mxu0 0.0
    %3067 = vmatpush1.msra.mxu0 0.0
    %3068 = vmatprep.subr.mxu0 0.0
    %3069 = vmatpush1.msra.mxu0 0.0
    %3070 = vmatprep.subr.mxu0 0.0
    %3071 = vmatpush1.msra.mxu0 0.0
    %3072 = vmatprep.subr.mxu0 0.0
    %3073 = vmatpush1.msra.mxu0 0.0
    %3074 = vmatprep.subr.mxu0 0.0
    %3075 = vmatpush1.msra.mxu0 0.0
    %3076 = vmatprep.subr.mxu0 0.0
    %3077 = vmatpush1.msra.mxu0 0.0
    %3078 = vmatprep.subr.mxu0 0.0
    %3079 = vmatpush1.msra.mxu0 0.0
    %3080 = vmatprep.subr.mxu0 0.0
    %3081 = vmatpush1.msra.mxu0 0.0
    %3082 = vmatprep.subr.mxu0 0.0
    %3083 = vmatpush1.msra.mxu0 0.0
    %3084 = vmatprep.subr.mxu0 0.0
    %3085 = vmatpush1.msra.mxu0 0.0
    %3086 = vmatprep.mubr.f32.mxu0 0.0
    %3087 = vmatmul.mubr.f32.gmra.mrb[0].mxu0 %v3017
    %v3088 = vpop.f32.mrb[0].mxu0
    %v3089 = vadd.f32 0.0, %v3088
    %v3090 = vpop.f32.mrb[0].mxu0
    %3091 = vmatprep.mubr.f32.mxu0 0.0
    %3092 = vmatmul.mubr.f32.gmra.mrb[0].mxu0 %v3020
    %v3093 = vpop.f32.mrb[0].mxu0
    %v3094 = vadd.f32 0.0, %v3093
    %v3095 = vpop.f32.mrb[0].mxu0
    %3096 = vdwg.mxu0
    %3099 = vrot.lane.b32.xlu0 %v2689, 8
    %v3100 = vpop.permute.xlu0 %3099
    %3101 = vrot.lane.b32.xlu0 %v2694, 8
    %v3102 = vpop.permute.xlu0 %3101
    %3107 = vrot.lane.b32.xlu0 %v2889, 16
    %v3108 = vpop.permute.xlu0 %3107
    %3109 = vrot.lane.b32.xlu0 %v2894, 16
    %v3110 = vpop.permute.xlu0 %3109
    %3115 = vrot.lane.b32.xlu0 %v3089, 24
    %v3116 = vpop.permute.xlu0 %3115
    %3117 = vrot.lane.b32.xlu0 %v3094, 24
    %v3118 = vpop.permute.xlu0 %3117
    %v3121 = vsel %vm181, %v2489, %v3100
    %v3122 = vsel %vm181, %v2494, %v3102
    %v3123 = vsel %vm267, %v3121, %v3108
    %v3124 = vsel %vm267, %v3122, %v3110
    %v3125 = vsel %vm1005, %v3123, %v3116
    %v3126 = vsel %vm1005, %v3124, %v3118
    %s3127 = scalar_lea.vmem %s11, 64
    %v3128 = vld [vmem:[%s3127] sm:$0xff]
    %v3129 = vld [vmem:[%s3127 + $0x8] sm:$0xff]
    %v3130 = vld [vmem:[%s3127 + $0x10] sm:$0xff]
    %v3131 = vld [vmem:[%s3127 + $0x18] sm:$0xff]
    %s3132 = scalar_lea.vmem %s12, 2
    %v3133 = vld [vmem:[%s3132] sm:$0x1]
    %v3135 = vlaneseq
    %v3136 = vshrl.u32 %v3135, 7
    %v3137 = vsub.s32 0, %v3136
    %v3138 = vrot.slane %v3133, %v3137
    %v3141 = vsel %vm91, %v3125, 0
    %v3144 = vsel %vm91, %v3126, 0
    %3146 = vmatprep.subr.mxu0 0.0
    %3147 = vmatpush1.msra.mxu0 %v3128
    %3148 = vmatprep.subr.mxu0 0.0
    %3149 = vmatpush1.msra.mxu0 %v3129
    %3150 = vmatprep.subr.mxu0 0.0
    %3151 = vmatpush1.msra.mxu0 %v3130
    %3152 = vmatprep.subr.mxu0 0.0
    %3153 = vmatpush1.msra.mxu0 %v3131
    %3154 = vmatprep.subr.mxu0 0.0
    %3155 = vmatpush1.msra.mxu0 0.0
    %3156 = vmatprep.subr.mxu0 0.0
    %3157 = vmatpush1.msra.mxu0 0.0
    %3158 = vmatprep.subr.mxu0 0.0
    %3159 = vmatpush1.msra.mxu0 0.0
    %3160 = vmatprep.subr.mxu0 0.0
    %3161 = vmatpush1.msra.mxu0 0.0
    %3162 = vmatprep.subr.mxu0 0.0
    %3163 = vmatpush1.msra.mxu0 0.0
    %3164 = vmatprep.subr.mxu0 0.0
    %3165 = vmatpush1.msra.mxu0 0.0
    %3166 = vmatprep.subr.mxu0 0.0
    %3167 = vmatpush1.msra.mxu0 0.0
    %3168 = vmatprep.subr.mxu0 0.0
    %3169 = vmatpush1.msra.mxu0 0.0
    %3170 = vmatprep.subr.mxu0 0.0
    %3171 = vmatpush1.msra.mxu0 0.0
    %3172 = vmatprep.subr.mxu0 0.0
    %3173 = vmatpush1.msra.mxu0 0.0
    %3174 = vmatprep.subr.mxu0 0.0
    %3175 = vmatpush1.msra.mxu0 0.0
    %3176 = vmatprep.subr.mxu0 0.0
    %3177 = vmatpush1.msra.mxu0 0.0
    %3178 = vmatprep.subr.mxu0 0.0
    %3179 = vmatpush1.msra.mxu0 0.0
    %3180 = vmatprep.subr.mxu0 0.0
    %3181 = vmatpush1.msra.mxu0 0.0
    %3182 = vmatprep.subr.mxu0 0.0
    %3183 = vmatpush1.msra.mxu0 0.0
    %3184 = vmatprep.subr.mxu0 0.0
    %3185 = vmatpush1.msra.mxu0 0.0
    %3186 = vmatprep.subr.mxu0 0.0
    %3187 = vmatpush1.msra.mxu0 0.0
    %3188 = vmatprep.subr.mxu0 0.0
    %3189 = vmatpush1.msra.mxu0 0.0
    %3190 = vmatprep.subr.mxu0 0.0
    %3191 = vmatpush1.msra.mxu0 0.0
    %3192 = vmatprep.subr.mxu0 0.0
    %3193 = vmatpush1.msra.mxu0 0.0
    %3194 = vmatprep.subr.mxu0 0.0
    %3195 = vmatpush1.msra.mxu0 0.0
    %3196 = vmatprep.subr.mxu0 0.0
    %3197 = vmatpush1.msra.mxu0 0.0
    %3198 = vmatprep.subr.mxu0 0.0
    %3199 = vmatpush1.msra.mxu0 0.0
    %3200 = vmatprep.subr.mxu0 0.0
    %3201 = vmatpush1.msra.mxu0 0.0
    %3202 = vmatprep.subr.mxu0 0.0
    %3203 = vmatpush1.msra.mxu0 0.0
    %3204 = vmatprep.subr.mxu0 0.0
    %3205 = vmatpush1.msra.mxu0 0.0
    %3206 = vmatprep.subr.mxu0 0.0
    %3207 = vmatpush1.msra.mxu0 0.0
    %3208 = vmatprep.subr.mxu0 0.0
    %3209 = vmatpush1.msra.mxu0 0.0
    %3210 = vmatprep.mubr.f32.mxu0 0.0
    %3211 = vmatmul.mubr.f32.gmra.mrb[0].mxu0 %v3141
    %v3212 = vpop.f32.mrb[0].mxu0
    %v3213 = vadd.f32 %v3138, %v3212
    %v3214 = vpop.f32.mrb[0].mxu0
    %3215 = vmatprep.mubr.f32.mxu0 0.0
    %3216 = vmatmul.mubr.f32.gmra.mrb[0].mxu0 %v3144
    %v3217 = vpop.f32.mrb[0].mxu0
    %v3218 = vadd.f32 %v3138, %v3217
    %v3219 = vpop.f32.mrb[0].mxu0
    %3220 = vdwg.mxu0
    %v3221 = vadd.f32 %v76, %v3213
    %v3222 = vadd.f32 %v77, %v3218
    %v3223 = vsel %vm91, %v3221, 0.0
    %3224 = vadd.xlane.f32.xlu0 %v3223
    %v3225 = vpop.xlane.xlu0 %3224
    %v3226 = vsel %vm91, %v3222, 0.0
    %3227 = vadd.xlane.f32.xlu0 %v3226
    %v3228 = vpop.xlane.xlu0 %3227
    %v3229 = vmul.f32 %v3225, %v1108
    %v3230 = vmul.f32 %v3228, %v1108
    %v3231 = vsub.f32 %v3221, %v3229
    %v3232 = vsub.f32 %v3222, %v3230
    %v3233 = vmul.f32 %v3231, %v3231
    %v3234 = vmul.f32 %v3232, %v3232
    %v3235 = vsel %vm91, %v3233, 0.0
    %3236 = vadd.xlane.f32.xlu0 %v3235
    %v3237 = vpop.xlane.xlu0 %3236
    %v3238 = vsel %vm91, %v3234, 0.0
    %3239 = vadd.xlane.f32.xlu0 %v3238
    %v3240 = vpop.xlane.xlu0 %3239
    %v3241 = vmul.f32 %v3237, %v1108
    %v3242 = vmul.f32 %v3240, %v1108
    %v3243 = vadd.f32 %v3241, 1e-05
    %v3244 = vadd.f32 %v3242, 1e-05
    %v3245 = vrsqrt.pop %v3243
    %v3246 = vrsqrt.pop %v3244
    %v3247 = vmul.f32 %v3231, %v3245
    %v3248 = vmul.f32 %v3232, %v3246
    %v3249 = vmul.f32 %v3247, %v1133
    %v3250 = vmul.f32 %v3248, %v1133
    %v3251 = vadd.f32 %v3249, %v1141
    %v3252 = vadd.f32 %v3250, %v1141
    %v3253 = vld [vmem:[%s6] sm:$0xff]
    %v3254 = vld [vmem:[%s6 + $0x8] sm:$0xff]
    %s3255 = scalar_lea.vmem %s9, 96
    %v3256 = vld [vmem:[%s3255] sm:$0xff]
    %v3257 = vld [vmem:[%s3255 + $0x8] sm:$0xff]
    %v3258 = vld [vmem:[%s3255 + $0x10] sm:$0xff]
    %v3259 = vld [vmem:[%s3255 + $0x18] sm:$0xff]
    %s3260 = scalar_lea.vmem %s10, 3
    %v3261 = vld [vmem:[%s3260] sm:$0x1]
    %v3263 = vlaneseq
    %v3264 = vshrl.u32 %v3263, 7
    %v3265 = vsub.s32 0, %v3264
    %v3266 = vrot.slane %v3261, %v3265
    %v3269 = vsel %vm91, %v1143, 0
    %v3272 = vsel %vm91, %v1144, 0
    %3274 = vmatprep.subr.mxu0 0.0
    %3275 = vmatpush1.msra.mxu0 %v3256
    %3276 = vmatprep.subr.mxu0 0.0
    %3277 = vmatpush1.msra.mxu0 %v3257
    %3278 = vmatprep.subr.mxu0 0.0
    %3279 = vmatpush1.msra.mxu0 %v3258
    %3280 = vmatprep.subr.mxu0 0.0
    %3281 = vmatpush1.msra.mxu0 %v3259
    %3282 = vmatprep.subr.mxu0 0.0
    %3283 = vmatpush1.msra.mxu0 0.0
    %3284 = vmatprep.subr.mxu0 0.0
    %3285 = vmatpush1.msra.mxu0 0.0
    %3286 = vmatprep.subr.mxu0 0.0
    %3287 = vmatpush1.msra.mxu0 0.0
    %3288 = vmatprep.subr.mxu0 0.0
    %3289 = vmatpush1.msra.mxu0 0.0
    %3290 = vmatprep.subr.mxu0 0.0
    %3291 = vmatpush1.msra.mxu0 0.0
    %3292 = vmatprep.subr.mxu0 0.0
    %3293 = vmatpush1.msra.mxu0 0.0
    %3294 = vmatprep.subr.mxu0 0.0
    %3295 = vmatpush1.msra.mxu0 0.0
    %3296 = vmatprep.subr.mxu0 0.0
    %3297 = vmatpush1.msra.mxu0 0.0
    %3298 = vmatprep.subr.mxu0 0.0
    %3299 = vmatpush1.msra.mxu0 0.0
    %3300 = vmatprep.subr.mxu0 0.0
    %3301 = vmatpush1.msra.mxu0 0.0
    %3302 = vmatprep.subr.mxu0 0.0
    %3303 = vmatpush1.msra.mxu0 0.0
    %3304 = vmatprep.subr.mxu0 0.0
    %3305 = vmatpush1.msra.mxu0 0.0
    %3306 = vmatprep.subr.mxu0 0.0
    %3307 = vmatpush1.msra.mxu0 0.0
    %3308 = vmatprep.subr.mxu0 0.0
    %3309 = vmatpush1.msra.mxu0 0.0
    %3310 = vmatprep.subr.mxu0 0.0
    %3311 = vmatpush1.msra.mxu0 0.0
    %3312 = vmatprep.subr.mxu0 0.0
    %3313 = vmatpush1.msra.mxu0 0.0
    %3314 = vmatprep.subr.mxu0 0.0
    %3315 = vmatpush1.msra.mxu0 0.0
    %3316 = vmatprep.subr.mxu0 0.0
    %3317 = vmatpush1.msra.mxu0 0.0
    %3318 = vmatprep.subr.mxu0 0.0
    %3319 = vmatpush1.msra.mxu0 0.0
    %3320 = vmatprep.subr.mxu0 0.0
    %3321 = vmatpush1.msra.mxu0 0.0
    %3322 = vmatprep.subr.mxu0 0.0
    %3323 = vmatpush1.msra.mxu0 0.0
    %3324 = vmatprep.subr.mxu0 0.0
    %3325 = vmatpush1.msra.mxu0 0.0
    %3326 = vmatprep.subr.mxu0 0.0
    %3327 = vmatpush1.msra.mxu0 0.0
    %3328 = vmatprep.subr.mxu0 0.0
    %3329 = vmatpush1.msra.mxu0 0.0
    %3330 = vmatprep.subr.mxu0 0.0
    %3331 = vmatpush1.msra.mxu0 0.0
    %3332 = vmatprep.subr.mxu0 0.0
    %3333 = vmatpush1.msra.mxu0 0.0
    %3334 = vmatprep.subr.mxu0 0.0
    %3335 = vmatpush1.msra.mxu0 0.0
    %3336 = vmatprep.subr.mxu0 0.0
    %3337 = vmatpush1.msra.mxu0 0.0
    %3338 = vmatprep.mubr.f32.mxu0 0.0
    %3339 = vmatmul.mubr.f32.gmra.mrb[0].mxu0 %v3269
    %v3340 = vpop.f32.mrb[0].mxu0
    %v3341 = vadd.f32 %v3266, %v3340
    %v3342 = vpop.f32.mrb[0].mxu0
    %3343 = vmatprep.mubr.f32.mxu0 0.0
    %3344 = vmatmul.mubr.f32.gmra.mrb[0].mxu0 %v3272
    %v3345 = vpop.f32.mrb[0].mxu0
    %v3346 = vadd.f32 %v3266, %v3345
    %v3347 = vpop.f32.mrb[0].mxu0
    %3348 = vdwg.mxu0
    %3353 = vrot.lane.b32.xlu0 %v3256, 96
    %v3354 = vpop.permute.xlu0 %3353
    %3355 = vrot.lane.b32.xlu0 %v3257, 96
    %v3356 = vpop.permute.xlu0 %3355
    %3357 = vrot.lane.b32.xlu0 %v3258, 96
    %v3358 = vpop.permute.xlu0 %3357
    %3359 = vrot.lane.b32.xlu0 %v3259, 96
    %v3360 = vpop.permute.xlu0 %3359
    %3365 = vrot.lane.b32.xlu0 %v3266, 96
    %v3366 = vpop.permute.xlu0 %3365
    %v3369 = vsel %vm91, %v2197, 0
    %v3372 = vsel %vm91, %v3251, 0
    %v3375 = vsel %vm91, %v2198, 0
    %v3378 = vsel %vm91, %v3252, 0
    %3380 = vmatprep.subr.mxu0 0.0
    %3381 = vmatpush1.msra.mxu0 %v3354
    %3382 = vmatprep.subr.mxu0 0.0
    %3383 = vmatpush1.msra.mxu0 %v3356
    %3384 = vmatprep.subr.mxu0 0.0
    %3385 = vmatpush1.msra.mxu0 %v3358
    %3386 = vmatprep.subr.mxu0 0.0
    %3387 = vmatpush1.msra.mxu0 %v3360
    %3388 = vmatprep.subr.mxu0 0.0
    %3389 = vmatpush1.msra.mxu0 0.0
    %3390 = vmatprep.subr.mxu0 0.0
    %3391 = vmatpush1.msra.mxu0 0.0
    %3392 = vmatprep.subr.mxu0 0.0
    %3393 = vmatpush1.msra.mxu0 0.0
    %3394 = vmatprep.subr.mxu0 0.0
    %3395 = vmatpush1.msra.mxu0 0.0
    %3396 = vmatprep.subr.mxu0 0.0
    %3397 = vmatpush1.msra.mxu0 0.0
    %3398 = vmatprep.subr.mxu0 0.0
    %3399 = vmatpush1.msra.mxu0 0.0
    %3400 = vmatprep.subr.mxu0 0.0
    %3401 = vmatpush1.msra.mxu0 0.0
    %3402 = vmatprep.subr.mxu0 0.0
    %3403 = vmatpush1.msra.mxu0 0.0
    %3404 = vmatprep.subr.mxu0 0.0
    %3405 = vmatpush1.msra.mxu0 0.0
    %3406 = vmatprep.subr.mxu0 0.0
    %3407 = vmatpush1.msra.mxu0 0.0
    %3408 = vmatprep.subr.mxu0 0.0
    %3409 = vmatpush1.msra.mxu0 0.0
    %3410 = vmatprep.subr.mxu0 0.0
    %3411 = vmatpush1.msra.mxu0 0.0
    %3412 = vmatprep.subr.mxu0 0.0
    %3413 = vmatpush1.msra.mxu0 0.0
    %3414 = vmatprep.subr.mxu0 0.0
    %3415 = vmatpush1.msra.mxu0 0.0
    %3416 = vmatprep.subr.mxu0 0.0
    %3417 = vmatpush1.msra.mxu0 0.0
    %3418 = vmatprep.subr.mxu0 0.0
    %3419 = vmatpush1.msra.mxu0 0.0
    %3420 = vmatprep.subr.mxu0 0.0
    %3421 = vmatpush1.msra.mxu0 0.0
    %3422 = vmatprep.subr.mxu0 0.0
    %3423 = vmatpush1.msra.mxu0 0.0
    %3424 = vmatprep.subr.mxu0 0.0
    %3425 = vmatpush1.msra.mxu0 0.0
    %3426 = vmatprep.subr.mxu0 0.0
    %3427 = vmatpush1.msra.mxu0 0.0
    %3428 = vmatprep.subr.mxu0 0.0
    %3429 = vmatpush1.msra.mxu0 0.0
    %3430 = vmatprep.subr.mxu0 0.0
    %3431 = vmatpush1.msra.mxu0 0.0
    %3432 = vmatprep.subr.mxu0 0.0
    %3433 = vmatpush1.msra.mxu0 0.0
    %3434 = vmatprep.subr.mxu0 0.0
    %3435 = vmatpush1.msra.mxu0 0.0
    %3436 = vmatprep.subr.mxu0 0.0
    %3437 = vmatpush1.msra.mxu0 0.0
    %3438 = vmatprep.subr.mxu0 0.0
    %3439 = vmatpush1.msra.mxu0 0.0
    %3440 = vmatprep.subr.mxu0 0.0
    %3441 = vmatpush1.msra.mxu0 0.0
    %3442 = vmatprep.subr.mxu0 0.0
    %3443 = vmatpush1.msra.mxu0 0.0
    %3444 = vmatprep.mubr.f32.mxu0 0.0
    %3445 = vmatmul.mubr.f32.gmra.mrb[0].mxu0 %v3369
    %v3446 = vpop.f32.mrb[0].mxu0
    %v3447 = vadd.f32 %v3366, %v3446
    %v3448 = vpop.f32.mrb[0].mxu0
    %3449 = vmatprep.mubr.f32.mxu0 0.0
    %3450 = vmatmul.mubr.f32.gmra.mrb[0].mxu0 %v3372
    %v3451 = vpop.f32.mrb[0].mxu0
    %v3452 = vadd.f32 %v3366, %v3451
    %v3453 = vpop.f32.mrb[0].mxu0
    %3454 = vmatprep.mubr.f32.mxu0 0.0
    %3455 = vmatmul.mubr.f32.gmra.mrb[0].mxu0 %v3375
    %v3456 = vpop.f32.mrb[0].mxu0
    %v3457 = vadd.f32 %v3366, %v3456
    %v3458 = vpop.f32.mrb[0].mxu0
    %3459 = vmatprep.mubr.f32.mxu0 0.0
    %3460 = vmatmul.mubr.f32.gmra.mrb[0].mxu0 %v3378
    %v3461 = vpop.f32.mrb[0].mxu0
    %v3462 = vadd.f32 %v3366, %v3461
    %v3463 = vpop.f32.mrb[0].mxu0
    %3464 = vdwg.mxu0
    %v3465 = vmul.f32 %v3341, 0.35355338
    %v3466 = vmul.f32 %v3346, 0.35355338
    %v3468 = vsel %vm181, %v3465, 0
    %v3471 = vsel %vm181, %v3466, 0
    %v3474 = vsel %vm181, %v3447, 0
    %v3477 = vsel %vm181, %v3452, 0
    %v3480 = vsel %vm181, %v3457, 0
    %v3483 = vsel %vm181, %v3462, 0
    %3485 = vmatprep.subr.mxu0 0.0
    %3486 = vmatpush1.xpose.msra.mxu0 %v3474
    %3487 = vmatprep.subr.mxu0 0.0
    %3488 = vmatpush1.xpose.msra.mxu0 %v3477
    %3489 = vmatprep.subr.mxu0 0.0
    %3490 = vmatpush1.xpose.msra.mxu0 %v3480
    %3491 = vmatprep.subr.mxu0 0.0
    %3492 = vmatpush1.xpose.msra.mxu0 %v3483
    %3493 = vmatprep.subr.mxu0 0.0
    %3494 = vmatpush1.xpose.msra.mxu0 0.0
    %3495 = vmatprep.subr.mxu0 0.0
    %3496 = vmatpush1.xpose.msra.mxu0 0.0
    %3497 = vmatprep.subr.mxu0 0.0
    %3498 = vmatpush1.xpose.msra.mxu0 0.0
    %3499 = vmatprep.subr.mxu0 0.0
    %3500 = vmatpush1.xpose.msra.mxu0 0.0
    %3501 = vmatprep.subr.mxu0 0.0
    %3502 = vmatpush1.xpose.msra.mxu0 0.0
    %3503 = vmatprep.subr.mxu0 0.0
    %3504 = vmatpush1.xpose.msra.mxu0 0.0
    %3505 = vmatprep.subr.mxu0 0.0
    %3506 = vmatpush1.xpose.msra.mxu0 0.0
    %3507 = vmatprep.subr.mxu0 0.0
    %3508 = vmatpush1.xpose.msra.mxu0 0.0
    %3509 = vmatprep.subr.mxu0 0.0
    %3510 = vmatpush1.xpose.msra.mxu0 0.0
    %3511 = vmatprep.subr.mxu0 0.0
    %3512 = vmatpush1.xpose.msra.mxu0 0.0
    %3513 = vmatprep.subr.mxu0 0.0
    %3514 = vmatpush1.xpose.msra.mxu0 0.0
    %3515 = vmatprep.subr.mxu0 0.0
    %3516 = vmatpush1.xpose.msra.mxu0 0.0
    %3517 = vmatprep.subr.mxu0 0.0
    %3518 = vmatpush1.xpose.msra.mxu0 0.0
    %3519 = vmatprep.subr.mxu0 0.0
    %3520 = vmatpush1.xpose.msra.mxu0 0.0
    %3521 = vmatprep.subr.mxu0 0.0
    %3522 = vmatpush1.xpose.msra.mxu0 0.0
    %3523 = vmatprep.subr.mxu0 0.0
    %3524 = vmatpush1.xpose.msra.mxu0 0.0
    %3525 = vmatprep.subr.mxu0 0.0
    %3526 = vmatpush1.xpose.msra.mxu0 0.0
    %3527 = vmatprep.subr.mxu0 0.0
    %3528 = vmatpush1.xpose.msra.mxu0 0.0
    %3529 = vmatprep.subr.mxu0 0.0
    %3530 = vmatpush1.xpose.msra.mxu0 0.0
    %3531 = vmatprep.subr.mxu0 0.0
    %3532 = vmatpush1.xpose.msra.mxu0 0.0
    %3533 = vmatprep.subr.mxu0 0.0
    %3534 = vmatpush1.xpose.msra.mxu0 0.0
    %3535 = vmatprep.subr.mxu0 0.0
    %3536 = vmatpush1.xpose.msra.mxu0 0.0
    %3537 = vmatprep.subr.mxu0 0.0
    %3538 = vmatpush1.xpose.msra.mxu0 0.0
    %3539 = vmatprep.subr.mxu0 0.0
    %3540 = vmatpush1.xpose.msra.mxu0 0.0
    %3541 = vmatprep.subr.mxu0 0.0
    %3542 = vmatpush1.xpose.msra.mxu0 0.0
    %3543 = vmatprep.subr.mxu0 0.0
    %3544 = vmatpush1.xpose.msra.mxu0 0.0
    %3545 = vmatprep.subr.mxu0 0.0
    %3546 = vmatpush1.xpose.msra.mxu0 0.0
    %3547 = vmatprep.subr.mxu0 0.0
    %3548 = vmatpush1.xpose.msra.mxu0 0.0
    %3549 = vmatprep.mubr.f32.mxu0 0.0
    %3550 = vmatmul.mubr.f32.gmra.mrb[0].mxu0 %v3468
    %v3551 = vpop.f32.mrb[0].mxu0
    %v3552 = vadd.f32 %v3253, %v3551
    %v3553 = vpop.f32.mrb[0].mxu0
    %3554 = vmatprep.mubr.f32.mxu0 0.0
    %3555 = vmatmul.mubr.f32.gmra.mrb[0].mxu0 %v3471
    %v3556 = vpop.f32.mrb[0].mxu0
    %v3557 = vadd.f32 %v3254, %v3556
    %v3558 = vpop.f32.mrb[0].mxu0
    %3559 = vdwg.mxu0
    %v3560 = vsel %vm91, %v3552, -inf
    %3561 = vmax.xlane.f32.xlu0 %v3560
    %v3562 = vpop.xlane.xlu0 %3561
    %v3563 = vsel %vm91, %v3557, -inf
    %3564 = vmax.xlane.f32.xlu0 %v3563
    %v3565 = vpop.xlane.xlu0 %3564
    %v3566 = vsub.f32 %v3552, %v3562
    %v3567 = vsub.f32 %v3557, %v3565
    %v3568 = vmul.f32 %v3566, 1.442695
    %v3569 = vpow.pop %v3568
    %v3570 = vmul.f32 %v3567, 1.442695
    %v3571 = vpow.pop %v3570
    %v3572 = vsel %vm91, %v3569, 0.0
    %3573 = vadd.xlane.f32.xlu0 %v3572
    %v3574 = vpop.xlane.xlu0 %3573
    %v3575 = vsel %vm91, %v3571, 0.0
    %3576 = vadd.xlane.f32.xlu0 %v3575
    %v3577 = vpop.xlane.xlu0 %3576
    %v3578 = vrcp.pop %v3574
    %v3579 = vmul.f32 %v3569, %v3578
    %v3580 = vrcp.pop %v3577
    %v3581 = vmul.f32 %v3571, %v3580
    %3582 = vst.msk [vmem:[%s22] sm:$0xff] %vm267, %v3579
    %3584 = vrot.lane.b32.xlu0 %v3581, 112
    %v3585 = vpop.permute.xlu0 %3584
    %3587 = vst.msk [vmem:[%s22 + $0x8] sm:$0xff] %vm267, %v3585
    %3588 = vrot.lane.b32.xlu0 %v3447, 96
    %v3589 = vpop.permute.xlu0 %3588
    %3590 = vrot.lane.b32.xlu0 %v3452, 96
    %v3591 = vpop.permute.xlu0 %3590
    %3592 = vrot.lane.b32.xlu0 %v3457, 96
    %v3593 = vpop.permute.xlu0 %3592
    %3594 = vrot.lane.b32.xlu0 %v3462, 96
    %v3595 = vpop.permute.xlu0 %3594
    %v3601 = vsel %vm91, %v3579, 0
    %v3603 = vsel %vm91, %v3581, 0
    %3605 = vmatprep.subr.mxu0 0.0
    %3606 = vmatpush1.msra.mxu0 %v3589
    %3607 = vmatprep.subr.mxu0 0.0
    %3608 = vmatpush1.msra.mxu0 %v3591
    %3609 = vmatprep.subr.mxu0 0.0
    %3610 = vmatpush1.msra.mxu0 %v3593
    %3611 = vmatprep.subr.mxu0 0.0
    %3612 = vmatpush1.msra.mxu0 %v3595
    %3613 = vmatprep.subr.mxu0 0.0
    %3614 = vmatpush1.msra.mxu0 0.0
    %3615 = vmatprep.subr.mxu0 0.0
    %3616 = vmatpush1.msra.mxu0 0.0
    %3617 = vmatprep.subr.mxu0 0.0
    %3618 = vmatpush1.msra.mxu0 0.0
    %3619 = vmatprep.subr.mxu0 0.0
    %3620 = vmatpush1.msra.mxu0 0.0
    %3621 = vmatprep.subr.mxu0 0.0
    %3622 = vmatpush1.msra.mxu0 0.0
    %3623 = vmatprep.subr.mxu0 0.0
    %3624 = vmatpush1.msra.mxu0 0.0
    %3625 = vmatprep.subr.mxu0 0.0
    %3626 = vmatpush1.msra.mxu0 0.0
    %3627 = vmatprep.subr.mxu0 0.0
    %3628 = vmatpush1.msra.mxu0 0.0
    %3629 = vmatprep.subr.mxu0 0.0
    %3630 = vmatpush1.msra.mxu0 0.0
    %3631 = vmatprep.subr.mxu0 0.0
    %3632 = vmatpush1.msra.mxu0 0.0
    %3633 = vmatprep.subr.mxu0 0.0
    %3634 = vmatpush1.msra.mxu0 0.0
    %3635 = vmatprep.subr.mxu0 0.0
    %3636 = vmatpush1.msra.mxu0 0.0
    %3637 = vmatprep.subr.mxu0 0.0
    %3638 = vmatpush1.msra.mxu0 0.0
    %3639 = vmatprep.subr.mxu0 0.0
    %3640 = vmatpush1.msra.mxu0 0.0
    %3641 = vmatprep.subr.mxu0 0.0
    %3642 = vmatpush1.msra.mxu0 0.0
    %3643 = vmatprep.subr.mxu0 0.0
    %3644 = vmatpush1.msra.mxu0 0.0
    %3645 = vmatprep.subr.mxu0 0.0
    %3646 = vmatpush1.msra.mxu0 0.0
    %3647 = vmatprep.subr.mxu0 0.0
    %3648 = vmatpush1.msra.mxu0 0.0
    %3649 = vmatprep.subr.mxu0 0.0
    %3650 = vmatpush1.msra.mxu0 0.0
    %3651 = vmatprep.subr.mxu0 0.0
    %3652 = vmatpush1.msra.mxu0 0.0
    %3653 = vmatprep.subr.mxu0 0.0
    %3654 = vmatpush1.msra.mxu0 0.0
    %3655 = vmatprep.subr.mxu0 0.0
    %3656 = vmatpush1.msra.mxu0 0.0
    %3657 = vmatprep.subr.mxu0 0.0
    %3658 = vmatpush1.msra.mxu0 0.0
    %3659 = vmatprep.subr.mxu0 0.0
    %3660 = vmatpush1.msra.mxu0 0.0
    %3661 = vmatprep.subr.mxu0 0.0
    %3662 = vmatpush1.msra.mxu0 0.0
    %3663 = vmatprep.subr.mxu0 0.0
    %3664 = vmatpush1.msra.mxu0 0.0
    %3665 = vmatprep.subr.mxu0 0.0
    %3666 = vmatpush1.msra.mxu0 0.0
    %3667 = vmatprep.subr.mxu0 0.0
    %3668 = vmatpush1.msra.mxu0 0.0
    %3669 = vmatprep.mubr.f32.mxu0 0.0
    %3670 = vmatmul.mubr.f32.gmra.mrb[0].mxu0 %v3601
    %v3671 = vpop.f32.mrb[0].mxu0
    %v3672 = vadd.f32 0.0, %v3671
    %v3673 = vpop.f32.mrb[0].mxu0
    %3674 = vmatprep.mubr.f32.mxu0 0.0
    %3675 = vmatmul.mubr.f32.gmra.mrb[0].mxu0 %v3603
    %v3676 = vpop.f32.mrb[0].mxu0
    %v3677 = vadd.f32 0.0, %v3676
    %v3678 = vpop.f32.mrb[0].mxu0
    %3679 = vdwg.mxu0
    %3680 = vrot.lane.b32.xlu0 %v3465, 120
    %v3681 = vpop.permute.xlu0 %3680
    %3682 = vrot.lane.b32.xlu0 %v3466, 120
    %v3683 = vpop.permute.xlu0 %3682
    %3684 = vrot.lane.b32.xlu0 %v3447, 120
    %v3685 = vpop.permute.xlu0 %3684
    %3686 = vrot.lane.b32.xlu0 %v3452, 120
    %v3687 = vpop.permute.xlu0 %3686
    %3688 = vrot.lane.b32.xlu0 %v3457, 120
    %v3689 = vpop.permute.xlu0 %3688
    %3690 = vrot.lane.b32.xlu0 %v3462, 120
    %v3691 = vpop.permute.xlu0 %3690
    %v3692 = vsel %vm181, %v3681, 0
    %v3694 = vsel %vm181, %v3683, 0
    %v3696 = vsel %vm181, %v3685, 0
    %v3698 = vsel %vm181, %v3687, 0
    %v3700 = vsel %vm181, %v3689, 0
    %v3702 = vsel %vm181, %v3691, 0
    %3704 = vmatprep.subr.mxu0 0.0
    %3705 = vmatpush1.xpose.msra.mxu0 %v3696
    %3706 = vmatprep.subr.mxu0 0.0
    %3707 = vmatpush1.xpose.msra.mxu0 %v3698
    %3708 = vmatprep.subr.mxu0 0.0
    %3709 = vmatpush1.xpose.msra.mxu0 %v3700
    %3710 = vmatprep.subr.mxu0 0.0
    %3711 = vmatpush1.xpose.msra.mxu0 %v3702
    %3712 = vmatprep.subr.mxu0 0.0
    %3713 = vmatpush1.xpose.msra.mxu0 0.0
    %3714 = vmatprep.subr.mxu0 0.0
    %3715 = vmatpush1.xpose.msra.mxu0 0.0
    %3716 = vmatprep.subr.mxu0 0.0
    %3717 = vmatpush1.xpose.msra.mxu0 0.0
    %3718 = vmatprep.subr.mxu0 0.0
    %3719 = vmatpush1.xpose.msra.mxu0 0.0
    %3720 = vmatprep.subr.mxu0 0.0
    %3721 = vmatpush1.xpose.msra.mxu0 0.0
    %3722 = vmatprep.subr.mxu0 0.0
    %3723 = vmatpush1.xpose.msra.mxu0 0.0
    %3724 = vmatprep.subr.mxu0 0.0
    %3725 = vmatpush1.xpose.msra.mxu0 0.0
    %3726 = vmatprep.subr.mxu0 0.0
    %3727 = vmatpush1.xpose.msra.mxu0 0.0
    %3728 = vmatprep.subr.mxu0 0.0
    %3729 = vmatpush1.xpose.msra.mxu0 0.0
    %3730 = vmatprep.subr.mxu0 0.0
    %3731 = vmatpush1.xpose.msra.mxu0 0.0
    %3732 = vmatprep.subr.mxu0 0.0
    %3733 = vmatpush1.xpose.msra.mxu0 0.0
    %3734 = vmatprep.subr.mxu0 0.0
    %3735 = vmatpush1.xpose.msra.mxu0 0.0
    %3736 = vmatprep.subr.mxu0 0.0
    %3737 = vmatpush1.xpose.msra.mxu0 0.0
    %3738 = vmatprep.subr.mxu0 0.0
    %3739 = vmatpush1.xpose.msra.mxu0 0.0
    %3740 = vmatprep.subr.mxu0 0.0
    %3741 = vmatpush1.xpose.msra.mxu0 0.0
    %3742 = vmatprep.subr.mxu0 0.0
    %3743 = vmatpush1.xpose.msra.mxu0 0.0
    %3744 = vmatprep.subr.mxu0 0.0
    %3745 = vmatpush1.xpose.msra.mxu0 0.0
    %3746 = vmatprep.subr.mxu0 0.0
    %3747 = vmatpush1.xpose.msra.mxu0 0.0
    %3748 = vmatprep.subr.mxu0 0.0
    %3749 = vmatpush1.xpose.msra.mxu0 0.0
    %3750 = vmatprep.subr.mxu0 0.0
    %3751 = vmatpush1.xpose.msra.mxu0 0.0
    %3752 = vmatprep.subr.mxu0 0.0
    %3753 = vmatpush1.xpose.msra.mxu0 0.0
    %3754 = vmatprep.subr.mxu0 0.0
    %3755 = vmatpush1.xpose.msra.mxu0 0.0
    %3756 = vmatprep.subr.mxu0 0.0
    %3757 = vmatpush1.xpose.msra.mxu0 0.0
    %3758 = vmatprep.subr.mxu0 0.0
    %3759 = vmatpush1.xpose.msra.mxu0 0.0
    %3760 = vmatprep.subr.mxu0 0.0
    %3761 = vmatpush1.xpose.msra.mxu0 0.0
    %3762 = vmatprep.subr.mxu0 0.0
    %3763 = vmatpush1.xpose.msra.mxu0 0.0
    %3764 = vmatprep.subr.mxu0 0.0
    %3765 = vmatpush1.xpose.msra.mxu0 0.0
    %3766 = vmatprep.subr.mxu0 0.0
    %3767 = vmatpush1.xpose.msra.mxu0 0.0
    %3768 = vmatprep.mubr.f32.mxu0 0.0
    %3769 = vmatmul.mubr.f32.gmra.mrb[0].mxu0 %v3692
    %v3770 = vpop.f32.mrb[0].mxu0
    %v3771 = vadd.f32 %v3253, %v3770
    %v3772 = vpop.f32.mrb[0].mxu0
    %3773 = vmatprep.mubr.f32.mxu0 0.0
    %3774 = vmatmul.mubr.f32.gmra.mrb[0].mxu0 %v3694
    %v3775 = vpop.f32.mrb[0].mxu0
    %v3776 = vadd.f32 %v3254, %v3775
    %v3777 = vpop.f32.mrb[0].mxu0
    %3778 = vdwg.mxu0
    %v3779 = vsel %vm91, %v3771, -inf
    %3780 = vmax.xlane.f32.xlu0 %v3779
    %v3781 = vpop.xlane.xlu0 %3780
    %v3782 = vsel %vm91, %v3776, -inf
    %3783 = vmax.xlane.f32.xlu0 %v3782
    %v3784 = vpop.xlane.xlu0 %3783
    %v3785 = vsub.f32 %v3771, %v3781
    %v3786 = vsub.f32 %v3776, %v3784
    %v3787 = vmul.f32 %v3785, 1.442695
    %v3788 = vpow.pop %v3787
    %v3789 = vmul.f32 %v3786, 1.442695
    %v3790 = vpow.pop %v3789
    %v3791 = vsel %vm91, %v3788, 0.0
    %3792 = vadd.xlane.f32.xlu0 %v3791
    %v3793 = vpop.xlane.xlu0 %3792
    %v3794 = vsel %vm91, %v3790, 0.0
    %3795 = vadd.xlane.f32.xlu0 %v3794
    %v3796 = vpop.xlane.xlu0 %3795
    %v3797 = vrcp.pop %v3793
    %v3798 = vmul.f32 %v3788, %v3797
    %v3799 = vrcp.pop %v3796
    %v3800 = vmul.f32 %v3790, %v3799
    %3802 = vrot.lane.b32.xlu0 %v3798, 16
    %v3803 = vpop.permute.xlu0 %3802
    %vm3805 = vcmask 261248
    %3806 = vst.msk [vmem:[%s22] sm:$0xff] %vm3805, %v3803
    %3807 = vst.msk [vmem:[%s22 + $0x8] sm:$0xff] %vm3805, %v3800
    %3808 = vrot.lane.b32.xlu0 %v3447, 88
    %v3809 = vpop.permute.xlu0 %3808
    %3810 = vrot.lane.b32.xlu0 %v3452, 88
    %v3811 = vpop.permute.xlu0 %3810
    %3812 = vrot.lane.b32.xlu0 %v3457, 88
    %v3813 = vpop.permute.xlu0 %3812
    %3814 = vrot.lane.b32.xlu0 %v3462, 88
    %v3815 = vpop.permute.xlu0 %3814
    %v3820 = vsel %vm91, %v3798, 0
    %v3823 = vsel %vm91, %v3800, 0
    %3825 = vmatprep.subr.mxu0 0.0
    %3826 = vmatpush1.msra.mxu0 %v3809
    %3827 = vmatprep.subr.mxu0 0.0
    %3828 = vmatpush1.msra.mxu0 %v3811
    %3829 = vmatprep.subr.mxu0 0.0
    %3830 = vmatpush1.msra.mxu0 %v3813
    %3831 = vmatprep.subr.mxu0 0.0
    %3832 = vmatpush1.msra.mxu0 %v3815
    %3833 = vmatprep.subr.mxu0 0.0
    %3834 = vmatpush1.msra.mxu0 0.0
    %3835 = vmatprep.subr.mxu0 0.0
    %3836 = vmatpush1.msra.mxu0 0.0
    %3837 = vmatprep.subr.mxu0 0.0
    %3838 = vmatpush1.msra.mxu0 0.0
    %3839 = vmatprep.subr.mxu0 0.0
    %3840 = vmatpush1.msra.mxu0 0.0
    %3841 = vmatprep.subr.mxu0 0.0
    %3842 = vmatpush1.msra.mxu0 0.0
    %3843 = vmatprep.subr.mxu0 0.0
    %3844 = vmatpush1.msra.mxu0 0.0
    %3845 = vmatprep.subr.mxu0 0.0
    %3846 = vmatpush1.msra.mxu0 0.0
    %3847 = vmatprep.subr.mxu0 0.0
    %3848 = vmatpush1.msra.mxu0 0.0
    %3849 = vmatprep.subr.mxu0 0.0
    %3850 = vmatpush1.msra.mxu0 0.0
    %3851 = vmatprep.subr.mxu0 0.0
    %3852 = vmatpush1.msra.mxu0 0.0
    %3853 = vmatprep.subr.mxu0 0.0
    %3854 = vmatpush1.msra.mxu0 0.0
    %3855 = vmatprep.subr.mxu0 0.0
    %3856 = vmatpush1.msra.mxu0 0.0
    %3857 = vmatprep.subr.mxu0 0.0
    %3858 = vmatpush1.msra.mxu0 0.0
    %3859 = vmatprep.subr.mxu0 0.0
    %3860 = vmatpush1.msra.mxu0 0.0
    %3861 = vmatprep.subr.mxu0 0.0
    %3862 = vmatpush1.msra.mxu0 0.0
    %3863 = vmatprep.subr.mxu0 0.0
    %3864 = vmatpush1.msra.mxu0 0.0
    %3865 = vmatprep.subr.mxu0 0.0
    %3866 = vmatpush1.msra.mxu0 0.0
    %3867 = vmatprep.subr.mxu0 0.0
    %3868 = vmatpush1.msra.mxu0 0.0
    %3869 = vmatprep.subr.mxu0 0.0
    %3870 = vmatpush1.msra.mxu0 0.0
    %3871 = vmatprep.subr.mxu0 0.0
    %3872 = vmatpush1.msra.mxu0 0.0
    %3873 = vmatprep.subr.mxu0 0.0
    %3874 = vmatpush1.msra.mxu0 0.0
    %3875 = vmatprep.subr.mxu0 0.0
    %3876 = vmatpush1.msra.mxu0 0.0
    %3877 = vmatprep.subr.mxu0 0.0
    %3878 = vmatpush1.msra.mxu0 0.0
    %3879 = vmatprep.subr.mxu0 0.0
    %3880 = vmatpush1.msra.mxu0 0.0
    %3881 = vmatprep.subr.mxu0 0.0
    %3882 = vmatpush1.msra.mxu0 0.0
    %3883 = vmatprep.subr.mxu0 0.0
    %3884 = vmatpush1.msra.mxu0 0.0
    %3885 = vmatprep.subr.mxu0 0.0
    %3886 = vmatpush1.msra.mxu0 0.0
    %3887 = vmatprep.subr.mxu0 0.0
    %3888 = vmatpush1.msra.mxu0 0.0
    %3889 = vmatprep.mubr.f32.mxu0 0.0
    %3890 = vmatmul.mubr.f32.gmra.mrb[0].mxu0 %v3820
    %v3891 = vpop.f32.mrb[0].mxu0
    %v3892 = vadd.f32 0.0, %v3891
    %v3893 = vpop.f32.mrb[0].mxu0
    %3894 = vmatprep.mubr.f32.mxu0 0.0
    %3895 = vmatmul.mubr.f32.gmra.mrb[0].mxu0 %v3823
    %v3896 = vpop.f32.mrb[0].mxu0
    %v3897 = vadd.f32 0.0, %v3896
    %v3898 = vpop.f32.mrb[0].mxu0
    %3899 = vdwg.mxu0
    %3900 = vrot.lane.b32.xlu0 %v3465, 112
    %v3901 = vpop.permute.xlu0 %3900
    %3902 = vrot.lane.b32.xlu0 %v3466, 112
    %v3903 = vpop.permute.xlu0 %3902
    %3904 = vrot.lane.b32.xlu0 %v3447, 112
    %v3905 = vpop.permute.xlu0 %3904
    %3906 = vrot.lane.b32.xlu0 %v3452, 112
    %v3907 = vpop.permute.xlu0 %3906
    %3908 = vrot.lane.b32.xlu0 %v3457, 112
    %v3909 = vpop.permute.xlu0 %3908
    %3910 = vrot.lane.b32.xlu0 %v3462, 112
    %v3911 = vpop.permute.xlu0 %3910
    %v3912 = vsel %vm181, %v3901, 0
    %v3914 = vsel %vm181, %v3903, 0
    %v3916 = vsel %vm181, %v3905, 0
    %v3918 = vsel %vm181, %v3907, 0
    %v3920 = vsel %vm181, %v3909, 0
    %v3922 = vsel %vm181, %v3911, 0
    %3924 = vmatprep.subr.mxu0 0.0
    %3925 = vmatpush1.xpose.msra.mxu0 %v3916
    %3926 = vmatprep.subr.mxu0 0.0
    %3927 = vmatpush1.xpose.msra.mxu0 %v3918
    %3928 = vmatprep.subr.mxu0 0.0
    %3929 = vmatpush1.xpose.msra.mxu0 %v3920
    %3930 = vmatprep.subr.mxu0 0.0
    %3931 = vmatpush1.xpose.msra.mxu0 %v3922
    %3932 = vmatprep.subr.mxu0 0.0
    %3933 = vmatpush1.xpose.msra.mxu0 0.0
    %3934 = vmatprep.subr.mxu0 0.0
    %3935 = vmatpush1.xpose.msra.mxu0 0.0
    %3936 = vmatprep.subr.mxu0 0.0
    %3937 = vmatpush1.xpose.msra.mxu0 0.0
    %3938 = vmatprep.subr.mxu0 0.0
    %3939 = vmatpush1.xpose.msra.mxu0 0.0
    %3940 = vmatprep.subr.mxu0 0.0
    %3941 = vmatpush1.xpose.msra.mxu0 0.0
    %3942 = vmatprep.subr.mxu0 0.0
    %3943 = vmatpush1.xpose.msra.mxu0 0.0
    %3944 = vmatprep.subr.mxu0 0.0
    %3945 = vmatpush1.xpose.msra.mxu0 0.0
    %3946 = vmatprep.subr.mxu0 0.0
    %3947 = vmatpush1.xpose.msra.mxu0 0.0
    %3948 = vmatprep.subr.mxu0 0.0
    %3949 = vmatpush1.xpose.msra.mxu0 0.0
    %3950 = vmatprep.subr.mxu0 0.0
    %3951 = vmatpush1.xpose.msra.mxu0 0.0
    %3952 = vmatprep.subr.mxu0 0.0
    %3953 = vmatpush1.xpose.msra.mxu0 0.0
    %3954 = vmatprep.subr.mxu0 0.0
    %3955 = vmatpush1.xpose.msra.mxu0 0.0
    %3956 = vmatprep.subr.mxu0 0.0
    %3957 = vmatpush1.xpose.msra.mxu0 0.0
    %3958 = vmatprep.subr.mxu0 0.0
    %3959 = vmatpush1.xpose.msra.mxu0 0.0
    %3960 = vmatprep.subr.mxu0 0.0
    %3961 = vmatpush1.xpose.msra.mxu0 0.0
    %3962 = vmatprep.subr.mxu0 0.0
    %3963 = vmatpush1.xpose.msra.mxu0 0.0
    %3964 = vmatprep.subr.mxu0 0.0
    %3965 = vmatpush1.xpose.msra.mxu0 0.0
    %3966 = vmatprep.subr.mxu0 0.0
    %3967 = vmatpush1.xpose.msra.mxu0 0.0
    %3968 = vmatprep.subr.mxu0 0.0
    %3969 = vmatpush1.xpose.msra.mxu0 0.0
    %3970 = vmatprep.subr.mxu0 0.0
    %3971 = vmatpush1.xpose.msra.mxu0 0.0
    %3972 = vmatprep.subr.mxu0 0.0
    %3973 = vmatpush1.xpose.msra.mxu0 0.0
    %3974 = vmatprep.subr.mxu0 0.0
    %3975 = vmatpush1.xpose.msra.mxu0 0.0
    %3976 = vmatprep.subr.mxu0 0.0
    %3977 = vmatpush1.xpose.msra.mxu0 0.0
    %3978 = vmatprep.subr.mxu0 0.0
    %3979 = vmatpush1.xpose.msra.mxu0 0.0
    %3980 = vmatprep.subr.mxu0 0.0
    %3981 = vmatpush1.xpose.msra.mxu0 0.0
    %3982 = vmatprep.subr.mxu0 0.0
    %3983 = vmatpush1.xpose.msra.mxu0 0.0
    %3984 = vmatprep.subr.mxu0 0.0
    %3985 = vmatpush1.xpose.msra.mxu0 0.0
    %3986 = vmatprep.subr.mxu0 0.0
    %3987 = vmatpush1.xpose.msra.mxu0 0.0
    %3988 = vmatprep.mubr.f32.mxu0 0.0
    %3989 = vmatmul.mubr.f32.gmra.mrb[0].mxu0 %v3912
    %v3990 = vpop.f32.mrb[0].mxu0
    %v3991 = vadd.f32 %v3253, %v3990
    %v3992 = vpop.f32.mrb[0].mxu0
    %3993 = vmatprep.mubr.f32.mxu0 0.0
    %3994 = vmatmul.mubr.f32.gmra.mrb[0].mxu0 %v3914
    %v3995 = vpop.f32.mrb[0].mxu0
    %v3996 = vadd.f32 %v3254, %v3995
    %v3997 = vpop.f32.mrb[0].mxu0
    %3998 = vdwg.mxu0
    %v3999 = vsel %vm91, %v3991, -inf
    %4000 = vmax.xlane.f32.xlu0 %v3999
    %v4001 = vpop.xlane.xlu0 %4000
    %v4002 = vsel %vm91, %v3996, -inf
    %4003 = vmax.xlane.f32.xlu0 %v4002
    %v4004 = vpop.xlane.xlu0 %4003
    %v4005 = vsub.f32 %v3991, %v4001
    %v4006 = vsub.f32 %v3996, %v4004
    %v4007 = vmul.f32 %v4005, 1.442695
    %v4008 = vpow.pop %v4007
    %v4009 = vmul.f32 %v4006, 1.442695
    %v4010 = vpow.pop %v4009
    %v4011 = vsel %vm91, %v4008, 0.0
    %4012 = vadd.xlane.f32.xlu0 %v4011
    %v4013 = vpop.xlane.xlu0 %4012
    %v4014 = vsel %vm91, %v4010, 0.0
    %4015 = vadd.xlane.f32.xlu0 %v4014
    %v4016 = vpop.xlane.xlu0 %4015
    %v4017 = vrcp.pop %v4013
    %v4018 = vmul.f32 %v4008, %v4017
    %v4019 = vrcp.pop %v4016
    %v4020 = vmul.f32 %v4010, %v4019
    %4022 = vrot.lane.b32.xlu0 %v4018, 32
    %v4023 = vpop.permute.xlu0 %4022
    %vm4025 = vcmask 392448
    %4026 = vst.msk [vmem:[%s22] sm:$0xff] %vm4025, %v4023
    %4028 = vrot.lane.b32.xlu0 %v4020, 16
    %v4029 = vpop.permute.xlu0 %4028
    %4031 = vst.msk [vmem:[%s22 + $0x8] sm:$0xff] %vm4025, %v4029
    %4032 = vrot.lane.b32.xlu0 %v3447, 80
    %v4033 = vpop.permute.xlu0 %4032
    %4034 = vrot.lane.b32.xlu0 %v3452, 80
    %v4035 = vpop.permute.xlu0 %4034
    %4036 = vrot.lane.b32.xlu0 %v3457, 80
    %v4037 = vpop.permute.xlu0 %4036
    %4038 = vrot.lane.b32.xlu0 %v3462, 80
    %v4039 = vpop.permute.xlu0 %4038
    %v4044 = vsel %vm91, %v4018, 0
    %v4046 = vsel %vm91, %v4020, 0
    %4048 = vmatprep.subr.mxu0 0.0
    %4049 = vmatpush1.msra.mxu0 %v4033
    %4050 = vmatprep.subr.mxu0 0.0
    %4051 = vmatpush1.msra.mxu0 %v4035
    %4052 = vmatprep.subr.mxu0 0.0
    %4053 = vmatpush1.msra.mxu0 %v4037
    %4054 = vmatprep.subr.mxu0 0.0
    %4055 = vmatpush1.msra.mxu0 %v4039
    %4056 = vmatprep.subr.mxu0 0.0
    %4057 = vmatpush1.msra.mxu0 0.0
    %4058 = vmatprep.subr.mxu0 0.0
    %4059 = vmatpush1.msra.mxu0 0.0
    %4060 = vmatprep.subr.mxu0 0.0
    %4061 = vmatpush1.msra.mxu0 0.0
    %4062 = vmatprep.subr.mxu0 0.0
    %4063 = vmatpush1.msra.mxu0 0.0
    %4064 = vmatprep.subr.mxu0 0.0
    %4065 = vmatpush1.msra.mxu0 0.0
    %4066 = vmatprep.subr.mxu0 0.0
    %4067 = vmatpush1.msra.mxu0 0.0
    %4068 = vmatprep.subr.mxu0 0.0
    %4069 = vmatpush1.msra.mxu0 0.0
    %4070 = vmatprep.subr.mxu0 0.0
    %4071 = vmatpush1.msra.mxu0 0.0
    %4072 = vmatprep.subr.mxu0 0.0
    %4073 = vmatpush1.msra.mxu0 0.0
    %4074 = vmatprep.subr.mxu0 0.0
    %4075 = vmatpush1.msra.mxu0 0.0
    %4076 = vmatprep.subr.mxu0 0.0
    %4077 = vmatpush1.msra.mxu0 0.0
    %4078 = vmatprep.subr.mxu0 0.0
    %4079 = vmatpush1.msra.mxu0 0.0
    %4080 = vmatprep.subr.mxu0 0.0
    %4081 = vmatpush1.msra.mxu0 0.0
    %4082 = vmatprep.subr.mxu0 0.0
    %4083 = vmatpush1.msra.mxu0 0.0
    %4084 = vmatprep.subr.mxu0 0.0
    %4085 = vmatpush1.msra.mxu0 0.0
    %4086 = vmatprep.subr.mxu0 0.0
    %4087 = vmatpush1.msra.mxu0 0.0
    %4088 = vmatprep.subr.mxu0 0.0
    %4089 = vmatpush1.msra.mxu0 0.0
    %4090 = vmatprep.subr.mxu0 0.0
    %4091 = vmatpush1.msra.mxu0 0.0
    %4092 = vmatprep.subr.mxu0 0.0
    %4093 = vmatpush1.msra.mxu0 0.0
    %4094 = vmatprep.subr.mxu0 0.0
    %4095 = vmatpush1.msra.mxu0 0.0
    %4096 = vmatprep.subr.mxu0 0.0
    %4097 = vmatpush1.msra.mxu0 0.0
    %4098 = vmatprep.subr.mxu0 0.0
    %4099 = vmatpush1.msra.mxu0 0.0
    %4100 = vmatprep.subr.mxu0 0.0
    %4101 = vmatpush1.msra.mxu0 0.0
    %4102 = vmatprep.subr.mxu0 0.0
    %4103 = vmatpush1.msra.mxu0 0.0
    %4104 = vmatprep.subr.mxu0 0.0
    %4105 = vmatpush1.msra.mxu0 0.0
    %4106 = vmatprep.subr.mxu0 0.0
    %4107 = vmatpush1.msra.mxu0 0.0
    %4108 = vmatprep.subr.mxu0 0.0
    %4109 = vmatpush1.msra.mxu0 0.0
    %4110 = vmatprep.subr.mxu0 0.0
    %4111 = vmatpush1.msra.mxu0 0.0
    %4112 = vmatprep.mubr.f32.mxu0 0.0
    %4113 = vmatmul.mubr.f32.gmra.mrb[0].mxu0 %v4044
    %v4114 = vpop.f32.mrb[0].mxu0
    %v4115 = vadd.f32 0.0, %v4114
    %v4116 = vpop.f32.mrb[0].mxu0
    %4117 = vmatprep.mubr.f32.mxu0 0.0
    %4118 = vmatmul.mubr.f32.gmra.mrb[0].mxu0 %v4046
    %v4119 = vpop.f32.mrb[0].mxu0
    %v4120 = vadd.f32 0.0, %v4119
    %v4121 = vpop.f32.mrb[0].mxu0
    %4122 = vdwg.mxu0
    %4123 = vrot.lane.b32.xlu0 %v3465, 104
    %v4124 = vpop.permute.xlu0 %4123
    %4125 = vrot.lane.b32.xlu0 %v3466, 104
    %v4126 = vpop.permute.xlu0 %4125
    %4127 = vrot.lane.b32.xlu0 %v3447, 104
    %v4128 = vpop.permute.xlu0 %4127
    %4129 = vrot.lane.b32.xlu0 %v3452, 104
    %v4130 = vpop.permute.xlu0 %4129
    %4131 = vrot.lane.b32.xlu0 %v3457, 104
    %v4132 = vpop.permute.xlu0 %4131
    %4133 = vrot.lane.b32.xlu0 %v3462, 104
    %v4134 = vpop.permute.xlu0 %4133
    %v4135 = vsel %vm181, %v4124, 0
    %v4137 = vsel %vm181, %v4126, 0
    %v4139 = vsel %vm181, %v4128, 0
    %v4141 = vsel %vm181, %v4130, 0
    %v4143 = vsel %vm181, %v4132, 0
    %v4145 = vsel %vm181, %v4134, 0
    %4147 = vmatprep.subr.mxu0 0.0
    %4148 = vmatpush1.xpose.msra.mxu0 %v4139
    %4149 = vmatprep.subr.mxu0 0.0
    %4150 = vmatpush1.xpose.msra.mxu0 %v4141
    %4151 = vmatprep.subr.mxu0 0.0
    %4152 = vmatpush1.xpose.msra.mxu0 %v4143
    %4153 = vmatprep.subr.mxu0 0.0
    %4154 = vmatpush1.xpose.msra.mxu0 %v4145
    %4155 = vmatprep.subr.mxu0 0.0
    %4156 = vmatpush1.xpose.msra.mxu0 0.0
    %4157 = vmatprep.subr.mxu0 0.0
    %4158 = vmatpush1.xpose.msra.mxu0 0.0
    %4159 = vmatprep.subr.mxu0 0.0
    %4160 = vmatpush1.xpose.msra.mxu0 0.0
    %4161 = vmatprep.subr.mxu0 0.0
    %4162 = vmatpush1.xpose.msra.mxu0 0.0
    %4163 = vmatprep.subr.mxu0 0.0
    %4164 = vmatpush1.xpose.msra.mxu0 0.0
    %4165 = vmatprep.subr.mxu0 0.0
    %4166 = vmatpush1.xpose.msra.mxu0 0.0
    %4167 = vmatprep.subr.mxu0 0.0
    %4168 = vmatpush1.xpose.msra.mxu0 0.0
    %4169 = vmatprep.subr.mxu0 0.0
    %4170 = vmatpush1.xpose.msra.mxu0 0.0
    %4171 = vmatprep.subr.mxu0 0.0
    %4172 = vmatpush1.xpose.msra.mxu0 0.0
    %4173 = vmatprep.subr.mxu0 0.0
    %4174 = vmatpush1.xpose.msra.mxu0 0.0
    %4175 = vmatprep.subr.mxu0 0.0
    %4176 = vmatpush1.xpose.msra.mxu0 0.0
    %4177 = vmatprep.subr.mxu0 0.0
    %4178 = vmatpush1.xpose.msra.mxu0 0.0
    %4179 = vmatprep.subr.mxu0 0.0
    %4180 = vmatpush1.xpose.msra.mxu0 0.0
    %4181 = vmatprep.subr.mxu0 0.0
    %4182 = vmatpush1.xpose.msra.mxu0 0.0
    %4183 = vmatprep.subr.mxu0 0.0
    %4184 = vmatpush1.xpose.msra.mxu0 0.0
    %4185 = vmatprep.subr.mxu0 0.0
    %4186 = vmatpush1.xpose.msra.mxu0 0.0
    %4187 = vmatprep.subr.mxu0 0.0
    %4188 = vmatpush1.xpose.msra.mxu0 0.0
    %4189 = vmatprep.subr.mxu0 0.0
    %4190 = vmatpush1.xpose.msra.mxu0 0.0
    %4191 = vmatprep.subr.mxu0 0.0
    %4192 = vmatpush1.xpose.msra.mxu0 0.0
    %4193 = vmatprep.subr.mxu0 0.0
    %4194 = vmatpush1.xpose.msra.mxu0 0.0
    %4195 = vmatprep.subr.mxu0 0.0
    %4196 = vmatpush1.xpose.msra.mxu0 0.0
    %4197 = vmatprep.subr.mxu0 0.0
    %4198 = vmatpush1.xpose.msra.mxu0 0.0
    %4199 = vmatprep.subr.mxu0 0.0
    %4200 = vmatpush1.xpose.msra.mxu0 0.0
    %4201 = vmatprep.subr.mxu0 0.0
    %4202 = vmatpush1.xpose.msra.mxu0 0.0
    %4203 = vmatprep.subr.mxu0 0.0
    %4204 = vmatpush1.xpose.msra.mxu0 0.0
    %4205 = vmatprep.subr.mxu0 0.0
    %4206 = vmatpush1.xpose.msra.mxu0 0.0
    %4207 = vmatprep.subr.mxu0 0.0
    %4208 = vmatpush1.xpose.msra.mxu0 0.0
    %4209 = vmatprep.subr.mxu0 0.0
    %4210 = vmatpush1.xpose.msra.mxu0 0.0
    %4211 = vmatprep.mubr.f32.mxu0 0.0
    %4212 = vmatmul.mubr.f32.gmra.mrb[0].mxu0 %v4135
    %v4213 = vpop.f32.mrb[0].mxu0
    %v4214 = vadd.f32 %v3253, %v4213
    %v4215 = vpop.f32.mrb[0].mxu0
    %4216 = vmatprep.mubr.f32.mxu0 0.0
    %4217 = vmatmul.mubr.f32.gmra.mrb[0].mxu0 %v4137
    %v4218 = vpop.f32.mrb[0].mxu0
    %v4219 = vadd.f32 %v3254, %v4218
    %v4220 = vpop.f32.mrb[0].mxu0
    %4221 = vdwg.mxu0
    %v4222 = vsel %vm91, %v4214, -inf
    %4223 = vmax.xlane.f32.xlu0 %v4222
    %v4224 = vpop.xlane.xlu0 %4223
    %v4225 = vsel %vm91, %v4219, -inf
    %4226 = vmax.xlane.f32.xlu0 %v4225
    %v4227 = vpop.xlane.xlu0 %4226
    %v4228 = vsub.f32 %v4214, %v4224
    %v4229 = vsub.f32 %v4219, %v4227
    %v4230 = vmul.f32 %v4228, 1.442695
    %v4231 = vpow.pop %v4230
    %v4232 = vmul.f32 %v4229, 1.442695
    %v4233 = vpow.pop %v4232
    %v4234 = vsel %vm91, %v4231, 0.0
    %4235 = vadd.xlane.f32.xlu0 %v4234
    %v4236 = vpop.xlane.xlu0 %4235
    %v4237 = vsel %vm91, %v4233, 0.0
    %4238 = vadd.xlane.f32.xlu0 %v4237
    %v4239 = vpop.xlane.xlu0 %4238
    %v4240 = vrcp.pop %v4236
    %v4241 = vmul.f32 %v4231, %v4240
    %v4242 = vrcp.pop %v4239
    %v4243 = vmul.f32 %v4233, %v4242
    %4245 = vrot.lane.b32.xlu0 %v4241, 48
    %v4246 = vpop.permute.xlu0 %4245
    %vm4248 = vcmask 523648
    %4249 = vst.msk [vmem:[%s22] sm:$0xff] %vm4248, %v4246
    %4251 = vrot.lane.b32.xlu0 %v4243, 32
    %v4252 = vpop.permute.xlu0 %4251
    %4254 = vst.msk [vmem:[%s22 + $0x8] sm:$0xff] %vm4248, %v4252
    %4255 = vrot.lane.b32.xlu0 %v3447, 72
    %v4256 = vpop.permute.xlu0 %4255
    %4257 = vrot.lane.b32.xlu0 %v3452, 72
    %v4258 = vpop.permute.xlu0 %4257
    %4259 = vrot.lane.b32.xlu0 %v3457, 72
    %v4260 = vpop.permute.xlu0 %4259
    %4261 = vrot.lane.b32.xlu0 %v3462, 72
    %v4262 = vpop.permute.xlu0 %4261
    %v4267 = vsel %vm91, %v4241, 0
    %v4269 = vsel %vm91, %v4243, 0
    %4271 = vmatprep.subr.mxu0 0.0
    %4272 = vmatpush1.msra.mxu0 %v4256
    %4273 = vmatprep.subr.mxu0 0.0
    %4274 = vmatpush1.msra.mxu0 %v4258
    %4275 = vmatprep.subr.mxu0 0.0
    %4276 = vmatpush1.msra.mxu0 %v4260
    %4277 = vmatprep.subr.mxu0 0.0
    %4278 = vmatpush1.msra.mxu0 %v4262
    %4279 = vmatprep.subr.mxu0 0.0
    %4280 = vmatpush1.msra.mxu0 0.0
    %4281 = vmatprep.subr.mxu0 0.0
    %4282 = vmatpush1.msra.mxu0 0.0
    %4283 = vmatprep.subr.mxu0 0.0
    %4284 = vmatpush1.msra.mxu0 0.0
    %4285 = vmatprep.subr.mxu0 0.0
    %4286 = vmatpush1.msra.mxu0 0.0
    %4287 = vmatprep.subr.mxu0 0.0
    %4288 = vmatpush1.msra.mxu0 0.0
    %4289 = vmatprep.subr.mxu0 0.0
    %4290 = vmatpush1.msra.mxu0 0.0
    %4291 = vmatprep.subr.mxu0 0.0
    %4292 = vmatpush1.msra.mxu0 0.0
    %4293 = vmatprep.subr.mxu0 0.0
    %4294 = vmatpush1.msra.mxu0 0.0
    %4295 = vmatprep.subr.mxu0 0.0
    %4296 = vmatpush1.msra.mxu0 0.0
    %4297 = vmatprep.subr.mxu0 0.0
    %4298 = vmatpush1.msra.mxu0 0.0
    %4299 = vmatprep.subr.mxu0 0.0
    %4300 = vmatpush1.msra.mxu0 0.0
    %4301 = vmatprep.subr.mxu0 0.0
    %4302 = vmatpush1.msra.mxu0 0.0
    %4303 = vmatprep.subr.mxu0 0.0
    %4304 = vmatpush1.msra.mxu0 0.0
    %4305 = vmatprep.subr.mxu0 0.0
    %4306 = vmatpush1.msra.mxu0 0.0
    %4307 = vmatprep.subr.mxu0 0.0
    %4308 = vmatpush1.msra.mxu0 0.0
    %4309 = vmatprep.subr.mxu0 0.0
    %4310 = vmatpush1.msra.mxu0 0.0
    %4311 = vmatprep.subr.mxu0 0.0
    %4312 = vmatpush1.msra.mxu0 0.0
    %4313 = vmatprep.subr.mxu0 0.0
    %4314 = vmatpush1.msra.mxu0 0.0
    %4315 = vmatprep.subr.mxu0 0.0
    %4316 = vmatpush1.msra.mxu0 0.0
    %4317 = vmatprep.subr.mxu0 0.0
    %4318 = vmatpush1.msra.mxu0 0.0
    %4319 = vmatprep.subr.mxu0 0.0
    %4320 = vmatpush1.msra.mxu0 0.0
    %4321 = vmatprep.subr.mxu0 0.0
    %4322 = vmatpush1.msra.mxu0 0.0
    %4323 = vmatprep.subr.mxu0 0.0
    %4324 = vmatpush1.msra.mxu0 0.0
    %4325 = vmatprep.subr.mxu0 0.0
    %4326 = vmatpush1.msra.mxu0 0.0
    %4327 = vmatprep.subr.mxu0 0.0
    %4328 = vmatpush1.msra.mxu0 0.0
    %4329 = vmatprep.subr.mxu0 0.0
    %4330 = vmatpush1.msra.mxu0 0.0
    %4331 = vmatprep.subr.mxu0 0.0
    %4332 = vmatpush1.msra.mxu0 0.0
    %4333 = vmatprep.subr.mxu0 0.0
    %4334 = vmatpush1.msra.mxu0 0.0
    %4335 = vmatprep.mubr.f32.mxu0 0.0
    %4336 = vmatmul.mubr.f32.gmra.mrb[0].mxu0 %v4267
    %v4337 = vpop.f32.mrb[0].mxu0
    %v4338 = vadd.f32 0.0, %v4337
    %v4339 = vpop.f32.mrb[0].mxu0
    %4340 = vmatprep.mubr.f32.mxu0 0.0
    %4341 = vmatmul.mubr.f32.gmra.mrb[0].mxu0 %v4269
    %v4342 = vpop.f32.mrb[0].mxu0
    %v4343 = vadd.f32 0.0, %v4342
    %v4344 = vpop.f32.mrb[0].mxu0
    %4345 = vdwg.mxu0
    %4348 = vrot.lane.b32.xlu0 %v3892, 8
    %v4349 = vpop.permute.xlu0 %4348
    %4350 = vrot.lane.b32.xlu0 %v3897, 8
    %v4351 = vpop.permute.xlu0 %4350
    %4356 = vrot.lane.b32.xlu0 %v4115, 16
    %v4357 = vpop.permute.xlu0 %4356
    %4358 = vrot.lane.b32.xlu0 %v4120, 16
    %v4359 = vpop.permute.xlu0 %4358
    %4364 = vrot.lane.b32.xlu0 %v4338, 24
    %v4365 = vpop.permute.xlu0 %4364
    %4366 = vrot.lane.b32.xlu0 %v4343, 24
    %v4367 = vpop.permute.xlu0 %4366
    %v4370 = vsel %vm181, %v3672, %v4349
    %v4371 = vsel %vm181, %v3677, %v4351
    %v4372 = vsel %vm267, %v4370, %v4357
    %v4373 = vsel %vm267, %v4371, %v4359
    %v4374 = vsel %vm1005, %v4372, %v4365
    %v4375 = vsel %vm1005, %v4373, %v4367
    %s4376 = scalar_lea.vmem %s11, 96
    %v4377 = vld [vmem:[%s4376] sm:$0xff]
    %v4378 = vld [vmem:[%s4376 + $0x8] sm:$0xff]
    %v4379 = vld [vmem:[%s4376 + $0x10] sm:$0xff]
    %v4380 = vld [vmem:[%s4376 + $0x18] sm:$0xff]
    %s4381 = scalar_lea.vmem %s12, 3
    %v4382 = vld [vmem:[%s4381] sm:$0x1]
    %v4384 = vlaneseq
    %v4385 = vshrl.u32 %v4384, 7
    %v4386 = vsub.s32 0, %v4385
    %v4387 = vrot.slane %v4382, %v4386
    %v4390 = vsel %vm91, %v4374, 0
    %v4393 = vsel %vm91, %v4375, 0
    %4395 = vmatprep.subr.mxu0 0.0
    %4396 = vmatpush1.msra.mxu0 %v4377
    %4397 = vmatprep.subr.mxu0 0.0
    %4398 = vmatpush1.msra.mxu0 %v4378
    %4399 = vmatprep.subr.mxu0 0.0
    %4400 = vmatpush1.msra.mxu0 %v4379
    %4401 = vmatprep.subr.mxu0 0.0
    %4402 = vmatpush1.msra.mxu0 %v4380
    %4403 = vmatprep.subr.mxu0 0.0
    %4404 = vmatpush1.msra.mxu0 0.0
    %4405 = vmatprep.subr.mxu0 0.0
    %4406 = vmatpush1.msra.mxu0 0.0
    %4407 = vmatprep.subr.mxu0 0.0
    %4408 = vmatpush1.msra.mxu0 0.0
    %4409 = vmatprep.subr.mxu0 0.0
    %4410 = vmatpush1.msra.mxu0 0.0
    %4411 = vmatprep.subr.mxu0 0.0
    %4412 = vmatpush1.msra.mxu0 0.0
    %4413 = vmatprep.subr.mxu0 0.0
    %4414 = vmatpush1.msra.mxu0 0.0
    %4415 = vmatprep.subr.mxu0 0.0
    %4416 = vmatpush1.msra.mxu0 0.0
    %4417 = vmatprep.subr.mxu0 0.0
    %4418 = vmatpush1.msra.mxu0 0.0
    %4419 = vmatprep.subr.mxu0 0.0
    %4420 = vmatpush1.msra.mxu0 0.0
    %4421 = vmatprep.subr.mxu0 0.0
    %4422 = vmatpush1.msra.mxu0 0.0
    %4423 = vmatprep.subr.mxu0 0.0
    %4424 = vmatpush1.msra.mxu0 0.0
    %4425 = vmatprep.subr.mxu0 0.0
    %4426 = vmatpush1.msra.mxu0 0.0
    %4427 = vmatprep.subr.mxu0 0.0
    %4428 = vmatpush1.msra.mxu0 0.0
    %4429 = vmatprep.subr.mxu0 0.0
    %4430 = vmatpush1.msra.mxu0 0.0
    %4431 = vmatprep.subr.mxu0 0.0
    %4432 = vmatpush1.msra.mxu0 0.0
    %4433 = vmatprep.subr.mxu0 0.0
    %4434 = vmatpush1.msra.mxu0 0.0
    %4435 = vmatprep.subr.mxu0 0.0
    %4436 = vmatpush1.msra.mxu0 0.0
    %4437 = vmatprep.subr.mxu0 0.0
    %4438 = vmatpush1.msra.mxu0 0.0
    %4439 = vmatprep.subr.mxu0 0.0
    %4440 = vmatpush1.msra.mxu0 0.0
    %4441 = vmatprep.subr.mxu0 0.0
    %4442 = vmatpush1.msra.mxu0 0.0
    %4443 = vmatprep.subr.mxu0 0.0
    %4444 = vmatpush1.msra.mxu0 0.0
    %4445 = vmatprep.subr.mxu0 0.0
    %4446 = vmatpush1.msra.mxu0 0.0
    %4447 = vmatprep.subr.mxu0 0.0
    %4448 = vmatpush1.msra.mxu0 0.0
    %4449 = vmatprep.subr.mxu0 0.0
    %4450 = vmatpush1.msra.mxu0 0.0
    %4451 = vmatprep.subr.mxu0 0.0
    %4452 = vmatpush1.msra.mxu0 0.0
    %4453 = vmatprep.subr.mxu0 0.0
    %4454 = vmatpush1.msra.mxu0 0.0
    %4455 = vmatprep.subr.mxu0 0.0
    %4456 = vmatpush1.msra.mxu0 0.0
    %4457 = vmatprep.subr.mxu0 0.0
    %4458 = vmatpush1.msra.mxu0 0.0
    %4459 = vmatprep.mubr.f32.mxu0 0.0
    %4460 = vmatmul.mubr.f32.gmra.mrb[0].mxu0 %v4390
    %v4461 = vpop.f32.mrb[0].mxu0
    %v4462 = vadd.f32 %v4387, %v4461
    %v4463 = vpop.f32.mrb[0].mxu0
    %4464 = vmatprep.mubr.f32.mxu0 0.0
    %4465 = vmatmul.mubr.f32.gmra.mrb[0].mxu0 %v4393
    %v4466 = vpop.f32.mrb[0].mxu0
    %v4467 = vadd.f32 %v4387, %v4466
    %v4468 = vpop.f32.mrb[0].mxu0
    %4469 = vdwg.mxu0
    %v4470 = vadd.f32 %v1143, %v4462
    %v4471 = vadd.f32 %v1144, %v4467
    %v4472 = vsel %vm91, %v4470, 0.0
    %4473 = vadd.xlane.f32.xlu0 %v4472
    %v4474 = vpop.xlane.xlu0 %4473
    %v4475 = vsel %vm91, %v4471, 0.0
    %4476 = vadd.xlane.f32.xlu0 %v4475
    %v4477 = vpop.xlane.xlu0 %4476
    %v4478 = vmul.f32 %v4474, %v1108
    %v4479 = vmul.f32 %v4477, %v1108
    %v4480 = vsub.f32 %v4470, %v4478
    %v4481 = vsub.f32 %v4471, %v4479
    %v4482 = vmul.f32 %v4480, %v4480
    %v4483 = vmul.f32 %v4481, %v4481
    %v4484 = vsel %vm91, %v4482, 0.0
    %4485 = vadd.xlane.f32.xlu0 %v4484
    %v4486 = vpop.xlane.xlu0 %4485
    %v4487 = vsel %vm91, %v4483, 0.0
    %4488 = vadd.xlane.f32.xlu0 %v4487
    %v4489 = vpop.xlane.xlu0 %4488
    %v4490 = vmul.f32 %v4486, %v1108
    %v4491 = vmul.f32 %v4489, %v1108
    %v4492 = vadd.f32 %v4490, 1e-05
    %v4493 = vadd.f32 %v4491, 1e-05
    %v4494 = vrsqrt.pop %v4492
    %v4495 = vrsqrt.pop %v4493
    %v4496 = vmul.f32 %v4480, %v4494
    %v4497 = vmul.f32 %v4481, %v4495
    %v4498 = vmul.f32 %v4496, %v1133
    %v4499 = vmul.f32 %v4497, %v1133
    %v4500 = vadd.f32 %v4498, %v1141
    %v4501 = vadd.f32 %v4499, %v1141
    %v4502 = vld [vmem:[%s7] sm:$0xff]
    %v4503 = vld [vmem:[%s7 + $0x8] sm:$0xff]
    %s4504 = scalar_lea.vmem %s9, 128
    %v4505 = vld [vmem:[%s4504] sm:$0xff]
    %v4506 = vld [vmem:[%s4504 + $0x8] sm:$0xff]
    %v4507 = vld [vmem:[%s4504 + $0x10] sm:$0xff]
    %v4508 = vld [vmem:[%s4504 + $0x18] sm:$0xff]
    %s4509 = scalar_lea.vmem %s10, 4
    %v4510 = vld [vmem:[%s4509] sm:$0x1]
    %v4512 = vlaneseq
    %v4513 = vshrl.u32 %v4512, 7
    %v4514 = vsub.s32 0, %v4513
    %v4515 = vrot.slane %v4510, %v4514
    %4517 = vmatprep.subr.mxu0 0.0
    %4518 = vmatpush1.msra.mxu0 %v4505
    %4519 = vmatprep.subr.mxu0 0.0
    %4520 = vmatpush1.msra.mxu0 %v4506
    %4521 = vmatprep.subr.mxu0 0.0
    %4522 = vmatpush1.msra.mxu0 %v4507
    %4523 = vmatprep.subr.mxu0 0.0
    %4524 = vmatpush1.msra.mxu0 %v4508
    %4525 = vmatprep.subr.mxu0 0.0
    %4526 = vmatpush1.msra.mxu0 0.0
    %4527 = vmatprep.subr.mxu0 0.0
    %4528 = vmatpush1.msra.mxu0 0.0
    %4529 = vmatprep.subr.mxu0 0.0
    %4530 = vmatpush1.msra.mxu0 0.0
    %4531 = vmatprep.subr.mxu0 0.0
    %4532 = vmatpush1.msra.mxu0 0.0
    %4533 = vmatprep.subr.mxu0 0.0
    %4534 = vmatpush1.msra.mxu0 0.0
    %4535 = vmatprep.subr.mxu0 0.0
    %4536 = vmatpush1.msra.mxu0 0.0
    %4537 = vmatprep.subr.mxu0 0.0
    %4538 = vmatpush1.msra.mxu0 0.0
    %4539 = vmatprep.subr.mxu0 0.0
    %4540 = vmatpush1.msra.mxu0 0.0
    %4541 = vmatprep.subr.mxu0 0.0
    %4542 = vmatpush1.msra.mxu0 0.0
    %4543 = vmatprep.subr.mxu0 0.0
    %4544 = vmatpush1.msra.mxu0 0.0
    %4545 = vmatprep.subr.mxu0 0.0
    %4546 = vmatpush1.msra.mxu0 0.0
    %4547 = vmatprep.subr.mxu0 0.0
    %4548 = vmatpush1.msra.mxu0 0.0
    %4549 = vmatprep.subr.mxu0 0.0
    %4550 = vmatpush1.msra.mxu0 0.0
    %4551 = vmatprep.subr.mxu0 0.0
    %4552 = vmatpush1.msra.mxu0 0.0
    %4553 = vmatprep.subr.mxu0 0.0
    %4554 = vmatpush1.msra.mxu0 0.0
    %4555 = vmatprep.subr.mxu0 0.0
    %4556 = vmatpush1.msra.mxu0 0.0
    %4557 = vmatprep.subr.mxu0 0.0
    %4558 = vmatpush1.msra.mxu0 0.0
    %4559 = vmatprep.subr.mxu0 0.0
    %4560 = vmatpush1.msra.mxu0 0.0
    %4561 = vmatprep.subr.mxu0 0.0
    %4562 = vmatpush1.msra.mxu0 0.0
    %4563 = vmatprep.subr.mxu0 0.0
    %4564 = vmatpush1.msra.mxu0 0.0
    %4565 = vmatprep.subr.mxu0 0.0
    %4566 = vmatpush1.msra.mxu0 0.0
    %4567 = vmatprep.subr.mxu0 0.0
    %4568 = vmatpush1.msra.mxu0 0.0
    %4569 = vmatprep.subr.mxu0 0.0
    %4570 = vmatpush1.msra.mxu0 0.0
    %4571 = vmatprep.subr.mxu0 0.0
    %4572 = vmatpush1.msra.mxu0 0.0
    %4573 = vmatprep.subr.mxu0 0.0
    %4574 = vmatpush1.msra.mxu0 0.0
    %4575 = vmatprep.subr.mxu0 0.0
    %4576 = vmatpush1.msra.mxu0 0.0
    %4577 = vmatprep.subr.mxu0 0.0
    %4578 = vmatpush1.msra.mxu0 0.0
    %4579 = vmatprep.subr.mxu0 0.0
    %4580 = vmatpush1.msra.mxu0 0.0
    %4581 = vmatprep.mubr.f32.mxu0 0.0
    %4582 = vmatmul.mubr.f32.gmra.mrb[0].mxu0 %v3369
    %v4583 = vpop.f32.mrb[0].mxu0
    %v4584 = vadd.f32 %v4515, %v4583
    %v4585 = vpop.f32.mrb[0].mxu0
    %4586 = vmatprep.mubr.f32.mxu0 0.0
    %4587 = vmatmul.mubr.f32.gmra.mrb[0].mxu0 %v3375
    %v4588 = vpop.f32.mrb[0].mxu0
    %v4589 = vadd.f32 %v4515, %v4588
    %v4590 = vpop.f32.mrb[0].mxu0
    %4591 = vdwg.mxu0
    %4596 = vrot.lane.b32.xlu0 %v4505, 96
    %v4597 = vpop.permute.xlu0 %4596
    %4598 = vrot.lane.b32.xlu0 %v4506, 96
    %v4599 = vpop.permute.xlu0 %4598
    %4600 = vrot.lane.b32.xlu0 %v4507, 96
    %v4601 = vpop.permute.xlu0 %4600
    %4602 = vrot.lane.b32.xlu0 %v4508, 96
    %v4603 = vpop.permute.xlu0 %4602
    %4608 = vrot.lane.b32.xlu0 %v4515, 96
    %v4609 = vpop.permute.xlu0 %4608
    %v4612 = vsel %vm91, %v4500, 0
    %v4615 = vsel %vm91, %v4501, 0
    %4617 = vmatprep.subr.mxu0 0.0
    %4618 = vmatpush1.msra.mxu0 %v4597
    %4619 = vmatprep.subr.mxu0 0.0
    %4620 = vmatpush1.msra.mxu0 %v4599
    %4621 = vmatprep.subr.mxu0 0.0
    %4622 = vmatpush1.msra.mxu0 %v4601
    %4623 = vmatprep.subr.mxu0 0.0
    %4624 = vmatpush1.msra.mxu0 %v4603
    %4625 = vmatprep.subr.mxu0 0.0
    %4626 = vmatpush1.msra.mxu0 0.0
    %4627 = vmatprep.subr.mxu0 0.0
    %4628 = vmatpush1.msra.mxu0 0.0
    %4629 = vmatprep.subr.mxu0 0.0
    %4630 = vmatpush1.msra.mxu0 0.0
    %4631 = vmatprep.subr.mxu0 0.0
    %4632 = vmatpush1.msra.mxu0 0.0
    %4633 = vmatprep.subr.mxu0 0.0
    %4634 = vmatpush1.msra.mxu0 0.0
    %4635 = vmatprep.subr.mxu0 0.0
    %4636 = vmatpush1.msra.mxu0 0.0
    %4637 = vmatprep.subr.mxu0 0.0
    %4638 = vmatpush1.msra.mxu0 0.0
    %4639 = vmatprep.subr.mxu0 0.0
    %4640 = vmatpush1.msra.mxu0 0.0
    %4641 = vmatprep.subr.mxu0 0.0
    %4642 = vmatpush1.msra.mxu0 0.0
    %4643 = vmatprep.subr.mxu0 0.0
    %4644 = vmatpush1.msra.mxu0 0.0
    %4645 = vmatprep.subr.mxu0 0.0
    %4646 = vmatpush1.msra.mxu0 0.0
    %4647 = vmatprep.subr.mxu0 0.0
    %4648 = vmatpush1.msra.mxu0 0.0
    %4649 = vmatprep.subr.mxu0 0.0
    %4650 = vmatpush1.msra.mxu0 0.0
    %4651 = vmatprep.subr.mxu0 0.0
    %4652 = vmatpush1.msra.mxu0 0.0
    %4653 = vmatprep.subr.mxu0 0.0
    %4654 = vmatpush1.msra.mxu0 0.0
    %4655 = vmatprep.subr.mxu0 0.0
    %4656 = vmatpush1.msra.mxu0 0.0
    %4657 = vmatprep.subr.mxu0 0.0
    %4658 = vmatpush1.msra.mxu0 0.0
    %4659 = vmatprep.subr.mxu0 0.0
    %4660 = vmatpush1.msra.mxu0 0.0
    %4661 = vmatprep.subr.mxu0 0.0
    %4662 = vmatpush1.msra.mxu0 0.0
    %4663 = vmatprep.subr.mxu0 0.0
    %4664 = vmatpush1.msra.mxu0 0.0
    %4665 = vmatprep.subr.mxu0 0.0
    %4666 = vmatpush1.msra.mxu0 0.0
    %4667 = vmatprep.subr.mxu0 0.0
    %4668 = vmatpush1.msra.mxu0 0.0
    %4669 = vmatprep.subr.mxu0 0.0
    %4670 = vmatpush1.msra.mxu0 0.0
    %4671 = vmatprep.subr.mxu0 0.0
    %4672 = vmatpush1.msra.mxu0 0.0
    %4673 = vmatprep.subr.mxu0 0.0
    %4674 = vmatpush1.msra.mxu0 0.0
    %4675 = vmatprep.subr.mxu0 0.0
    %4676 = vmatpush1.msra.mxu0 0.0
    %4677 = vmatprep.subr.mxu0 0.0
    %4678 = vmatpush1.msra.mxu0 0.0
    %4679 = vmatprep.subr.mxu0 0.0
    %4680 = vmatpush1.msra.mxu0 0.0
    %4681 = vmatprep.mubr.f32.mxu0 0.0
    %4682 = vmatmul.mubr.f32.gmra.mrb[0].mxu0 %v4612
    %v4683 = vpop.f32.mrb[0].mxu0
    %v4684 = vadd.f32 %v4609, %v4683
    %v4685 = vpop.f32.mrb[0].mxu0
    %4686 = vmatprep.mubr.f32.mxu0 0.0
    %4687 = vmatmul.mubr.f32.gmra.mrb[0].mxu0 %v4615
    %v4688 = vpop.f32.mrb[0].mxu0
    %v4689 = vadd.f32 %v4609, %v4688
    %v4690 = vpop.f32.mrb[0].mxu0
    %4691 = vdwg.mxu0
    %v4692 = vmul.f32 %v4584, 0.35355338
    %v4693 = vmul.f32 %v4589, 0.35355338
    %v4695 = vsel %vm181, %v4692, 0
    %v4698 = vsel %vm181, %v4693, 0
    %v4701 = vsel %vm181, %v4684, 0
    %v4704 = vsel %vm181, %v4689, 0
    %4706 = vmatprep.subr.mxu0 0.0
    %4707 = vmatpush1.xpose.msra.mxu0 %v4701
    %4708 = vmatprep.subr.mxu0 0.0
    %4709 = vmatpush1.xpose.msra.mxu0 %v4704
    %4710 = vmatprep.subr.mxu0 0.0
    %4711 = vmatpush1.xpose.msra.mxu0 0.0
    %4712 = vmatprep.subr.mxu0 0.0
    %4713 = vmatpush1.xpose.msra.mxu0 0.0
    %4714 = vmatprep.subr.mxu0 0.0
    %4715 = vmatpush1.xpose.msra.mxu0 0.0
    %4716 = vmatprep.subr.mxu0 0.0
    %4717 = vmatpush1.xpose.msra.mxu0 0.0
    %4718 = vmatprep.subr.mxu0 0.0
    %4719 = vmatpush1.xpose.msra.mxu0 0.0
    %4720 = vmatprep.subr.mxu0 0.0
    %4721 = vmatpush1.xpose.msra.mxu0 0.0
    %4722 = vmatprep.subr.mxu0 0.0
    %4723 = vmatpush1.xpose.msra.mxu0 0.0
    %4724 = vmatprep.subr.mxu0 0.0
    %4725 = vmatpush1.xpose.msra.mxu0 0.0
    %4726 = vmatprep.subr.mxu0 0.0
    %4727 = vmatpush1.xpose.msra.mxu0 0.0
    %4728 = vmatprep.subr.mxu0 0.0
    %4729 = vmatpush1.xpose.msra.mxu0 0.0
    %4730 = vmatprep.subr.mxu0 0.0
    %4731 = vmatpush1.xpose.msra.mxu0 0.0
    %4732 = vmatprep.subr.mxu0 0.0
    %4733 = vmatpush1.xpose.msra.mxu0 0.0
    %4734 = vmatprep.subr.mxu0 0.0
    %4735 = vmatpush1.xpose.msra.mxu0 0.0
    %4736 = vmatprep.subr.mxu0 0.0
    %4737 = vmatpush1.xpose.msra.mxu0 0.0
    %4738 = vmatprep.subr.mxu0 0.0
    %4739 = vmatpush1.xpose.msra.mxu0 0.0
    %4740 = vmatprep.subr.mxu0 0.0
    %4741 = vmatpush1.xpose.msra.mxu0 0.0
    %4742 = vmatprep.subr.mxu0 0.0
    %4743 = vmatpush1.xpose.msra.mxu0 0.0
    %4744 = vmatprep.subr.mxu0 0.0
    %4745 = vmatpush1.xpose.msra.mxu0 0.0
    %4746 = vmatprep.subr.mxu0 0.0
    %4747 = vmatpush1.xpose.msra.mxu0 0.0
    %4748 = vmatprep.subr.mxu0 0.0
    %4749 = vmatpush1.xpose.msra.mxu0 0.0
    %4750 = vmatprep.subr.mxu0 0.0
    %4751 = vmatpush1.xpose.msra.mxu0 0.0
    %4752 = vmatprep.subr.mxu0 0.0
    %4753 = vmatpush1.xpose.msra.mxu0 0.0
    %4754 = vmatprep.subr.mxu0 0.0
    %4755 = vmatpush1.xpose.msra.mxu0 0.0
    %4756 = vmatprep.subr.mxu0 0.0
    %4757 = vmatpush1.xpose.msra.mxu0 0.0
    %4758 = vmatprep.subr.mxu0 0.0
    %4759 = vmatpush1.xpose.msra.mxu0 0.0
    %4760 = vmatprep.subr.mxu0 0.0
    %4761 = vmatpush1.xpose.msra.mxu0 0.0
    %4762 = vmatprep.subr.mxu0 0.0
    %4763 = vmatpush1.xpose.msra.mxu0 0.0
    %4764 = vmatprep.subr.mxu0 0.0
    %4765 = vmatpush1.xpose.msra.mxu0 0.0
    %4766 = vmatprep.subr.mxu0 0.0
    %4767 = vmatpush1.xpose.msra.mxu0 0.0
    %4768 = vmatprep.subr.mxu0 0.0
    %4769 = vmatpush1.xpose.msra.mxu0 0.0
    %4770 = vmatprep.mubr.f32.mxu0 0.0
    %4771 = vmatmul.mubr.f32.gmra.mrb[0].mxu0 %v4695
    %v4772 = vpop.f32.mrb[0].mxu0
    %v4773 = vadd.f32 %v4502, %v4772
    %v4774 = vpop.f32.mrb[0].mxu0
    %4775 = vmatprep.mubr.f32.mxu0 0.0
    %4776 = vmatmul.mubr.f32.gmra.mrb[0].mxu0 %v4698
    %v4777 = vpop.f32.mrb[0].mxu0
    %v4778 = vadd.f32 %v4503, %v4777
    %v4779 = vpop.f32.mrb[0].mxu0
    %4780 = vdwg.mxu0
    %v4781 = vsel %vm267, %v4773, -inf
    %4782 = vmax.xlane.f32.xlu0 %v4781
    %v4783 = vpop.xlane.xlu0 %4782
    %v4784 = vsel %vm267, %v4778, -inf
    %4785 = vmax.xlane.f32.xlu0 %v4784
    %v4786 = vpop.xlane.xlu0 %4785
    %v4787 = vsub.f32 %v4773, %v4783
    %v4788 = vsub.f32 %v4778, %v4786
    %v4789 = vmul.f32 %v4787, 1.442695
    %v4790 = vpow.pop %v4789
    %v4791 = vmul.f32 %v4788, 1.442695
    %v4792 = vpow.pop %v4791
    %v4793 = vsel %vm267, %v4790, 0.0
    %4794 = vadd.xlane.f32.xlu0 %v4793
    %v4795 = vpop.xlane.xlu0 %4794
    %v4796 = vsel %vm267, %v4792, 0.0
    %4797 = vadd.xlane.f32.xlu0 %v4796
    %v4798 = vpop.xlane.xlu0 %4797
    %v4799 = vrcp.pop %v4795
    %v4800 = vmul.f32 %v4790, %v4799
    %v4801 = vrcp.pop %v4798
    %v4802 = vmul.f32 %v4792, %v4801
    %4803 = vst.msk [vmem:[%s23] sm:$0xff] %vm181, %v4800
    %4805 = vrot.lane.b32.xlu0 %v4802, 120
    %v4806 = vpop.permute.xlu0 %4805
    %4808 = vst.msk [vmem:[%s23 + $0x8] sm:$0xff] %vm181, %v4806
    %4809 = vrot.lane.b32.xlu0 %v4684, 96
    %v4810 = vpop.permute.xlu0 %4809
    %4811 = vrot.lane.b32.xlu0 %v4689, 96
    %v4812 = vpop.permute.xlu0 %4811
    %v4816 = vsel %vm267, %v4800, 0
    %v4818 = vsel %vm267, %v4802, 0
    %4820 = vmatprep.subr.mxu0 0.0
    %4821 = vmatpush1.msra.mxu0 %v4810
    %4822 = vmatprep.subr.mxu0 0.0
    %4823 = vmatpush1.msra.mxu0 %v4812
    %4824 = vmatprep.subr.mxu0 0.0
    %4825 = vmatpush1.msra.mxu0 0.0
    %4826 = vmatprep.subr.mxu0 0.0
    %4827 = vmatpush1.msra.mxu0 0.0
    %4828 = vmatprep.subr.mxu0 0.0
    %4829 = vmatpush1.msra.mxu0 0.0
    %4830 = vmatprep.subr.mxu0 0.0
    %4831 = vmatpush1.msra.mxu0 0.0
    %4832 = vmatprep.subr.mxu0 0.0
    %4833 = vmatpush1.msra.mxu0 0.0
    %4834 = vmatprep.subr.mxu0 0.0
    %4835 = vmatpush1.msra.mxu0 0.0
    %4836 = vmatprep.subr.mxu0 0.0
    %4837 = vmatpush1.msra.mxu0 0.0
    %4838 = vmatprep.subr.mxu0 0.0
    %4839 = vmatpush1.msra.mxu0 0.0
    %4840 = vmatprep.subr.mxu0 0.0
    %4841 = vmatpush1.msra.mxu0 0.0
    %4842 = vmatprep.subr.mxu0 0.0
    %4843 = vmatpush1.msra.mxu0 0.0
    %4844 = vmatprep.subr.mxu0 0.0
    %4845 = vmatpush1.msra.mxu0 0.0
    %4846 = vmatprep.subr.mxu0 0.0
    %4847 = vmatpush1.msra.mxu0 0.0
    %4848 = vmatprep.subr.mxu0 0.0
    %4849 = vmatpush1.msra.mxu0 0.0
    %4850 = vmatprep.subr.mxu0 0.0
    %4851 = vmatpush1.msra.mxu0 0.0
    %4852 = vmatprep.subr.mxu0 0.0
    %4853 = vmatpush1.msra.mxu0 0.0
    %4854 = vmatprep.subr.mxu0 0.0
    %4855 = vmatpush1.msra.mxu0 0.0
    %4856 = vmatprep.subr.mxu0 0.0
    %4857 = vmatpush1.msra.mxu0 0.0
    %4858 = vmatprep.subr.mxu0 0.0
    %4859 = vmatpush1.msra.mxu0 0.0
    %4860 = vmatprep.subr.mxu0 0.0
    %4861 = vmatpush1.msra.mxu0 0.0
    %4862 = vmatprep.subr.mxu0 0.0
    %4863 = vmatpush1.msra.mxu0 0.0
    %4864 = vmatprep.subr.mxu0 0.0
    %4865 = vmatpush1.msra.mxu0 0.0
    %4866 = vmatprep.subr.mxu0 0.0
    %4867 = vmatpush1.msra.mxu0 0.0
    %4868 = vmatprep.subr.mxu0 0.0
    %4869 = vmatpush1.msra.mxu0 0.0
    %4870 = vmatprep.subr.mxu0 0.0
    %4871 = vmatpush1.msra.mxu0 0.0
    %4872 = vmatprep.subr.mxu0 0.0
    %4873 = vmatpush1.msra.mxu0 0.0
    %4874 = vmatprep.subr.mxu0 0.0
    %4875 = vmatpush1.msra.mxu0 0.0
    %4876 = vmatprep.subr.mxu0 0.0
    %4877 = vmatpush1.msra.mxu0 0.0
    %4878 = vmatprep.subr.mxu0 0.0
    %4879 = vmatpush1.msra.mxu0 0.0
    %4880 = vmatprep.subr.mxu0 0.0
    %4881 = vmatpush1.msra.mxu0 0.0
    %4882 = vmatprep.subr.mxu0 0.0
    %4883 = vmatpush1.msra.mxu0 0.0
    %4884 = vmatprep.mubr.f32.mxu0 0.0
    %4885 = vmatmul.mubr.f32.gmra.mrb[0].mxu0 %v4816
    %v4886 = vpop.f32.mrb[0].mxu0
    %v4887 = vadd.f32 0.0, %v4886
    %v4888 = vpop.f32.mrb[0].mxu0
    %4889 = vmatprep.mubr.f32.mxu0 0.0
    %4890 = vmatmul.mubr.f32.gmra.mrb[0].mxu0 %v4818
    %v4891 = vpop.f32.mrb[0].mxu0
    %v4892 = vadd.f32 0.0, %v4891
    %v4893 = vpop.f32.mrb[0].mxu0
    %4894 = vdwg.mxu0
    %4895 = vrot.lane.b32.xlu0 %v4692, 120
    %v4896 = vpop.permute.xlu0 %4895
    %4897 = vrot.lane.b32.xlu0 %v4693, 120
    %v4898 = vpop.permute.xlu0 %4897
    %4899 = vrot.lane.b32.xlu0 %v4684, 120
    %v4900 = vpop.permute.xlu0 %4899
    %4901 = vrot.lane.b32.xlu0 %v4689, 120
    %v4902 = vpop.permute.xlu0 %4901
    %v4903 = vsel %vm181, %v4896, 0
    %v4905 = vsel %vm181, %v4898, 0
    %v4907 = vsel %vm181, %v4900, 0
    %v4909 = vsel %vm181, %v4902, 0
    %4911 = vmatprep.subr.mxu0 0.0
    %4912 = vmatpush1.xpose.msra.mxu0 %v4907
    %4913 = vmatprep.subr.mxu0 0.0
    %4914 = vmatpush1.xpose.msra.mxu0 %v4909
    %4915 = vmatprep.subr.mxu0 0.0
    %4916 = vmatpush1.xpose.msra.mxu0 0.0
    %4917 = vmatprep.subr.mxu0 0.0
    %4918 = vmatpush1.xpose.msra.mxu0 0.0
    %4919 = vmatprep.subr.mxu0 0.0
    %4920 = vmatpush1.xpose.msra.mxu0 0.0
    %4921 = vmatprep.subr.mxu0 0.0
    %4922 = vmatpush1.xpose.msra.mxu0 0.0
    %4923 = vmatprep.subr.mxu0 0.0
    %4924 = vmatpush1.xpose.msra.mxu0 0.0
    %4925 = vmatprep.subr.mxu0 0.0
    %4926 = vmatpush1.xpose.msra.mxu0 0.0
    %4927 = vmatprep.subr.mxu0 0.0
    %4928 = vmatpush1.xpose.msra.mxu0 0.0
    %4929 = vmatprep.subr.mxu0 0.0
    %4930 = vmatpush1.xpose.msra.mxu0 0.0
    %4931 = vmatprep.subr.mxu0 0.0
    %4932 = vmatpush1.xpose.msra.mxu0 0.0
    %4933 = vmatprep.subr.mxu0 0.0
    %4934 = vmatpush1.xpose.msra.mxu0 0.0
    %4935 = vmatprep.subr.mxu0 0.0
    %4936 = vmatpush1.xpose.msra.mxu0 0.0
    %4937 = vmatprep.subr.mxu0 0.0
    %4938 = vmatpush1.xpose.msra.mxu0 0.0
    %4939 = vmatprep.subr.mxu0 0.0
    %4940 = vmatpush1.xpose.msra.mxu0 0.0
    %4941 = vmatprep.subr.mxu0 0.0
    %4942 = vmatpush1.xpose.msra.mxu0 0.0
    %4943 = vmatprep.subr.mxu0 0.0
    %4944 = vmatpush1.xpose.msra.mxu0 0.0
    %4945 = vmatprep.subr.mxu0 0.0
    %4946 = vmatpush1.xpose.msra.mxu0 0.0
    %4947 = vmatprep.subr.mxu0 0.0
    %4948 = vmatpush1.xpose.msra.mxu0 0.0
    %4949 = vmatprep.subr.mxu0 0.0
    %4950 = vmatpush1.xpose.msra.mxu0 0.0
    %4951 = vmatprep.subr.mxu0 0.0
    %4952 = vmatpush1.xpose.msra.mxu0 0.0
    %4953 = vmatprep.subr.mxu0 0.0
    %4954 = vmatpush1.xpose.msra.mxu0 0.0
    %4955 = vmatprep.subr.mxu0 0.0
    %4956 = vmatpush1.xpose.msra.mxu0 0.0
    %4957 = vmatprep.subr.mxu0 0.0
    %4958 = vmatpush1.xpose.msra.mxu0 0.0
    %4959 = vmatprep.subr.mxu0 0.0
    %4960 = vmatpush1.xpose.msra.mxu0 0.0
    %4961 = vmatprep.subr.mxu0 0.0
    %4962 = vmatpush1.xpose.msra.mxu0 0.0
    %4963 = vmatprep.subr.mxu0 0.0
    %4964 = vmatpush1.xpose.msra.mxu0 0.0
    %4965 = vmatprep.subr.mxu0 0.0
    %4966 = vmatpush1.xpose.msra.mxu0 0.0
    %4967 = vmatprep.subr.mxu0 0.0
    %4968 = vmatpush1.xpose.msra.mxu0 0.0
    %4969 = vmatprep.subr.mxu0 0.0
    %4970 = vmatpush1.xpose.msra.mxu0 0.0
    %4971 = vmatprep.subr.mxu0 0.0
    %4972 = vmatpush1.xpose.msra.mxu0 0.0
    %4973 = vmatprep.subr.mxu0 0.0
    %4974 = vmatpush1.xpose.msra.mxu0 0.0
    %4975 = vmatprep.mubr.f32.mxu0 0.0
    %4976 = vmatmul.mubr.f32.gmra.mrb[0].mxu0 %v4903
    %v4977 = vpop.f32.mrb[0].mxu0
    %v4978 = vadd.f32 %v4502, %v4977
    %v4979 = vpop.f32.mrb[0].mxu0
    %4980 = vmatprep.mubr.f32.mxu0 0.0
    %4981 = vmatmul.mubr.f32.gmra.mrb[0].mxu0 %v4905
    %v4982 = vpop.f32.mrb[0].mxu0
    %v4983 = vadd.f32 %v4503, %v4982
    %v4984 = vpop.f32.mrb[0].mxu0
    %4985 = vdwg.mxu0
    %v4986 = vsel %vm267, %v4978, -inf
    %4987 = vmax.xlane.f32.xlu0 %v4986
    %v4988 = vpop.xlane.xlu0 %4987
    %v4989 = vsel %vm267, %v4983, -inf
    %4990 = vmax.xlane.f32.xlu0 %v4989
    %v4991 = vpop.xlane.xlu0 %4990
    %v4992 = vsub.f32 %v4978, %v4988
    %v4993 = vsub.f32 %v4983, %v4991
    %v4994 = vmul.f32 %v4992, 1.442695
    %v4995 = vpow.pop %v4994
    %v4996 = vmul.f32 %v4993, 1.442695
    %v4997 = vpow.pop %v4996
    %v4998 = vsel %vm267, %v4995, 0.0
    %4999 = vadd.xlane.f32.xlu0 %v4998
    %v5000 = vpop.xlane.xlu0 %4999
    %v5001 = vsel %vm267, %v4997, 0.0
    %5002 = vadd.xlane.f32.xlu0 %v5001
    %v5003 = vpop.xlane.xlu0 %5002
    %v5004 = vrcp.pop %v5000
    %v5005 = vmul.f32 %v4995, %v5004
    %v5006 = vrcp.pop %v5003
    %v5007 = vmul.f32 %v4997, %v5006
    %5009 = vrot.lane.b32.xlu0 %v5005, 8
    %v5010 = vpop.permute.xlu0 %5009
    %vm5012 = vcmask 130112
    %5013 = vst.msk [vmem:[%s23] sm:$0xff] %vm5012, %v5010
    %5014 = vst.msk [vmem:[%s23 + $0x8] sm:$0xff] %vm5012, %v5007
    %5015 = vrot.lane.b32.xlu0 %v4684, 88
    %v5016 = vpop.permute.xlu0 %5015
    %5017 = vrot.lane.b32.xlu0 %v4689, 88
    %v5018 = vpop.permute.xlu0 %5017
    %v5021 = vsel %vm267, %v5005, 0
    %v5024 = vsel %vm267, %v5007, 0
    %5026 = vmatprep.subr.mxu0 0.0
    %5027 = vmatpush1.msra.mxu0 %v5016
    %5028 = vmatprep.subr.mxu0 0.0
    %5029 = vmatpush1.msra.mxu0 %v5018
    %5030 = vmatprep.subr.mxu0 0.0
    %5031 = vmatpush1.msra.mxu0 0.0
    %5032 = vmatprep.subr.mxu0 0.0
    %5033 = vmatpush1.msra.mxu0 0.0
    %5034 = vmatprep.subr.mxu0 0.0
    %5035 = vmatpush1.msra.mxu0 0.0
    %5036 = vmatprep.subr.mxu0 0.0
    %5037 = vmatpush1.msra.mxu0 0.0
    %5038 = vmatprep.subr.mxu0 0.0
    %5039 = vmatpush1.msra.mxu0 0.0
    %5040 = vmatprep.subr.mxu0 0.0
    %5041 = vmatpush1.msra.mxu0 0.0
    %5042 = vmatprep.subr.mxu0 0.0
    %5043 = vmatpush1.msra.mxu0 0.0
    %5044 = vmatprep.subr.mxu0 0.0
    %5045 = vmatpush1.msra.mxu0 0.0
    %5046 = vmatprep.subr.mxu0 0.0
    %5047 = vmatpush1.msra.mxu0 0.0
    %5048 = vmatprep.subr.mxu0 0.0
    %5049 = vmatpush1.msra.mxu0 0.0
    %5050 = vmatprep.subr.mxu0 0.0
    %5051 = vmatpush1.msra.mxu0 0.0
    %5052 = vmatprep.subr.mxu0 0.0
    %5053 = vmatpush1.msra.mxu0 0.0
    %5054 = vmatprep.subr.mxu0 0.0
    %5055 = vmatpush1.msra.mxu0 0.0
    %5056 = vmatprep.subr.mxu0 0.0
    %5057 = vmatpush1.msra.mxu0 0.0
    %5058 = vmatprep.subr.mxu0 0.0
    %5059 = vmatpush1.msra.mxu0 0.0
    %5060 = vmatprep.subr.mxu0 0.0
    %5061 = vmatpush1.msra.mxu0 0.0
    %5062 = vmatprep.subr.mxu0 0.0
    %5063 = vmatpush1.msra.mxu0 0.0
    %5064 = vmatprep.subr.mxu0 0.0
    %5065 = vmatpush1.msra.mxu0 0.0
    %5066 = vmatprep.subr.mxu0 0.0
    %5067 = vmatpush1.msra.mxu0 0.0
    %5068 = vmatprep.subr.mxu0 0.0
    %5069 = vmatpush1.msra.mxu0 0.0
    %5070 = vmatprep.subr.mxu0 0.0
    %5071 = vmatpush1.msra.mxu0 0.0
    %5072 = vmatprep.subr.mxu0 0.0
    %5073 = vmatpush1.msra.mxu0 0.0
    %5074 = vmatprep.subr.mxu0 0.0
    %5075 = vmatpush1.msra.mxu0 0.0
    %5076 = vmatprep.subr.mxu0 0.0
    %5077 = vmatpush1.msra.mxu0 0.0
    %5078 = vmatprep.subr.mxu0 0.0
    %5079 = vmatpush1.msra.mxu0 0.0
    %5080 = vmatprep.subr.mxu0 0.0
    %5081 = vmatpush1.msra.mxu0 0.0
    %5082 = vmatprep.subr.mxu0 0.0
    %5083 = vmatpush1.msra.mxu0 0.0
    %5084 = vmatprep.subr.mxu0 0.0
    %5085 = vmatpush1.msra.mxu0 0.0
    %5086 = vmatprep.subr.mxu0 0.0
    %5087 = vmatpush1.msra.mxu0 0.0
    %5088 = vmatprep.subr.mxu0 0.0
    %5089 = vmatpush1.msra.mxu0 0.0
    %5090 = vmatprep.mubr.f32.mxu0 0.0
    %5091 = vmatmul.mubr.f32.gmra.mrb[0].mxu0 %v5021
    %v5092 = vpop.f32.mrb[0].mxu0
    %v5093 = vadd.f32 0.0, %v5092
    %v5094 = vpop.f32.mrb[0].mxu0
    %5095 = vmatprep.mubr.f32.mxu0 0.0
    %5096 = vmatmul.mubr.f32.gmra.mrb[0].mxu0 %v5024
    %v5097 = vpop.f32.mrb[0].mxu0
    %v5098 = vadd.f32 0.0, %v5097
    %v5099 = vpop.f32.mrb[0].mxu0
    %5100 = vdwg.mxu0
    %5101 = vrot.lane.b32.xlu0 %v4692, 112
    %v5102 = vpop.permute.xlu0 %5101
    %5103 = vrot.lane.b32.xlu0 %v4693, 112
    %v5104 = vpop.permute.xlu0 %5103
    %5105 = vrot.lane.b32.xlu0 %v4684, 112
    %v5106 = vpop.permute.xlu0 %5105
    %5107 = vrot.lane.b32.xlu0 %v4689, 112
    %v5108 = vpop.permute.xlu0 %5107
    %v5109 = vsel %vm181, %v5102, 0
    %v5111 = vsel %vm181, %v5104, 0
    %v5113 = vsel %vm181, %v5106, 0
    %v5115 = vsel %vm181, %v5108, 0
    %5117 = vmatprep.subr.mxu0 0.0
    %5118 = vmatpush1.xpose.msra.mxu0 %v5113
    %5119 = vmatprep.subr.mxu0 0.0
    %5120 = vmatpush1.xpose.msra.mxu0 %v5115
    %5121 = vmatprep.subr.mxu0 0.0
    %5122 = vmatpush1.xpose.msra.mxu0 0.0
    %5123 = vmatprep.subr.mxu0 0.0
    %5124 = vmatpush1.xpose.msra.mxu0 0.0
    %5125 = vmatprep.subr.mxu0 0.0
    %5126 = vmatpush1.xpose.msra.mxu0 0.0
    %5127 = vmatprep.subr.mxu0 0.0
    %5128 = vmatpush1.xpose.msra.mxu0 0.0
    %5129 = vmatprep.subr.mxu0 0.0
    %5130 = vmatpush1.xpose.msra.mxu0 0.0
    %5131 = vmatprep.subr.mxu0 0.0
    %5132 = vmatpush1.xpose.msra.mxu0 0.0
    %5133 = vmatprep.subr.mxu0 0.0
    %5134 = vmatpush1.xpose.msra.mxu0 0.0
    %5135 = vmatprep.subr.mxu0 0.0
    %5136 = vmatpush1.xpose.msra.mxu0 0.0
    %5137 = vmatprep.subr.mxu0 0.0
    %5138 = vmatpush1.xpose.msra.mxu0 0.0
    %5139 = vmatprep.subr.mxu0 0.0
    %5140 = vmatpush1.xpose.msra.mxu0 0.0
    %5141 = vmatprep.subr.mxu0 0.0
    %5142 = vmatpush1.xpose.msra.mxu0 0.0
    %5143 = vmatprep.subr.mxu0 0.0
    %5144 = vmatpush1.xpose.msra.mxu0 0.0
    %5145 = vmatprep.subr.mxu0 0.0
    %5146 = vmatpush1.xpose.msra.mxu0 0.0
    %5147 = vmatprep.subr.mxu0 0.0
    %5148 = vmatpush1.xpose.msra.mxu0 0.0
    %5149 = vmatprep.subr.mxu0 0.0
    %5150 = vmatpush1.xpose.msra.mxu0 0.0
    %5151 = vmatprep.subr.mxu0 0.0
    %5152 = vmatpush1.xpose.msra.mxu0 0.0
    %5153 = vmatprep.subr.mxu0 0.0
    %5154 = vmatpush1.xpose.msra.mxu0 0.0
    %5155 = vmatprep.subr.mxu0 0.0
    %5156 = vmatpush1.xpose.msra.mxu0 0.0
    %5157 = vmatprep.subr.mxu0 0.0
    %5158 = vmatpush1.xpose.msra.mxu0 0.0
    %5159 = vmatprep.subr.mxu0 0.0
    %5160 = vmatpush1.xpose.msra.mxu0 0.0
    %5161 = vmatprep.subr.mxu0 0.0
    %5162 = vmatpush1.xpose.msra.mxu0 0.0
    %5163 = vmatprep.subr.mxu0 0.0
    %5164 = vmatpush1.xpose.msra.mxu0 0.0
    %5165 = vmatprep.subr.mxu0 0.0
    %5166 = vmatpush1.xpose.msra.mxu0 0.0
    %5167 = vmatprep.subr.mxu0 0.0
    %5168 = vmatpush1.xpose.msra.mxu0 0.0
    %5169 = vmatprep.subr.mxu0 0.0
    %5170 = vmatpush1.xpose.msra.mxu0 0.0
    %5171 = vmatprep.subr.mxu0 0.0
    %5172 = vmatpush1.xpose.msra.mxu0 0.0
    %5173 = vmatprep.subr.mxu0 0.0
    %5174 = vmatpush1.xpose.msra.mxu0 0.0
    %5175 = vmatprep.subr.mxu0 0.0
    %5176 = vmatpush1.xpose.msra.mxu0 0.0
    %5177 = vmatprep.subr.mxu0 0.0
    %5178 = vmatpush1.xpose.msra.mxu0 0.0
    %5179 = vmatprep.subr.mxu0 0.0
    %5180 = vmatpush1.xpose.msra.mxu0 0.0
    %5181 = vmatprep.mubr.f32.mxu0 0.0
    %5182 = vmatmul.mubr.f32.gmra.mrb[0].mxu0 %v5109
    %v5183 = vpop.f32.mrb[0].mxu0
    %v5184 = vadd.f32 %v4502, %v5183
    %v5185 = vpop.f32.mrb[0].mxu0
    %5186 = vmatprep.mubr.f32.mxu0 0.0
    %5187 = vmatmul.mubr.f32.gmra.mrb[0].mxu0 %v5111
    %v5188 = vpop.f32.mrb[0].mxu0
    %v5189 = vadd.f32 %v4503, %v5188
    %v5190 = vpop.f32.mrb[0].mxu0
    %5191 = vdwg.mxu0
    %v5192 = vsel %vm267, %v5184, -inf
    %5193 = vmax.xlane.f32.xlu0 %v5192
    %v5194 = vpop.xlane.xlu0 %5193
    %v5195 = vsel %vm267, %v5189, -inf
    %5196 = vmax.xlane.f32.xlu0 %v5195
    %v5197 = vpop.xlane.xlu0 %5196
    %v5198 = vsub.f32 %v5184, %v5194
    %v5199 = vsub.f32 %v5189, %v5197
    %v5200 = vmul.f32 %v5198, 1.442695
    %v5201 = vpow.pop %v5200
    %v5202 = vmul.f32 %v5199, 1.442695
    %v5203 = vpow.pop %v5202
    %v5204 = vsel %vm267, %v5201, 0.0
    %5205 = vadd.xlane.f32.xlu0 %v5204
    %v5206 = vpop.xlane.xlu0 %5205
    %v5207 = vsel %vm267, %v5203, 0.0
    %5208 = vadd.xlane.f32.xlu0 %v5207
    %v5209 = vpop.xlane.xlu0 %5208
    %v5210 = vrcp.pop %v5206
    %v5211 = vmul.f32 %v5201, %v5210
    %v5212 = vrcp.pop %v5209
    %v5213 = vmul.f32 %v5203, %v5212
    %5215 = vrot.lane.b32.xlu0 %v5211, 16
    %v5216 = vpop.permute.xlu0 %5215
    %vm5218 = vcmask 195712
    %5219 = vst.msk [vmem:[%s23] sm:$0xff] %vm5218, %v5216
    %5221 = vrot.lane.b32.xlu0 %v5213, 8
    %v5222 = vpop.permute.xlu0 %5221
    %5224 = vst.msk [vmem:[%s23 + $0x8] sm:$0xff] %vm5218, %v5222
    %5225 = vrot.lane.b32.xlu0 %v4684, 80
    %v5226 = vpop.permute.xlu0 %5225
    %5227 = vrot.lane.b32.xlu0 %v4689, 80
    %v5228 = vpop.permute.xlu0 %5227
    %v5231 = vsel %vm267, %v5211, 0
    %v5233 = vsel %vm267, %v5213, 0
    %5235 = vmatprep.subr.mxu0 0.0
    %5236 = vmatpush1.msra.mxu0 %v5226
    %5237 = vmatprep.subr.mxu0 0.0
    %5238 = vmatpush1.msra.mxu0 %v5228
    %5239 = vmatprep.subr.mxu0 0.0
    %5240 = vmatpush1.msra.mxu0 0.0
    %5241 = vmatprep.subr.mxu0 0.0
    %5242 = vmatpush1.msra.mxu0 0.0
    %5243 = vmatprep.subr.mxu0 0.0
    %5244 = vmatpush1.msra.mxu0 0.0
    %5245 = vmatprep.subr.mxu0 0.0
    %5246 = vmatpush1.msra.mxu0 0.0
    %5247 = vmatprep.subr.mxu0 0.0
    %5248 = vmatpush1.msra.mxu0 0.0
    %5249 = vmatprep.subr.mxu0 0.0
    %5250 = vmatpush1.msra.mxu0 0.0
    %5251 = vmatprep.subr.mxu0 0.0
    %5252 = vmatpush1.msra.mxu0 0.0
    %5253 = vmatprep.subr.mxu0 0.0
    %5254 = vmatpush1.msra.mxu0 0.0
    %5255 = vmatprep.subr.mxu0 0.0
    %5256 = vmatpush1.msra.mxu0 0.0
    %5257 = vmatprep.subr.mxu0 0.0
    %5258 = vmatpush1.msra.mxu0 0.0
    %5259 = vmatprep.subr.mxu0 0.0
    %5260 = vmatpush1.msra.mxu0 0.0
    %5261 = vmatprep.subr.mxu0 0.0
    %5262 = vmatpush1.msra.mxu0 0.0
    %5263 = vmatprep.subr.mxu0 0.0
    %5264 = vmatpush1.msra.mxu0 0.0
    %5265 = vmatprep.subr.mxu0 0.0
    %5266 = vmatpush1.msra.mxu0 0.0
    %5267 = vmatprep.subr.mxu0 0.0
    %5268 = vmatpush1.msra.mxu0 0.0
    %5269 = vmatprep.subr.mxu0 0.0
    %5270 = vmatpush1.msra.mxu0 0.0
    %5271 = vmatprep.subr.mxu0 0.0
    %5272 = vmatpush1.msra.mxu0 0.0
    %5273 = vmatprep.subr.mxu0 0.0
    %5274 = vmatpush1.msra.mxu0 0.0
    %5275 = vmatprep.subr.mxu0 0.0
    %5276 = vmatpush1.msra.mxu0 0.0
    %5277 = vmatprep.subr.mxu0 0.0
    %5278 = vmatpush1.msra.mxu0 0.0
    %5279 = vmatprep.subr.mxu0 0.0
    %5280 = vmatpush1.msra.mxu0 0.0
    %5281 = vmatprep.subr.mxu0 0.0
    %5282 = vmatpush1.msra.mxu0 0.0
    %5283 = vmatprep.subr.mxu0 0.0
    %5284 = vmatpush1.msra.mxu0 0.0
    %5285 = vmatprep.subr.mxu0 0.0
    %5286 = vmatpush1.msra.mxu0 0.0
    %5287 = vmatprep.subr.mxu0 0.0
    %5288 = vmatpush1.msra.mxu0 0.0
    %5289 = vmatprep.subr.mxu0 0.0
    %5290 = vmatpush1.msra.mxu0 0.0
    %5291 = vmatprep.subr.mxu0 0.0
    %5292 = vmatpush1.msra.mxu0 0.0
    %5293 = vmatprep.subr.mxu0 0.0
    %5294 = vmatpush1.msra.mxu0 0.0
    %5295 = vmatprep.subr.mxu0 0.0
    %5296 = vmatpush1.msra.mxu0 0.0
    %5297 = vmatprep.subr.mxu0 0.0
    %5298 = vmatpush1.msra.mxu0 0.0
    %5299 = vmatprep.mubr.f32.mxu0 0.0
    %5300 = vmatmul.mubr.f32.gmra.mrb[0].mxu0 %v5231
    %v5301 = vpop.f32.mrb[0].mxu0
    %v5302 = vadd.f32 0.0, %v5301
    %v5303 = vpop.f32.mrb[0].mxu0
    %5304 = vmatprep.mubr.f32.mxu0 0.0
    %5305 = vmatmul.mubr.f32.gmra.mrb[0].mxu0 %v5233
    %v5306 = vpop.f32.mrb[0].mxu0
    %v5307 = vadd.f32 0.0, %v5306
    %v5308 = vpop.f32.mrb[0].mxu0
    %5309 = vdwg.mxu0
    %5310 = vrot.lane.b32.xlu0 %v4692, 104
    %v5311 = vpop.permute.xlu0 %5310
    %5312 = vrot.lane.b32.xlu0 %v4693, 104
    %v5313 = vpop.permute.xlu0 %5312
    %5314 = vrot.lane.b32.xlu0 %v4684, 104
    %v5315 = vpop.permute.xlu0 %5314
    %5316 = vrot.lane.b32.xlu0 %v4689, 104
    %v5317 = vpop.permute.xlu0 %5316
    %v5318 = vsel %vm181, %v5311, 0
    %v5320 = vsel %vm181, %v5313, 0
    %v5322 = vsel %vm181, %v5315, 0
    %v5324 = vsel %vm181, %v5317, 0
    %5326 = vmatprep.subr.mxu0 0.0
    %5327 = vmatpush1.xpose.msra.mxu0 %v5322
    %5328 = vmatprep.subr.mxu0 0.0
    %5329 = vmatpush1.xpose.msra.mxu0 %v5324
    %5330 = vmatprep.subr.mxu0 0.0
    %5331 = vmatpush1.xpose.msra.mxu0 0.0
    %5332 = vmatprep.subr.mxu0 0.0
    %5333 = vmatpush1.xpose.msra.mxu0 0.0
    %5334 = vmatprep.subr.mxu0 0.0
    %5335 = vmatpush1.xpose.msra.mxu0 0.0
    %5336 = vmatprep.subr.mxu0 0.0
    %5337 = vmatpush1.xpose.msra.mxu0 0.0
    %5338 = vmatprep.subr.mxu0 0.0
    %5339 = vmatpush1.xpose.msra.mxu0 0.0
    %5340 = vmatprep.subr.mxu0 0.0
    %5341 = vmatpush1.xpose.msra.mxu0 0.0
    %5342 = vmatprep.subr.mxu0 0.0
    %5343 = vmatpush1.xpose.msra.mxu0 0.0
    %5344 = vmatprep.subr.mxu0 0.0
    %5345 = vmatpush1.xpose.msra.mxu0 0.0
    %5346 = vmatprep.subr.mxu0 0.0
    %5347 = vmatpush1.xpose.msra.mxu0 0.0
    %5348 = vmatprep.subr.mxu0 0.0
    %5349 = vmatpush1.xpose.msra.mxu0 0.0
    %5350 = vmatprep.subr.mxu0 0.0
    %5351 = vmatpush1.xpose.msra.mxu0 0.0
    %5352 = vmatprep.subr.mxu0 0.0
    %5353 = vmatpush1.xpose.msra.mxu0 0.0
    %5354 = vmatprep.subr.mxu0 0.0
    %5355 = vmatpush1.xpose.msra.mxu0 0.0
    %5356 = vmatprep.subr.mxu0 0.0
    %5357 = vmatpush1.xpose.msra.mxu0 0.0
    %5358 = vmatprep.subr.mxu0 0.0
    %5359 = vmatpush1.xpose.msra.mxu0 0.0
    %5360 = vmatprep.subr.mxu0 0.0
    %5361 = vmatpush1.xpose.msra.mxu0 0.0
    %5362 = vmatprep.subr.mxu0 0.0
    %5363 = vmatpush1.xpose.msra.mxu0 0.0
    %5364 = vmatprep.subr.mxu0 0.0
    %5365 = vmatpush1.xpose.msra.mxu0 0.0
    %5366 = vmatprep.subr.mxu0 0.0
    %5367 = vmatpush1.xpose.msra.mxu0 0.0
    %5368 = vmatprep.subr.mxu0 0.0
    %5369 = vmatpush1.xpose.msra.mxu0 0.0
    %5370 = vmatprep.subr.mxu0 0.0
    %5371 = vmatpush1.xpose.msra.mxu0 0.0
    %5372 = vmatprep.subr.mxu0 0.0
    %5373 = vmatpush1.xpose.msra.mxu0 0.0
    %5374 = vmatprep.subr.mxu0 0.0
    %5375 = vmatpush1.xpose.msra.mxu0 0.0
    %5376 = vmatprep.subr.mxu0 0.0
    %5377 = vmatpush1.xpose.msra.mxu0 0.0
    %5378 = vmatprep.subr.mxu0 0.0
    %5379 = vmatpush1.xpose.msra.mxu0 0.0
    %5380 = vmatprep.subr.mxu0 0.0
    %5381 = vmatpush1.xpose.msra.mxu0 0.0
    %5382 = vmatprep.subr.mxu0 0.0
    %5383 = vmatpush1.xpose.msra.mxu0 0.0
    %5384 = vmatprep.subr.mxu0 0.0
    %5385 = vmatpush1.xpose.msra.mxu0 0.0
    %5386 = vmatprep.subr.mxu0 0.0
    %5387 = vmatpush1.xpose.msra.mxu0 0.0
    %5388 = vmatprep.subr.mxu0 0.0
    %5389 = vmatpush1.xpose.msra.mxu0 0.0
    %5390 = vmatprep.mubr.f32.mxu0 0.0
    %5391 = vmatmul.mubr.f32.gmra.mrb[0].mxu0 %v5318
    %v5392 = vpop.f32.mrb[0].mxu0
    %v5393 = vadd.f32 %v4502, %v5392
    %v5394 = vpop.f32.mrb[0].mxu0
    %5395 = vmatprep.mubr.f32.mxu0 0.0
    %5396 = vmatmul.mubr.f32.gmra.mrb[0].mxu0 %v5320
    %v5397 = vpop.f32.mrb[0].mxu0
    %v5398 = vadd.f32 %v4503, %v5397
    %v5399 = vpop.f32.mrb[0].mxu0
    %5400 = vdwg.mxu0
    %v5401 = vsel %vm267, %v5393, -inf
    %5402 = vmax.xlane.f32.xlu0 %v5401
    %v5403 = vpop.xlane.xlu0 %5402
    %v5404 = vsel %vm267, %v5398, -inf
    %5405 = vmax.xlane.f32.xlu0 %v5404
    %v5406 = vpop.xlane.xlu0 %5405
    %v5407 = vsub.f32 %v5393, %v5403
    %v5408 = vsub.f32 %v5398, %v5406
    %v5409 = vmul.f32 %v5407, 1.442695
    %v5410 = vpow.pop %v5409
    %v5411 = vmul.f32 %v5408, 1.442695
    %v5412 = vpow.pop %v5411
    %v5413 = vsel %vm267, %v5410, 0.0
    %5414 = vadd.xlane.f32.xlu0 %v5413
    %v5415 = vpop.xlane.xlu0 %5414
    %v5416 = vsel %vm267, %v5412, 0.0
    %5417 = vadd.xlane.f32.xlu0 %v5416
    %v5418 = vpop.xlane.xlu0 %5417
    %v5419 = vrcp.pop %v5415
    %v5420 = vmul.f32 %v5410, %v5419
    %v5421 = vrcp.pop %v5418
    %v5422 = vmul.f32 %v5412, %v5421
    %5424 = vrot.lane.b32.xlu0 %v5420, 24
    %v5425 = vpop.permute.xlu0 %5424
    %vm5427 = vcmask 261312
    %5428 = vst.msk [vmem:[%s23] sm:$0xff] %vm5427, %v5425
    %5430 = vrot.lane.b32.xlu0 %v5422, 16
    %v5431 = vpop.permute.xlu0 %5430
    %5433 = vst.msk [vmem:[%s23 + $0x8] sm:$0xff] %vm5427, %v5431
    %5434 = vrot.lane.b32.xlu0 %v4684, 72
    %v5435 = vpop.permute.xlu0 %5434
    %5436 = vrot.lane.b32.xlu0 %v4689, 72
    %v5437 = vpop.permute.xlu0 %5436
    %v5440 = vsel %vm267, %v5420, 0
    %v5442 = vsel %vm267, %v5422, 0
    %5444 = vmatprep.subr.mxu0 0.0
    %5445 = vmatpush1.msra.mxu0 %v5435
    %5446 = vmatprep.subr.mxu0 0.0
    %5447 = vmatpush1.msra.mxu0 %v5437
    %5448 = vmatprep.subr.mxu0 0.0
    %5449 = vmatpush1.msra.mxu0 0.0
    %5450 = vmatprep.subr.mxu0 0.0
    %5451 = vmatpush1.msra.mxu0 0.0
    %5452 = vmatprep.subr.mxu0 0.0
    %5453 = vmatpush1.msra.mxu0 0.0
    %5454 = vmatprep.subr.mxu0 0.0
    %5455 = vmatpush1.msra.mxu0 0.0
    %5456 = vmatprep.subr.mxu0 0.0
    %5457 = vmatpush1.msra.mxu0 0.0
    %5458 = vmatprep.subr.mxu0 0.0
    %5459 = vmatpush1.msra.mxu0 0.0
    %5460 = vmatprep.subr.mxu0 0.0
    %5461 = vmatpush1.msra.mxu0 0.0
    %5462 = vmatprep.subr.mxu0 0.0
    %5463 = vmatpush1.msra.mxu0 0.0
    %5464 = vmatprep.subr.mxu0 0.0
    %5465 = vmatpush1.msra.mxu0 0.0
    %5466 = vmatprep.subr.mxu0 0.0
    %5467 = vmatpush1.msra.mxu0 0.0
    %5468 = vmatprep.subr.mxu0 0.0
    %5469 = vmatpush1.msra.mxu0 0.0
    %5470 = vmatprep.subr.mxu0 0.0
    %5471 = vmatpush1.msra.mxu0 0.0
    %5472 = vmatprep.subr.mxu0 0.0
    %5473 = vmatpush1.msra.mxu0 0.0
    %5474 = vmatprep.subr.mxu0 0.0
    %5475 = vmatpush1.msra.mxu0 0.0
    %5476 = vmatprep.subr.mxu0 0.0
    %5477 = vmatpush1.msra.mxu0 0.0
    %5478 = vmatprep.subr.mxu0 0.0
    %5479 = vmatpush1.msra.mxu0 0.0
    %5480 = vmatprep.subr.mxu0 0.0
    %5481 = vmatpush1.msra.mxu0 0.0
    %5482 = vmatprep.subr.mxu0 0.0
    %5483 = vmatpush1.msra.mxu0 0.0
    %5484 = vmatprep.subr.mxu0 0.0
    %5485 = vmatpush1.msra.mxu0 0.0
    %5486 = vmatprep.subr.mxu0 0.0
    %5487 = vmatpush1.msra.mxu0 0.0
    %5488 = vmatprep.subr.mxu0 0.0
    %5489 = vmatpush1.msra.mxu0 0.0
    %5490 = vmatprep.subr.mxu0 0.0
    %5491 = vmatpush1.msra.mxu0 0.0
    %5492 = vmatprep.subr.mxu0 0.0
    %5493 = vmatpush1.msra.mxu0 0.0
    %5494 = vmatprep.subr.mxu0 0.0
    %5495 = vmatpush1.msra.mxu0 0.0
    %5496 = vmatprep.subr.mxu0 0.0
    %5497 = vmatpush1.msra.mxu0 0.0
    %5498 = vmatprep.subr.mxu0 0.0
    %5499 = vmatpush1.msra.mxu0 0.0
    %5500 = vmatprep.subr.mxu0 0.0
    %5501 = vmatpush1.msra.mxu0 0.0
    %5502 = vmatprep.subr.mxu0 0.0
    %5503 = vmatpush1.msra.mxu0 0.0
    %5504 = vmatprep.subr.mxu0 0.0
    %5505 = vmatpush1.msra.mxu0 0.0
    %5506 = vmatprep.subr.mxu0 0.0
    %5507 = vmatpush1.msra.mxu0 0.0
    %5508 = vmatprep.mubr.f32.mxu0 0.0
    %5509 = vmatmul.mubr.f32.gmra.mrb[0].mxu0 %v5440
    %v5510 = vpop.f32.mrb[0].mxu0
    %v5511 = vadd.f32 0.0, %v5510
    %v5512 = vpop.f32.mrb[0].mxu0
    %5513 = vmatprep.mubr.f32.mxu0 0.0
    %5514 = vmatmul.mubr.f32.gmra.mrb[0].mxu0 %v5442
    %v5515 = vpop.f32.mrb[0].mxu0
    %v5516 = vadd.f32 0.0, %v5515
    %v5517 = vpop.f32.mrb[0].mxu0
    %5518 = vdwg.mxu0
    %5521 = vrot.lane.b32.xlu0 %v5093, 8
    %v5522 = vpop.permute.xlu0 %5521
    %5523 = vrot.lane.b32.xlu0 %v5098, 8
    %v5524 = vpop.permute.xlu0 %5523
    %5529 = vrot.lane.b32.xlu0 %v5302, 16
    %v5530 = vpop.permute.xlu0 %5529
    %5531 = vrot.lane.b32.xlu0 %v5307, 16
    %v5532 = vpop.permute.xlu0 %5531
    %5537 = vrot.lane.b32.xlu0 %v5511, 24
    %v5538 = vpop.permute.xlu0 %5537
    %5539 = vrot.lane.b32.xlu0 %v5516, 24
    %v5540 = vpop.permute.xlu0 %5539
    %v5543 = vsel %vm181, %v4887, %v5522
    %v5544 = vsel %vm181, %v4892, %v5524
    %v5545 = vsel %vm267, %v5543, %v5530
    %v5546 = vsel %vm267, %v5544, %v5532
    %v5547 = vsel %vm1005, %v5545, %v5538
    %v5548 = vsel %vm1005, %v5546, %v5540
    %s5549 = scalar_lea.vmem %s11, 128
    %v5550 = vld [vmem:[%s5549] sm:$0xff]
    %v5551 = vld [vmem:[%s5549 + $0x8] sm:$0xff]
    %v5552 = vld [vmem:[%s5549 + $0x10] sm:$0xff]
    %v5553 = vld [vmem:[%s5549 + $0x18] sm:$0xff]
    %s5554 = scalar_lea.vmem %s12, 4
    %v5555 = vld [vmem:[%s5554] sm:$0x1]
    %v5557 = vlaneseq
    %v5558 = vshrl.u32 %v5557, 7
    %v5559 = vsub.s32 0, %v5558
    %v5560 = vrot.slane %v5555, %v5559
    %v5563 = vsel %vm91, %v5547, 0
    %v5566 = vsel %vm91, %v5548, 0
    %5568 = vmatprep.subr.mxu0 0.0
    %5569 = vmatpush1.msra.mxu0 %v5550
    %5570 = vmatprep.subr.mxu0 0.0
    %5571 = vmatpush1.msra.mxu0 %v5551
    %5572 = vmatprep.subr.mxu0 0.0
    %5573 = vmatpush1.msra.mxu0 %v5552
    %5574 = vmatprep.subr.mxu0 0.0
    %5575 = vmatpush1.msra.mxu0 %v5553
    %5576 = vmatprep.subr.mxu0 0.0
    %5577 = vmatpush1.msra.mxu0 0.0
    %5578 = vmatprep.subr.mxu0 0.0
    %5579 = vmatpush1.msra.mxu0 0.0
    %5580 = vmatprep.subr.mxu0 0.0
    %5581 = vmatpush1.msra.mxu0 0.0
    %5582 = vmatprep.subr.mxu0 0.0
    %5583 = vmatpush1.msra.mxu0 0.0
    %5584 = vmatprep.subr.mxu0 0.0
    %5585 = vmatpush1.msra.mxu0 0.0
    %5586 = vmatprep.subr.mxu0 0.0
    %5587 = vmatpush1.msra.mxu0 0.0
    %5588 = vmatprep.subr.mxu0 0.0
    %5589 = vmatpush1.msra.mxu0 0.0
    %5590 = vmatprep.subr.mxu0 0.0
    %5591 = vmatpush1.msra.mxu0 0.0
    %5592 = vmatprep.subr.mxu0 0.0
    %5593 = vmatpush1.msra.mxu0 0.0
    %5594 = vmatprep.subr.mxu0 0.0
    %5595 = vmatpush1.msra.mxu0 0.0
    %5596 = vmatprep.subr.mxu0 0.0
    %5597 = vmatpush1.msra.mxu0 0.0
    %5598 = vmatprep.subr.mxu0 0.0
    %5599 = vmatpush1.msra.mxu0 0.0
    %5600 = vmatprep.subr.mxu0 0.0
    %5601 = vmatpush1.msra.mxu0 0.0
    %5602 = vmatprep.subr.mxu0 0.0
    %5603 = vmatpush1.msra.mxu0 0.0
    %5604 = vmatprep.subr.mxu0 0.0
    %5605 = vmatpush1.msra.mxu0 0.0
    %5606 = vmatprep.subr.mxu0 0.0
    %5607 = vmatpush1.msra.mxu0 0.0
    %5608 = vmatprep.subr.mxu0 0.0
    %5609 = vmatpush1.msra.mxu0 0.0
    %5610 = vmatprep.subr.mxu0 0.0
    %5611 = vmatpush1.msra.mxu0 0.0
    %5612 = vmatprep.subr.mxu0 0.0
    %5613 = vmatpush1.msra.mxu0 0.0
    %5614 = vmatprep.subr.mxu0 0.0
    %5615 = vmatpush1.msra.mxu0 0.0
    %5616 = vmatprep.subr.mxu0 0.0
    %5617 = vmatpush1.msra.mxu0 0.0
    %5618 = vmatprep.subr.mxu0 0.0
    %5619 = vmatpush1.msra.mxu0 0.0
    %5620 = vmatprep.subr.mxu0 0.0
    %5621 = vmatpush1.msra.mxu0 0.0
    %5622 = vmatprep.subr.mxu0 0.0
    %5623 = vmatpush1.msra.mxu0 0.0
    %5624 = vmatprep.subr.mxu0 0.0
    %5625 = vmatpush1.msra.mxu0 0.0
    %5626 = vmatprep.subr.mxu0 0.0
    %5627 = vmatpush1.msra.mxu0 0.0
    %5628 = vmatprep.subr.mxu0 0.0
    %5629 = vmatpush1.msra.mxu0 0.0
    %5630 = vmatprep.subr.mxu0 0.0
    %5631 = vmatpush1.msra.mxu0 0.0
    %5632 = vmatprep.mubr.f32.mxu0 0.0
    %5633 = vmatmul.mubr.f32.gmra.mrb[0].mxu0 %v5563
    %v5634 = vpop.f32.mrb[0].mxu0
    %v5635 = vadd.f32 %v5560, %v5634
    %v5636 = vpop.f32.mrb[0].mxu0
    %5637 = vmatprep.mubr.f32.mxu0 0.0
    %5638 = vmatmul.mubr.f32.gmra.mrb[0].mxu0 %v5566
    %v5639 = vpop.f32.mrb[0].mxu0
    %v5640 = vadd.f32 %v5560, %v5639
    %v5641 = vpop.f32.mrb[0].mxu0
    %5642 = vdwg.mxu0
    %v5643 = vadd.f32 %v2197, %v5635
    %v5644 = vadd.f32 %v2198, %v5640
    %v5645 = vsel %vm91, %v5643, 0.0
    %5646 = vadd.xlane.f32.xlu0 %v5645
    %v5647 = vpop.xlane.xlu0 %5646
    %v5648 = vsel %vm91, %v5644, 0.0
    %5649 = vadd.xlane.f32.xlu0 %v5648
    %v5650 = vpop.xlane.xlu0 %5649
    %v5651 = vmul.f32 %v5647, %v1108
    %v5652 = vmul.f32 %v5650, %v1108
    %v5653 = vsub.f32 %v5643, %v5651
    %v5654 = vsub.f32 %v5644, %v5652
    %v5655 = vmul.f32 %v5653, %v5653
    %v5656 = vmul.f32 %v5654, %v5654
    %v5657 = vsel %vm91, %v5655, 0.0
    %5658 = vadd.xlane.f32.xlu0 %v5657
    %v5659 = vpop.xlane.xlu0 %5658
    %v5660 = vsel %vm91, %v5656, 0.0
    %5661 = vadd.xlane.f32.xlu0 %v5660
    %v5662 = vpop.xlane.xlu0 %5661
    %v5663 = vmul.f32 %v5659, %v1108
    %v5664 = vmul.f32 %v5662, %v1108
    %v5665 = vadd.f32 %v5663, 1e-05
    %v5666 = vadd.f32 %v5664, 1e-05
    %v5667 = vrsqrt.pop %v5665
    %v5668 = vrsqrt.pop %v5666
    %v5669 = vmul.f32 %v5653, %v5667
    %v5670 = vmul.f32 %v5654, %v5668
    %v5671 = vmul.f32 %v5669, %v1133
    %v5672 = vmul.f32 %v5670, %v1133
    %v5673 = vadd.f32 %v5671, %v1141
    %v5674 = vadd.f32 %v5672, %v1141
    %v5675 = vld [vmem:[%s8] sm:$0xff]
    %v5676 = vld [vmem:[%s8 + $0x8] sm:$0xff]
    %s5677 = scalar_lea.vmem %s9, 160
    %v5678 = vld [vmem:[%s5677] sm:$0xff]
    %v5679 = vld [vmem:[%s5677 + $0x8] sm:$0xff]
    %v5680 = vld [vmem:[%s5677 + $0x10] sm:$0xff]
    %v5681 = vld [vmem:[%s5677 + $0x18] sm:$0xff]
    %s5682 = scalar_lea.vmem %s10, 5
    %v5683 = vld [vmem:[%s5682] sm:$0x1]
    %v5685 = vlaneseq
    %v5686 = vshrl.u32 %v5685, 7
    %v5687 = vsub.s32 0, %v5686
    %v5688 = vrot.slane %v5683, %v5687
    %5690 = vmatprep.subr.mxu0 0.0
    %5691 = vmatpush1.msra.mxu0 %v5678
    %5692 = vmatprep.subr.mxu0 0.0
    %5693 = vmatpush1.msra.mxu0 %v5679
    %5694 = vmatprep.subr.mxu0 0.0
    %5695 = vmatpush1.msra.mxu0 %v5680
    %5696 = vmatprep.subr.mxu0 0.0
    %5697 = vmatpush1.msra.mxu0 %v5681
    %5698 = vmatprep.subr.mxu0 0.0
    %5699 = vmatpush1.msra.mxu0 0.0
    %5700 = vmatprep.subr.mxu0 0.0
    %5701 = vmatpush1.msra.mxu0 0.0
    %5702 = vmatprep.subr.mxu0 0.0
    %5703 = vmatpush1.msra.mxu0 0.0
    %5704 = vmatprep.subr.mxu0 0.0
    %5705 = vmatpush1.msra.mxu0 0.0
    %5706 = vmatprep.subr.mxu0 0.0
    %5707 = vmatpush1.msra.mxu0 0.0
    %5708 = vmatprep.subr.mxu0 0.0
    %5709 = vmatpush1.msra.mxu0 0.0
    %5710 = vmatprep.subr.mxu0 0.0
    %5711 = vmatpush1.msra.mxu0 0.0
    %5712 = vmatprep.subr.mxu0 0.0
    %5713 = vmatpush1.msra.mxu0 0.0
    %5714 = vmatprep.subr.mxu0 0.0
    %5715 = vmatpush1.msra.mxu0 0.0
    %5716 = vmatprep.subr.mxu0 0.0
    %5717 = vmatpush1.msra.mxu0 0.0
    %5718 = vmatprep.subr.mxu0 0.0
    %5719 = vmatpush1.msra.mxu0 0.0
    %5720 = vmatprep.subr.mxu0 0.0
    %5721 = vmatpush1.msra.mxu0 0.0
    %5722 = vmatprep.subr.mxu0 0.0
    %5723 = vmatpush1.msra.mxu0 0.0
    %5724 = vmatprep.subr.mxu0 0.0
    %5725 = vmatpush1.msra.mxu0 0.0
    %5726 = vmatprep.subr.mxu0 0.0
    %5727 = vmatpush1.msra.mxu0 0.0
    %5728 = vmatprep.subr.mxu0 0.0
    %5729 = vmatpush1.msra.mxu0 0.0
    %5730 = vmatprep.subr.mxu0 0.0
    %5731 = vmatpush1.msra.mxu0 0.0
    %5732 = vmatprep.subr.mxu0 0.0
    %5733 = vmatpush1.msra.mxu0 0.0
    %5734 = vmatprep.subr.mxu0 0.0
    %5735 = vmatpush1.msra.mxu0 0.0
    %5736 = vmatprep.subr.mxu0 0.0
    %5737 = vmatpush1.msra.mxu0 0.0
    %5738 = vmatprep.subr.mxu0 0.0
    %5739 = vmatpush1.msra.mxu0 0.0
    %5740 = vmatprep.subr.mxu0 0.0
    %5741 = vmatpush1.msra.mxu0 0.0
    %5742 = vmatprep.subr.mxu0 0.0
    %5743 = vmatpush1.msra.mxu0 0.0
    %5744 = vmatprep.subr.mxu0 0.0
    %5745 = vmatpush1.msra.mxu0 0.0
    %5746 = vmatprep.subr.mxu0 0.0
    %5747 = vmatpush1.msra.mxu0 0.0
    %5748 = vmatprep.subr.mxu0 0.0
    %5749 = vmatpush1.msra.mxu0 0.0
    %5750 = vmatprep.subr.mxu0 0.0
    %5751 = vmatpush1.msra.mxu0 0.0
    %5752 = vmatprep.subr.mxu0 0.0
    %5753 = vmatpush1.msra.mxu0 0.0
    %5754 = vmatprep.mubr.f32.mxu0 0.0
    %5755 = vmatmul.mubr.f32.gmra.mrb[0].mxu0 %v3372
    %v5756 = vpop.f32.mrb[0].mxu0
    %v5757 = vadd.f32 %v5688, %v5756
    %v5758 = vpop.f32.mrb[0].mxu0
    %5759 = vmatprep.mubr.f32.mxu0 0.0
    %5760 = vmatmul.mubr.f32.gmra.mrb[0].mxu0 %v3378
    %v5761 = vpop.f32.mrb[0].mxu0
    %v5762 = vadd.f32 %v5688, %v5761
    %v5763 = vpop.f32.mrb[0].mxu0
    %5764 = vdwg.mxu0
    %5769 = vrot.lane.b32.xlu0 %v5678, 96
    %v5770 = vpop.permute.xlu0 %5769
    %5771 = vrot.lane.b32.xlu0 %v5679, 96
    %v5772 = vpop.permute.xlu0 %5771
    %5773 = vrot.lane.b32.xlu0 %v5680, 96
    %v5774 = vpop.permute.xlu0 %5773
    %5775 = vrot.lane.b32.xlu0 %v5681, 96
    %v5776 = vpop.permute.xlu0 %5775
    %5781 = vrot.lane.b32.xlu0 %v5688, 96
    %v5782 = vpop.permute.xlu0 %5781
    %5784 = vmatprep.subr.mxu0 0.0
    %5785 = vmatpush1.msra.mxu0 %v5770
    %5786 = vmatprep.subr.mxu0 0.0
    %5787 = vmatpush1.msra.mxu0 %v5772
    %5788 = vmatprep.subr.mxu0 0.0
    %5789 = vmatpush1.msra.mxu0 %v5774
    %5790 = vmatprep.subr.mxu0 0.0
    %5791 = vmatpush1.msra.mxu0 %v5776
    %5792 = vmatprep.subr.mxu0 0.0
    %5793 = vmatpush1.msra.mxu0 0.0
    %5794 = vmatprep.subr.mxu0 0.0
    %5795 = vmatpush1.msra.mxu0 0.0
    %5796 = vmatprep.subr.mxu0 0.0
    %5797 = vmatpush1.msra.mxu0 0.0
    %5798 = vmatprep.subr.mxu0 0.0
    %5799 = vmatpush1.msra.mxu0 0.0
    %5800 = vmatprep.subr.mxu0 0.0
    %5801 = vmatpush1.msra.mxu0 0.0
    %5802 = vmatprep.subr.mxu0 0.0
    %5803 = vmatpush1.msra.mxu0 0.0
    %5804 = vmatprep.subr.mxu0 0.0
    %5805 = vmatpush1.msra.mxu0 0.0
    %5806 = vmatprep.subr.mxu0 0.0
    %5807 = vmatpush1.msra.mxu0 0.0
    %5808 = vmatprep.subr.mxu0 0.0
    %5809 = vmatpush1.msra.mxu0 0.0
    %5810 = vmatprep.subr.mxu0 0.0
    %5811 = vmatpush1.msra.mxu0 0.0
    %5812 = vmatprep.subr.mxu0 0.0
    %5813 = vmatpush1.msra.mxu0 0.0
    %5814 = vmatprep.subr.mxu0 0.0
    %5815 = vmatpush1.msra.mxu0 0.0
    %5816 = vmatprep.subr.mxu0 0.0
    %5817 = vmatpush1.msra.mxu0 0.0
    %5818 = vmatprep.subr.mxu0 0.0
    %5819 = vmatpush1.msra.mxu0 0.0
    %5820 = vmatprep.subr.mxu0 0.0
    %5821 = vmatpush1.msra.mxu0 0.0
    %5822 = vmatprep.subr.mxu0 0.0
    %5823 = vmatpush1.msra.mxu0 0.0
    %5824 = vmatprep.subr.mxu0 0.0
    %5825 = vmatpush1.msra.mxu0 0.0
    %5826 = vmatprep.subr.mxu0 0.0
    %5827 = vmatpush1.msra.mxu0 0.0
    %5828 = vmatprep.subr.mxu0 0.0
    %5829 = vmatpush1.msra.mxu0 0.0
    %5830 = vmatprep.subr.mxu0 0.0
    %5831 = vmatpush1.msra.mxu0 0.0
    %5832 = vmatprep.subr.mxu0 0.0
    %5833 = vmatpush1.msra.mxu0 0.0
    %5834 = vmatprep.subr.mxu0 0.0
    %5835 = vmatpush1.msra.mxu0 0.0
    %5836 = vmatprep.subr.mxu0 0.0
    %5837 = vmatpush1.msra.mxu0 0.0
    %5838 = vmatprep.subr.mxu0 0.0
    %5839 = vmatpush1.msra.mxu0 0.0
    %5840 = vmatprep.subr.mxu0 0.0
    %5841 = vmatpush1.msra.mxu0 0.0
    %5842 = vmatprep.subr.mxu0 0.0
    %5843 = vmatpush1.msra.mxu0 0.0
    %5844 = vmatprep.subr.mxu0 0.0
    %5845 = vmatpush1.msra.mxu0 0.0
    %5846 = vmatprep.subr.mxu0 0.0
    %5847 = vmatpush1.msra.mxu0 0.0
    %5848 = vmatprep.mubr.f32.mxu0 0.0
    %5849 = vmatmul.mubr.f32.gmra.mrb[0].mxu0 %v4612
    %v5850 = vpop.f32.mrb[0].mxu0
    %v5851 = vadd.f32 %v5782, %v5850
    %v5852 = vpop.f32.mrb[0].mxu0
    %5853 = vmatprep.mubr.f32.mxu0 0.0
    %5854 = vmatmul.mubr.f32.gmra.mrb[0].mxu0 %v4615
    %v5855 = vpop.f32.mrb[0].mxu0
    %v5856 = vadd.f32 %v5782, %v5855
    %v5857 = vpop.f32.mrb[0].mxu0
    %5858 = vdwg.mxu0
    %v5859 = vmul.f32 %v5757, 0.35355338
    %v5860 = vmul.f32 %v5762, 0.35355338
    %v5862 = vsel %vm181, %v5859, 0
    %v5865 = vsel %vm181, %v5860, 0
    %v5868 = vsel %vm181, %v5851, 0
    %v5871 = vsel %vm181, %v5856, 0
    %5873 = vmatprep.subr.mxu0 0.0
    %5874 = vmatpush1.xpose.msra.mxu0 %v5868
    %5875 = vmatprep.subr.mxu0 0.0
    %5876 = vmatpush1.xpose.msra.mxu0 %v5871
    %5877 = vmatprep.subr.mxu0 0.0
    %5878 = vmatpush1.xpose.msra.mxu0 0.0
    %5879 = vmatprep.subr.mxu0 0.0
    %5880 = vmatpush1.xpose.msra.mxu0 0.0
    %5881 = vmatprep.subr.mxu0 0.0
    %5882 = vmatpush1.xpose.msra.mxu0 0.0
    %5883 = vmatprep.subr.mxu0 0.0
    %5884 = vmatpush1.xpose.msra.mxu0 0.0
    %5885 = vmatprep.subr.mxu0 0.0
    %5886 = vmatpush1.xpose.msra.mxu0 0.0
    %5887 = vmatprep.subr.mxu0 0.0
    %5888 = vmatpush1.xpose.msra.mxu0 0.0
    %5889 = vmatprep.subr.mxu0 0.0
    %5890 = vmatpush1.xpose.msra.mxu0 0.0
    %5891 = vmatprep.subr.mxu0 0.0
    %5892 = vmatpush1.xpose.msra.mxu0 0.0
    %5893 = vmatprep.subr.mxu0 0.0
    %5894 = vmatpush1.xpose.msra.mxu0 0.0
    %5895 = vmatprep.subr.mxu0 0.0
    %5896 = vmatpush1.xpose.msra.mxu0 0.0
    %5897 = vmatprep.subr.mxu0 0.0
    %5898 = vmatpush1.xpose.msra.mxu0 0.0
    %5899 = vmatprep.subr.mxu0 0.0
    %5900 = vmatpush1.xpose.msra.mxu0 0.0
    %5901 = vmatprep.subr.mxu0 0.0
    %5902 = vmatpush1.xpose.msra.mxu0 0.0
    %5903 = vmatprep.subr.mxu0 0.0
    %5904 = vmatpush1.xpose.msra.mxu0 0.0
    %5905 = vmatprep.subr.mxu0 0.0
    %5906 = vmatpush1.xpose.msra.mxu0 0.0
    %5907 = vmatprep.subr.mxu0 0.0
    %5908 = vmatpush1.xpose.msra.mxu0 0.0
    %5909 = vmatprep.subr.mxu0 0.0
    %5910 = vmatpush1.xpose.msra.mxu0 0.0
    %5911 = vmatprep.subr.mxu0 0.0
    %5912 = vmatpush1.xpose.msra.mxu0 0.0
    %5913 = vmatprep.subr.mxu0 0.0
    %5914 = vmatpush1.xpose.msra.mxu0 0.0
    %5915 = vmatprep.subr.mxu0 0.0
    %5916 = vmatpush1.xpose.msra.mxu0 0.0
    %5917 = vmatprep.subr.mxu0 0.0
    %5918 = vmatpush1.xpose.msra.mxu0 0.0
    %5919 = vmatprep.subr.mxu0 0.0
    %5920 = vmatpush1.xpose.msra.mxu0 0.0
    %5921 = vmatprep.subr.mxu0 0.0
    %5922 = vmatpush1.xpose.msra.mxu0 0.0
    %5923 = vmatprep.subr.mxu0 0.0
    %5924 = vmatpush1.xpose.msra.mxu0 0.0
    %5925 = vmatprep.subr.mxu0 0.0
    %5926 = vmatpush1.xpose.msra.mxu0 0.0
    %5927 = vmatprep.subr.mxu0 0.0
    %5928 = vmatpush1.xpose.msra.mxu0 0.0
    %5929 = vmatprep.subr.mxu0 0.0
    %5930 = vmatpush1.xpose.msra.mxu0 0.0
    %5931 = vmatprep.subr.mxu0 0.0
    %5932 = vmatpush1.xpose.msra.mxu0 0.0
    %5933 = vmatprep.subr.mxu0 0.0
    %5934 = vmatpush1.xpose.msra.mxu0 0.0
    %5935 = vmatprep.subr.mxu0 0.0
    %5936 = vmatpush1.xpose.msra.mxu0 0.0
    %5937 = vmatprep.mubr.f32.mxu0 0.0
    %5938 = vmatmul.mubr.f32.gmra.mrb[0].mxu0 %v5862
    %v5939 = vpop.f32.mrb[0].mxu0
    %v5940 = vadd.f32 %v5675, %v5939
    %v5941 = vpop.f32.mrb[0].mxu0
    %5942 = vmatprep.mubr.f32.mxu0 0.0
    %5943 = vmatmul.mubr.f32.gmra.mrb[0].mxu0 %v5865
    %v5944 = vpop.f32.mrb[0].mxu0
    %v5945 = vadd.f32 %v5676, %v5944
    %v5946 = vpop.f32.mrb[0].mxu0
    %5947 = vdwg.mxu0
    %v5948 = vsel %vm267, %v5940, -inf
    %5949 = vmax.xlane.f32.xlu0 %v5948
    %v5950 = vpop.xlane.xlu0 %5949
    %v5951 = vsel %vm267, %v5945, -inf
    %5952 = vmax.xlane.f32.xlu0 %v5951
    %v5953 = vpop.xlane.xlu0 %5952
    %v5954 = vsub.f32 %v5940, %v5950
    %v5955 = vsub.f32 %v5945, %v5953
    %v5956 = vmul.f32 %v5954, 1.442695
    %v5957 = vpow.pop %v5956
    %v5958 = vmul.f32 %v5955, 1.442695
    %v5959 = vpow.pop %v5958
    %v5960 = vsel %vm267, %v5957, 0.0
    %5961 = vadd.xlane.f32.xlu0 %v5960
    %v5962 = vpop.xlane.xlu0 %5961
    %v5963 = vsel %vm267, %v5959, 0.0
    %5964 = vadd.xlane.f32.xlu0 %v5963
    %v5965 = vpop.xlane.xlu0 %5964
    %v5966 = vrcp.pop %v5962
    %v5967 = vmul.f32 %v5957, %v5966
    %v5968 = vrcp.pop %v5965
    %v5969 = vmul.f32 %v5959, %v5968
    %5970 = vst.msk [vmem:[%s24] sm:$0xff] %vm181, %v5967
    %5972 = vrot.lane.b32.xlu0 %v5969, 120
    %v5973 = vpop.permute.xlu0 %5972
    %5975 = vst.msk [vmem:[%s24 + $0x8] sm:$0xff] %vm181, %v5973
    %5976 = vrot.lane.b32.xlu0 %v5851, 96
    %v5977 = vpop.permute.xlu0 %5976
    %5978 = vrot.lane.b32.xlu0 %v5856, 96
    %v5979 = vpop.permute.xlu0 %5978
    %v5983 = vsel %vm267, %v5967, 0
    %v5985 = vsel %vm267, %v5969, 0
    %5987 = vmatprep.subr.mxu0 0.0
    %5988 = vmatpush1.msra.mxu0 %v5977
    %5989 = vmatprep.subr.mxu0 0.0
    %5990 = vmatpush1.msra.mxu0 %v5979
    %5991 = vmatprep.subr.mxu0 0.0
    %5992 = vmatpush1.msra.mxu0 0.0
    %5993 = vmatprep.subr.mxu0 0.0
    %5994 = vmatpush1.msra.mxu0 0.0
    %5995 = vmatprep.subr.mxu0 0.0
    %5996 = vmatpush1.msra.mxu0 0.0
    %5997 = vmatprep.subr.mxu0 0.0
    %5998 = vmatpush1.msra.mxu0 0.0
    %5999 = vmatprep.subr.mxu0 0.0
    %6000 = vmatpush1.msra.mxu0 0.0
    %6001 = vmatprep.subr.mxu0 0.0
    %6002 = vmatpush1.msra.mxu0 0.0
    %6003 = vmatprep.subr.mxu0 0.0
    %6004 = vmatpush1.msra.mxu0 0.0
    %6005 = vmatprep.subr.mxu0 0.0
    %6006 = vmatpush1.msra.mxu0 0.0
    %6007 = vmatprep.subr.mxu0 0.0
    %6008 = vmatpush1.msra.mxu0 0.0
    %6009 = vmatprep.subr.mxu0 0.0
    %6010 = vmatpush1.msra.mxu0 0.0
    %6011 = vmatprep.subr.mxu0 0.0
    %6012 = vmatpush1.msra.mxu0 0.0
    %6013 = vmatprep.subr.mxu0 0.0
    %6014 = vmatpush1.msra.mxu0 0.0
    %6015 = vmatprep.subr.mxu0 0.0
    %6016 = vmatpush1.msra.mxu0 0.0
    %6017 = vmatprep.subr.mxu0 0.0
    %6018 = vmatpush1.msra.mxu0 0.0
    %6019 = vmatprep.subr.mxu0 0.0
    %6020 = vmatpush1.msra.mxu0 0.0
    %6021 = vmatprep.subr.mxu0 0.0
    %6022 = vmatpush1.msra.mxu0 0.0
    %6023 = vmatprep.subr.mxu0 0.0
    %6024 = vmatpush1.msra.mxu0 0.0
    %6025 = vmatprep.subr.mxu0 0.0
    %6026 = vmatpush1.msra.mxu0 0.0
    %6027 = vmatprep.subr.mxu0 0.0
    %6028 = vmatpush1.msra.mxu0 0.0
    %6029 = vmatprep.subr.mxu0 0.0
    %6030 = vmatpush1.msra.mxu0 0.0
    %6031 = vmatprep.subr.mxu0 0.0
    %6032 = vmatpush1.msra.mxu0 0.0
    %6033 = vmatprep.subr.mxu0 0.0
    %6034 = vmatpush1.msra.mxu0 0.0
    %6035 = vmatprep.subr.mxu0 0.0
    %6036 = vmatpush1.msra.mxu0 0.0
    %6037 = vmatprep.subr.mxu0 0.0
    %6038 = vmatpush1.msra.mxu0 0.0
    %6039 = vmatprep.subr.mxu0 0.0
    %6040 = vmatpush1.msra.mxu0 0.0
    %6041 = vmatprep.subr.mxu0 0.0
    %6042 = vmatpush1.msra.mxu0 0.0
    %6043 = vmatprep.subr.mxu0 0.0
    %6044 = vmatpush1.msra.mxu0 0.0
    %6045 = vmatprep.subr.mxu0 0.0
    %6046 = vmatpush1.msra.mxu0 0.0
    %6047 = vmatprep.subr.mxu0 0.0
    %6048 = vmatpush1.msra.mxu0 0.0
    %6049 = vmatprep.subr.mxu0 0.0
    %6050 = vmatpush1.msra.mxu0 0.0
    %6051 = vmatprep.mubr.f32.mxu0 0.0
    %6052 = vmatmul.mubr.f32.gmra.mrb[0].mxu0 %v5983
    %v6053 = vpop.f32.mrb[0].mxu0
    %v6054 = vadd.f32 0.0, %v6053
    %v6055 = vpop.f32.mrb[0].mxu0
    %6056 = vmatprep.mubr.f32.mxu0 0.0
    %6057 = vmatmul.mubr.f32.gmra.mrb[0].mxu0 %v5985
    %v6058 = vpop.f32.mrb[0].mxu0
    %v6059 = vadd.f32 0.0, %v6058
    %v6060 = vpop.f32.mrb[0].mxu0
    %6061 = vdwg.mxu0
    %6062 = vrot.lane.b32.xlu0 %v5859, 120
    %v6063 = vpop.permute.xlu0 %6062
    %6064 = vrot.lane.b32.xlu0 %v5860, 120
    %v6065 = vpop.permute.xlu0 %6064
    %6066 = vrot.lane.b32.xlu0 %v5851, 120
    %v6067 = vpop.permute.xlu0 %6066
    %6068 = vrot.lane.b32.xlu0 %v5856, 120
    %v6069 = vpop.permute.xlu0 %6068
    %v6070 = vsel %vm181, %v6063, 0
    %v6072 = vsel %vm181, %v6065, 0
    %v6074 = vsel %vm181, %v6067, 0
    %v6076 = vsel %vm181, %v6069, 0
    %6078 = vmatprep.subr.mxu0 0.0
    %6079 = vmatpush1.xpose.msra.mxu0 %v6074
    %6080 = vmatprep.subr.mxu0 0.0
    %6081 = vmatpush1.xpose.msra.mxu0 %v6076
    %6082 = vmatprep.subr.mxu0 0.0
    %6083 = vmatpush1.xpose.msra.mxu0 0.0
    %6084 = vmatprep.subr.mxu0 0.0
    %6085 = vmatpush1.xpose.msra.mxu0 0.0
    %6086 = vmatprep.subr.mxu0 0.0
    %6087 = vmatpush1.xpose.msra.mxu0 0.0
    %6088 = vmatprep.subr.mxu0 0.0
    %6089 = vmatpush1.xpose.msra.mxu0 0.0
    %6090 = vmatprep.subr.mxu0 0.0
    %6091 = vmatpush1.xpose.msra.mxu0 0.0
    %6092 = vmatprep.subr.mxu0 0.0
    %6093 = vmatpush1.xpose.msra.mxu0 0.0
    %6094 = vmatprep.subr.mxu0 0.0
    %6095 = vmatpush1.xpose.msra.mxu0 0.0
    %6096 = vmatprep.subr.mxu0 0.0
    %6097 = vmatpush1.xpose.msra.mxu0 0.0
    %6098 = vmatprep.subr.mxu0 0.0
    %6099 = vmatpush1.xpose.msra.mxu0 0.0
    %6100 = vmatprep.subr.mxu0 0.0
    %6101 = vmatpush1.xpose.msra.mxu0 0.0
    %6102 = vmatprep.subr.mxu0 0.0
    %6103 = vmatpush1.xpose.msra.mxu0 0.0
    %6104 = vmatprep.subr.mxu0 0.0
    %6105 = vmatpush1.xpose.msra.mxu0 0.0
    %6106 = vmatprep.subr.mxu0 0.0
    %6107 = vmatpush1.xpose.msra.mxu0 0.0
    %6108 = vmatprep.subr.mxu0 0.0
    %6109 = vmatpush1.xpose.msra.mxu0 0.0
    %6110 = vmatprep.subr.mxu0 0.0
    %6111 = vmatpush1.xpose.msra.mxu0 0.0
    %6112 = vmatprep.subr.mxu0 0.0
    %6113 = vmatpush1.xpose.msra.mxu0 0.0
    %6114 = vmatprep.subr.mxu0 0.0
    %6115 = vmatpush1.xpose.msra.mxu0 0.0
    %6116 = vmatprep.subr.mxu0 0.0
    %6117 = vmatpush1.xpose.msra.mxu0 0.0
    %6118 = vmatprep.subr.mxu0 0.0
    %6119 = vmatpush1.xpose.msra.mxu0 0.0
    %6120 = vmatprep.subr.mxu0 0.0
    %6121 = vmatpush1.xpose.msra.mxu0 0.0
    %6122 = vmatprep.subr.mxu0 0.0
    %6123 = vmatpush1.xpose.msra.mxu0 0.0
    %6124 = vmatprep.subr.mxu0 0.0
    %6125 = vmatpush1.xpose.msra.mxu0 0.0
    %6126 = vmatprep.subr.mxu0 0.0
    %6127 = vmatpush1.xpose.msra.mxu0 0.0
    %6128 = vmatprep.subr.mxu0 0.0
    %6129 = vmatpush1.xpose.msra.mxu0 0.0
    %6130 = vmatprep.subr.mxu0 0.0
    %6131 = vmatpush1.xpose.msra.mxu0 0.0
    %6132 = vmatprep.subr.mxu0 0.0
    %6133 = vmatpush1.xpose.msra.mxu0 0.0
    %6134 = vmatprep.subr.mxu0 0.0
    %6135 = vmatpush1.xpose.msra.mxu0 0.0
    %6136 = vmatprep.subr.mxu0 0.0
    %6137 = vmatpush1.xpose.msra.mxu0 0.0
    %6138 = vmatprep.subr.mxu0 0.0
    %6139 = vmatpush1.xpose.msra.mxu0 0.0
    %6140 = vmatprep.subr.mxu0 0.0
    %6141 = vmatpush1.xpose.msra.mxu0 0.0
    %6142 = vmatprep.mubr.f32.mxu0 0.0
    %6143 = vmatmul.mubr.f32.gmra.mrb[0].mxu0 %v6070
    %v6144 = vpop.f32.mrb[0].mxu0
    %v6145 = vadd.f32 %v5675, %v6144
    %v6146 = vpop.f32.mrb[0].mxu0
    %6147 = vmatprep.mubr.f32.mxu0 0.0
    %6148 = vmatmul.mubr.f32.gmra.mrb[0].mxu0 %v6072
    %v6149 = vpop.f32.mrb[0].mxu0
    %v6150 = vadd.f32 %v5676, %v6149
    %v6151 = vpop.f32.mrb[0].mxu0
    %6152 = vdwg.mxu0
    %v6153 = vsel %vm267, %v6145, -inf
    %6154 = vmax.xlane.f32.xlu0 %v6153
    %v6155 = vpop.xlane.xlu0 %6154
    %v6156 = vsel %vm267, %v6150, -inf
    %6157 = vmax.xlane.f32.xlu0 %v6156
    %v6158 = vpop.xlane.xlu0 %6157
    %v6159 = vsub.f32 %v6145, %v6155
    %v6160 = vsub.f32 %v6150, %v6158
    %v6161 = vmul.f32 %v6159, 1.442695
    %v6162 = vpow.pop %v6161
    %v6163 = vmul.f32 %v6160, 1.442695
    %v6164 = vpow.pop %v6163
    %v6165 = vsel %vm267, %v6162, 0.0
    %6166 = vadd.xlane.f32.xlu0 %v6165
    %v6167 = vpop.xlane.xlu0 %6166
    %v6168 = vsel %vm267, %v6164, 0.0
    %6169 = vadd.xlane.f32.xlu0 %v6168
    %v6170 = vpop.xlane.xlu0 %6169
    %v6171 = vrcp.pop %v6167
    %v6172 = vmul.f32 %v6162, %v6171
    %v6173 = vrcp.pop %v6170
    %v6174 = vmul.f32 %v6164, %v6173
    %6176 = vrot.lane.b32.xlu0 %v6172, 8
    %v6177 = vpop.permute.xlu0 %6176
    %6179 = vst.msk [vmem:[%s24] sm:$0xff] %vm5012, %v6177
    %6180 = vst.msk [vmem:[%s24 + $0x8] sm:$0xff] %vm5012, %v6174
    %6181 = vrot.lane.b32.xlu0 %v5851, 88
    %v6182 = vpop.permute.xlu0 %6181
    %6183 = vrot.lane.b32.xlu0 %v5856, 88
    %v6184 = vpop.permute.xlu0 %6183
    %v6187 = vsel %vm267, %v6172, 0
    %v6190 = vsel %vm267, %v6174, 0
    %6192 = vmatprep.subr.mxu0 0.0
    %6193 = vmatpush1.msra.mxu0 %v6182
    %6194 = vmatprep.subr.mxu0 0.0
    %6195 = vmatpush1.msra.mxu0 %v6184
    %6196 = vmatprep.subr.mxu0 0.0
    %6197 = vmatpush1.msra.mxu0 0.0
    %6198 = vmatprep.subr.mxu0 0.0
    %6199 = vmatpush1.msra.mxu0 0.0
    %6200 = vmatprep.subr.mxu0 0.0
    %6201 = vmatpush1.msra.mxu0 0.0
    %6202 = vmatprep.subr.mxu0 0.0
    %6203 = vmatpush1.msra.mxu0 0.0
    %6204 = vmatprep.subr.mxu0 0.0
    %6205 = vmatpush1.msra.mxu0 0.0
    %6206 = vmatprep.subr.mxu0 0.0
    %6207 = vmatpush1.msra.mxu0 0.0
    %6208 = vmatprep.subr.mxu0 0.0
    %6209 = vmatpush1.msra.mxu0 0.0
    %6210 = vmatprep.subr.mxu0 0.0
    %6211 = vmatpush1.msra.mxu0 0.0
    %6212 = vmatprep.subr.mxu0 0.0
    %6213 = vmatpush1.msra.mxu0 0.0
    %6214 = vmatprep.subr.mxu0 0.0
    %6215 = vmatpush1.msra.mxu0 0.0
    %6216 = vmatprep.subr.mxu0 0.0
    %6217 = vmatpush1.msra.mxu0 0.0
    %6218 = vmatprep.subr.mxu0 0.0
    %6219 = vmatpush1.msra.mxu0 0.0
    %6220 = vmatprep.subr.mxu0 0.0
    %6221 = vmatpush1.msra.mxu0 0.0
    %6222 = vmatprep.subr.mxu0 0.0
    %6223 = vmatpush1.msra.mxu0 0.0
    %6224 = vmatprep.subr.mxu0 0.0
    %6225 = vmatpush1.msra.mxu0 0.0
    %6226 = vmatprep.subr.mxu0 0.0
    %6227 = vmatpush1.msra.mxu0 0.0
    %6228 = vmatprep.subr.mxu0 0.0
    %6229 = vmatpush1.msra.mxu0 0.0
    %6230 = vmatprep.subr.mxu0 0.0
    %6231 = vmatpush1.msra.mxu0 0.0
    %6232 = vmatprep.subr.mxu0 0.0
    %6233 = vmatpush1.msra.mxu0 0.0
    %6234 = vmatprep.subr.mxu0 0.0
    %6235 = vmatpush1.msra.mxu0 0.0
    %6236 = vmatprep.subr.mxu0 0.0
    %6237 = vmatpush1.msra.mxu0 0.0
    %6238 = vmatprep.subr.mxu0 0.0
    %6239 = vmatpush1.msra.mxu0 0.0
    %6240 = vmatprep.subr.mxu0 0.0
    %6241 = vmatpush1.msra.mxu0 0.0
    %6242 = vmatprep.subr.mxu0 0.0
    %6243 = vmatpush1.msra.mxu0 0.0
    %6244 = vmatprep.subr.mxu0 0.0
    %6245 = vmatpush1.msra.mxu0 0.0
    %6246 = vmatprep.subr.mxu0 0.0
    %6247 = vmatpush1.msra.mxu0 0.0
    %6248 = vmatprep.subr.mxu0 0.0
    %6249 = vmatpush1.msra.mxu0 0.0
    %6250 = vmatprep.subr.mxu0 0.0
    %6251 = vmatpush1.msra.mxu0 0.0
    %6252 = vmatprep.subr.mxu0 0.0
    %6253 = vmatpush1.msra.mxu0 0.0
    %6254 = vmatprep.subr.mxu0 0.0
    %6255 = vmatpush1.msra.mxu0 0.0
    %6256 = vmatprep.mubr.f32.mxu0 0.0
    %6257 = vmatmul.mubr.f32.gmra.mrb[0].mxu0 %v6187
    %v6258 = vpop.f32.mrb[0].mxu0
    %v6259 = vadd.f32 0.0, %v6258
    %v6260 = vpop.f32.mrb[0].mxu0
    %6261 = vmatprep.mubr.f32.mxu0 0.0
    %6262 = vmatmul.mubr.f32.gmra.mrb[0].mxu0 %v6190
    %v6263 = vpop.f32.mrb[0].mxu0
    %v6264 = vadd.f32 0.0, %v6263
    %v6265 = vpop.f32.mrb[0].mxu0
    %6266 = vdwg.mxu0
    %6267 = vrot.lane.b32.xlu0 %v5859, 112
    %v6268 = vpop.permute.xlu0 %6267
    %6269 = vrot.lane.b32.xlu0 %v5860, 112
    %v6270 = vpop.permute.xlu0 %6269
    %6271 = vrot.lane.b32.xlu0 %v5851, 112
    %v6272 = vpop.permute.xlu0 %6271
    %6273 = vrot.lane.b32.xlu0 %v5856, 112
    %v6274 = vpop.permute.xlu0 %6273
    %v6275 = vsel %vm181, %v6268, 0
    %v6277 = vsel %vm181, %v6270, 0
    %v6279 = vsel %vm181, %v6272, 0
    %v6281 = vsel %vm181, %v6274, 0
    %6283 = vmatprep.subr.mxu0 0.0
    %6284 = vmatpush1.xpose.msra.mxu0 %v6279
    %6285 = vmatprep.subr.mxu0 0.0
    %6286 = vmatpush1.xpose.msra.mxu0 %v6281
    %6287 = vmatprep.subr.mxu0 0.0
    %6288 = vmatpush1.xpose.msra.mxu0 0.0
    %6289 = vmatprep.subr.mxu0 0.0
    %6290 = vmatpush1.xpose.msra.mxu0 0.0
    %6291 = vmatprep.subr.mxu0 0.0
    %6292 = vmatpush1.xpose.msra.mxu0 0.0
    %6293 = vmatprep.subr.mxu0 0.0
    %6294 = vmatpush1.xpose.msra.mxu0 0.0
    %6295 = vmatprep.subr.mxu0 0.0
    %6296 = vmatpush1.xpose.msra.mxu0 0.0
    %6297 = vmatprep.subr.mxu0 0.0
    %6298 = vmatpush1.xpose.msra.mxu0 0.0
    %6299 = vmatprep.subr.mxu0 0.0
    %6300 = vmatpush1.xpose.msra.mxu0 0.0
    %6301 = vmatprep.subr.mxu0 0.0
    %6302 = vmatpush1.xpose.msra.mxu0 0.0
    %6303 = vmatprep.subr.mxu0 0.0
    %6304 = vmatpush1.xpose.msra.mxu0 0.0
    %6305 = vmatprep.subr.mxu0 0.0
    %6306 = vmatpush1.xpose.msra.mxu0 0.0
    %6307 = vmatprep.subr.mxu0 0.0
    %6308 = vmatpush1.xpose.msra.mxu0 0.0
    %6309 = vmatprep.subr.mxu0 0.0
    %6310 = vmatpush1.xpose.msra.mxu0 0.0
    %6311 = vmatprep.subr.mxu0 0.0
    %6312 = vmatpush1.xpose.msra.mxu0 0.0
    %6313 = vmatprep.subr.mxu0 0.0
    %6314 = vmatpush1.xpose.msra.mxu0 0.0
    %6315 = vmatprep.subr.mxu0 0.0
    %6316 = vmatpush1.xpose.msra.mxu0 0.0
    %6317 = vmatprep.subr.mxu0 0.0
    %6318 = vmatpush1.xpose.msra.mxu0 0.0
    %6319 = vmatprep.subr.mxu0 0.0
    %6320 = vmatpush1.xpose.msra.mxu0 0.0
    %6321 = vmatprep.subr.mxu0 0.0
    %6322 = vmatpush1.xpose.msra.mxu0 0.0
    %6323 = vmatprep.subr.mxu0 0.0
    %6324 = vmatpush1.xpose.msra.mxu0 0.0
    %6325 = vmatprep.subr.mxu0 0.0
    %6326 = vmatpush1.xpose.msra.mxu0 0.0
    %6327 = vmatprep.subr.mxu0 0.0
    %6328 = vmatpush1.xpose.msra.mxu0 0.0
    %6329 = vmatprep.subr.mxu0 0.0
    %6330 = vmatpush1.xpose.msra.mxu0 0.0
    %6331 = vmatprep.subr.mxu0 0.0
    %6332 = vmatpush1.xpose.msra.mxu0 0.0
    %6333 = vmatprep.subr.mxu0 0.0
    %6334 = vmatpush1.xpose.msra.mxu0 0.0
    %6335 = vmatprep.subr.mxu0 0.0
    %6336 = vmatpush1.xpose.msra.mxu0 0.0
    %6337 = vmatprep.subr.mxu0 0.0
    %6338 = vmatpush1.xpose.msra.mxu0 0.0
    %6339 = vmatprep.subr.mxu0 0.0
    %6340 = vmatpush1.xpose.msra.mxu0 0.0
    %6341 = vmatprep.subr.mxu0 0.0
    %6342 = vmatpush1.xpose.msra.mxu0 0.0
    %6343 = vmatprep.subr.mxu0 0.0
    %6344 = vmatpush1.xpose.msra.mxu0 0.0
    %6345 = vmatprep.subr.mxu0 0.0
    %6346 = vmatpush1.xpose.msra.mxu0 0.0
    %6347 = vmatprep.mubr.f32.mxu0 0.0
    %6348 = vmatmul.mubr.f32.gmra.mrb[0].mxu0 %v6275
    %v6349 = vpop.f32.mrb[0].mxu0
    %v6350 = vadd.f32 %v5675, %v6349
    %v6351 = vpop.f32.mrb[0].mxu0
    %6352 = vmatprep.mubr.f32.mxu0 0.0
    %6353 = vmatmul.mubr.f32.gmra.mrb[0].mxu0 %v6277
    %v6354 = vpop.f32.mrb[0].mxu0
    %v6355 = vadd.f32 %v5676, %v6354
    %v6356 = vpop.f32.mrb[0].mxu0
    %6357 = vdwg.mxu0
    %v6358 = vsel %vm267, %v6350, -inf
    %6359 = vmax.xlane.f32.xlu0 %v6358
    %v6360 = vpop.xlane.xlu0 %6359
    %v6361 = vsel %vm267, %v6355, -inf
    %6362 = vmax.xlane.f32.xlu0 %v6361
    %v6363 = vpop.xlane.xlu0 %6362
    %v6364 = vsub.f32 %v6350, %v6360
    %v6365 = vsub.f32 %v6355, %v6363
    %v6366 = vmul.f32 %v6364, 1.442695
    %v6367 = vpow.pop %v6366
    %v6368 = vmul.f32 %v6365, 1.442695
    %v6369 = vpow.pop %v6368
    %v6370 = vsel %vm267, %v6367, 0.0
    %6371 = vadd.xlane.f32.xlu0 %v6370
    %v6372 = vpop.xlane.xlu0 %6371
    %v6373 = vsel %vm267, %v6369, 0.0
    %6374 = vadd.xlane.f32.xlu0 %v6373
    %v6375 = vpop.xlane.xlu0 %6374
    %v6376 = vrcp.pop %v6372
    %v6377 = vmul.f32 %v6367, %v6376
    %v6378 = vrcp.pop %v6375
    %v6379 = vmul.f32 %v6369, %v6378
    %6381 = vrot.lane.b32.xlu0 %v6377, 16
    %v6382 = vpop.permute.xlu0 %6381
    %6384 = vst.msk [vmem:[%s24] sm:$0xff] %vm5218, %v6382
    %6386 = vrot.lane.b32.xlu0 %v6379, 8
    %v6387 = vpop.permute.xlu0 %6386
    %6389 = vst.msk [vmem:[%s24 + $0x8] sm:$0xff] %vm5218, %v6387
    %6390 = vrot.lane.b32.xlu0 %v5851, 80
    %v6391 = vpop.permute.xlu0 %6390
    %6392 = vrot.lane.b32.xlu0 %v5856, 80
    %v6393 = vpop.permute.xlu0 %6392
    %v6396 = vsel %vm267, %v6377, 0
    %v6398 = vsel %vm267, %v6379, 0
    %6400 = vmatprep.subr.mxu0 0.0
    %6401 = vmatpush1.msra.mxu0 %v6391
    %6402 = vmatprep.subr.mxu0 0.0
    %6403 = vmatpush1.msra.mxu0 %v6393
    %6404 = vmatprep.subr.mxu0 0.0
    %6405 = vmatpush1.msra.mxu0 0.0
    %6406 = vmatprep.subr.mxu0 0.0
    %6407 = vmatpush1.msra.mxu0 0.0
    %6408 = vmatprep.subr.mxu0 0.0
    %6409 = vmatpush1.msra.mxu0 0.0
    %6410 = vmatprep.subr.mxu0 0.0
    %6411 = vmatpush1.msra.mxu0 0.0
    %6412 = vmatprep.subr.mxu0 0.0
    %6413 = vmatpush1.msra.mxu0 0.0
    %6414 = vmatprep.subr.mxu0 0.0
    %6415 = vmatpush1.msra.mxu0 0.0
    %6416 = vmatprep.subr.mxu0 0.0
    %6417 = vmatpush1.msra.mxu0 0.0
    %6418 = vmatprep.subr.mxu0 0.0
    %6419 = vmatpush1.msra.mxu0 0.0
    %6420 = vmatprep.subr.mxu0 0.0
    %6421 = vmatpush1.msra.mxu0 0.0
    %6422 = vmatprep.subr.mxu0 0.0
    %6423 = vmatpush1.msra.mxu0 0.0
    %6424 = vmatprep.subr.mxu0 0.0
    %6425 = vmatpush1.msra.mxu0 0.0
    %6426 = vmatprep.subr.mxu0 0.0
    %6427 = vmatpush1.msra.mxu0 0.0
    %6428 = vmatprep.subr.mxu0 0.0
    %6429 = vmatpush1.msra.mxu0 0.0
    %6430 = vmatprep.subr.mxu0 0.0
    %6431 = vmatpush1.msra.mxu0 0.0
    %6432 = vmatprep.subr.mxu0 0.0
    %6433 = vmatpush1.msra.mxu0 0.0
    %6434 = vmatprep.subr.mxu0 0.0
    %6435 = vmatpush1.msra.mxu0 0.0
    %6436 = vmatprep.subr.mxu0 0.0
    %6437 = vmatpush1.msra.mxu0 0.0
    %6438 = vmatprep.subr.mxu0 0.0
    %6439 = vmatpush1.msra.mxu0 0.0
    %6440 = vmatprep.subr.mxu0 0.0
    %6441 = vmatpush1.msra.mxu0 0.0
    %6442 = vmatprep.subr.mxu0 0.0
    %6443 = vmatpush1.msra.mxu0 0.0
    %6444 = vmatprep.subr.mxu0 0.0
    %6445 = vmatpush1.msra.mxu0 0.0
    %6446 = vmatprep.subr.mxu0 0.0
    %6447 = vmatpush1.msra.mxu0 0.0
    %6448 = vmatprep.subr.mxu0 0.0
    %6449 = vmatpush1.msra.mxu0 0.0
    %6450 = vmatprep.subr.mxu0 0.0
    %6451 = vmatpush1.msra.mxu0 0.0
    %6452 = vmatprep.subr.mxu0 0.0
    %6453 = vmatpush1.msra.mxu0 0.0
    %6454 = vmatprep.subr.mxu0 0.0
    %6455 = vmatpush1.msra.mxu0 0.0
    %6456 = vmatprep.subr.mxu0 0.0
    %6457 = vmatpush1.msra.mxu0 0.0
    %6458 = vmatprep.subr.mxu0 0.0
    %6459 = vmatpush1.msra.mxu0 0.0
    %6460 = vmatprep.subr.mxu0 0.0
    %6461 = vmatpush1.msra.mxu0 0.0
    %6462 = vmatprep.subr.mxu0 0.0
    %6463 = vmatpush1.msra.mxu0 0.0
    %6464 = vmatprep.mubr.f32.mxu0 0.0
    %6465 = vmatmul.mubr.f32.gmra.mrb[0].mxu0 %v6396
    %v6466 = vpop.f32.mrb[0].mxu0
    %v6467 = vadd.f32 0.0, %v6466
    %v6468 = vpop.f32.mrb[0].mxu0
    %6469 = vmatprep.mubr.f32.mxu0 0.0
    %6470 = vmatmul.mubr.f32.gmra.mrb[0].mxu0 %v6398
    %v6471 = vpop.f32.mrb[0].mxu0
    %v6472 = vadd.f32 0.0, %v6471
    %v6473 = vpop.f32.mrb[0].mxu0
    %6474 = vdwg.mxu0
    %6475 = vrot.lane.b32.xlu0 %v5859, 104
    %v6476 = vpop.permute.xlu0 %6475
    %6477 = vrot.lane.b32.xlu0 %v5860, 104
    %v6478 = vpop.permute.xlu0 %6477
    %6479 = vrot.lane.b32.xlu0 %v5851, 104
    %v6480 = vpop.permute.xlu0 %6479
    %6481 = vrot.lane.b32.xlu0 %v5856, 104
    %v6482 = vpop.permute.xlu0 %6481
    %v6483 = vsel %vm181, %v6476, 0
    %v6485 = vsel %vm181, %v6478, 0
    %v6487 = vsel %vm181, %v6480, 0
    %v6489 = vsel %vm181, %v6482, 0
    %6491 = vmatprep.subr.mxu0 0.0
    %6492 = vmatpush1.xpose.msra.mxu0 %v6487
    %6493 = vmatprep.subr.mxu0 0.0
    %6494 = vmatpush1.xpose.msra.mxu0 %v6489
    %6495 = vmatprep.subr.mxu0 0.0
    %6496 = vmatpush1.xpose.msra.mxu0 0.0
    %6497 = vmatprep.subr.mxu0 0.0
    %6498 = vmatpush1.xpose.msra.mxu0 0.0
    %6499 = vmatprep.subr.mxu0 0.0
    %6500 = vmatpush1.xpose.msra.mxu0 0.0
    %6501 = vmatprep.subr.mxu0 0.0
    %6502 = vmatpush1.xpose.msra.mxu0 0.0
    %6503 = vmatprep.subr.mxu0 0.0
    %6504 = vmatpush1.xpose.msra.mxu0 0.0
    %6505 = vmatprep.subr.mxu0 0.0
    %6506 = vmatpush1.xpose.msra.mxu0 0.0
    %6507 = vmatprep.subr.mxu0 0.0
    %6508 = vmatpush1.xpose.msra.mxu0 0.0
    %6509 = vmatprep.subr.mxu0 0.0
    %6510 = vmatpush1.xpose.msra.mxu0 0.0
    %6511 = vmatprep.subr.mxu0 0.0
    %6512 = vmatpush1.xpose.msra.mxu0 0.0
    %6513 = vmatprep.subr.mxu0 0.0
    %6514 = vmatpush1.xpose.msra.mxu0 0.0
    %6515 = vmatprep.subr.mxu0 0.0
    %6516 = vmatpush1.xpose.msra.mxu0 0.0
    %6517 = vmatprep.subr.mxu0 0.0
    %6518 = vmatpush1.xpose.msra.mxu0 0.0
    %6519 = vmatprep.subr.mxu0 0.0
    %6520 = vmatpush1.xpose.msra.mxu0 0.0
    %6521 = vmatprep.subr.mxu0 0.0
    %6522 = vmatpush1.xpose.msra.mxu0 0.0
    %6523 = vmatprep.subr.mxu0 0.0
    %6524 = vmatpush1.xpose.msra.mxu0 0.0
    %6525 = vmatprep.subr.mxu0 0.0
    %6526 = vmatpush1.xpose.msra.mxu0 0.0
    %6527 = vmatprep.subr.mxu0 0.0
    %6528 = vmatpush1.xpose.msra.mxu0 0.0
    %6529 = vmatprep.subr.mxu0 0.0
    %6530 = vmatpush1.xpose.msra.mxu0 0.0
    %6531 = vmatprep.subr.mxu0 0.0
    %6532 = vmatpush1.xpose.msra.mxu0 0.0
    %6533 = vmatprep.subr.mxu0 0.0
    %6534 = vmatpush1.xpose.msra.mxu0 0.0
    %6535 = vmatprep.subr.mxu0 0.0
    %6536 = vmatpush1.xpose.msra.mxu0 0.0
    %6537 = vmatprep.subr.mxu0 0.0
    %6538 = vmatpush1.xpose.msra.mxu0 0.0
    %6539 = vmatprep.subr.mxu0 0.0
    %6540 = vmatpush1.xpose.msra.mxu0 0.0
    %6541 = vmatprep.subr.mxu0 0.0
    %6542 = vmatpush1.xpose.msra.mxu0 0.0
    %6543 = vmatprep.subr.mxu0 0.0
    %6544 = vmatpush1.xpose.msra.mxu0 0.0
    %6545 = vmatprep.subr.mxu0 0.0
    %6546 = vmatpush1.xpose.msra.mxu0 0.0
    %6547 = vmatprep.subr.mxu0 0.0
    %6548 = vmatpush1.xpose.msra.mxu0 0.0
    %6549 = vmatprep.subr.mxu0 0.0
    %6550 = vmatpush1.xpose.msra.mxu0 0.0
    %6551 = vmatprep.subr.mxu0 0.0
    %6552 = vmatpush1.xpose.msra.mxu0 0.0
    %6553 = vmatprep.subr.mxu0 0.0
    %6554 = vmatpush1.xpose.msra.mxu0 0.0
    %6555 = vmatprep.mubr.f32.mxu0 0.0
    %6556 = vmatmul.mubr.f32.gmra.mrb[0].mxu0 %v6483
    %v6557 = vpop.f32.mrb[0].mxu0
    %v6558 = vadd.f32 %v5675, %v6557
    %v6559 = vpop.f32.mrb[0].mxu0
    %6560 = vmatprep.mubr.f32.mxu0 0.0
    %6561 = vmatmul.mubr.f32.gmra.mrb[0].mxu0 %v6485
    %v6562 = vpop.f32.mrb[0].mxu0
    %v6563 = vadd.f32 %v5676, %v6562
    %v6564 = vpop.f32.mrb[0].mxu0
    %6565 = vdwg.mxu0
    %v6566 = vsel %vm267, %v6558, -inf
    %6567 = vmax.xlane.f32.xlu0 %v6566
    %v6568 = vpop.xlane.xlu0 %6567
    %v6569 = vsel %vm267, %v6563, -inf
    %6570 = vmax.xlane.f32.xlu0 %v6569
    %v6571 = vpop.xlane.xlu0 %6570
    %v6572 = vsub.f32 %v6558, %v6568
    %v6573 = vsub.f32 %v6563, %v6571
    %v6574 = vmul.f32 %v6572, 1.442695
    %v6575 = vpow.pop %v6574
    %v6576 = vmul.f32 %v6573, 1.442695
    %v6577 = vpow.pop %v6576
    %v6578 = vsel %vm267, %v6575, 0.0
    %6579 = vadd.xlane.f32.xlu0 %v6578
    %v6580 = vpop.xlane.xlu0 %6579
    %v6581 = vsel %vm267, %v6577, 0.0
    %6582 = vadd.xlane.f32.xlu0 %v6581
    %v6583 = vpop.xlane.xlu0 %6582
    %v6584 = vrcp.pop %v6580
    %v6585 = vmul.f32 %v6575, %v6584
    %v6586 = vrcp.pop %v6583
    %v6587 = vmul.f32 %v6577, %v6586
    %6589 = vrot.lane.b32.xlu0 %v6585, 24
    %v6590 = vpop.permute.xlu0 %6589
    %6592 = vst.msk [vmem:[%s24] sm:$0xff] %vm5427, %v6590
    %6594 = vrot.lane.b32.xlu0 %v6587, 16
    %v6595 = vpop.permute.xlu0 %6594
    %6597 = vst.msk [vmem:[%s24 + $0x8] sm:$0xff] %vm5427, %v6595
    %6598 = vrot.lane.b32.xlu0 %v5851, 72
    %v6599 = vpop.permute.xlu0 %6598
    %6600 = vrot.lane.b32.xlu0 %v5856, 72
    %v6601 = vpop.permute.xlu0 %6600
    %v6604 = vsel %vm267, %v6585, 0
    %v6606 = vsel %vm267, %v6587, 0
    %6608 = vmatprep.subr.mxu0 0.0
    %6609 = vmatpush1.msra.mxu0 %v6599
    %6610 = vmatprep.subr.mxu0 0.0
    %6611 = vmatpush1.msra.mxu0 %v6601
    %6612 = vmatprep.subr.mxu0 0.0
    %6613 = vmatpush1.msra.mxu0 0.0
    %6614 = vmatprep.subr.mxu0 0.0
    %6615 = vmatpush1.msra.mxu0 0.0
    %6616 = vmatprep.subr.mxu0 0.0
    %6617 = vmatpush1.msra.mxu0 0.0
    %6618 = vmatprep.subr.mxu0 0.0
    %6619 = vmatpush1.msra.mxu0 0.0
    %6620 = vmatprep.subr.mxu0 0.0
    %6621 = vmatpush1.msra.mxu0 0.0
    %6622 = vmatprep.subr.mxu0 0.0
    %6623 = vmatpush1.msra.mxu0 0.0
    %6624 = vmatprep.subr.mxu0 0.0
    %6625 = vmatpush1.msra.mxu0 0.0
    %6626 = vmatprep.subr.mxu0 0.0
    %6627 = vmatpush1.msra.mxu0 0.0
    %6628 = vmatprep.subr.mxu0 0.0
    %6629 = vmatpush1.msra.mxu0 0.0
    %6630 = vmatprep.subr.mxu0 0.0
    %6631 = vmatpush1.msra.mxu0 0.0
    %6632 = vmatprep.subr.mxu0 0.0
    %6633 = vmatpush1.msra.mxu0 0.0
    %6634 = vmatprep.subr.mxu0 0.0
    %6635 = vmatpush1.msra.mxu0 0.0
    %6636 = vmatprep.subr.mxu0 0.0
    %6637 = vmatpush1.msra.mxu0 0.0
    %6638 = vmatprep.subr.mxu0 0.0
    %6639 = vmatpush1.msra.mxu0 0.0
    %6640 = vmatprep.subr.mxu0 0.0
    %6641 = vmatpush1.msra.mxu0 0.0
    %6642 = vmatprep.subr.mxu0 0.0
    %6643 = vmatpush1.msra.mxu0 0.0
    %6644 = vmatprep.subr.mxu0 0.0
    %6645 = vmatpush1.msra.mxu0 0.0
    %6646 = vmatprep.subr.mxu0 0.0
    %6647 = vmatpush1.msra.mxu0 0.0
    %6648 = vmatprep.subr.mxu0 0.0
    %6649 = vmatpush1.msra.mxu0 0.0
    %6650 = vmatprep.subr.mxu0 0.0
    %6651 = vmatpush1.msra.mxu0 0.0
    %6652 = vmatprep.subr.mxu0 0.0
    %6653 = vmatpush1.msra.mxu0 0.0
    %6654 = vmatprep.subr.mxu0 0.0
    %6655 = vmatpush1.msra.mxu0 0.0
    %6656 = vmatprep.subr.mxu0 0.0
    %6657 = vmatpush1.msra.mxu0 0.0
    %6658 = vmatprep.subr.mxu0 0.0
    %6659 = vmatpush1.msra.mxu0 0.0
    %6660 = vmatprep.subr.mxu0 0.0
    %6661 = vmatpush1.msra.mxu0 0.0
    %6662 = vmatprep.subr.mxu0 0.0
    %6663 = vmatpush1.msra.mxu0 0.0
    %6664 = vmatprep.subr.mxu0 0.0
    %6665 = vmatpush1.msra.mxu0 0.0
    %6666 = vmatprep.subr.mxu0 0.0
    %6667 = vmatpush1.msra.mxu0 0.0
    %6668 = vmatprep.subr.mxu0 0.0
    %6669 = vmatpush1.msra.mxu0 0.0
    %6670 = vmatprep.subr.mxu0 0.0
    %6671 = vmatpush1.msra.mxu0 0.0
    %6672 = vmatprep.mubr.f32.mxu0 0.0
    %6673 = vmatmul.mubr.f32.gmra.mrb[0].mxu0 %v6604
    %v6674 = vpop.f32.mrb[0].mxu0
    %v6675 = vadd.f32 0.0, %v6674
    %v6676 = vpop.f32.mrb[0].mxu0
    %6677 = vmatprep.mubr.f32.mxu0 0.0
    %6678 = vmatmul.mubr.f32.gmra.mrb[0].mxu0 %v6606
    %v6679 = vpop.f32.mrb[0].mxu0
    %v6680 = vadd.f32 0.0, %v6679
    %v6681 = vpop.f32.mrb[0].mxu0
    %6682 = vdwg.mxu0
    %6685 = vrot.lane.b32.xlu0 %v6259, 8
    %v6686 = vpop.permute.xlu0 %6685
    %6687 = vrot.lane.b32.xlu0 %v6264, 8
    %v6688 = vpop.permute.xlu0 %6687
    %6693 = vrot.lane.b32.xlu0 %v6467, 16
    %v6694 = vpop.permute.xlu0 %6693
    %6695 = vrot.lane.b32.xlu0 %v6472, 16
    %v6696 = vpop.permute.xlu0 %6695
    %6701 = vrot.lane.b32.xlu0 %v6675, 24
    %v6702 = vpop.permute.xlu0 %6701
    %6703 = vrot.lane.b32.xlu0 %v6680, 24
    %v6704 = vpop.permute.xlu0 %6703
    %v6707 = vsel %vm181, %v6054, %v6686
    %v6708 = vsel %vm181, %v6059, %v6688
    %v6709 = vsel %vm267, %v6707, %v6694
    %v6710 = vsel %vm267, %v6708, %v6696
    %v6711 = vsel %vm1005, %v6709, %v6702
    %v6712 = vsel %vm1005, %v6710, %v6704
    %s6713 = scalar_lea.vmem %s11, 160
    %v6714 = vld [vmem:[%s6713] sm:$0xff]
    %v6715 = vld [vmem:[%s6713 + $0x8] sm:$0xff]
    %v6716 = vld [vmem:[%s6713 + $0x10] sm:$0xff]
    %v6717 = vld [vmem:[%s6713 + $0x18] sm:$0xff]
    %s6718 = scalar_lea.vmem %s12, 5
    %v6719 = vld [vmem:[%s6718] sm:$0x1]
    %v6721 = vlaneseq
    %v6722 = vshrl.u32 %v6721, 7
    %v6723 = vsub.s32 0, %v6722
    %v6724 = vrot.slane %v6719, %v6723
    %v6727 = vsel %vm91, %v6711, 0
    %v6730 = vsel %vm91, %v6712, 0
    %6732 = vmatprep.subr.mxu0 0.0
    %6733 = vmatpush1.msra.mxu0 %v6714
    %6734 = vmatprep.subr.mxu0 0.0
    %6735 = vmatpush1.msra.mxu0 %v6715
    %6736 = vmatprep.subr.mxu0 0.0
    %6737 = vmatpush1.msra.mxu0 %v6716
    %6738 = vmatprep.subr.mxu0 0.0
    %6739 = vmatpush1.msra.mxu0 %v6717
    %6740 = vmatprep.subr.mxu0 0.0
    %6741 = vmatpush1.msra.mxu0 0.0
    %6742 = vmatprep.subr.mxu0 0.0
    %6743 = vmatpush1.msra.mxu0 0.0
    %6744 = vmatprep.subr.mxu0 0.0
    %6745 = vmatpush1.msra.mxu0 0.0
    %6746 = vmatprep.subr.mxu0 0.0
    %6747 = vmatpush1.msra.mxu0 0.0
    %6748 = vmatprep.subr.mxu0 0.0
    %6749 = vmatpush1.msra.mxu0 0.0
    %6750 = vmatprep.subr.mxu0 0.0
    %6751 = vmatpush1.msra.mxu0 0.0
    %6752 = vmatprep.subr.mxu0 0.0
    %6753 = vmatpush1.msra.mxu0 0.0
    %6754 = vmatprep.subr.mxu0 0.0
    %6755 = vmatpush1.msra.mxu0 0.0
    %6756 = vmatprep.subr.mxu0 0.0
    %6757 = vmatpush1.msra.mxu0 0.0
    %6758 = vmatprep.subr.mxu0 0.0
    %6759 = vmatpush1.msra.mxu0 0.0
    %6760 = vmatprep.subr.mxu0 0.0
    %6761 = vmatpush1.msra.mxu0 0.0
    %6762 = vmatprep.subr.mxu0 0.0
    %6763 = vmatpush1.msra.mxu0 0.0
    %6764 = vmatprep.subr.mxu0 0.0
    %6765 = vmatpush1.msra.mxu0 0.0
    %6766 = vmatprep.subr.mxu0 0.0
    %6767 = vmatpush1.msra.mxu0 0.0
    %6768 = vmatprep.subr.mxu0 0.0
    %6769 = vmatpush1.msra.mxu0 0.0
    %6770 = vmatprep.subr.mxu0 0.0
    %6771 = vmatpush1.msra.mxu0 0.0
    %6772 = vmatprep.subr.mxu0 0.0
    %6773 = vmatpush1.msra.mxu0 0.0
    %6774 = vmatprep.subr.mxu0 0.0
    %6775 = vmatpush1.msra.mxu0 0.0
    %6776 = vmatprep.subr.mxu0 0.0
    %6777 = vmatpush1.msra.mxu0 0.0
    %6778 = vmatprep.subr.mxu0 0.0
    %6779 = vmatpush1.msra.mxu0 0.0
    %6780 = vmatprep.subr.mxu0 0.0
    %6781 = vmatpush1.msra.mxu0 0.0
    %6782 = vmatprep.subr.mxu0 0.0
    %6783 = vmatpush1.msra.mxu0 0.0
    %6784 = vmatprep.subr.mxu0 0.0
    %6785 = vmatpush1.msra.mxu0 0.0
    %6786 = vmatprep.subr.mxu0 0.0
    %6787 = vmatpush1.msra.mxu0 0.0
    %6788 = vmatprep.subr.mxu0 0.0
    %6789 = vmatpush1.msra.mxu0 0.0
    %6790 = vmatprep.subr.mxu0 0.0
    %6791 = vmatpush1.msra.mxu0 0.0
    %6792 = vmatprep.subr.mxu0 0.0
    %6793 = vmatpush1.msra.mxu0 0.0
    %6794 = vmatprep.subr.mxu0 0.0
    %6795 = vmatpush1.msra.mxu0 0.0
    %6796 = vmatprep.mubr.f32.mxu0 0.0
    %6797 = vmatmul.mubr.f32.gmra.mrb[0].mxu0 %v6727
    %v6798 = vpop.f32.mrb[0].mxu0
    %v6799 = vadd.f32 %v6724, %v6798
    %v6800 = vpop.f32.mrb[0].mxu0
    %6801 = vmatprep.mubr.f32.mxu0 0.0
    %6802 = vmatmul.mubr.f32.gmra.mrb[0].mxu0 %v6730
    %v6803 = vpop.f32.mrb[0].mxu0
    %v6804 = vadd.f32 %v6724, %v6803
    %v6805 = vpop.f32.mrb[0].mxu0
    %6806 = vdwg.mxu0
    %v6807 = vadd.f32 %v3251, %v6799
    %v6808 = vadd.f32 %v3252, %v6804
    %v6809 = vsel %vm91, %v6807, 0.0
    %6810 = vadd.xlane.f32.xlu0 %v6809
    %v6811 = vpop.xlane.xlu0 %6810
    %v6812 = vsel %vm91, %v6808, 0.0
    %6813 = vadd.xlane.f32.xlu0 %v6812
    %v6814 = vpop.xlane.xlu0 %6813
    %v6815 = vmul.f32 %v6811, %v1108
    %v6816 = vmul.f32 %v6814, %v1108
    %v6817 = vsub.f32 %v6807, %v6815
    %v6818 = vsub.f32 %v6808, %v6816
    %v6819 = vmul.f32 %v6817, %v6817
    %v6820 = vmul.f32 %v6818, %v6818
    %v6821 = vsel %vm91, %v6819, 0.0
    %6822 = vadd.xlane.f32.xlu0 %v6821
    %v6823 = vpop.xlane.xlu0 %6822
    %v6824 = vsel %vm91, %v6820, 0.0
    %6825 = vadd.xlane.f32.xlu0 %v6824
    %v6826 = vpop.xlane.xlu0 %6825
    %v6827 = vmul.f32 %v6823, %v1108
    %v6828 = vmul.f32 %v6826, %v1108
    %v6829 = vadd.f32 %v6827, 1e-05
    %v6830 = vadd.f32 %v6828, 1e-05
    %v6831 = vrsqrt.pop %v6829
    %v6832 = vrsqrt.pop %v6830
    %v6833 = vmul.f32 %v6817, %v6831
    %v6834 = vmul.f32 %v6818, %v6832
    %v6835 = vmul.f32 %v6833, %v1133
    %v6836 = vmul.f32 %v6834, %v1133
    %v6837 = vadd.f32 %v6835, %v1141
    %v6838 = vadd.f32 %v6836, %v1141
    %v6839 = vld [vmem:[%s13] sm:$0xff]
    %v6840 = vld [vmem:[%s13 + $0x8] sm:$0xff]
    %v6841 = vld [vmem:[%s13 + $0x10] sm:$0xff]
    %v6842 = vld [vmem:[%s13 + $0x18] sm:$0xff]
    %v6843 = vld [vmem:[%s14] sm:$0x1]
    %v6845 = vlaneseq
    %v6846 = vshrl.u32 %v6845, 7
    %v6847 = vsub.s32 0, %v6846
    %v6848 = vrot.slane %v6843, %v6847
    %6850 = vmatprep.subr.mxu0 0.0
    %6851 = vmatpush1.msra.mxu0 %v6839
    %6852 = vmatprep.subr.mxu0 0.0
    %6853 = vmatpush1.msra.mxu0 %v6840
    %6854 = vmatprep.subr.mxu0 0.0
    %6855 = vmatpush1.msra.mxu0 %v6841
    %6856 = vmatprep.subr.mxu0 0.0
    %6857 = vmatpush1.msra.mxu0 %v6842
    %6858 = vmatprep.subr.mxu0 0.0
    %6859 = vmatpush1.msra.mxu0 0.0
    %6860 = vmatprep.subr.mxu0 0.0
    %6861 = vmatpush1.msra.mxu0 0.0
    %6862 = vmatprep.subr.mxu0 0.0
    %6863 = vmatpush1.msra.mxu0 0.0
    %6864 = vmatprep.subr.mxu0 0.0
    %6865 = vmatpush1.msra.mxu0 0.0
    %6866 = vmatprep.subr.mxu0 0.0
    %6867 = vmatpush1.msra.mxu0 0.0
    %6868 = vmatprep.subr.mxu0 0.0
    %6869 = vmatpush1.msra.mxu0 0.0
    %6870 = vmatprep.subr.mxu0 0.0
    %6871 = vmatpush1.msra.mxu0 0.0
    %6872 = vmatprep.subr.mxu0 0.0
    %6873 = vmatpush1.msra.mxu0 0.0
    %6874 = vmatprep.subr.mxu0 0.0
    %6875 = vmatpush1.msra.mxu0 0.0
    %6876 = vmatprep.subr.mxu0 0.0
    %6877 = vmatpush1.msra.mxu0 0.0
    %6878 = vmatprep.subr.mxu0 0.0
    %6879 = vmatpush1.msra.mxu0 0.0
    %6880 = vmatprep.subr.mxu0 0.0
    %6881 = vmatpush1.msra.mxu0 0.0
    %6882 = vmatprep.subr.mxu0 0.0
    %6883 = vmatpush1.msra.mxu0 0.0
    %6884 = vmatprep.subr.mxu0 0.0
    %6885 = vmatpush1.msra.mxu0 0.0
    %6886 = vmatprep.subr.mxu0 0.0
    %6887 = vmatpush1.msra.mxu0 0.0
    %6888 = vmatprep.subr.mxu0 0.0
    %6889 = vmatpush1.msra.mxu0 0.0
    %6890 = vmatprep.subr.mxu0 0.0
    %6891 = vmatpush1.msra.mxu0 0.0
    %6892 = vmatprep.subr.mxu0 0.0
    %6893 = vmatpush1.msra.mxu0 0.0
    %6894 = vmatprep.subr.mxu0 0.0
    %6895 = vmatpush1.msra.mxu0 0.0
    %6896 = vmatprep.subr.mxu0 0.0
    %6897 = vmatpush1.msra.mxu0 0.0
    %6898 = vmatprep.subr.mxu0 0.0
    %6899 = vmatpush1.msra.mxu0 0.0
    %6900 = vmatprep.subr.mxu0 0.0
    %6901 = vmatpush1.msra.mxu0 0.0
    %6902 = vmatprep.subr.mxu0 0.0
    %6903 = vmatpush1.msra.mxu0 0.0
    %6904 = vmatprep.subr.mxu0 0.0
    %6905 = vmatpush1.msra.mxu0 0.0
    %6906 = vmatprep.subr.mxu0 0.0
    %6907 = vmatpush1.msra.mxu0 0.0
    %6908 = vmatprep.subr.mxu0 0.0
    %6909 = vmatpush1.msra.mxu0 0.0
    %6910 = vmatprep.subr.mxu0 0.0
    %6911 = vmatpush1.msra.mxu0 0.0
    %6912 = vmatprep.subr.mxu0 0.0
    %6913 = vmatpush1.msra.mxu0 0.0
    %6914 = vmatprep.mubr.f32.mxu0 0.0
    %6915 = vmatmul.mubr.f32.gmra.mrb[0].mxu0 %v4612
    %v6916 = vpop.f32.mrb[0].mxu0
    %v6917 = vadd.f32 %v6848, %v6916
    %v6918 = vpop.f32.mrb[0].mxu0
    %6919 = vmatprep.mubr.f32.mxu0 0.0
    %6920 = vmatmul.mubr.f32.gmra.mrb[0].mxu0 %v4615
    %v6921 = vpop.f32.mrb[0].mxu0
    %v6922 = vadd.f32 %v6848, %v6921
    %v6923 = vpop.f32.mrb[0].mxu0
    %6924 = vdwg.mxu0
    %v6925 = vmax.f32 %v6917, 0.0
    %v6926 = vmax.f32 %v6922, 0.0
    %v6927 = vld [vmem:[%s15] sm:$0xff]
    %v6928 = vld [vmem:[%s15 + $0x8] sm:$0xff]
    %v6929 = vld [vmem:[%s15 + $0x10] sm:$0xff]
    %v6930 = vld [vmem:[%s15 + $0x18] sm:$0xff]
    %v6931 = vld [vmem:[%s15 + $0x20] sm:$0xff]
    %v6932 = vld [vmem:[%s15 + $0x28] sm:$0xff]
    %v6933 = vld [vmem:[%s15 + $0x30] sm:$0xff]
    %v6934 = vld [vmem:[%s15 + $0x38] sm:$0xff]
    %v6935 = vld [vmem:[%s16] sm:$0x1]
    %v6937 = vlaneseq
    %v6938 = vshrl.u32 %v6937, 7
    %v6939 = vsub.s32 0, %v6938
    %v6940 = vrot.slane %v6935, %v6939
    %vm6942 = vcmask 523264
    %v6944 = vsel %vm6942, %v6925, 0
    %v6947 = vsel %vm6942, %v6926, 0
    %6949 = vmatprep.subr.mxu0 0.0
    %6950 = vmatpush1.msra.mxu0 %v6927
    %6951 = vmatprep.subr.mxu0 0.0
    %6952 = vmatpush1.msra.mxu0 %v6928
    %6953 = vmatprep.subr.mxu0 0.0
    %6954 = vmatpush1.msra.mxu0 %v6929
    %6955 = vmatprep.subr.mxu0 0.0
    %6956 = vmatpush1.msra.mxu0 %v6930
    %6957 = vmatprep.subr.mxu0 0.0
    %6958 = vmatpush1.msra.mxu0 %v6931
    %6959 = vmatprep.subr.mxu0 0.0
    %6960 = vmatpush1.msra.mxu0 %v6932
    %6961 = vmatprep.subr.mxu0 0.0
    %6962 = vmatpush1.msra.mxu0 %v6933
    %6963 = vmatprep.subr.mxu0 0.0
    %6964 = vmatpush1.msra.mxu0 %v6934
    %6965 = vmatprep.subr.mxu0 0.0
    %6966 = vmatpush1.msra.mxu0 0.0
    %6967 = vmatprep.subr.mxu0 0.0
    %6968 = vmatpush1.msra.mxu0 0.0
    %6969 = vmatprep.subr.mxu0 0.0
    %6970 = vmatpush1.msra.mxu0 0.0
    %6971 = vmatprep.subr.mxu0 0.0
    %6972 = vmatpush1.msra.mxu0 0.0
    %6973 = vmatprep.subr.mxu0 0.0
    %6974 = vmatpush1.msra.mxu0 0.0
    %6975 = vmatprep.subr.mxu0 0.0
    %6976 = vmatpush1.msra.mxu0 0.0
    %6977 = vmatprep.subr.mxu0 0.0
    %6978 = vmatpush1.msra.mxu0 0.0
    %6979 = vmatprep.subr.mxu0 0.0
    %6980 = vmatpush1.msra.mxu0 0.0
    %6981 = vmatprep.subr.mxu0 0.0
    %6982 = vmatpush1.msra.mxu0 0.0
    %6983 = vmatprep.subr.mxu0 0.0
    %6984 = vmatpush1.msra.mxu0 0.0
    %6985 = vmatprep.subr.mxu0 0.0
    %6986 = vmatpush1.msra.mxu0 0.0
    %6987 = vmatprep.subr.mxu0 0.0
    %6988 = vmatpush1.msra.mxu0 0.0
    %6989 = vmatprep.subr.mxu0 0.0
    %6990 = vmatpush1.msra.mxu0 0.0
    %6991 = vmatprep.subr.mxu0 0.0
    %6992 = vmatpush1.msra.mxu0 0.0
    %6993 = vmatprep.subr.mxu0 0.0
    %6994 = vmatpush1.msra.mxu0 0.0
    %6995 = vmatprep.subr.mxu0 0.0
    %6996 = vmatpush1.msra.mxu0 0.0
    %6997 = vmatprep.subr.mxu0 0.0
    %6998 = vmatpush1.msra.mxu0 0.0
    %6999 = vmatprep.subr.mxu0 0.0
    %7000 = vmatpush1.msra.mxu0 0.0
    %7001 = vmatprep.subr.mxu0 0.0
    %7002 = vmatpush1.msra.mxu0 0.0
    %7003 = vmatprep.subr.mxu0 0.0
    %7004 = vmatpush1.msra.mxu0 0.0
    %7005 = vmatprep.subr.mxu0 0.0
    %7006 = vmatpush1.msra.mxu0 0.0
    %7007 = vmatprep.subr.mxu0 0.0
    %7008 = vmatpush1.msra.mxu0 0.0
    %7009 = vmatprep.subr.mxu0 0.0
    %7010 = vmatpush1.msra.mxu0 0.0
    %7011 = vmatprep.subr.mxu0 0.0
    %7012 = vmatpush1.msra.mxu0 0.0
    %7013 = vmatprep.mubr.f32.mxu0 0.0
    %7014 = vmatmul.mubr.f32.gmra.mrb[0].mxu0 %v6944
    %v7015 = vpop.f32.mrb[0].mxu0
    %v7016 = vadd.f32 %v6940, %v7015
    %v7017 = vpop.f32.mrb[0].mxu0
    %7018 = vmatprep.mubr.f32.mxu0 0.0
    %7019 = vmatmul.mubr.f32.gmra.mrb[0].mxu0 %v6947
    %v7020 = vpop.f32.mrb[0].mxu0
    %v7021 = vadd.f32 %v6940, %v7020
    %v7022 = vpop.f32.mrb[0].mxu0
    %7023 = vdwg.mxu0
    %v7024 = vadd.f32 %v4500, %v7016
    %v7025 = vadd.f32 %v4501, %v7021
    %v7026 = vsel %vm91, %v7024, 0.0
    %7027 = vadd.xlane.f32.xlu0 %v7026
    %v7028 = vpop.xlane.xlu0 %7027
    %v7029 = vsel %vm91, %v7025, 0.0
    %7030 = vadd.xlane.f32.xlu0 %v7029
    %v7031 = vpop.xlane.xlu0 %7030
    %v7032 = vmul.f32 %v7028, %v1108
    %v7033 = vmul.f32 %v7031, %v1108
    %v7034 = vsub.f32 %v7024, %v7032
    %v7035 = vsub.f32 %v7025, %v7033
    %v7036 = vmul.f32 %v7034, %v7034
    %v7037 = vmul.f32 %v7035, %v7035
    %v7038 = vsel %vm91, %v7036, 0.0
    %7039 = vadd.xlane.f32.xlu0 %v7038
    %v7040 = vpop.xlane.xlu0 %7039
    %v7041 = vsel %vm91, %v7037, 0.0
    %7042 = vadd.xlane.f32.xlu0 %v7041
    %v7043 = vpop.xlane.xlu0 %7042
    %v7044 = vmul.f32 %v7040, %v1108
    %v7045 = vmul.f32 %v7043, %v1108
    %v7046 = vadd.f32 %v7044, 1e-05
    %v7047 = vadd.f32 %v7045, 1e-05
    %v7048 = vrsqrt.pop %v7046
    %v7049 = vrsqrt.pop %v7047
    %v7050 = vmul.f32 %v7034, %v7048
    %v7051 = vmul.f32 %v7035, %v7049
    %v7052 = vmul.f32 %v7050, %v1133
    %v7053 = vmul.f32 %v7051, %v1133
    %v7054 = vadd.f32 %v7052, %v1141
    %v7055 = vadd.f32 %v7053, %v1141
    %s7056 = scalar_lea.vmem %s13, 32
    %v7057 = vld [vmem:[%s7056] sm:$0xff]
    %v7058 = vld [vmem:[%s7056 + $0x8] sm:$0xff]
    %v7059 = vld [vmem:[%s7056 + $0x10] sm:$0xff]
    %v7060 = vld [vmem:[%s7056 + $0x18] sm:$0xff]
    %s7061 = scalar_lea.vmem %s14, 1
    %v7062 = vld [vmem:[%s7061] sm:$0x1]
    %v7064 = vlaneseq
    %v7065 = vshrl.u32 %v7064, 7
    %v7066 = vsub.s32 0, %v7065
    %v7067 = vrot.slane %v7062, %v7066
    %v7070 = vsel %vm91, %v5673, 0
    %v7073 = vsel %vm91, %v5674, 0
    %7075 = vmatprep.subr.mxu0 0.0
    %7076 = vmatpush1.msra.mxu0 %v7057
    %7077 = vmatprep.subr.mxu0 0.0
    %7078 = vmatpush1.msra.mxu0 %v7058
    %7079 = vmatprep.subr.mxu0 0.0
    %7080 = vmatpush1.msra.mxu0 %v7059
    %7081 = vmatprep.subr.mxu0 0.0
    %7082 = vmatpush1.msra.mxu0 %v7060
    %7083 = vmatprep.subr.mxu0 0.0
    %7084 = vmatpush1.msra.mxu0 0.0
    %7085 = vmatprep.subr.mxu0 0.0
    %7086 = vmatpush1.msra.mxu0 0.0
    %7087 = vmatprep.subr.mxu0 0.0
    %7088 = vmatpush1.msra.mxu0 0.0
    %7089 = vmatprep.subr.mxu0 0.0
    %7090 = vmatpush1.msra.mxu0 0.0
    %7091 = vmatprep.subr.mxu0 0.0
    %7092 = vmatpush1.msra.mxu0 0.0
    %7093 = vmatprep.subr.mxu0 0.0
    %7094 = vmatpush1.msra.mxu0 0.0
    %7095 = vmatprep.subr.mxu0 0.0
    %7096 = vmatpush1.msra.mxu0 0.0
    %7097 = vmatprep.subr.mxu0 0.0
    %7098 = vmatpush1.msra.mxu0 0.0
    %7099 = vmatprep.subr.mxu0 0.0
    %7100 = vmatpush1.msra.mxu0 0.0
    %7101 = vmatprep.subr.mxu0 0.0
    %7102 = vmatpush1.msra.mxu0 0.0
    %7103 = vmatprep.subr.mxu0 0.0
    %7104 = vmatpush1.msra.mxu0 0.0
    %7105 = vmatprep.subr.mxu0 0.0
    %7106 = vmatpush1.msra.mxu0 0.0
    %7107 = vmatprep.subr.mxu0 0.0
    %7108 = vmatpush1.msra.mxu0 0.0
    %7109 = vmatprep.subr.mxu0 0.0
    %7110 = vmatpush1.msra.mxu0 0.0
    %7111 = vmatprep.subr.mxu0 0.0
    %7112 = vmatpush1.msra.mxu0 0.0
    %7113 = vmatprep.subr.mxu0 0.0
    %7114 = vmatpush1.msra.mxu0 0.0
    %7115 = vmatprep.subr.mxu0 0.0
    %7116 = vmatpush1.msra.mxu0 0.0
    %7117 = vmatprep.subr.mxu0 0.0
    %7118 = vmatpush1.msra.mxu0 0.0
    %7119 = vmatprep.subr.mxu0 0.0
    %7120 = vmatpush1.msra.mxu0 0.0
    %7121 = vmatprep.subr.mxu0 0.0
    %7122 = vmatpush1.msra.mxu0 0.0
    %7123 = vmatprep.subr.mxu0 0.0
    %7124 = vmatpush1.msra.mxu0 0.0
    %7125 = vmatprep.subr.mxu0 0.0
    %7126 = vmatpush1.msra.mxu0 0.0
    %7127 = vmatprep.subr.mxu0 0.0
    %7128 = vmatpush1.msra.mxu0 0.0
    %7129 = vmatprep.subr.mxu0 0.0
    %7130 = vmatpush1.msra.mxu0 0.0
    %7131 = vmatprep.subr.mxu0 0.0
    %7132 = vmatpush1.msra.mxu0 0.0
    %7133 = vmatprep.subr.mxu0 0.0
    %7134 = vmatpush1.msra.mxu0 0.0
    %7135 = vmatprep.subr.mxu0 0.0
    %7136 = vmatpush1.msra.mxu0 0.0
    %7137 = vmatprep.subr.mxu0 0.0
    %7138 = vmatpush1.msra.mxu0 0.0
    %7139 = vmatprep.mubr.f32.mxu0 0.0
    %7140 = vmatmul.mubr.f32.gmra.mrb[0].mxu0 %v7070
    %v7141 = vpop.f32.mrb[0].mxu0
    %v7142 = vadd.f32 %v7067, %v7141
    %v7143 = vpop.f32.mrb[0].mxu0
    %7144 = vmatprep.mubr.f32.mxu0 0.0
    %7145 = vmatmul.mubr.f32.gmra.mrb[0].mxu0 %v7073
    %v7146 = vpop.f32.mrb[0].mxu0
    %v7147 = vadd.f32 %v7067, %v7146
    %v7148 = vpop.f32.mrb[0].mxu0
    %7149 = vdwg.mxu0
    %v7150 = vmax.f32 %v7142, 0.0
    %v7151 = vmax.f32 %v7147, 0.0
    %s7152 = scalar_lea.vmem %s15, 64
    %v7153 = vld [vmem:[%s7152] sm:$0xff]
    %v7154 = vld [vmem:[%s7152 + $0x8] sm:$0xff]
    %v7155 = vld [vmem:[%s7152 + $0x10] sm:$0xff]
    %v7156 = vld [vmem:[%s7152 + $0x18] sm:$0xff]
    %v7157 = vld [vmem:[%s7152 + $0x20] sm:$0xff]
    %v7158 = vld [vmem:[%s7152 + $0x28] sm:$0xff]
    %v7159 = vld [vmem:[%s7152 + $0x30] sm:$0xff]
    %v7160 = vld [vmem:[%s7152 + $0x38] sm:$0xff]
    %s7161 = scalar_lea.vmem %s16, 1
    %v7162 = vld [vmem:[%s7161] sm:$0x1]
    %v7164 = vlaneseq
    %v7165 = vshrl.u32 %v7164, 7
    %v7166 = vsub.s32 0, %v7165
    %v7167 = vrot.slane %v7162, %v7166
    %v7170 = vsel %vm6942, %v7150, 0
    %v7173 = vsel %vm6942, %v7151, 0
    %7175 = vmatprep.subr.mxu0 0.0
    %7176 = vmatpush1.msra.mxu0 %v7153
    %7177 = vmatprep.subr.mxu0 0.0
    %7178 = vmatpush1.msra.mxu0 %v7154
    %7179 = vmatprep.subr.mxu0 0.0
    %7180 = vmatpush1.msra.mxu0 %v7155
    %7181 = vmatprep.subr.mxu0 0.0
    %7182 = vmatpush1.msra.mxu0 %v7156
    %7183 = vmatprep.subr.mxu0 0.0
    %7184 = vmatpush1.msra.mxu0 %v7157
    %7185 = vmatprep.subr.mxu0 0.0
    %7186 = vmatpush1.msra.mxu0 %v7158
    %7187 = vmatprep.subr.mxu0 0.0
    %7188 = vmatpush1.msra.mxu0 %v7159
    %7189 = vmatprep.subr.mxu0 0.0
    %7190 = vmatpush1.msra.mxu0 %v7160
    %7191 = vmatprep.subr.mxu0 0.0
    %7192 = vmatpush1.msra.mxu0 0.0
    %7193 = vmatprep.subr.mxu0 0.0
    %7194 = vmatpush1.msra.mxu0 0.0
    %7195 = vmatprep.subr.mxu0 0.0
    %7196 = vmatpush1.msra.mxu0 0.0
    %7197 = vmatprep.subr.mxu0 0.0
    %7198 = vmatpush1.msra.mxu0 0.0
    %7199 = vmatprep.subr.mxu0 0.0
    %7200 = vmatpush1.msra.mxu0 0.0
    %7201 = vmatprep.subr.mxu0 0.0
    %7202 = vmatpush1.msra.mxu0 0.0
    %7203 = vmatprep.subr.mxu0 0.0
    %7204 = vmatpush1.msra.mxu0 0.0
    %7205 = vmatprep.subr.mxu0 0.0
    %7206 = vmatpush1.msra.mxu0 0.0
    %7207 = vmatprep.subr.mxu0 0.0
    %7208 = vmatpush1.msra.mxu0 0.0
    %7209 = vmatprep.subr.mxu0 0.0
    %7210 = vmatpush1.msra.mxu0 0.0
    %7211 = vmatprep.subr.mxu0 0.0
    %7212 = vmatpush1.msra.mxu0 0.0
    %7213 = vmatprep.subr.mxu0 0.0
    %7214 = vmatpush1.msra.mxu0 0.0
    %7215 = vmatprep.subr.mxu0 0.0
    %7216 = vmatpush1.msra.mxu0 0.0
    %7217 = vmatprep.subr.mxu0 0.0
    %7218 = vmatpush1.msra.mxu0 0.0
    %7219 = vmatprep.subr.mxu0 0.0
    %7220 = vmatpush1.msra.mxu0 0.0
    %7221 = vmatprep.subr.mxu0 0.0
    %7222 = vmatpush1.msra.mxu0 0.0
    %7223 = vmatprep.subr.mxu0 0.0
    %7224 = vmatpush1.msra.mxu0 0.0
    %7225 = vmatprep.subr.mxu0 0.0
    %7226 = vmatpush1.msra.mxu0 0.0
    %7227 = vmatprep.subr.mxu0 0.0
    %7228 = vmatpush1.msra.mxu0 0.0
    %7229 = vmatprep.subr.mxu0 0.0
    %7230 = vmatpush1.msra.mxu0 0.0
    %7231 = vmatprep.subr.mxu0 0.0
    %7232 = vmatpush1.msra.mxu0 0.0
    %7233 = vmatprep.subr.mxu0 0.0
    %7234 = vmatpush1.msra.mxu0 0.0
    %7235 = vmatprep.subr.mxu0 0.0
    %7236 = vmatpush1.msra.mxu0 0.0
    %7237 = vmatprep.subr.mxu0 0.0
    %7238 = vmatpush1.msra.mxu0 0.0
    %7239 = vmatprep.mubr.f32.mxu0 0.0
    %7240 = vmatmul.mubr.f32.gmra.mrb[0].mxu0 %v7170
    %v7241 = vpop.f32.mrb[0].mxu0
    %v7242 = vadd.f32 %v7167, %v7241
    %v7243 = vpop.f32.mrb[0].mxu0
    %7244 = vmatprep.mubr.f32.mxu0 0.0
    %7245 = vmatmul.mubr.f32.gmra.mrb[0].mxu0 %v7173
    %v7246 = vpop.f32.mrb[0].mxu0
    %v7247 = vadd.f32 %v7167, %v7246
    %v7248 = vpop.f32.mrb[0].mxu0
    %7249 = vdwg.mxu0
    %v7250 = vadd.f32 %v5673, %v7242
    %v7251 = vadd.f32 %v5674, %v7247
    %v7252 = vsel %vm91, %v7250, 0.0
    %7253 = vadd.xlane.f32.xlu0 %v7252
    %v7254 = vpop.xlane.xlu0 %7253
    %v7255 = vsel %vm91, %v7251, 0.0
    %7256 = vadd.xlane.f32.xlu0 %v7255
    %v7257 = vpop.xlane.xlu0 %7256
    %v7258 = vmul.f32 %v7254, %v1108
    %v7259 = vmul.f32 %v7257, %v1108
    %v7260 = vsub.f32 %v7250, %v7258
    %v7261 = vsub.f32 %v7251, %v7259
    %v7262 = vmul.f32 %v7260, %v7260
    %v7263 = vmul.f32 %v7261, %v7261
    %v7264 = vsel %vm91, %v7262, 0.0
    %7265 = vadd.xlane.f32.xlu0 %v7264
    %v7266 = vpop.xlane.xlu0 %7265
    %v7267 = vsel %vm91, %v7263, 0.0
    %7268 = vadd.xlane.f32.xlu0 %v7267
    %v7269 = vpop.xlane.xlu0 %7268
    %v7270 = vmul.f32 %v7266, %v1108
    %v7271 = vmul.f32 %v7269, %v1108
    %v7272 = vadd.f32 %v7270, 1e-05
    %v7273 = vadd.f32 %v7271, 1e-05
    %v7274 = vrsqrt.pop %v7272
    %v7275 = vrsqrt.pop %v7273
    %v7276 = vmul.f32 %v7260, %v7274
    %v7277 = vmul.f32 %v7261, %v7275
    %v7278 = vmul.f32 %v7276, %v1133
    %v7279 = vmul.f32 %v7277, %v1133
    %v7280 = vadd.f32 %v7278, %v1141
    %v7281 = vadd.f32 %v7279, %v1141
    %s7282 = scalar_lea.vmem %s13, 64
    %v7283 = vld [vmem:[%s7282] sm:$0xff]
    %v7284 = vld [vmem:[%s7282 + $0x8] sm:$0xff]
    %v7285 = vld [vmem:[%s7282 + $0x10] sm:$0xff]
    %v7286 = vld [vmem:[%s7282 + $0x18] sm:$0xff]
    %s7287 = scalar_lea.vmem %s14, 2
    %v7288 = vld [vmem:[%s7287] sm:$0x1]
    %v7290 = vlaneseq
    %v7291 = vshrl.u32 %v7290, 7
    %v7292 = vsub.s32 0, %v7291
    %v7293 = vrot.slane %v7288, %v7292
    %v7296 = vsel %vm91, %v6837, 0
    %v7299 = vsel %vm91, %v6838, 0
    %7301 = vmatprep.subr.mxu0 0.0
    %7302 = vmatpush1.msra.mxu0 %v7283
    %7303 = vmatprep.subr.mxu0 0.0
    %7304 = vmatpush1.msra.mxu0 %v7284
    %7305 = vmatprep.subr.mxu0 0.0
    %7306 = vmatpush1.msra.mxu0 %v7285
    %7307 = vmatprep.subr.mxu0 0.0
    %7308 = vmatpush1.msra.mxu0 %v7286
    %7309 = vmatprep.subr.mxu0 0.0
    %7310 = vmatpush1.msra.mxu0 0.0
    %7311 = vmatprep.subr.mxu0 0.0
    %7312 = vmatpush1.msra.mxu0 0.0
    %7313 = vmatprep.subr.mxu0 0.0
    %7314 = vmatpush1.msra.mxu0 0.0
    %7315 = vmatprep.subr.mxu0 0.0
    %7316 = vmatpush1.msra.mxu0 0.0
    %7317 = vmatprep.subr.mxu0 0.0
    %7318 = vmatpush1.msra.mxu0 0.0
    %7319 = vmatprep.subr.mxu0 0.0
    %7320 = vmatpush1.msra.mxu0 0.0
    %7321 = vmatprep.subr.mxu0 0.0
    %7322 = vmatpush1.msra.mxu0 0.0
    %7323 = vmatprep.subr.mxu0 0.0
    %7324 = vmatpush1.msra.mxu0 0.0
    %7325 = vmatprep.subr.mxu0 0.0
    %7326 = vmatpush1.msra.mxu0 0.0
    %7327 = vmatprep.subr.mxu0 0.0
    %7328 = vmatpush1.msra.mxu0 0.0
    %7329 = vmatprep.subr.mxu0 0.0
    %7330 = vmatpush1.msra.mxu0 0.0
    %7331 = vmatprep.subr.mxu0 0.0
    %7332 = vmatpush1.msra.mxu0 0.0
    %7333 = vmatprep.subr.mxu0 0.0
    %7334 = vmatpush1.msra.mxu0 0.0
    %7335 = vmatprep.subr.mxu0 0.0
    %7336 = vmatpush1.msra.mxu0 0.0
    %7337 = vmatprep.subr.mxu0 0.0
    %7338 = vmatpush1.msra.mxu0 0.0
    %7339 = vmatprep.subr.mxu0 0.0
    %7340 = vmatpush1.msra.mxu0 0.0
    %7341 = vmatprep.subr.mxu0 0.0
    %7342 = vmatpush1.msra.mxu0 0.0
    %7343 = vmatprep.subr.mxu0 0.0
    %7344 = vmatpush1.msra.mxu0 0.0
    %7345 = vmatprep.subr.mxu0 0.0
    %7346 = vmatpush1.msra.mxu0 0.0
    %7347 = vmatprep.subr.mxu0 0.0
    %7348 = vmatpush1.msra.mxu0 0.0
    %7349 = vmatprep.subr.mxu0 0.0
    %7350 = vmatpush1.msra.mxu0 0.0
    %7351 = vmatprep.subr.mxu0 0.0
    %7352 = vmatpush1.msra.mxu0 0.0
    %7353 = vmatprep.subr.mxu0 0.0
    %7354 = vmatpush1.msra.mxu0 0.0
    %7355 = vmatprep.subr.mxu0 0.0
    %7356 = vmatpush1.msra.mxu0 0.0
    %7357 = vmatprep.subr.mxu0 0.0
    %7358 = vmatpush1.msra.mxu0 0.0
    %7359 = vmatprep.subr.mxu0 0.0
    %7360 = vmatpush1.msra.mxu0 0.0
    %7361 = vmatprep.subr.mxu0 0.0
    %7362 = vmatpush1.msra.mxu0 0.0
    %7363 = vmatprep.subr.mxu0 0.0
    %7364 = vmatpush1.msra.mxu0 0.0
    %7365 = vmatprep.mubr.f32.mxu0 0.0
    %7366 = vmatmul.mubr.f32.gmra.mrb[0].mxu0 %v7296
    %v7367 = vpop.f32.mrb[0].mxu0
    %v7368 = vadd.f32 %v7293, %v7367
    %v7369 = vpop.f32.mrb[0].mxu0
    %7370 = vmatprep.mubr.f32.mxu0 0.0
    %7371 = vmatmul.mubr.f32.gmra.mrb[0].mxu0 %v7299
    %v7372 = vpop.f32.mrb[0].mxu0
    %v7373 = vadd.f32 %v7293, %v7372
    %v7374 = vpop.f32.mrb[0].mxu0
    %7375 = vdwg.mxu0
    %v7376 = vmax.f32 %v7368, 0.0
    %v7377 = vmax.f32 %v7373, 0.0
    %s7378 = scalar_lea.vmem %s15, 128
    %v7379 = vld [vmem:[%s7378] sm:$0xff]
    %v7380 = vld [vmem:[%s7378 + $0x8] sm:$0xff]
    %v7381 = vld [vmem:[%s7378 + $0x10] sm:$0xff]
    %v7382 = vld [vmem:[%s7378 + $0x18] sm:$0xff]
    %v7383 = vld [vmem:[%s7378 + $0x20] sm:$0xff]
    %v7384 = vld [vmem:[%s7378 + $0x28] sm:$0xff]
    %v7385 = vld [vmem:[%s7378 + $0x30] sm:$0xff]
    %v7386 = vld [vmem:[%s7378 + $0x38] sm:$0xff]
    %s7387 = scalar_lea.vmem %s16, 2
    %v7388 = vld [vmem:[%s7387] sm:$0x1]
    %v7390 = vlaneseq
    %v7391 = vshrl.u32 %v7390, 7
    %v7392 = vsub.s32 0, %v7391
    %v7393 = vrot.slane %v7388, %v7392
    %v7396 = vsel %vm6942, %v7376, 0
    %v7399 = vsel %vm6942, %v7377, 0
    %7401 = vmatprep.subr.mxu0 0.0
    %7402 = vmatpush1.msra.mxu0 %v7379
    %7403 = vmatprep.subr.mxu0 0.0
    %7404 = vmatpush1.msra.mxu0 %v7380
    %7405 = vmatprep.subr.mxu0 0.0
    %7406 = vmatpush1.msra.mxu0 %v7381
    %7407 = vmatprep.subr.mxu0 0.0
    %7408 = vmatpush1.msra.mxu0 %v7382
    %7409 = vmatprep.subr.mxu0 0.0
    %7410 = vmatpush1.msra.mxu0 %v7383
    %7411 = vmatprep.subr.mxu0 0.0
    %7412 = vmatpush1.msra.mxu0 %v7384
    %7413 = vmatprep.subr.mxu0 0.0
    %7414 = vmatpush1.msra.mxu0 %v7385
    %7415 = vmatprep.subr.mxu0 0.0
    %7416 = vmatpush1.msra.mxu0 %v7386
    %7417 = vmatprep.subr.mxu0 0.0
    %7418 = vmatpush1.msra.mxu0 0.0
    %7419 = vmatprep.subr.mxu0 0.0
    %7420 = vmatpush1.msra.mxu0 0.0
    %7421 = vmatprep.subr.mxu0 0.0
    %7422 = vmatpush1.msra.mxu0 0.0
    %7423 = vmatprep.subr.mxu0 0.0
    %7424 = vmatpush1.msra.mxu0 0.0
    %7425 = vmatprep.subr.mxu0 0.0
    %7426 = vmatpush1.msra.mxu0 0.0
    %7427 = vmatprep.subr.mxu0 0.0
    %7428 = vmatpush1.msra.mxu0 0.0
    %7429 = vmatprep.subr.mxu0 0.0
    %7430 = vmatpush1.msra.mxu0 0.0
    %7431 = vmatprep.subr.mxu0 0.0
    %7432 = vmatpush1.msra.mxu0 0.0
    %7433 = vmatprep.subr.mxu0 0.0
    %7434 = vmatpush1.msra.mxu0 0.0
    %7435 = vmatprep.subr.mxu0 0.0
    %7436 = vmatpush1.msra.mxu0 0.0
    %7437 = vmatprep.subr.mxu0 0.0
    %7438 = vmatpush1.msra.mxu0 0.0
    %7439 = vmatprep.subr.mxu0 0.0
    %7440 = vmatpush1.msra.mxu0 0.0
    %7441 = vmatprep.subr.mxu0 0.0
    %7442 = vmatpush1.msra.mxu0 0.0
    %7443 = vmatprep.subr.mxu0 0.0
    %7444 = vmatpush1.msra.mxu0 0.0
    %7445 = vmatprep.subr.mxu0 0.0
    %7446 = vmatpush1.msra.mxu0 0.0
    %7447 = vmatprep.subr.mxu0 0.0
    %7448 = vmatpush1.msra.mxu0 0.0
    %7449 = vmatprep.subr.mxu0 0.0
    %7450 = vmatpush1.msra.mxu0 0.0
    %7451 = vmatprep.subr.mxu0 0.0
    %7452 = vmatpush1.msra.mxu0 0.0
    %7453 = vmatprep.subr.mxu0 0.0
    %7454 = vmatpush1.msra.mxu0 0.0
    %7455 = vmatprep.subr.mxu0 0.0
    %7456 = vmatpush1.msra.mxu0 0.0
    %7457 = vmatprep.subr.mxu0 0.0
    %7458 = vmatpush1.msra.mxu0 0.0
    %7459 = vmatprep.subr.mxu0 0.0
    %7460 = vmatpush1.msra.mxu0 0.0
    %7461 = vmatprep.subr.mxu0 0.0
    %7462 = vmatpush1.msra.mxu0 0.0
    %7463 = vmatprep.subr.mxu0 0.0
    %7464 = vmatpush1.msra.mxu0 0.0
    %7465 = vmatprep.mubr.f32.mxu0 0.0
    %7466 = vmatmul.mubr.f32.gmra.mrb[0].mxu0 %v7396
    %v7467 = vpop.f32.mrb[0].mxu0
    %v7468 = vadd.f32 %v7393, %v7467
    %v7469 = vpop.f32.mrb[0].mxu0
    %7470 = vmatprep.mubr.f32.mxu0 0.0
    %7471 = vmatmul.mubr.f32.gmra.mrb[0].mxu0 %v7399
    %v7472 = vpop.f32.mrb[0].mxu0
    %v7473 = vadd.f32 %v7393, %v7472
    %v7474 = vpop.f32.mrb[0].mxu0
    %7475 = vdwg.mxu0
    %v7476 = vadd.f32 %v6837, %v7468
    %v7477 = vadd.f32 %v6838, %v7473
    %v7478 = vsel %vm91, %v7476, 0.0
    %7479 = vadd.xlane.f32.xlu0 %v7478
    %v7480 = vpop.xlane.xlu0 %7479
    %v7481 = vsel %vm91, %v7477, 0.0
    %7482 = vadd.xlane.f32.xlu0 %v7481
    %v7483 = vpop.xlane.xlu0 %7482
    %v7484 = vmul.f32 %v7480, %v1108
    %v7485 = vmul.f32 %v7483, %v1108
    %v7486 = vsub.f32 %v7476, %v7484
    %v7487 = vsub.f32 %v7477, %v7485
    %v7488 = vmul.f32 %v7486, %v7486
    %v7489 = vmul.f32 %v7487, %v7487
    %v7490 = vsel %vm91, %v7488, 0.0
    %7491 = vadd.xlane.f32.xlu0 %v7490
    %v7492 = vpop.xlane.xlu0 %7491
    %v7493 = vsel %vm91, %v7489, 0.0
    %7494 = vadd.xlane.f32.xlu0 %v7493
    %v7495 = vpop.xlane.xlu0 %7494
    %v7496 = vmul.f32 %v7492, %v1108
    %v7497 = vmul.f32 %v7495, %v1108
    %v7498 = vadd.f32 %v7496, 1e-05
    %v7499 = vadd.f32 %v7497, 1e-05
    %v7500 = vrsqrt.pop %v7498
    %v7501 = vrsqrt.pop %v7499
    %v7502 = vmul.f32 %v7486, %v7500
    %v7503 = vmul.f32 %v7487, %v7501
    %v7504 = vmul.f32 %v7502, %v1133
    %v7505 = vmul.f32 %v7503, %v1133
    %v7506 = vadd.f32 %v7504, %v1141
    %v7507 = vadd.f32 %v7505, %v1141
    %7508 = vst.msk [vmem:[#allocation2] sm:$0xff] %vm91, %v7054
    %7509 = vst.msk [vmem:[#allocation2 + $0x8] sm:$0xff] %vm91, %v7055
    %7510 = vst.msk [vmem:[#allocation4] sm:$0xff] %vm91, %v7280
    %7511 = vst.msk [vmem:[#allocation4 + $0x8] sm:$0xff] %vm91, %v7281
    %7512 = vst.msk [vmem:[#allocation6] sm:$0xff] %vm91, %v7506
    %7513 = vst.msk [vmem:[#allocation6 + $0x8] sm:$0xff] %vm91, %v7507
    // Predicated region
    $region78: #{attention_block_forward.1} parent=1 // pred_check
      _
    $region79: #{attention_block_forward.1} parent=1 // pred_check_branch
      %7515 = sbr.rel (0) target = $region81
    $region80: #{attention_block_forward.1} parent=1 // pred_region
      %s7517 = ssub.s32 256, 256
      %7518 = vsyncadd [#allocation3], %s7517
      %s7519 = sshll.u32 [#allocation2], 4
      %s7520 = int_to_ptr.vmem [resolvable:$true] %s7519
      %7525 = dma.vmem_to_hbm [thread:$0]  %s7520, 256, %s19, [#allocation3], 128, 128, 8
    $region81: #{attention_block_forward.1} parent=1 // pred_fallthru
      _
    // Predicated region
    $region82: #{attention_block_forward.1} parent=1 // pred_check
      _
    $region83: #{attention_block_forward.1} parent=1 // pred_check_branch
      %7527 = sbr.rel (0) target = $region85
    $region84: #{attention_block_forward.1} parent=1 // pred_region
      %s7529 = ssub.s32 256, 256
      %7530 = vsyncadd [#allocation5], %s7529
      %s7531 = sshll.u32 [#allocation4], 4
      %s7532 = int_to_ptr.vmem [resolvable:$true] %s7531
      %7537 = dma.vmem_to_hbm [thread:$0]  %s7532, 256, %s20, [#allocation5], 128, 128, 8
    $region85: #{attention_block_forward.1} parent=1 // pred_fallthru
      _
    // Predicated region
    $region86: #{attention_block_forward.1} parent=1 // pred_check
      _
    $region87: #{attention_block_forward.1} parent=1 // pred_check_branch
      %7539 = sbr.rel (0) target = $region89
    $region88: #{attention_block_forward.1} parent=1 // pred_region
      %s7541 = ssub.s32 256, 256
      %7542 = vsyncadd [#allocation5], %s7541
      %s7543 = sshll.u32 [#allocation6], 4
      %s7544 = int_to_ptr.vmem [resolvable:$true] %s7543
      %7549 = dma.vmem_to_hbm [thread:$0]  %s7544, 256, %s21, [#allocation5], 128, 128, 8
    $region89: #{attention_block_forward.1} parent=1 // pred_fallthru
      _
    // Predicated region
    $region90: #{attention_block_forward.1} parent=1 // pred_check
      _
    $region91: #{attention_block_forward.1} parent=1 // pred_check_branch
      %7551 = sbr.rel (0) target = $region93
    $region92: #{attention_block_forward.1} parent=1 // pred_region
      _
    $region93: #{attention_block_forward.1} parent=1 // pred_fallthru
      _
    // Predicated region
    $region94: #{attention_block_forward.1} parent=1 // pred_check
      _
    $region95: #{attention_block_forward.1} parent=1 // pred_check_branch
      %7553 = sbr.rel (0) target = $region97
    $region96: #{attention_block_forward.1} parent=1 // pred_region
      _
    $region97: #{attention_block_forward.1} parent=1 // pred_fallthru
      _
    // Predicated region
    $region98: #{attention_block_forward.1} parent=1 // pred_check
      _
    $region99: #{attention_block_forward.1} parent=1 // pred_check_branch
      %7555 = sbr.rel (0) target = $region101
    $region100: #{attention_block_forward.1} parent=1 // pred_region
      _
    $region101: #{attention_block_forward.1} parent=1 // pred_fallthru
      _
    // Predicated region
    $region102: #{attention_block_forward.1} parent=1 // pred_check
      _
    $region103: #{attention_block_forward.1} parent=1 // pred_check_branch
      %7557 = sbr.rel (0) target = $region105
    $region104: #{attention_block_forward.1} parent=1 // pred_region
      %7558 = dma.done [#allocation3], 256
    $region105: #{attention_block_forward.1} parent=1 // pred_fallthru
      _
    // Predicated region
    $region106: #{attention_block_forward.1} parent=1 // pred_check
      _
    $region107: #{attention_block_forward.1} parent=1 // pred_check_branch
      %7560 = sbr.rel (0) target = $region109
    $region108: #{attention_block_forward.1} parent=1 // pred_region
      %7561 = dma.done [#allocation5], 256
    $region109: #{attention_block_forward.1} parent=1 // pred_fallthru
      _
    // Predicated region
    $region110: #{attention_block_forward.1} parent=1 // pred_check
      _
    $region111: #{attention_block_forward.1} parent=1 // pred_check_branch
      %7563 = sbr.rel (0) target = $region113
    $region112: #{attention_block_forward.1} parent=1 // pred_region
      %7564 = dma.done [#allocation5], 256
    $region113: #{attention_block_forward.1} parent=1 // pred_fallthru
      _
    // Predicated region
    $region114: #{attention_block_forward.1} parent=1 // pred_check
      _
    $region115: #{attention_block_forward.1} parent=1 // pred_check_branch
      %7566 = sbr.rel (0) target = $region117
    $region116: #{attention_block_forward.1} parent=1 // pred_region
      _
    $region117: #{attention_block_forward.1} parent=1 // pred_fallthru
      _
    // Predicated region
    $region118: #{attention_block_forward.1} parent=1 // pred_check
      _
    $region119: #{attention_block_forward.1} parent=1 // pred_check_branch
      %7568 = sbr.rel (0) target = $region121
    $region120: #{attention_block_forward.1} parent=1 // pred_region
      _
    $region121: #{attention_block_forward.1} parent=1 // pred_fallthru
      _
    // Predicated region
    $region122: #{attention_block_forward.1} parent=1 // pred_check
      _
    $region123: #{attention_block_forward.1} parent=1 // pred_check_branch
      %7570 = sbr.rel (0) target = $region125
    $region124: #{attention_block_forward.1} parent=1 // pred_region
      _
    $region125: #{attention_block_forward.1} parent=1 // pred_fallthru
      _
    %7571 = vsyncpa [#allocation3], 1
    %7572 = vsyncpa [#allocation5], 1

</llo_original>
